<compile_context>
chip_gen: v6e
topology: v6e:2x2x1
jax: 0.10.0
libtpu: 0.0.40
codegen_flags: <defaults>
</compile_context>

<pallas_src>
import functools

import jax
import jax.numpy as jnp
from jax.experimental import pallas as pl
from jax.experimental.pallas import tpu as pltpu


# ----------------------------------------------------------------------------
# Pallas kernel: one grid step per (image, row-tile). All branches + projection fused.
# ----------------------------------------------------------------------------
def aspp_kernel(x_ref, w1_ref, w3_ref, wproj_ref, s_ref, b_ref, ps_ref, rb_ref,
                o_ref, *, dils, row_tile, wp_pad, dmax):
    f32 = jnp.float32
    bf16 = jnp.bfloat16
    L = row_tile * wp_pad                      # rows of the wide (width-padded) tile

    s_all = s_ref[...]                         # [4, Cout] branch BN scales
    b_all = b_ref[...]                         # [4, Cout] branch BN biases

    def bn_relu(y, i):
        return jnp.maximum(y * s_all[i:i + 1, :] + b_all[i:i + 1, :], 0.0)

    def tap(off):
        # Contiguous window of the flattened, zero-guarded slab; bf16 for the MXU.
        return x_ref[pl.ds(off, L), :].astype(bf16)

    # Branch 0: 1x1 conv + BN + ReLU, folded into the projection immediately so only
    # one branch intermediate plus the accumulator is ever live.
    center = dmax + dmax * wp_pad
    b0 = bn_relu(jnp.dot(tap(center), w1_ref[...], preferred_element_type=f32), 0)
    acc = jnp.dot(b0.astype(bf16), wproj_ref[0], preferred_element_type=f32)

    # Branches 1..3: 3x3 dilated convs as 9 shifted-window matmuls each (no im2col).
    for bi, d in enumerate(dils):
        conv = None
        for kh in range(3):
            for kw in range(3):
                off = dmax + (dmax + (kh - 1) * d) * wp_pad + (kw - 1) * d
                part = jnp.dot(tap(off), w3_ref[bi * 9 + kh * 3 + kw],
                               preferred_element_type=f32)
                conv = part if conv is None else conv + part
        bb = bn_relu(conv, bi + 1)
        acc = acc + jnp.dot(bb.astype(bf16), wproj_ref[bi + 1],
                            preferred_element_type=f32)

    # Projection BN + ReLU. The pooled-branch contribution and the projection-BN bias
    # were folded into the per-image row bias rb_ref in the wrapper.
    o_ref[...] = jnp.maximum(acc * ps_ref[...] + rb_ref[...], 0.0)


# ----------------------------------------------------------------------------
# Wrapper: NCHW in / NCHW out, builds flat halo slabs + hoisted pooled branch.
# ----------------------------------------------------------------------------
def aspp_pallas(x_nchw, params, rates, row_tile=8):
    N, Cin, H, W = x_nchw.shape
    Cout = params["w1"].shape[-1]
    dmax = max(rates)
    Wp = W + 2 * dmax                    # "wide" output grid, cropped at the end
    assert H % row_tile == 0, "row_tile must divide H"
    T = H // row_tile
    L = row_tile * Wp
    S = (row_tile + 2 * dmax) * Wp + 2 * dmax   # slab rows per tile (incl. halo+guard)

    f32, bf16 = jnp.float32, jnp.bfloat16
    hi = jax.lax.Precision.HIGHEST
    rnd = lambda a: a.astype(bf16).astype(f32)  # same operand rounding the MXU sees

    # NCHW -> NHWC so channels sit on the 128-lane axis.
    # TODO(synk): keep activations NHWC end-to-end in a full model so this transpose
    # (a whole-array HBM round trip) drops off the measured path.
    x_nhwc = jnp.transpose(x_nchw, (0, 2, 3, 1)).astype(f32)

    # Zero-pad spatially by dmax, flatten rows, add dmax guard rows so every 3x3 tap
    # of every dilation is a single contiguous window of the flat slab.
    xp = jnp.pad(x_nhwc, ((0, 0), (dmax, dmax), (dmax, dmax), (0, 0)))
    xf = xp.reshape(N, (H + 2 * dmax) * Wp, Cin)
    xg = jnp.pad(xf, ((0, 0), (dmax, dmax), (0, 0)))
    # Per-row-tile slabs (halo duplication ~2*dmax/row_tile, vs 27x for HBM im2col).
    x_tiles = jnp.stack([xg[:, t * row_tile * Wp: t * row_tile * Wp + S, :]
                         for t in range(T)], axis=1)            # [N, T, S, Cin] f32
    # TODO(synk): on Mosaic versions with unaligned packed-sublane window loads, ship
    # the slabs as bf16 to also halve activation HBM traffic (taps already go to the
    # MXU as bf16).

    # Weights as bf16 MXU operands; BN folded into f32 per-channel scale/bias.
    w1m = params["w1"].reshape(Cin, Cout).astype(bf16)
    w3m = jnp.concatenate([w.reshape(9, Cin, Cout) for w in params["w3"]],
                          axis=0).astype(bf16)                   # [27, Cin, Cout]
    wprojm = params["wproj"].reshape(5 * Cout, Cout)
    wproj_br = wprojm[:4 * Cout].reshape(4, Cout, Cout).astype(bf16)
    scales = params["scales"].astype(f32)                        # [6, Cout]
    biases = params["biases"].astype(f32)                        # [6, Cout]

    # Global-average-pool branch hoisted to the wrapper: per-image constant; keeping
    # it here removes the cross-tile reduction and the 1-row MXU matmuls.
    pooled = jnp.mean(rnd(x_nhwc), axis=(1, 2))                                  # [N, Cin]
    b4 = jnp.maximum(jnp.dot(pooled, rnd(params["wp"]).reshape(Cin, Cout),
                             precision=hi) * scales[4] + biases[4], 0.0)         # [N, Cout]
    c4 = jnp.dot(rnd(b4), rnd(wprojm[4 * Cout:]), precision=hi)                  # [N, Cout]
    row_bias = (biases[5] + scales[5] * c4).reshape(N, 1, Cout)                  # epilogue bias

    kernel = functools.partial(aspp_kernel, dils=tuple(rates), row_tile=row_tile,
                               wp_pad=Wp, dmax=dmax)

    out_wide = pl.pallas_call(
        kernel,
        out_shape=jax.ShapeDtypeStruct((N, T, L, Cout), f32),
        grid_spec=pltpu.PrefetchScalarGridSpec(
            num_scalar_prefetch=0,
            grid=(N, T),
            in_specs=[
                pl.BlockSpec((None, None, S, Cin), lambda n, t: (n, t, 0, 0)),
                pl.BlockSpec((Cin, Cout), lambda n, t: (0, 0)),
                pl.BlockSpec((27, Cin, Cout), lambda n, t: (0, 0, 0)),
                pl.BlockSpec((4, Cout, Cout), lambda n, t: (0, 0, 0)),
                pl.BlockSpec((4, Cout), lambda n, t: (0, 0)),
                pl.BlockSpec((4, Cout), lambda n, t: (0, 0)),
                pl.BlockSpec((1, Cout), lambda n, t: (0, 0)),
                pl.BlockSpec((None, 1, Cout), lambda n, t: (n, 0, 0)),
            ],
            out_specs=pl.BlockSpec((None, None, L, Cout), lambda n, t: (n, t, 0, 0)),
        ),
        compiler_params=pltpu.CompilerParams(
            dimension_semantics=("parallel", "parallel"),
            vmem_limit_bytes=48 * 1024 * 1024,
        ),
    )(x_tiles, w1m, w3m, wproj_br, scales[:4], biases[:4], scales[5:6], row_bias)

    # Wide grid -> crop the width padding, back to NCHW.
    out = out_wide.reshape(N, H, Wp, Cout)[:, :, dmax:dmax + W, :]
    return jnp.transpose(out, (0, 3, 1, 2))


# ----------------------------------------------------------------------------
# Pure-JAX reference at the same operand precision (bf16 MXU operands, f32 accum).
# ----------------------------------------------------------------------------
def aspp_reference(x_nchw, params, rates):
    f32 = jnp.float32
    hi = jax.lax.Precision.HIGHEST
    rnd = lambda a: a.astype(jnp.bfloat16).astype(f32)
    x = rnd(jnp.transpose(x_nchw, (0, 2, 3, 1)).astype(f32))

    def conv(inp, w_hwio, d=1, p=0):
        return jax.lax.conv_general_dilated(
            inp, w_hwio, window_strides=(1, 1),
            padding=[(p, p), (p, p)], rhs_dilation=(d, d),
            dimension_numbers=("NHWC", "HWIO", "NHWC"), precision=hi)

    def bn_relu(y, i):
        return jnp.maximum(y * params["scales"][i] + params["biases"][i], 0.0)

    b0 = bn_relu(conv(x, rnd(params["w1"])), 0)
    b1 = bn_relu(conv(x, rnd(params["w3"][0]), rates[0], rates[0]), 1)
    b2 = bn_relu(conv(x, rnd(params["w3"][1]), rates[1], rates[1]), 2)
    b3 = bn_relu(conv(x, rnd(params["w3"][2]), rates[2], rates[2]), 3)
    pooled = jnp.mean(x, axis=(1, 2), keepdims=True)
    b4 = jnp.broadcast_to(bn_relu(conv(pooled, rnd(params["wp"])), 4), b0.shape)
    cat = rnd(jnp.concatenate([b0, b1, b2, b3, b4], axis=-1))
    out = bn_relu(conv(cat, rnd(params["wproj"])), 5)
    return jnp.transpose(out, (0, 3, 1, 2))


# ----------------------------------------------------------------------------
# Deterministic parameter construction (shapes dictated by ASPP.__init__)
# ----------------------------------------------------------------------------
def make_params(key, in_channels, out_channels=256):
    ks = jax.random.split(key, 16)
    scale = 0.1
    w1 = scale * jax.random.normal(ks[0], (1, 1, in_channels, out_channels), jnp.float32)
    w3 = [scale * jax.random.normal(ks[1 + i], (3, 3, in_channels, out_channels), jnp.float32)
          for i in range(3)]
    wp = scale * jax.random.normal(ks[4], (1, 1, in_channels, out_channels), jnp.float32)
    wproj = scale * jax.random.normal(ks[5], (1, 1, 5 * out_channels, out_channels), jnp.float32)

    # 6 BatchNorms (5 branch BNs + projection BN), folded to per-channel scale/bias.
    eps = 1e-5
    gamma = 1.0 + 0.1 * jax.random.normal(ks[6], (6, out_channels), jnp.float32)
    beta = 0.1 * jax.random.normal(ks[7], (6, out_channels), jnp.float32)
    rmean = 0.1 * jax.random.normal(ks[8], (6, out_channels), jnp.float32)
    rvar = jax.random.uniform(ks[9], (6, out_channels), jnp.float32, 0.5, 1.5)
    scales = gamma / jnp.sqrt(rvar + eps)
    biases = beta - rmean * scales
    return {"w1": w1, "w3": w3, "wp": wp, "wproj": wproj,
            "scales": scales, "biases": biases}


if __name__ == "__main__":
    key = jax.random.PRNGKey(0)
    kx, kp = jax.random.split(key)

    N, Cin, H, W = 2, 8, 16, 16       # small shapes (out_channels=256 fixed by module)
    rates = (1, 2, 3)                 # atrous_rates scaled down to the toy spatial size

    x = jax.random.normal(kx, (N, Cin, H, W), jnp.float32)   # NCHW, like PyTorch
    params = make_params(kp, Cin, out_channels=256)

    out = jax.block_until_ready(aspp_pallas(x, params, rates, row_tile=8))
    ref = jax.block_until_ready(aspp_reference(x, params, rates))

    assert out.shape == (N, 256, H, W), out.shape
    max_err = float(jnp.max(jnp.abs(out - ref)))
    assert jnp.allclose(out, ref, rtol=2e-4, atol=2e-3), max_err

    print("KERNEL_OK")
</pallas_src>

<mosaic_0001>
module attributes {stable_mosaic.version = 11 : i64} {
  func.func @aspp_kernel(%arg0: i32, %arg1: i32, %arg2: memref<1x1x314x8xf32, #tpu.memory_space<vmem>>, %arg3: memref<8x256xbf16, #tpu.memory_space<vmem>>, %arg4: memref<27x8x256xbf16, #tpu.memory_space<vmem>>, %arg5: memref<4x256x256xbf16, #tpu.memory_space<vmem>>, %arg6: memref<4x256xf32, #tpu.memory_space<vmem>>, %arg7: memref<4x256xf32, #tpu.memory_space<vmem>>, %arg8: memref<1x256xf32, #tpu.memory_space<vmem>>, %arg9: memref<1x1x256xf32, #tpu.memory_space<vmem>>, %arg10: memref<1x1x176x256xf32, #tpu.memory_space<vmem>>) attributes {dimension_semantics = [#tpu.dimension_semantics<parallel>, #tpu.dimension_semantics<parallel>], iteration_bounds = array<i64: 2, 2>, scalar_prefetch = 0 : i64, scratch_operands = 0 : i64, tpu.core_type = #tpu.core_type<tc>, window_params = [{transform_indices = @transform_0, window_bounds = array<i64: 1, 1, 314, 8>}, {pipeline_mode = #tpu.pipeline_mode<synchronous>, transform_indices = @transform_1, window_bounds = array<i64: 8, 256>}, {pipeline_mode = #tpu.pipeline_mode<synchronous>, transform_indices = @transform_2, window_bounds = array<i64: 27, 8, 256>}, {pipeline_mode = #tpu.pipeline_mode<synchronous>, transform_indices = @transform_3, window_bounds = array<i64: 4, 256, 256>}, {pipeline_mode = #tpu.pipeline_mode<synchronous>, transform_indices = @transform_4, window_bounds = array<i64: 4, 256>}, {pipeline_mode = #tpu.pipeline_mode<synchronous>, transform_indices = @transform_5, window_bounds = array<i64: 4, 256>}, {pipeline_mode = #tpu.pipeline_mode<synchronous>, transform_indices = @transform_6, window_bounds = array<i64: 1, 256>}, {transform_indices = @transform_7, window_bounds = array<i64: 1, 1, 256>}, {transform_indices = @transform_8, window_bounds = array<i64: 1, 1, 176, 256>}]} {
    %c0 = arith.constant 0 : index
    %c0_0 = arith.constant 0 : index
    %0 = vector.load %arg6[%c0, %c0_0] : memref<4x256xf32, #tpu.memory_space<vmem>>, vector<4x256xf32>
    %c0_1 = arith.constant 0 : index
    %c0_2 = arith.constant 0 : index
    %1 = vector.load %arg7[%c0_1, %c0_2] : memref<4x256xf32, #tpu.memory_space<vmem>>, vector<4x256xf32>
    %c0_3 = arith.constant 0 : index
    %c0_4 = arith.constant 0 : index
    %c69 = arith.constant 69 : index
    %c0_5 = arith.constant 0 : index
    %2 = vector.load %arg2[%c0_3, %c0_4, %c69, %c0_5] : memref<1x1x314x8xf32, #tpu.memory_space<vmem>>, vector<1x1x176x8xf32>
    %3 = vector.shape_cast %2 : vector<1x1x176x8xf32> to vector<176x8xf32>
    %4 = arith.truncf %3 : vector<176x8xf32> to vector<176x8xbf16>
    %c0_6 = arith.constant 0 : index
    %c0_7 = arith.constant 0 : index
    %5 = vector.load %arg3[%c0_6, %c0_7] : memref<8x256xbf16, #tpu.memory_space<vmem>>, vector<8x256xbf16>
    %cst = arith.constant dense<0.000000e+00> : vector<176x256xf32>
    %6 = tpu.matmul %4, %5, %cst {dimension_numbers = #tpu.dot_dimension_numbers<[1], [0], [0], [1], [0, 0, 1, 1], [], []>} : vector<176x8xbf16>, vector<8x256xbf16>, vector<176x256xf32> -> vector<176x256xf32>
    %7 = vector.extract_strided_slice %0 {offsets = [0, 0], sizes = [1, 256], strides = [1, 1]} : vector<4x256xf32> to vector<1x256xf32>
    %8 = vector.broadcast %7 : vector<1x256xf32> to vector<176x256xf32>
    %9 = arith.mulf %6, %8 : vector<176x256xf32>
    %10 = vector.extract_strided_slice %1 {offsets = [0, 0], sizes = [1, 256], strides = [1, 1]} : vector<4x256xf32> to vector<1x256xf32>
    %11 = vector.broadcast %10 : vector<1x256xf32> to vector<176x256xf32>
    %12 = arith.addf %9, %11 : vector<176x256xf32>
    %cst_8 = arith.constant 0.000000e+00 : f32
    %13 = vector.broadcast %cst_8 : f32 to vector<176x256xf32>
    %14 = arith.maximumf %12, %13 : vector<176x256xf32>
    %15 = arith.truncf %14 : vector<176x256xf32> to vector<176x256xbf16>
    %c0_9 = arith.constant 0 : index
    %c0_10 = arith.constant 0 : index
    %c0_11 = arith.constant 0 : index
    %16 = vector.load %arg5[%c0_9, %c0_10, %c0_11] : memref<4x256x256xbf16, #tpu.memory_space<vmem>>, vector<1x256x256xbf16>
    %17 = vector.shape_cast %16 : vector<1x256x256xbf16> to vector<256x256xbf16>
    %cst_12 = arith.constant dense<0.000000e+00> : vector<176x256xf32>
    %18 = tpu.matmul %15, %17, %cst_12 {dimension_numbers = #tpu.dot_dimension_numbers<[1], [0], [0], [1], [0, 0, 1, 1], [], []>} : vector<176x256xbf16>, vector<256x256xbf16>, vector<176x256xf32> -> vector<176x256xf32>
    %c0_13 = arith.constant 0 : index
    %c0_14 = arith.constant 0 : index
    %c46 = arith.constant 46 : index
    %c0_15 = arith.constant 0 : index
    %19 = vector.load %arg2[%c0_13, %c0_14, %c46, %c0_15] : memref<1x1x314x8xf32, #tpu.memory_space<vmem>>, vector<1x1x176x8xf32>
    %20 = vector.shape_cast %19 : vector<1x1x176x8xf32> to vector<176x8xf32>
    %21 = arith.truncf %20 : vector<176x8xf32> to vector<176x8xbf16>
    %c0_16 = arith.constant 0 : index
    %c0_17 = arith.constant 0 : index
    %c0_18 = arith.constant 0 : index
    %22 = vector.load %arg4[%c0_16, %c0_17, %c0_18] : memref<27x8x256xbf16, #tpu.memory_space<vmem>>, vector<1x8x256xbf16>
    %23 = vector.shape_cast %22 : vector<1x8x256xbf16> to vector<8x256xbf16>
    %cst_19 = arith.constant dense<0.000000e+00> : vector<176x256xf32>
    %24 = tpu.matmul %21, %23, %cst_19 {dimension_numbers = #tpu.dot_dimension_numbers<[1], [0], [0], [1], [0, 0, 1, 1], [], []>} : vector<176x8xbf16>, vector<8x256xbf16>, vector<176x256xf32> -> vector<176x256xf32>
    %c0_20 = arith.constant 0 : index
    %c0_21 = arith.constant 0 : index
    %c47 = arith.constant 47 : index
    %c0_22 = arith.constant 0 : index
    %25 = vector.load %arg2[%c0_20, %c0_21, %c47, %c0_22] : memref<1x1x314x8xf32, #tpu.memory_space<vmem>>, vector<1x1x176x8xf32>
    %26 = vector.shape_cast %25 : vector<1x1x176x8xf32> to vector<176x8xf32>
    %27 = arith.truncf %26 : vector<176x8xf32> to vector<176x8xbf16>
    %c1 = arith.constant 1 : index
    %c0_23 = arith.constant 0 : index
    %c0_24 = arith.constant 0 : index
    %28 = vector.load %arg4[%c1, %c0_23, %c0_24] : memref<27x8x256xbf16, #tpu.memory_space<vmem>>, vector<1x8x256xbf16>
    %29 = vector.shape_cast %28 : vector<1x8x256xbf16> to vector<8x256xbf16>
    %cst_25 = arith.constant dense<0.000000e+00> : vector<176x256xf32>
    %30 = tpu.matmul %27, %29, %cst_25 {dimension_numbers = #tpu.dot_dimension_numbers<[1], [0], [0], [1], [0, 0, 1, 1], [], []>} : vector<176x8xbf16>, vector<8x256xbf16>, vector<176x256xf32> -> vector<176x256xf32>
    %31 = arith.addf %24, %30 : vector<176x256xf32>
    %c0_26 = arith.constant 0 : index
    %c0_27 = arith.constant 0 : index
    %c48 = arith.constant 48 : index
    %c0_28 = arith.constant 0 : index
    %32 = vector.load %arg2[%c0_26, %c0_27, %c48, %c0_28] : memref<1x1x314x8xf32, #tpu.memory_space<vmem>>, vector<1x1x176x8xf32>
    %33 = vector.shape_cast %32 : vector<1x1x176x8xf32> to vector<176x8xf32>
    %34 = arith.truncf %33 : vector<176x8xf32> to vector<176x8xbf16>
    %c2 = arith.constant 2 : index
    %c0_29 = arith.constant 0 : index
    %c0_30 = arith.constant 0 : index
    %35 = vector.load %arg4[%c2, %c0_29, %c0_30] : memref<27x8x256xbf16, #tpu.memory_space<vmem>>, vector<1x8x256xbf16>
    %36 = vector.shape_cast %35 : vector<1x8x256xbf16> to vector<8x256xbf16>
    %cst_31 = arith.constant dense<0.000000e+00> : vector<176x256xf32>
    %37 = tpu.matmul %34, %36, %cst_31 {dimension_numbers = #tpu.dot_dimension_numbers<[1], [0], [0], [1], [0, 0, 1, 1], [], []>} : vector<176x8xbf16>, vector<8x256xbf16>, vector<176x256xf32> -> vector<176x256xf32>
    %38 = arith.addf %31, %37 : vector<176x256xf32>
    %c0_32 = arith.constant 0 : index
    %c0_33 = arith.constant 0 : index
    %c68 = arith.constant 68 : index
    %c0_34 = arith.constant 0 : index
    %39 = vector.load %arg2[%c0_32, %c0_33, %c68, %c0_34] : memref<1x1x314x8xf32, #tpu.memory_space<vmem>>, vector<1x1x176x8xf32>
    %40 = vector.shape_cast %39 : vector<1x1x176x8xf32> to vector<176x8xf32>
    %41 = arith.truncf %40 : vector<176x8xf32> to vector<176x8xbf16>
    %c3 = arith.constant 3 : index
    %c0_35 = arith.constant 0 : index
    %c0_36 = arith.constant 0 : index
    %42 = vector.load %arg4[%c3, %c0_35, %c0_36] : memref<27x8x256xbf16, #tpu.memory_space<vmem>>, vector<1x8x256xbf16>
    %43 = vector.shape_cast %42 : vector<1x8x256xbf16> to vector<8x256xbf16>
    %cst_37 = arith.constant dense<0.000000e+00> : vector<176x256xf32>
    %44 = tpu.matmul %41, %43, %cst_37 {dimension_numbers = #tpu.dot_dimension_numbers<[1], [0], [0], [1], [0, 0, 1, 1], [], []>} : vector<176x8xbf16>, vector<8x256xbf16>, vector<176x256xf32> -> vector<176x256xf32>
    %45 = arith.addf %38, %44 : vector<176x256xf32>
    %c0_38 = arith.constant 0 : index
    %c0_39 = arith.constant 0 : index
    %c69_40 = arith.constant 69 : index
    %c0_41 = arith.constant 0 : index
    %46 = vector.load %arg2[%c0_38, %c0_39, %c69_40, %c0_41] : memref<1x1x314x8xf32, #tpu.memory_space<vmem>>, vector<1x1x176x8xf32>
    %47 = vector.shape_cast %46 : vector<1x1x176x8xf32> to vector<176x8xf32>
    %48 = arith.truncf %47 : vector<176x8xf32> to vector<176x8xbf16>
    %c4 = arith.constant 4 : index
    %c0_42 = arith.constant 0 : index
    %c0_43 = arith.constant 0 : index
    %49 = vector.load %arg4[%c4, %c0_42, %c0_43] : memref<27x8x256xbf16, #tpu.memory_space<vmem>>, vector<1x8x256xbf16>
    %50 = vector.shape_cast %49 : vector<1x8x256xbf16> to vector<8x256xbf16>
    %cst_44 = arith.constant dense<0.000000e+00> : vector<176x256xf32>
    %51 = tpu.matmul %48, %50, %cst_44 {dimension_numbers = #tpu.dot_dimension_numbers<[1], [0], [0], [1], [0, 0, 1, 1], [], []>} : vector<176x8xbf16>, vector<8x256xbf16>, vector<176x256xf32> -> vector<176x256xf32>
    %52 = arith.addf %45, %51 : vector<176x256xf32>
    %c0_45 = arith.constant 0 : index
    %c0_46 = arith.constant 0 : index
    %c70 = arith.constant 70 : index
    %c0_47 = arith.constant 0 : index
    %53 = vector.load %arg2[%c0_45, %c0_46, %c70, %c0_47] : memref<1x1x314x8xf32, #tpu.memory_space<vmem>>, vector<1x1x176x8xf32>
    %54 = vector.shape_cast %53 : vector<1x1x176x8xf32> to vector<176x8xf32>
    %55 = arith.truncf %54 : vector<176x8xf32> to vector<176x8xbf16>
    %c5 = arith.constant 5 : index
    %c0_48 = arith.constant 0 : index
    %c0_49 = arith.constant 0 : index
    %56 = vector.load %arg4[%c5, %c0_48, %c0_49] : memref<27x8x256xbf16, #tpu.memory_space<vmem>>, vector<1x8x256xbf16>
    %57 = vector.shape_cast %56 : vector<1x8x256xbf16> to vector<8x256xbf16>
    %cst_50 = arith.constant dense<0.000000e+00> : vector<176x256xf32>
    %58 = tpu.matmul %55, %57, %cst_50 {dimension_numbers = #tpu.dot_dimension_numbers<[1], [0], [0], [1], [0, 0, 1, 1], [], []>} : vector<176x8xbf16>, vector<8x256xbf16>, vector<176x256xf32> -> vector<176x256xf32>
    %59 = arith.addf %52, %58 : vector<176x256xf32>
    %c0_51 = arith.constant 0 : index
    %c0_52 = arith.constant 0 : index
    %c90 = arith.constant 90 : index
    %c0_53 = arith.constant 0 : index
    %60 = vector.load %arg2[%c0_51, %c0_52, %c90, %c0_53] : memref<1x1x314x8xf32, #tpu.memory_space<vmem>>, vector<1x1x176x8xf32>
    %61 = vector.shape_cast %60 : vector<1x1x176x8xf32> to vector<176x8xf32>
    %62 = arith.truncf %61 : vector<176x8xf32> to vector<176x8xbf16>
    %c6 = arith.constant 6 : index
    %c0_54 = arith.constant 0 : index
    %c0_55 = arith.constant 0 : index
    %63 = vector.load %arg4[%c6, %c0_54, %c0_55] : memref<27x8x256xbf16, #tpu.memory_space<vmem>>, vector<1x8x256xbf16>
    %64 = vector.shape_cast %63 : vector<1x8x256xbf16> to vector<8x256xbf16>
    %cst_56 = arith.constant dense<0.000000e+00> : vector<176x256xf32>
    %65 = tpu.matmul %62, %64, %cst_56 {dimension_numbers = #tpu.dot_dimension_numbers<[1], [0], [0], [1], [0, 0, 1, 1], [], []>} : vector<176x8xbf16>, vector<8x256xbf16>, vector<176x256xf32> -> vector<176x256xf32>
    %66 = arith.addf %59, %65 : vector<176x256xf32>
    %c0_57 = arith.constant 0 : index
    %c0_58 = arith.constant 0 : index
    %c91 = arith.constant 91 : index
    %c0_59 = arith.constant 0 : index
    %67 = vector.load %arg2[%c0_57, %c0_58, %c91, %c0_59] : memref<1x1x314x8xf32, #tpu.memory_space<vmem>>, vector<1x1x176x8xf32>
    %68 = vector.shape_cast %67 : vector<1x1x176x8xf32> to vector<176x8xf32>
    %69 = arith.truncf %68 : vector<176x8xf32> to vector<176x8xbf16>
    %c7 = arith.constant 7 : index
    %c0_60 = arith.constant 0 : index
    %c0_61 = arith.constant 0 : index
    %70 = vector.load %arg4[%c7, %c0_60, %c0_61] : memref<27x8x256xbf16, #tpu.memory_space<vmem>>, vector<1x8x256xbf16>
    %71 = vector.shape_cast %70 : vector<1x8x256xbf16> to vector<8x256xbf16>
    %cst_62 = arith.constant dense<0.000000e+00> : vector<176x256xf32>
    %72 = tpu.matmul %69, %71, %cst_62 {dimension_numbers = #tpu.dot_dimension_numbers<[1], [0], [0], [1], [0, 0, 1, 1], [], []>} : vector<176x8xbf16>, vector<8x256xbf16>, vector<176x256xf32> -> vector<176x256xf32>
    %73 = arith.addf %66, %72 : vector<176x256xf32>
    %c0_63 = arith.constant 0 : index
    %c0_64 = arith.constant 0 : index
    %c92 = arith.constant 92 : index
    %c0_65 = arith.constant 0 : index
    %74 = vector.load %arg2[%c0_63, %c0_64, %c92, %c0_65] : memref<1x1x314x8xf32, #tpu.memory_space<vmem>>, vector<1x1x176x8xf32>
    %75 = vector.shape_cast %74 : vector<1x1x176x8xf32> to vector<176x8xf32>
    %76 = arith.truncf %75 : vector<176x8xf32> to vector<176x8xbf16>
    %c8 = arith.constant 8 : index
    %c0_66 = arith.constant 0 : index
    %c0_67 = arith.constant 0 : index
    %77 = vector.load %arg4[%c8, %c0_66, %c0_67] : memref<27x8x256xbf16, #tpu.memory_space<vmem>>, vector<1x8x256xbf16>
    %78 = vector.shape_cast %77 : vector<1x8x256xbf16> to vector<8x256xbf16>
    %cst_68 = arith.constant dense<0.000000e+00> : vector<176x256xf32>
    %79 = tpu.matmul %76, %78, %cst_68 {dimension_numbers = #tpu.dot_dimension_numbers<[1], [0], [0], [1], [0, 0, 1, 1], [], []>} : vector<176x8xbf16>, vector<8x256xbf16>, vector<176x256xf32> -> vector<176x256xf32>
    %80 = arith.addf %73, %79 : vector<176x256xf32>
    %81 = vector.extract_strided_slice %0 {offsets = [1, 0], sizes = [1, 256], strides = [1, 1]} : vector<4x256xf32> to vector<1x256xf32>
    %82 = vector.broadcast %81 : vector<1x256xf32> to vector<176x256xf32>
    %83 = arith.mulf %80, %82 : vector<176x256xf32>
    %84 = vector.extract_strided_slice %1 {offsets = [1, 0], sizes = [1, 256], strides = [1, 1]} : vector<4x256xf32> to vector<1x256xf32>
    %85 = vector.broadcast %84 : vector<1x256xf32> to vector<176x256xf32>
    %86 = arith.addf %83, %85 : vector<176x256xf32>
    %cst_69 = arith.constant 0.000000e+00 : f32
    %87 = vector.broadcast %cst_69 : f32 to vector<176x256xf32>
    %88 = arith.maximumf %86, %87 : vector<176x256xf32>
    %89 = arith.truncf %88 : vector<176x256xf32> to vector<176x256xbf16>
    %c1_70 = arith.constant 1 : index
    %c0_71 = arith.constant 0 : index
    %c0_72 = arith.constant 0 : index
    %90 = vector.load %arg5[%c1_70, %c0_71, %c0_72] : memref<4x256x256xbf16, #tpu.memory_space<vmem>>, vector<1x256x256xbf16>
    %91 = vector.shape_cast %90 : vector<1x256x256xbf16> to vector<256x256xbf16>
    %cst_73 = arith.constant dense<0.000000e+00> : vector<176x256xf32>
    %92 = tpu.matmul %89, %91, %cst_73 {dimension_numbers = #tpu.dot_dimension_numbers<[1], [0], [0], [1], [0, 0, 1, 1], [], []>} : vector<176x256xbf16>, vector<256x256xbf16>, vector<176x256xf32> -> vector<176x256xf32>
    %93 = arith.addf %18, %92 : vector<176x256xf32>
    %c0_74 = arith.constant 0 : index
    %c0_75 = arith.constant 0 : index
    %c23 = arith.constant 23 : index
    %c0_76 = arith.constant 0 : index
    %94 = vector.load %arg2[%c0_74, %c0_75, %c23, %c0_76] : memref<1x1x314x8xf32, #tpu.memory_space<vmem>>, vector<1x1x176x8xf32>
    %95 = vector.shape_cast %94 : vector<1x1x176x8xf32> to vector<176x8xf32>
    %96 = arith.truncf %95 : vector<176x8xf32> to vector<176x8xbf16>
    %c9 = arith.constant 9 : index
    %c0_77 = arith.constant 0 : index
    %c0_78 = arith.constant 0 : index
    %97 = vector.load %arg4[%c9, %c0_77, %c0_78] : memref<27x8x256xbf16, #tpu.memory_space<vmem>>, vector<1x8x256xbf16>
    %98 = vector.shape_cast %97 : vector<1x8x256xbf16> to vector<8x256xbf16>
    %cst_79 = arith.constant dense<0.000000e+00> : vector<176x256xf32>
    %99 = tpu.matmul %96, %98, %cst_79 {dimension_numbers = #tpu.dot_dimension_numbers<[1], [0], [0], [1], [0, 0, 1, 1], [], []>} : vector<176x8xbf16>, vector<8x256xbf16>, vector<176x256xf32> -> vector<176x256xf32>
    %c0_80 = arith.constant 0 : index
    %c0_81 = arith.constant 0 : index
    %c25 = arith.constant 25 : index
    %c0_82 = arith.constant 0 : index
    %100 = vector.load %arg2[%c0_80, %c0_81, %c25, %c0_82] : memref<1x1x314x8xf32, #tpu.memory_space<vmem>>, vector<1x1x176x8xf32>
    %101 = vector.shape_cast %100 : vector<1x1x176x8xf32> to vector<176x8xf32>
    %102 = arith.truncf %101 : vector<176x8xf32> to vector<176x8xbf16>
    %c10 = arith.constant 10 : index
    %c0_83 = arith.constant 0 : index
    %c0_84 = arith.constant 0 : index
    %103 = vector.load %arg4[%c10, %c0_83, %c0_84] : memref<27x8x256xbf16, #tpu.memory_space<vmem>>, vector<1x8x256xbf16>
    %104 = vector.shape_cast %103 : vector<1x8x256xbf16> to vector<8x256xbf16>
    %cst_85 = arith.constant dense<0.000000e+00> : vector<176x256xf32>
    %105 = tpu.matmul %102, %104, %cst_85 {dimension_numbers = #tpu.dot_dimension_numbers<[1], [0], [0], [1], [0, 0, 1, 1], [], []>} : vector<176x8xbf16>, vector<8x256xbf16>, vector<176x256xf32> -> vector<176x256xf32>
    %106 = arith.addf %99, %105 : vector<176x256xf32>
    %c0_86 = arith.constant 0 : index
    %c0_87 = arith.constant 0 : index
    %c27 = arith.constant 27 : index
    %c0_88 = arith.constant 0 : index
    %107 = vector.load %arg2[%c0_86, %c0_87, %c27, %c0_88] : memref<1x1x314x8xf32, #tpu.memory_space<vmem>>, vector<1x1x176x8xf32>
    %108 = vector.shape_cast %107 : vector<1x1x176x8xf32> to vector<176x8xf32>
    %109 = arith.truncf %108 : vector<176x8xf32> to vector<176x8xbf16>
    %c11 = arith.constant 11 : index
    %c0_89 = arith.constant 0 : index
    %c0_90 = arith.constant 0 : index
    %110 = vector.load %arg4[%c11, %c0_89, %c0_90] : memref<27x8x256xbf16, #tpu.memory_space<vmem>>, vector<1x8x256xbf16>
    %111 = vector.shape_cast %110 : vector<1x8x256xbf16> to vector<8x256xbf16>
    %cst_91 = arith.constant dense<0.000000e+00> : vector<176x256xf32>
    %112 = tpu.matmul %109, %111, %cst_91 {dimension_numbers = #tpu.dot_dimension_numbers<[1], [0], [0], [1], [0, 0, 1, 1], [], []>} : vector<176x8xbf16>, vector<8x256xbf16>, vector<176x256xf32> -> vector<176x256xf32>
    %113 = arith.addf %106, %112 : vector<176x256xf32>
    %c0_92 = arith.constant 0 : index
    %c0_93 = arith.constant 0 : index
    %c67 = arith.constant 67 : index
    %c0_94 = arith.constant 0 : index
    %114 = vector.load %arg2[%c0_92, %c0_93, %c67, %c0_94] : memref<1x1x314x8xf32, #tpu.memory_space<vmem>>, vector<1x1x176x8xf32>
    %115 = vector.shape_cast %114 : vector<1x1x176x8xf32> to vector<176x8xf32>
    %116 = arith.truncf %115 : vector<176x8xf32> to vector<176x8xbf16>
    %c12 = arith.constant 12 : index
    %c0_95 = arith.constant 0 : index
    %c0_96 = arith.constant 0 : index
    %117 = vector.load %arg4[%c12, %c0_95, %c0_96] : memref<27x8x256xbf16, #tpu.memory_space<vmem>>, vector<1x8x256xbf16>
    %118 = vector.shape_cast %117 : vector<1x8x256xbf16> to vector<8x256xbf16>
    %cst_97 = arith.constant dense<0.000000e+00> : vector<176x256xf32>
    %119 = tpu.matmul %116, %118, %cst_97 {dimension_numbers = #tpu.dot_dimension_numbers<[1], [0], [0], [1], [0, 0, 1, 1], [], []>} : vector<176x8xbf16>, vector<8x256xbf16>, vector<176x256xf32> -> vector<176x256xf32>
    %120 = arith.addf %113, %119 : vector<176x256xf32>
    %c0_98 = arith.constant 0 : index
    %c0_99 = arith.constant 0 : index
    %c69_100 = arith.constant 69 : index
    %c0_101 = arith.constant 0 : index
    %121 = vector.load %arg2[%c0_98, %c0_99, %c69_100, %c0_101] : memref<1x1x314x8xf32, #tpu.memory_space<vmem>>, vector<1x1x176x8xf32>
    %122 = vector.shape_cast %121 : vector<1x1x176x8xf32> to vector<176x8xf32>
    %123 = arith.truncf %122 : vector<176x8xf32> to vector<176x8xbf16>
    %c13 = arith.constant 13 : index
    %c0_102 = arith.constant 0 : index
    %c0_103 = arith.constant 0 : index
    %124 = vector.load %arg4[%c13, %c0_102, %c0_103] : memref<27x8x256xbf16, #tpu.memory_space<vmem>>, vector<1x8x256xbf16>
    %125 = vector.shape_cast %124 : vector<1x8x256xbf16> to vector<8x256xbf16>
    %cst_104 = arith.constant dense<0.000000e+00> : vector<176x256xf32>
    %126 = tpu.matmul %123, %125, %cst_104 {dimension_numbers = #tpu.dot_dimension_numbers<[1], [0], [0], [1], [0, 0, 1, 1], [], []>} : vector<176x8xbf16>, vector<8x256xbf16>, vector<176x256xf32> -> vector<176x256xf32>
    %127 = arith.addf %120, %126 : vector<176x256xf32>
    %c0_105 = arith.constant 0 : index
    %c0_106 = arith.constant 0 : index
    %c71 = arith.constant 71 : index
    %c0_107 = arith.constant 0 : index
    %128 = vector.load %arg2[%c0_105, %c0_106, %c71, %c0_107] : memref<1x1x314x8xf32, #tpu.memory_space<vmem>>, vector<1x1x176x8xf32>
    %129 = vector.shape_cast %128 : vector<1x1x176x8xf32> to vector<176x8xf32>
    %130 = arith.truncf %129 : vector<176x8xf32> to vector<176x8xbf16>
    %c14 = arith.constant 14 : index
    %c0_108 = arith.constant 0 : index
    %c0_109 = arith.constant 0 : index
    %131 = vector.load %arg4[%c14, %c0_108, %c0_109] : memref<27x8x256xbf16, #tpu.memory_space<vmem>>, vector<1x8x256xbf16>
    %132 = vector.shape_cast %131 : vector<1x8x256xbf16> to vector<8x256xbf16>
    %cst_110 = arith.constant dense<0.000000e+00> : vector<176x256xf32>
    %133 = tpu.matmul %130, %132, %cst_110 {dimension_numbers = #tpu.dot_dimension_numbers<[1], [0], [0], [1], [0, 0, 1, 1], [], []>} : vector<176x8xbf16>, vector<8x256xbf16>, vector<176x256xf32> -> vector<176x256xf32>
    %134 = arith.addf %127, %133 : vector<176x256xf32>
    %c0_111 = arith.constant 0 : index
    %c0_112 = arith.constant 0 : index
    %c111 = arith.constant 111 : index
    %c0_113 = arith.constant 0 : index
    %135 = vector.load %arg2[%c0_111, %c0_112, %c111, %c0_113] : memref<1x1x314x8xf32, #tpu.memory_space<vmem>>, vector<1x1x176x8xf32>
    %136 = vector.shape_cast %135 : vector<1x1x176x8xf32> to vector<176x8xf32>
    %137 = arith.truncf %136 : vector<176x8xf32> to vector<176x8xbf16>
    %c15 = arith.constant 15 : index
    %c0_114 = arith.constant 0 : index
    %c0_115 = arith.constant 0 : index
    %138 = vector.load %arg4[%c15, %c0_114, %c0_115] : memref<27x8x256xbf16, #tpu.memory_space<vmem>>, vector<1x8x256xbf16>
    %139 = vector.shape_cast %138 : vector<1x8x256xbf16> to vector<8x256xbf16>
    %cst_116 = arith.constant dense<0.000000e+00> : vector<176x256xf32>
    %140 = tpu.matmul %137, %139, %cst_116 {dimension_numbers = #tpu.dot_dimension_numbers<[1], [0], [0], [1], [0, 0, 1, 1], [], []>} : vector<176x8xbf16>, vector<8x256xbf16>, vector<176x256xf32> -> vector<176x256xf32>
    %141 = arith.addf %134, %140 : vector<176x256xf32>
    %c0_117 = arith.constant 0 : index
    %c0_118 = arith.constant 0 : index
    %c113 = arith.constant 113 : index
    %c0_119 = arith.constant 0 : index
    %142 = vector.load %arg2[%c0_117, %c0_118, %c113, %c0_119] : memref<1x1x314x8xf32, #tpu.memory_space<vmem>>, vector<1x1x176x8xf32>
    %143 = vector.shape_cast %142 : vector<1x1x176x8xf32> to vector<176x8xf32>
    %144 = arith.truncf %143 : vector<176x8xf32> to vector<176x8xbf16>
    %c16 = arith.constant 16 : index
    %c0_120 = arith.constant 0 : index
    %c0_121 = arith.constant 0 : index
    %145 = vector.load %arg4[%c16, %c0_120, %c0_121] : memref<27x8x256xbf16, #tpu.memory_space<vmem>>, vector<1x8x256xbf16>
    %146 = vector.shape_cast %145 : vector<1x8x256xbf16> to vector<8x256xbf16>
    %cst_122 = arith.constant dense<0.000000e+00> : vector<176x256xf32>
    %147 = tpu.matmul %144, %146, %cst_122 {dimension_numbers = #tpu.dot_dimension_numbers<[1], [0], [0], [1], [0, 0, 1, 1], [], []>} : vector<176x8xbf16>, vector<8x256xbf16>, vector<176x256xf32> -> vector<176x256xf32>
    %148 = arith.addf %141, %147 : vector<176x256xf32>
    %c0_123 = arith.constant 0 : index
    %c0_124 = arith.constant 0 : index
    %c115 = arith.constant 115 : index
    %c0_125 = arith.constant 0 : index
    %149 = vector.load %arg2[%c0_123, %c0_124, %c115, %c0_125] : memref<1x1x314x8xf32, #tpu.memory_space<vmem>>, vector<1x1x176x8xf32>
    %150 = vector.shape_cast %149 : vector<1x1x176x8xf32> to vector<176x8xf32>
    %151 = arith.truncf %150 : vector<176x8xf32> to vector<176x8xbf16>
    %c17 = arith.constant 17 : index
    %c0_126 = arith.constant 0 : index
    %c0_127 = arith.constant 0 : index
    %152 = vector.load %arg4[%c17, %c0_126, %c0_127] : memref<27x8x256xbf16, #tpu.memory_space<vmem>>, vector<1x8x256xbf16>
    %153 = vector.shape_cast %152 : vector<1x8x256xbf16> to vector<8x256xbf16>
    %cst_128 = arith.constant dense<0.000000e+00> : vector<176x256xf32>
    %154 = tpu.matmul %151, %153, %cst_128 {dimension_numbers = #tpu.dot_dimension_numbers<[1], [0], [0], [1], [0, 0, 1, 1], [], []>} : vector<176x8xbf16>, vector<8x256xbf16>, vector<176x256xf32> -> vector<176x256xf32>
    %155 = arith.addf %148, %154 : vector<176x256xf32>
    %156 = vector.extract_strided_slice %0 {offsets = [2, 0], sizes = [1, 256], strides = [1, 1]} : vector<4x256xf32> to vector<1x256xf32>
    %157 = vector.broadcast %156 : vector<1x256xf32> to vector<176x256xf32>
    %158 = arith.mulf %155, %157 : vector<176x256xf32>
    %159 = vector.extract_strided_slice %1 {offsets = [2, 0], sizes = [1, 256], strides = [1, 1]} : vector<4x256xf32> to vector<1x256xf32>
    %160 = vector.broadcast %159 : vector<1x256xf32> to vector<176x256xf32>
    %161 = arith.addf %158, %160 : vector<176x256xf32>
    %cst_129 = arith.constant 0.000000e+00 : f32
    %162 = vector.broadcast %cst_129 : f32 to vector<176x256xf32>
    %163 = arith.maximumf %161, %162 : vector<176x256xf32>
    %164 = arith.truncf %163 : vector<176x256xf32> to vector<176x256xbf16>
    %c2_130 = arith.constant 2 : index
    %c0_131 = arith.constant 0 : index
    %c0_132 = arith.constant 0 : index
    %165 = vector.load %arg5[%c2_130, %c0_131, %c0_132] : memref<4x256x256xbf16, #tpu.memory_space<vmem>>, vector<1x256x256xbf16>
    %166 = vector.shape_cast %165 : vector<1x256x256xbf16> to vector<256x256xbf16>
    %cst_133 = arith.constant dense<0.000000e+00> : vector<176x256xf32>
    %167 = tpu.matmul %164, %166, %cst_133 {dimension_numbers = #tpu.dot_dimension_numbers<[1], [0], [0], [1], [0, 0, 1, 1], [], []>} : vector<176x256xbf16>, vector<256x256xbf16>, vector<176x256xf32> -> vector<176x256xf32>
    %168 = arith.addf %93, %167 : vector<176x256xf32>
    %c0_134 = arith.constant 0 : index
    %c0_135 = arith.constant 0 : index
    %c0_136 = arith.constant 0 : index
    %c0_137 = arith.constant 0 : index
    %169 = vector.load %arg2[%c0_134, %c0_135, %c0_136, %c0_137] : memref<1x1x314x8xf32, #tpu.memory_space<vmem>>, vector<1x1x176x8xf32>
    %170 = vector.shape_cast %169 : vector<1x1x176x8xf32> to vector<176x8xf32>
    %171 = arith.truncf %170 : vector<176x8xf32> to vector<176x8xbf16>
    %c18 = arith.constant 18 : index
    %c0_138 = arith.constant 0 : index
    %c0_139 = arith.constant 0 : index
    %172 = vector.load %arg4[%c18, %c0_138, %c0_139] : memref<27x8x256xbf16, #tpu.memory_space<vmem>>, vector<1x8x256xbf16>
    %173 = vector.shape_cast %172 : vector<1x8x256xbf16> to vector<8x256xbf16>
    %cst_140 = arith.constant dense<0.000000e+00> : vector<176x256xf32>
    %174 = tpu.matmul %171, %173, %cst_140 {dimension_numbers = #tpu.dot_dimension_numbers<[1], [0], [0], [1], [0, 0, 1, 1], [], []>} : vector<176x8xbf16>, vector<8x256xbf16>, vector<176x256xf32> -> vector<176x256xf32>
    %c0_141 = arith.constant 0 : index
    %c0_142 = arith.constant 0 : index
    %c3_143 = arith.constant 3 : index
    %c0_144 = arith.constant 0 : index
    %175 = vector.load %arg2[%c0_141, %c0_142, %c3_143, %c0_144] : memref<1x1x314x8xf32, #tpu.memory_space<vmem>>, vector<1x1x176x8xf32>
    %176 = vector.shape_cast %175 : vector<1x1x176x8xf32> to vector<176x8xf32>
    %177 = arith.truncf %176 : vector<176x8xf32> to vector<176x8xbf16>
    %c19 = arith.constant 19 : index
    %c0_145 = arith.constant 0 : index
    %c0_146 = arith.constant 0 : index
    %178 = vector.load %arg4[%c19, %c0_145, %c0_146] : memref<27x8x256xbf16, #tpu.memory_space<vmem>>, vector<1x8x256xbf16>
    %179 = vector.shape_cast %178 : vector<1x8x256xbf16> to vector<8x256xbf16>
    %cst_147 = arith.constant dense<0.000000e+00> : vector<176x256xf32>
    %180 = tpu.matmul %177, %179, %cst_147 {dimension_numbers = #tpu.dot_dimension_numbers<[1], [0], [0], [1], [0, 0, 1, 1], [], []>} : vector<176x8xbf16>, vector<8x256xbf16>, vector<176x256xf32> -> vector<176x256xf32>
    %181 = arith.addf %174, %180 : vector<176x256xf32>
    %c0_148 = arith.constant 0 : index
    %c0_149 = arith.constant 0 : index
    %c6_150 = arith.constant 6 : index
    %c0_151 = arith.constant 0 : index
    %182 = vector.load %arg2[%c0_148, %c0_149, %c6_150, %c0_151] : memref<1x1x314x8xf32, #tpu.memory_space<vmem>>, vector<1x1x176x8xf32>
    %183 = vector.shape_cast %182 : vector<1x1x176x8xf32> to vector<176x8xf32>
    %184 = arith.truncf %183 : vector<176x8xf32> to vector<176x8xbf16>
    %c20 = arith.constant 20 : index
    %c0_152 = arith.constant 0 : index
    %c0_153 = arith.constant 0 : index
    %185 = vector.load %arg4[%c20, %c0_152, %c0_153] : memref<27x8x256xbf16, #tpu.memory_space<vmem>>, vector<1x8x256xbf16>
    %186 = vector.shape_cast %185 : vector<1x8x256xbf16> to vector<8x256xbf16>
    %cst_154 = arith.constant dense<0.000000e+00> : vector<176x256xf32>
    %187 = tpu.matmul %184, %186, %cst_154 {dimension_numbers = #tpu.dot_dimension_numbers<[1], [0], [0], [1], [0, 0, 1, 1], [], []>} : vector<176x8xbf16>, vector<8x256xbf16>, vector<176x256xf32> -> vector<176x256xf32>
    %188 = arith.addf %181, %187 : vector<176x256xf32>
    %c0_155 = arith.constant 0 : index
    %c0_156 = arith.constant 0 : index
    %c66 = arith.constant 66 : index
    %c0_157 = arith.constant 0 : index
    %189 = vector.load %arg2[%c0_155, %c0_156, %c66, %c0_157] : memref<1x1x314x8xf32, #tpu.memory_space<vmem>>, vector<1x1x176x8xf32>
    %190 = vector.shape_cast %189 : vector<1x1x176x8xf32> to vector<176x8xf32>
    %191 = arith.truncf %190 : vector<176x8xf32> to vector<176x8xbf16>
    %c21 = arith.constant 21 : index
    %c0_158 = arith.constant 0 : index
    %c0_159 = arith.constant 0 : index
    %192 = vector.load %arg4[%c21, %c0_158, %c0_159] : memref<27x8x256xbf16, #tpu.memory_space<vmem>>, vector<1x8x256xbf16>
    %193 = vector.shape_cast %192 : vector<1x8x256xbf16> to vector<8x256xbf16>
    %cst_160 = arith.constant dense<0.000000e+00> : vector<176x256xf32>
    %194 = tpu.matmul %191, %193, %cst_160 {dimension_numbers = #tpu.dot_dimension_numbers<[1], [0], [0], [1], [0, 0, 1, 1], [], []>} : vector<176x8xbf16>, vector<8x256xbf16>, vector<176x256xf32> -> vector<176x256xf32>
    %195 = arith.addf %188, %194 : vector<176x256xf32>
    %c0_161 = arith.constant 0 : index
    %c0_162 = arith.constant 0 : index
    %c69_163 = arith.constant 69 : index
    %c0_164 = arith.constant 0 : index
    %196 = vector.load %arg2[%c0_161, %c0_162, %c69_163, %c0_164] : memref<1x1x314x8xf32, #tpu.memory_space<vmem>>, vector<1x1x176x8xf32>
    %197 = vector.shape_cast %196 : vector<1x1x176x8xf32> to vector<176x8xf32>
    %198 = arith.truncf %197 : vector<176x8xf32> to vector<176x8xbf16>
    %c22 = arith.constant 22 : index
    %c0_165 = arith.constant 0 : index
    %c0_166 = arith.constant 0 : index
    %199 = vector.load %arg4[%c22, %c0_165, %c0_166] : memref<27x8x256xbf16, #tpu.memory_space<vmem>>, vector<1x8x256xbf16>
    %200 = vector.shape_cast %199 : vector<1x8x256xbf16> to vector<8x256xbf16>
    %cst_167 = arith.constant dense<0.000000e+00> : vector<176x256xf32>
    %201 = tpu.matmul %198, %200, %cst_167 {dimension_numbers = #tpu.dot_dimension_numbers<[1], [0], [0], [1], [0, 0, 1, 1], [], []>} : vector<176x8xbf16>, vector<8x256xbf16>, vector<176x256xf32> -> vector<176x256xf32>
    %202 = arith.addf %195, %201 : vector<176x256xf32>
    %c0_168 = arith.constant 0 : index
    %c0_169 = arith.constant 0 : index
    %c72 = arith.constant 72 : index
    %c0_170 = arith.constant 0 : index
    %203 = vector.load %arg2[%c0_168, %c0_169, %c72, %c0_170] : memref<1x1x314x8xf32, #tpu.memory_space<vmem>>, vector<1x1x176x8xf32>
    %204 = vector.shape_cast %203 : vector<1x1x176x8xf32> to vector<176x8xf32>
    %205 = arith.truncf %204 : vector<176x8xf32> to vector<176x8xbf16>
    %c23_171 = arith.constant 23 : index
    %c0_172 = arith.constant 0 : index
    %c0_173 = arith.constant 0 : index
    %206 = vector.load %arg4[%c23_171, %c0_172, %c0_173] : memref<27x8x256xbf16, #tpu.memory_space<vmem>>, vector<1x8x256xbf16>
    %207 = vector.shape_cast %206 : vector<1x8x256xbf16> to vector<8x256xbf16>
    %cst_174 = arith.constant dense<0.000000e+00> : vector<176x256xf32>
    %208 = tpu.matmul %205, %207, %cst_174 {dimension_numbers = #tpu.dot_dimension_numbers<[1], [0], [0], [1], [0, 0, 1, 1], [], []>} : vector<176x8xbf16>, vector<8x256xbf16>, vector<176x256xf32> -> vector<176x256xf32>
    %209 = arith.addf %202, %208 : vector<176x256xf32>
    %c0_175 = arith.constant 0 : index
    %c0_176 = arith.constant 0 : index
    %c132 = arith.constant 132 : index
    %c0_177 = arith.constant 0 : index
    %210 = vector.load %arg2[%c0_175, %c0_176, %c132, %c0_177] : memref<1x1x314x8xf32, #tpu.memory_space<vmem>>, vector<1x1x176x8xf32>
    %211 = vector.shape_cast %210 : vector<1x1x176x8xf32> to vector<176x8xf32>
    %212 = arith.truncf %211 : vector<176x8xf32> to vector<176x8xbf16>
    %c24 = arith.constant 24 : index
    %c0_178 = arith.constant 0 : index
    %c0_179 = arith.constant 0 : index
    %213 = vector.load %arg4[%c24, %c0_178, %c0_179] : memref<27x8x256xbf16, #tpu.memory_space<vmem>>, vector<1x8x256xbf16>
    %214 = vector.shape_cast %213 : vector<1x8x256xbf16> to vector<8x256xbf16>
    %cst_180 = arith.constant dense<0.000000e+00> : vector<176x256xf32>
    %215 = tpu.matmul %212, %214, %cst_180 {dimension_numbers = #tpu.dot_dimension_numbers<[1], [0], [0], [1], [0, 0, 1, 1], [], []>} : vector<176x8xbf16>, vector<8x256xbf16>, vector<176x256xf32> -> vector<176x256xf32>
    %216 = arith.addf %209, %215 : vector<176x256xf32>
    %c0_181 = arith.constant 0 : index
    %c0_182 = arith.constant 0 : index
    %c135 = arith.constant 135 : index
    %c0_183 = arith.constant 0 : index
    %217 = vector.load %arg2[%c0_181, %c0_182, %c135, %c0_183] : memref<1x1x314x8xf32, #tpu.memory_space<vmem>>, vector<1x1x176x8xf32>
    %218 = vector.shape_cast %217 : vector<1x1x176x8xf32> to vector<176x8xf32>
    %219 = arith.truncf %218 : vector<176x8xf32> to vector<176x8xbf16>
    %c25_184 = arith.constant 25 : index
    %c0_185 = arith.constant 0 : index
    %c0_186 = arith.constant 0 : index
    %220 = vector.load %arg4[%c25_184, %c0_185, %c0_186] : memref<27x8x256xbf16, #tpu.memory_space<vmem>>, vector<1x8x256xbf16>
    %221 = vector.shape_cast %220 : vector<1x8x256xbf16> to vector<8x256xbf16>
    %cst_187 = arith.constant dense<0.000000e+00> : vector<176x256xf32>
    %222 = tpu.matmul %219, %221, %cst_187 {dimension_numbers = #tpu.dot_dimension_numbers<[1], [0], [0], [1], [0, 0, 1, 1], [], []>} : vector<176x8xbf16>, vector<8x256xbf16>, vector<176x256xf32> -> vector<176x256xf32>
    %223 = arith.addf %216, %222 : vector<176x256xf32>
    %c0_188 = arith.constant 0 : index
    %c0_189 = arith.constant 0 : index
    %c138 = arith.constant 138 : index
    %c0_190 = arith.constant 0 : index
    %224 = vector.load %arg2[%c0_188, %c0_189, %c138, %c0_190] : memref<1x1x314x8xf32, #tpu.memory_space<vmem>>, vector<1x1x176x8xf32>
    %225 = vector.shape_cast %224 : vector<1x1x176x8xf32> to vector<176x8xf32>
    %226 = arith.truncf %225 : vector<176x8xf32> to vector<176x8xbf16>
    %c26 = arith.constant 26 : index
    %c0_191 = arith.constant 0 : index
    %c0_192 = arith.constant 0 : index
    %227 = vector.load %arg4[%c26, %c0_191, %c0_192] : memref<27x8x256xbf16, #tpu.memory_space<vmem>>, vector<1x8x256xbf16>
    %228 = vector.shape_cast %227 : vector<1x8x256xbf16> to vector<8x256xbf16>
    %cst_193 = arith.constant dense<0.000000e+00> : vector<176x256xf32>
    %229 = tpu.matmul %226, %228, %cst_193 {dimension_numbers = #tpu.dot_dimension_numbers<[1], [0], [0], [1], [0, 0, 1, 1], [], []>} : vector<176x8xbf16>, vector<8x256xbf16>, vector<176x256xf32> -> vector<176x256xf32>
    %230 = arith.addf %223, %229 : vector<176x256xf32>
    %231 = vector.extract_strided_slice %0 {offsets = [3, 0], sizes = [1, 256], strides = [1, 1]} : vector<4x256xf32> to vector<1x256xf32>
    %232 = vector.broadcast %231 : vector<1x256xf32> to vector<176x256xf32>
    %233 = arith.mulf %230, %232 : vector<176x256xf32>
    %234 = vector.extract_strided_slice %1 {offsets = [3, 0], sizes = [1, 256], strides = [1, 1]} : vector<4x256xf32> to vector<1x256xf32>
    %235 = vector.broadcast %234 : vector<1x256xf32> to vector<176x256xf32>
    %236 = arith.addf %233, %235 : vector<176x256xf32>
    %cst_194 = arith.constant 0.000000e+00 : f32
    %237 = vector.broadcast %cst_194 : f32 to vector<176x256xf32>
    %238 = arith.maximumf %236, %237 : vector<176x256xf32>
    %239 = arith.truncf %238 : vector<176x256xf32> to vector<176x256xbf16>
    %c3_195 = arith.constant 3 : index
    %c0_196 = arith.constant 0 : index
    %c0_197 = arith.constant 0 : index
    %240 = vector.load %arg5[%c3_195, %c0_196, %c0_197] : memref<4x256x256xbf16, #tpu.memory_space<vmem>>, vector<1x256x256xbf16>
    %241 = vector.shape_cast %240 : vector<1x256x256xbf16> to vector<256x256xbf16>
    %cst_198 = arith.constant dense<0.000000e+00> : vector<176x256xf32>
    %242 = tpu.matmul %239, %241, %cst_198 {dimension_numbers = #tpu.dot_dimension_numbers<[1], [0], [0], [1], [0, 0, 1, 1], [], []>} : vector<176x256xbf16>, vector<256x256xbf16>, vector<176x256xf32> -> vector<176x256xf32>
    %243 = arith.addf %168, %242 : vector<176x256xf32>
    %c0_199 = arith.constant 0 : index
    %c0_200 = arith.constant 0 : index
    %244 = vector.load %arg8[%c0_199, %c0_200] : memref<1x256xf32, #tpu.memory_space<vmem>>, vector<1x256xf32>
    %245 = vector.broadcast %244 : vector<1x256xf32> to vector<176x256xf32>
    %246 = arith.mulf %243, %245 : vector<176x256xf32>
    %c0_201 = arith.constant 0 : index
    %c0_202 = arith.constant 0 : index
    %c0_203 = arith.constant 0 : index
    %247 = vector.load %arg9[%c0_201, %c0_202, %c0_203] : memref<1x1x256xf32, #tpu.memory_space<vmem>>, vector<1x1x256xf32>
    %248 = vector.shape_cast %247 : vector<1x1x256xf32> to vector<1x256xf32>
    %249 = vector.broadcast %248 : vector<1x256xf32> to vector<176x256xf32>
    %250 = arith.addf %246, %249 : vector<176x256xf32>
    %cst_204 = arith.constant 0.000000e+00 : f32
    %251 = vector.broadcast %cst_204 : f32 to vector<176x256xf32>
    %252 = arith.maximumf %250, %251 : vector<176x256xf32>
    %c0_205 = arith.constant 0 : index
    %c0_206 = arith.constant 0 : index
    %c0_207 = arith.constant 0 : index
    %c0_208 = arith.constant 0 : index
    %253 = vector.load %arg10[%c0_205, %c0_206, %c0_207, %c0_208] : memref<1x1x176x256xf32, #tpu.memory_space<vmem>>, vector<1x1x176x256xf32>
    %254 = vector.shape_cast %253 : vector<1x1x176x256xf32> to vector<176x256xf32>
    %255 = vector.shape_cast %252 : vector<176x256xf32> to vector<1x1x176x256xf32>
    tpu.vector_store %arg10[%c0_205, %c0_206, %c0_207, %c0_208], %255 {strides = array<i32>} : memref<1x1x176x256xf32, #tpu.memory_space<vmem>>, vector<1x1x176x256xf32>,
    return
  }
  func.func @transform_0(%arg0: i32, %arg1: i32) -> (i32, i32, i32, i32) {
    %c0_i32 = arith.constant 0 : i32
    %c0_i32_0 = arith.constant 0 : i32
    %c0_i32_1 = arith.constant 0 : i32
    return %arg0, %arg1, %c0_i32, %c0_i32_0 : i32, i32, i32, i32
  }
  func.func @transform_1(%arg0: i32, %arg1: i32) -> (i32, i32) {
    %c0_i32 = arith.constant 0 : i32
    %c0_i32_0 = arith.constant 0 : i32
    %c0_i32_1 = arith.constant 0 : i32
    return %c0_i32, %c0_i32_0 : i32, i32
  }
  func.func @transform_2(%arg0: i32, %arg1: i32) -> (i32, i32, i32) {
    %c0_i32 = arith.constant 0 : i32
    %c0_i32_0 = arith.constant 0 : i32
    %c0_i32_1 = arith.constant 0 : i32
    %c0_i32_2 = arith.constant 0 : i32
    return %c0_i32, %c0_i32_0, %c0_i32_1 : i32, i32, i32
  }
  func.func @transform_3(%arg0: i32, %arg1: i32) -> (i32, i32, i32) {
    %c0_i32 = arith.constant 0 : i32
    %c0_i32_0 = arith.constant 0 : i32
    %c0_i32_1 = arith.constant 0 : i32
    %c0_i32_2 = arith.constant 0 : i32
    return %c0_i32, %c0_i32_0, %c0_i32_1 : i32, i32, i32
  }
  func.func @transform_4(%arg0: i32, %arg1: i32) -> (i32, i32) {
    %c0_i32 = arith.constant 0 : i32
    %c0_i32_0 = arith.constant 0 : i32
    %c0_i32_1 = arith.constant 0 : i32
    return %c0_i32, %c0_i32_0 : i32, i32
  }
  func.func @transform_5(%arg0: i32, %arg1: i32) -> (i32, i32) {
    %c0_i32 = arith.constant 0 : i32
    %c0_i32_0 = arith.constant 0 : i32
    %c0_i32_1 = arith.constant 0 : i32
    return %c0_i32, %c0_i32_0 : i32, i32
  }
  func.func @transform_6(%arg0: i32, %arg1: i32) -> (i32, i32) {
    %c0_i32 = arith.constant 0 : i32
    %c0_i32_0 = arith.constant 0 : i32
    %c0_i32_1 = arith.constant 0 : i32
    return %c0_i32, %c0_i32_0 : i32, i32
  }
  func.func @transform_7(%arg0: i32, %arg1: i32) -> (i32, i32, i32) {
    %c0_i32 = arith.constant 0 : i32
    %c0_i32_0 = arith.constant 0 : i32
    %c0_i32_1 = arith.constant 0 : i32
    return %arg0, %c0_i32, %c0_i32_0 : i32, i32, i32
  }
  func.func @transform_8(%arg0: i32, %arg1: i32) -> (i32, i32, i32, i32) {
    %c0_i32 = arith.constant 0 : i32
    %c0_i32_0 = arith.constant 0 : i32
    %c0_i32_1 = arith.constant 0 : i32
    return %arg0, %arg1, %c0_i32, %c0_i32_0 : i32, i32, i32, i32
  }
}

</mosaic_0001>

<llo_original>
// kernel: tpu_custom_call.1
$region0: #{tpu_custom_call.1}
  #allocation0 [shape = 'u32[]', space=smem, size = 0x4, offset = 0x4, fixed_abs, tag = 'smem constant byte address 0x4 - core index']
  #allocation1 [shape = 'u32[144,128]{1,0:T(1,128)}', space=vmem, size = 0x12000, scoped, tag = 'internal scratch']
  %s0 = inlined_call_operand.vmem [shape: f32[2,2,314,8], index: 0, kind: input, shape index: {}]
  %s1 = inlined_call_operand.vmem [shape: bf16[8,256], index: 1, kind: input, shape index: {}]
  %s2 = inlined_call_operand.vmem [shape: bf16[27,8,256], index: 2, kind: input, shape index: {}]
  %s3 = inlined_call_operand.vmem [shape: bf16[4,256,256], index: 3, kind: input, shape index: {}]
  %s4 = inlined_call_operand.vmem [shape: f32[4,256], index: 4, kind: input, shape index: {}]
  %s5 = inlined_call_operand.vmem [shape: f32[4,256], index: 5, kind: input, shape index: {}]
  %s6 = inlined_call_operand.vmem [shape: f32[1,256], index: 6, kind: input, shape index: {}]
  %s7 = inlined_call_operand.vmem [shape: f32[2,1,256], index: 7, kind: input, shape index: {}]
  %s8 = inlined_call_operand.hbm [shape: f32[2,2,176,256], index: 8, kind: output, shape index: {}]
  %s9 = sld [smem:[#allocation0]]
  $region65: #{tpu_custom_call.1} parent=0
    _
  %s11 = ssub.s32 1, %s9
  %s12 = scalar_select 0, %s11, %s9
  $region1: #{tpu_custom_call.1} parent=0
    #allocation2 [shape = 'u8[360448]{0}', space=vmem, size = 0x58000, scoped, tag = 'output window, operand 0']
    #allocation3 [shape = 's32[2]{0}', space=sflag, size = 0x8, scoped, tag = 'scoped memory for tpu_custom_call.1']
    %13 = vsyncpa [#allocation3], 0
    %s14 = scalar_lea.sflag [#allocation3], 1
    %15 = vsyncpa %s14, 0
    loop: start=0, step=1, limit=6
    $region2: #{tpu_custom_call.1} parent=1 // loop_pre_header
      _
    $region3: #{tpu_custom_call.1} parent=1 // loop_header
      %s17 = sphi 0, %s21
      %p18 = scmp.ge.s32.totalorder %s17, 6
      %s24 = sphi 0, %s36
      %s25 = sphi 0, %s32
      %s26 = sphi 0, %s24
      %s27 = sphi 0, %s25
      %s28 = sphi 0, %s26
      %s29 = sphi 0, %s27
      %s41 = sphi 0, %s43
      %s44 = sphi 0, %s41
      %s45 = sphi 0, %s44
      %s61 = sphi 0, %s45
      %s65 = sphi 0, %s65
      %s67 = sphi 0, %s65
      %s68 = sphi 0, %s67
      %s82 = sphi 0, %s68
      %s86 = sphi 0, %s86
      %s88 = sphi 0, %s86
      %s89 = sphi 0, %s88
      %s103 = sphi 0, %s89
      %s107 = sphi 0, %s107
      %s109 = sphi 0, %s107
      %s110 = sphi 0, %s109
      %s124 = sphi 0, %s110
      %s128 = sphi 0, %s128
      %s130 = sphi 0, %s128
      %s131 = sphi 0, %s130
      %s145 = sphi 0, %s131
      %s149 = sphi 0, %s149
      %s151 = sphi 0, %s149
      %s152 = sphi 0, %s151
      %s166 = sphi 0, %s152
      %s170 = sphi 0, %s170
      %s172 = sphi 0, %s170
      %s173 = sphi 0, %s172
      %s187 = sphi 0, %s173
      %s193 = sphi 0, %s195
      %s196 = sphi 0, %s193
      %s197 = sphi 0, %s196
      %s213 = sphi 0, %s197
      %s221 = sphi 0, %s223
      %s224 = sphi 0, %s221
      %s225 = sphi 0, %s224
      %s241 = sphi 0, %s225
    $region4: #{tpu_custom_call.1} parent=1 // loop_header_branch
      %20 = sbr.rel (%p18) target = $region8
    $region5: #{tpu_custom_call.1} parent=1 // loop_body
      %s22 = ssub.s32 %s17, 1
      %s23 = ssub.s32 %s17, 2
      %s30 = sadd.s32 1, %s25
      %p31 = scmp.ge.s32.totalorder %s30, 2
      %s32 = scalar_select %p31, 0, %s30
      %s33 = sadd.s32 1, %s24
      %s34 = scalar_select %p31, %s33, %s24
      %p35 = scmp.ge.s32.totalorder %s34, 2
      %s36 = scalar_select %p35, 0, %s34
      %s37 = ssub.s32 %s24, %s36
      %s38 = ssub.s32 %s25, %s32
      %s39 = sor.u32 %s37, %s38
      %p40 = scmp.eq.s32.totalorder %s39, 0
      %s42 = sadd.s32 %s41, 1
      %s43 = scalar_select %p40, %s41, %s42
      %p46 = pneg %p40
      %p47 = scmp.eq.s32.totalorder %s17, 3
      %p48 = por %p46, %p47
      %p49 = scmp.ne.s32.totalorder %s41, %s44
      %p50 = scmp.eq.s32.totalorder %s17, 0
      %p51 = por %p49, %p50
      %p52 = scmp.ne.s32.totalorder %s41, %s44
      %p53 = scmp.eq.s32.totalorder %s22, 3
      %p54 = por %p52, %p53
      %p55 = scmp.ne.s32.totalorder %s44, %s45
      %p56 = scmp.eq.s32.totalorder %s22, 0
      %p57 = por %p55, %p56
      %p58 = scmp.ne.s32.totalorder %s44, %s45
      %p59 = scmp.eq.s32.totalorder %s23, 3
      %p60 = por %p58, %p59
      %p62 = scmp.ne.s32.totalorder %s45, %s61
      %p63 = scmp.eq.s32.totalorder %s23, 0
      %p64 = por %p62, %p63
      %s66 = sadd.s32 %s65, 1
      %p69 = scmp.eq.s32.totalorder %s17, 3
      %p70 = scmp.ne.s32.totalorder %s65, %s67
      %p71 = scmp.eq.s32.totalorder %s17, 0
      %p72 = por %p70, %p71
      %p73 = scmp.ne.s32.totalorder %s65, %s67
      %p74 = scmp.eq.s32.totalorder %s22, 3
      %p75 = por %p73, %p74
      %p76 = scmp.ne.s32.totalorder %s67, %s68
      %p77 = scmp.eq.s32.totalorder %s22, 0
      %p78 = por %p76, %p77
      %p79 = scmp.ne.s32.totalorder %s67, %s68
      %p80 = scmp.eq.s32.totalorder %s23, 3
      %p81 = por %p79, %p80
      %p83 = scmp.ne.s32.totalorder %s68, %s82
      %p84 = scmp.eq.s32.totalorder %s23, 0
      %p85 = por %p83, %p84
      %s87 = sadd.s32 %s86, 1
      %p90 = scmp.eq.s32.totalorder %s17, 3
      %p91 = scmp.ne.s32.totalorder %s86, %s88
      %p92 = scmp.eq.s32.totalorder %s17, 0
      %p93 = por %p91, %p92
      %p94 = scmp.ne.s32.totalorder %s86, %s88
      %p95 = scmp.eq.s32.totalorder %s22, 3
      %p96 = por %p94, %p95
      %p97 = scmp.ne.s32.totalorder %s88, %s89
      %p98 = scmp.eq.s32.totalorder %s22, 0
      %p99 = por %p97, %p98
      %p100 = scmp.ne.s32.totalorder %s88, %s89
      %p101 = scmp.eq.s32.totalorder %s23, 3
      %p102 = por %p100, %p101
      %p104 = scmp.ne.s32.totalorder %s89, %s103
      %p105 = scmp.eq.s32.totalorder %s23, 0
      %p106 = por %p104, %p105
      %s108 = sadd.s32 %s107, 1
      %p111 = scmp.eq.s32.totalorder %s17, 3
      %p112 = scmp.ne.s32.totalorder %s107, %s109
      %p113 = scmp.eq.s32.totalorder %s17, 0
      %p114 = por %p112, %p113
      %p115 = scmp.ne.s32.totalorder %s107, %s109
      %p116 = scmp.eq.s32.totalorder %s22, 3
      %p117 = por %p115, %p116
      %p118 = scmp.ne.s32.totalorder %s109, %s110
      %p119 = scmp.eq.s32.totalorder %s22, 0
      %p120 = por %p118, %p119
      %p121 = scmp.ne.s32.totalorder %s109, %s110
      %p122 = scmp.eq.s32.totalorder %s23, 3
      %p123 = por %p121, %p122
      %p125 = scmp.ne.s32.totalorder %s110, %s124
      %p126 = scmp.eq.s32.totalorder %s23, 0
      %p127 = por %p125, %p126
      %s129 = sadd.s32 %s128, 1
      %p132 = scmp.eq.s32.totalorder %s17, 3
      %p133 = scmp.ne.s32.totalorder %s128, %s130
      %p134 = scmp.eq.s32.totalorder %s17, 0
      %p135 = por %p133, %p134
      %p136 = scmp.ne.s32.totalorder %s128, %s130
      %p137 = scmp.eq.s32.totalorder %s22, 3
      %p138 = por %p136, %p137
      %p139 = scmp.ne.s32.totalorder %s130, %s131
      %p140 = scmp.eq.s32.totalorder %s22, 0
      %p141 = por %p139, %p140
      %p142 = scmp.ne.s32.totalorder %s130, %s131
      %p143 = scmp.eq.s32.totalorder %s23, 3
      %p144 = por %p142, %p143
      %p146 = scmp.ne.s32.totalorder %s131, %s145
      %p147 = scmp.eq.s32.totalorder %s23, 0
      %p148 = por %p146, %p147
      %s150 = sadd.s32 %s149, 1
      %p153 = scmp.eq.s32.totalorder %s17, 3
      %p154 = scmp.ne.s32.totalorder %s149, %s151
      %p155 = scmp.eq.s32.totalorder %s17, 0
      %p156 = por %p154, %p155
      %p157 = scmp.ne.s32.totalorder %s149, %s151
      %p158 = scmp.eq.s32.totalorder %s22, 3
      %p159 = por %p157, %p158
      %p160 = scmp.ne.s32.totalorder %s151, %s152
      %p161 = scmp.eq.s32.totalorder %s22, 0
      %p162 = por %p160, %p161
      %p163 = scmp.ne.s32.totalorder %s151, %s152
      %p164 = scmp.eq.s32.totalorder %s23, 3
      %p165 = por %p163, %p164
      %p167 = scmp.ne.s32.totalorder %s152, %s166
      %p168 = scmp.eq.s32.totalorder %s23, 0
      %p169 = por %p167, %p168
      %s171 = sadd.s32 %s170, 1
      %p174 = scmp.eq.s32.totalorder %s17, 3
      %p175 = scmp.ne.s32.totalorder %s170, %s172
      %p176 = scmp.eq.s32.totalorder %s17, 0
      %p177 = por %p175, %p176
      %p178 = scmp.ne.s32.totalorder %s170, %s172
      %p179 = scmp.eq.s32.totalorder %s22, 3
      %p180 = por %p178, %p179
      %p181 = scmp.ne.s32.totalorder %s172, %s173
      %p182 = scmp.eq.s32.totalorder %s22, 0
      %p183 = por %p181, %p182
      %p184 = scmp.ne.s32.totalorder %s172, %s173
      %p185 = scmp.eq.s32.totalorder %s23, 3
      %p186 = por %p184, %p185
      %p188 = scmp.ne.s32.totalorder %s173, %s187
      %p189 = scmp.eq.s32.totalorder %s23, 0
      %p190 = por %p188, %p189
      %s191 = ssub.s32 %s24, %s36
      %p192 = scmp.eq.s32.totalorder %s191, 0
      %s194 = sadd.s32 %s193, 1
      %s195 = scalar_select %p192, %s193, %s194
      %p198 = pneg %p192
      %p199 = scmp.eq.s32.totalorder %s17, 3
      %p200 = por %p198, %p199
      %p201 = scmp.ne.s32.totalorder %s193, %s196
      %p202 = scmp.eq.s32.totalorder %s17, 0
      %p203 = por %p201, %p202
      %p204 = scmp.ne.s32.totalorder %s193, %s196
      %p205 = scmp.eq.s32.totalorder %s22, 3
      %p206 = por %p204, %p205
      %p207 = scmp.ne.s32.totalorder %s196, %s197
      %p208 = scmp.eq.s32.totalorder %s22, 0
      %p209 = por %p207, %p208
      %p210 = scmp.ne.s32.totalorder %s196, %s197
      %p211 = scmp.eq.s32.totalorder %s23, 3
      %p212 = por %p210, %p211
      %p214 = scmp.ne.s32.totalorder %s197, %s213
      %p215 = scmp.eq.s32.totalorder %s23, 0
      %p216 = por %p214, %p215
      %s217 = ssub.s32 %s24, %s36
      %s218 = ssub.s32 %s25, %s32
      %s219 = sor.u32 %s217, %s218
      %p220 = scmp.eq.s32.totalorder %s219, 0
      %s222 = sadd.s32 %s221, 1
      %s223 = scalar_select %p220, %s221, %s222
      %p226 = pneg %p220
      %p227 = scmp.eq.s32.totalorder %s17, 3
      %p228 = por %p226, %p227
      %p229 = scmp.ne.s32.totalorder %s221, %s224
      %p230 = scmp.eq.s32.totalorder %s17, 0
      %p231 = por %p229, %p230
      %p232 = scmp.ne.s32.totalorder %s221, %s224
      %p233 = scmp.eq.s32.totalorder %s22, 3
      %p234 = por %p232, %p233
      %p235 = scmp.ne.s32.totalorder %s224, %s225
      %p236 = scmp.eq.s32.totalorder %s22, 0
      %p237 = por %p235, %p236
      %p238 = scmp.ne.s32.totalorder %s224, %s225
      %p239 = scmp.eq.s32.totalorder %s23, 3
      %p240 = por %p238, %p239
      %p242 = scmp.ne.s32.totalorder %s225, %s241
      %p243 = scmp.eq.s32.totalorder %s23, 0
      %p244 = por %p242, %p243
      %p245 = scmp.le.s32.totalorder 1, %s17
      %p246 = scmp.lt.s32.totalorder %s17, 5
      %p247 = pnand %p245, %p246
      %p248 = pneg %p247
      // Predicated region
      $region9: #{tpu_custom_call.1} parent=5 // pred_check
        _
      $region10: #{tpu_custom_call.1} parent=5 // pred_check_branch
        %250 = sbr.rel (%p247) target = $region12
      $region11: #{tpu_custom_call.1} parent=5 // pred_region
        %s251 = ssub.s32 %s17, 1
        // Predicated region
        $region13: #{tpu_custom_call.1} parent=11 // pred_check
          %p252 = pneg %p78
        $region14: #{tpu_custom_call.1} parent=11 // pred_check_branch
          %254 = sbr.rel (%p252) target = $region16
        $region15: #{tpu_custom_call.1} parent=11 // pred_region
          _
        $region16: #{tpu_custom_call.1} parent=11 // pred_fallthru
          _
        // Predicated region
        $region17: #{tpu_custom_call.1} parent=11 // pred_check
          %p255 = pneg %p99
        $region18: #{tpu_custom_call.1} parent=11 // pred_check_branch
          %257 = sbr.rel (%p255) target = $region20
        $region19: #{tpu_custom_call.1} parent=11 // pred_region
          _
        $region20: #{tpu_custom_call.1} parent=11 // pred_fallthru
          _
        // Predicated region
        $region21: #{tpu_custom_call.1} parent=11 // pred_check
          %p258 = pneg %p120
        $region22: #{tpu_custom_call.1} parent=11 // pred_check_branch
          %260 = sbr.rel (%p258) target = $region24
        $region23: #{tpu_custom_call.1} parent=11 // pred_region
          _
        $region24: #{tpu_custom_call.1} parent=11 // pred_fallthru
          _
        // Predicated region
        $region25: #{tpu_custom_call.1} parent=11 // pred_check
          %p261 = pneg %p141
        $region26: #{tpu_custom_call.1} parent=11 // pred_check_branch
          %263 = sbr.rel (%p261) target = $region28
        $region27: #{tpu_custom_call.1} parent=11 // pred_region
          _
        $region28: #{tpu_custom_call.1} parent=11 // pred_fallthru
          _
        // Predicated region
        $region29: #{tpu_custom_call.1} parent=11 // pred_check
          %p264 = pneg %p162
        $region30: #{tpu_custom_call.1} parent=11 // pred_check_branch
          %266 = sbr.rel (%p264) target = $region32
        $region31: #{tpu_custom_call.1} parent=11 // pred_region
          _
        $region32: #{tpu_custom_call.1} parent=11 // pred_fallthru
          _
        // Predicated region
        $region33: #{tpu_custom_call.1} parent=11 // pred_check
          %p267 = pneg %p183
        $region34: #{tpu_custom_call.1} parent=11 // pred_check_branch
          %269 = sbr.rel (%p267) target = $region36
        $region35: #{tpu_custom_call.1} parent=11 // pred_region
          _
        $region36: #{tpu_custom_call.1} parent=11 // pred_fallthru
          _
      $region12: #{tpu_custom_call.1} parent=5 // pred_fallthru
        _
      %p270 = scmp.lt.s32.totalorder %s17, 4
      // Predicated region
      $region37: #{tpu_custom_call.1} parent=5 // pred_check
        %p271 = pneg %p270
      $region38: #{tpu_custom_call.1} parent=5 // pred_check_branch
        %273 = sbr.rel (%p271) target = $region40
      $region39: #{tpu_custom_call.1} parent=5 // pred_region
        // Predicated region
        $region41: #{tpu_custom_call.1} parent=39 // pred_check
          %p274 = pneg %p51
        $region42: #{tpu_custom_call.1} parent=39 // pred_check_branch
          %276 = sbr.rel (%p274) target = $region44
        $region43: #{tpu_custom_call.1} parent=39 // pred_region
          %p277 = scmp.lt.s32.totalorder %s24, 1
          %s278 = scalar_select %p277, %s24, 1
          %p279 = scmp.lt.s32.totalorder %s25, 1
          %s280 = scalar_select %p279, %s25, 1
          %s281 = smul.addr %s280, 40
          %s282 = smul.addr %s278, 80
          %s283 = sadd.s32 %s281, %s282
          %s284 = smul.addr %s283, 8
          %s285 = scalar_lea.vmem %s0, %s284
        $region44: #{tpu_custom_call.1} parent=39 // pred_fallthru
          _
        // Predicated region
        $region45: #{tpu_custom_call.1} parent=39 // pred_check
          %p286 = pneg %p203
        $region46: #{tpu_custom_call.1} parent=39 // pred_check_branch
          %288 = sbr.rel (%p286) target = $region48
        $region47: #{tpu_custom_call.1} parent=39 // pred_region
          %p289 = scmp.lt.s32.totalorder %s24, 1
          %s290 = scalar_select %p289, %s24, 1
          %s291 = smul.addr %s290, 2
          %s292 = scalar_lea.vmem %s7, %s291
        $region48: #{tpu_custom_call.1} parent=39 // pred_fallthru
          _
      $region40: #{tpu_custom_call.1} parent=5 // pred_fallthru
        _
      %p293 = scmp.le.s32.totalorder 1, %s17
      %p294 = scmp.lt.s32.totalorder %s17, 5
      %p295 = pnand %p293, %p294
      %p296 = pneg %p295
      // Predicated region
      $region49: #{tpu_custom_call.1} parent=5 // pred_check
        _
      $region50: #{tpu_custom_call.1} parent=5 // pred_check_branch
        %298 = sbr.rel (%p295) target = $region52
      $region51: #{tpu_custom_call.1} parent=5 // pred_region
        %s299 = ssub.s32 %s17, 1
        %p300 = scmp.lt.s32.totalorder %s26, 1
        %s301 = scalar_select %p300, %s26, 1
        %p302 = scmp.lt.s32.totalorder %s27, 1
        %s303 = scalar_select %p302, %s27, 1
        %s304 = smul.addr %s303, 40
        %s305 = smul.addr %s301, 80
        %s306 = sadd.s32 %s304, %s305
        %s307 = smul.addr %s306, 8
        %s308 = scalar_lea.vmem %s0, %s307
        %p309 = pneg %p57
        %p310 = pneg %p54
        %p311 = pneg %p78
        %p312 = pneg %p75
        %p313 = pneg %p99
        %p314 = pneg %p96
        %p315 = pneg %p120
        %p316 = pneg %p117
        %p317 = pneg %p141
        %p318 = pneg %p138
        %p319 = pneg %p162
        %p320 = pneg %p159
        %p321 = pneg %p183
        %p322 = pneg %p180
        %p323 = scmp.lt.s32.totalorder %s26, 1
        %s324 = scalar_select %p323, %s26, 1
        %s325 = smul.addr %s324, 2
        %s326 = scalar_lea.vmem %s7, %s325
        %p327 = pneg %p209
        %p328 = pneg %p206
        %p329 = pneg %p237
        %p330 = pneg %p234
        %s331 = sand.u32 %s224, 1
        %s332 = scalar_lea.sflag [#allocation3], %s331
        %s333 = sand.u32 %s224, 1
        %s334 = smul.addr %s333, 352
        %s335 = scalar_lea.vmem [#allocation2], %s334
        %p336 = scmp.lt.s32.totalorder %s26, 1
        %s337 = scalar_select %p336, %s26, 1
        %p338 = scmp.lt.s32.totalorder %s27, 1
        %s339 = scalar_select %p338, %s27, 1
        %s340 = smul.addr %s339, 40
        %s341 = smul.addr %s337, 80
        %s342 = sadd.s32 %s340, %s341
        %s343 = smul.addr %s342, 8
        %s344 = scalar_lea.vmem %s0, %s343
        %p345 = scmp.lt.s32.totalorder %s26, 1
        %s346 = scalar_select %p345, %s26, 1
        %s347 = smul.addr %s346, 2
        %s348 = scalar_lea.vmem %s7, %s347
        %v350 = vld [vmem:[%s4] sm:$0xff]
        %v351 = vld [vmem:[%s5] sm:$0xff]
        %v352 = vld [vmem:[%s344 + $0x45] sm:$0xff]
        %v353 = vld [vmem:[%s344 + $0x4d] sm:$0xff]
        %v354 = vld [vmem:[%s344 + $0x55] sm:$0xff]
        %v355 = vld [vmem:[%s344 + $0x5d] sm:$0xff]
        %v356 = vld [vmem:[%s344 + $0x65] sm:$0xff]
        %v357 = vld [vmem:[%s344 + $0x6d] sm:$0xff]
        %v358 = vld [vmem:[%s344 + $0x75] sm:$0xff]
        %v359 = vld [vmem:[%s344 + $0x7d] sm:$0xff]
        %v360 = vld [vmem:[%s344 + $0x85] sm:$0xff]
        %v361 = vld [vmem:[%s344 + $0x8d] sm:$0xff]
        %v362 = vld [vmem:[%s344 + $0x95] sm:$0xff]
        %v363 = vld [vmem:[%s344 + $0x9d] sm:$0xff]
        %v364 = vld [vmem:[%s344 + $0xa5] sm:$0xff]
        %v365 = vld [vmem:[%s344 + $0xad] sm:$0xff]
        %v366 = vld [vmem:[%s344 + $0xb5] sm:$0xff]
        %v367 = vld [vmem:[%s344 + $0xbd] sm:$0xff]
        %v368 = vld [vmem:[%s344 + $0xc5] sm:$0xff]
        %v369 = vld [vmem:[%s344 + $0xcd] sm:$0xff]
        %v370 = vld [vmem:[%s344 + $0xd5] sm:$0xff]
        %v371 = vld [vmem:[%s344 + $0xdd] sm:$0xff]
        %v372 = vld [vmem:[%s344 + $0xe5] sm:$0xff]
        %v373 = vld [vmem:[%s344 + $0xed] sm:$0xff]
        %v374 = vpack.c.bf16 %v353, %v352
        %v375 = vpack.c.bf16 %v355, %v354
        %v376 = vpack.c.bf16 %v357, %v356
        %v377 = vpack.c.bf16 %v359, %v358
        %v378 = vpack.c.bf16 %v361, %v360
        %v379 = vpack.c.bf16 %v363, %v362
        %v380 = vpack.c.bf16 %v365, %v364
        %v381 = vpack.c.bf16 %v367, %v366
        %v382 = vpack.c.bf16 %v369, %v368
        %v383 = vpack.c.bf16 %v371, %v370
        %v384 = vpack.c.bf16 %v373, %v372
        %v385 = vld [vmem:[%s1] sm:$0xff]
        %v387 = vunpack.c.l.b16 %v385
        %v388 = vunpack.c.h.b16 %v385
        %v389 = vpack.c.b16 %v387, %v387
        %v390 = vpack.c.b16 %v388, %v388
        %vm391 = vcmask 64512
        %v393 = vsel %vm391, %v374, 0
        %v396 = vsel %vm391, %v375, 0
        %v399 = vsel %vm391, %v376, 0
        %v402 = vsel %vm391, %v377, 0
        %v405 = vsel %vm391, %v378, 0
        %v408 = vsel %vm391, %v379, 0
        %v411 = vsel %vm391, %v380, 0
        %v414 = vsel %vm391, %v381, 0
        %v417 = vsel %vm391, %v382, 0
        %v420 = vsel %vm391, %v383, 0
        %v423 = vsel %vm391, %v384, 0
        %vm425 = vcmask 1043456
        %v427 = vsel %vm425, %v389, 0
        %v430 = vsel %vm425, %v390, 0
        %432 = vmatprep.subr.bf16.mxu0 0
        %433 = vmatpush1.bf16.msra.mxu0 0
        %434 = vmatprep.subr.bf16.mxu0 0
        %435 = vmatpush1.bf16.msra.mxu0 0
        %436 = vmatprep.subr.bf16.mxu0 0
        %437 = vmatpush1.bf16.msra.mxu0 0
        %438 = vmatprep.subr.bf16.mxu0 0
        %439 = vmatpush1.bf16.msra.mxu0 0
        %440 = vmatprep.subr.bf16.mxu0 0
        %441 = vmatpush1.bf16.msra.mxu0 0
        %442 = vmatprep.subr.bf16.mxu0 0
        %443 = vmatpush1.bf16.msra.mxu0 0
        %444 = vmatprep.subr.bf16.mxu0 0
        %445 = vmatpush1.bf16.msra.mxu0 0
        %446 = vmatprep.subr.bf16.mxu0 %v430
        %447 = vmatpush1.bf16.msra.mxu0 %v427
        %448 = vmatprep.subr.bf16.mxu0 0
        %449 = vmatpush2.bf16.msra.mxu0 0
        %450 = vmatprep.subr.bf16.mxu0 0
        %451 = vmatpush2.bf16.msra.mxu0 0
        %452 = vmatprep.subr.bf16.mxu0 0
        %453 = vmatpush2.bf16.msra.mxu0 0
        %454 = vmatprep.subr.bf16.mxu0 0
        %455 = vmatpush2.bf16.msra.mxu0 0
        %456 = vmatprep.subr.bf16.mxu0 0
        %457 = vmatpush2.bf16.msra.mxu0 0
        %458 = vmatprep.subr.bf16.mxu0 0
        %459 = vmatpush2.bf16.msra.mxu0 0
        %460 = vmatprep.subr.bf16.mxu0 0
        %461 = vmatpush2.bf16.msra.mxu0 0
        %462 = vmatprep.subr.bf16.mxu0 0
        %463 = vmatpush2.bf16.msra.mxu0 0
        %464 = vmatprep.mubr.bf16.mxu0 0
        %465 = vmatmul.mubr.bf16.gmra.mxu0 %v393
        %v466 = vpop.f32.mrf.mxu0
        %v467 = vadd.f32 0.0, %v466
        %v468 = vpop.f32.mrf.mxu0
        %v469 = vadd.f32 0.0, %v468
        %v470 = vpop.f32.mrf.mxu0
        %v471 = vadd.f32 0.0, %v470
        %v472 = vpop.f32.mrf.mxu0
        %v473 = vadd.f32 0.0, %v472
        %474 = vmatprep.mubr.bf16.mxu0 0
        %475 = vmatmul.mubr.bf16.gmra.mxu0 %v396
        %v476 = vpop.f32.mrf.mxu0
        %v477 = vadd.f32 0.0, %v476
        %v478 = vpop.f32.mrf.mxu0
        %v479 = vadd.f32 0.0, %v478
        %v480 = vpop.f32.mrf.mxu0
        %v481 = vadd.f32 0.0, %v480
        %v482 = vpop.f32.mrf.mxu0
        %v483 = vadd.f32 0.0, %v482
        %484 = vmatprep.mubr.bf16.mxu0 0
        %485 = vmatmul.mubr.bf16.gmra.mxu0 %v399
        %v486 = vpop.f32.mrf.mxu0
        %v487 = vadd.f32 0.0, %v486
        %v488 = vpop.f32.mrf.mxu0
        %v489 = vadd.f32 0.0, %v488
        %v490 = vpop.f32.mrf.mxu0
        %v491 = vadd.f32 0.0, %v490
        %v492 = vpop.f32.mrf.mxu0
        %v493 = vadd.f32 0.0, %v492
        %494 = vmatprep.mubr.bf16.mxu0 0
        %495 = vmatmul.mubr.bf16.gmra.mxu0 %v402
        %v496 = vpop.f32.mrf.mxu0
        %v497 = vadd.f32 0.0, %v496
        %v498 = vpop.f32.mrf.mxu0
        %v499 = vadd.f32 0.0, %v498
        %v500 = vpop.f32.mrf.mxu0
        %v501 = vadd.f32 0.0, %v500
        %v502 = vpop.f32.mrf.mxu0
        %v503 = vadd.f32 0.0, %v502
        %504 = vmatprep.mubr.bf16.mxu0 0
        %505 = vmatmul.mubr.bf16.gmra.mxu0 %v405
        %v506 = vpop.f32.mrf.mxu0
        %v507 = vadd.f32 0.0, %v506
        %v508 = vpop.f32.mrf.mxu0
        %v509 = vadd.f32 0.0, %v508
        %v510 = vpop.f32.mrf.mxu0
        %v511 = vadd.f32 0.0, %v510
        %v512 = vpop.f32.mrf.mxu0
        %v513 = vadd.f32 0.0, %v512
        %514 = vmatprep.mubr.bf16.mxu0 0
        %515 = vmatmul.mubr.bf16.gmra.mxu0 %v408
        %v516 = vpop.f32.mrf.mxu0
        %v517 = vadd.f32 0.0, %v516
        %v518 = vpop.f32.mrf.mxu0
        %v519 = vadd.f32 0.0, %v518
        %v520 = vpop.f32.mrf.mxu0
        %v521 = vadd.f32 0.0, %v520
        %v522 = vpop.f32.mrf.mxu0
        %v523 = vadd.f32 0.0, %v522
        %524 = vmatprep.mubr.bf16.mxu0 0
        %525 = vmatmul.mubr.bf16.gmra.mxu0 %v411
        %v526 = vpop.f32.mrf.mxu0
        %v527 = vadd.f32 0.0, %v526
        %v528 = vpop.f32.mrf.mxu0
        %v529 = vadd.f32 0.0, %v528
        %v530 = vpop.f32.mrf.mxu0
        %v531 = vadd.f32 0.0, %v530
        %v532 = vpop.f32.mrf.mxu0
        %v533 = vadd.f32 0.0, %v532
        %534 = vmatprep.mubr.bf16.mxu0 0
        %535 = vmatmul.mubr.bf16.gmra.mxu0 %v414
        %v536 = vpop.f32.mrf.mxu0
        %v537 = vadd.f32 0.0, %v536
        %v538 = vpop.f32.mrf.mxu0
        %v539 = vadd.f32 0.0, %v538
        %v540 = vpop.f32.mrf.mxu0
        %v541 = vadd.f32 0.0, %v540
        %v542 = vpop.f32.mrf.mxu0
        %v543 = vadd.f32 0.0, %v542
        %544 = vmatprep.mubr.bf16.mxu0 0
        %545 = vmatmul.mubr.bf16.gmra.mxu0 %v417
        %v546 = vpop.f32.mrf.mxu0
        %v547 = vadd.f32 0.0, %v546
        %v548 = vpop.f32.mrf.mxu0
        %v549 = vadd.f32 0.0, %v548
        %v550 = vpop.f32.mrf.mxu0
        %v551 = vadd.f32 0.0, %v550
        %v552 = vpop.f32.mrf.mxu0
        %v553 = vadd.f32 0.0, %v552
        %554 = vmatprep.mubr.bf16.mxu0 0
        %555 = vmatmul.mubr.bf16.gmra.mxu0 %v420
        %v556 = vpop.f32.mrf.mxu0
        %v557 = vadd.f32 0.0, %v556
        %v558 = vpop.f32.mrf.mxu0
        %v559 = vadd.f32 0.0, %v558
        %v560 = vpop.f32.mrf.mxu0
        %v561 = vadd.f32 0.0, %v560
        %v562 = vpop.f32.mrf.mxu0
        %v563 = vadd.f32 0.0, %v562
        %564 = vmatprep.mubr.bf16.mxu0 0
        %565 = vmatmul.mubr.bf16.gmra.mxu0 %v423
        %v566 = vpop.f32.mrf.mxu0
        %v567 = vadd.f32 0.0, %v566
        %v568 = vpop.f32.mrf.mxu0
        %v569 = vadd.f32 0.0, %v568
        %v570 = vpop.f32.mrf.mxu0
        %v571 = vadd.f32 0.0, %v570
        %v572 = vpop.f32.mrf.mxu0
        %v573 = vadd.f32 0.0, %v572
        %574 = vdwg.mxu0
        %v576 = vlaneseq
        %v577 = vshrl.u32 %v576, 7
        %v578 = vsub.s32 0, %v577
        %v579 = vrot.slane %v350, %v578
        %v580 = vlaneseq
        %v581 = vshrl.u32 %v580, 7
        %v582 = vsub.s32 4, %v581
        %v583 = vrot.slane %v350, %v582
        %v586 = vlaneseq
        %v587 = vshrl.u32 %v586, 7
        %v588 = vsub.s32 0, %v587
        %v589 = vrot.slane %v579, %v588
        %v590 = vlaneseq
        %v591 = vshrl.u32 %v590, 7
        %v592 = vsub.s32 0, %v591
        %v593 = vrot.slane %v583, %v592
        %v594 = vmul.f32 %v467, %v589
        %v595 = vmul.f32 %v469, %v593
        %v596 = vmul.f32 %v471, %v589
        %v597 = vmul.f32 %v473, %v593
        %v598 = vmul.f32 %v477, %v589
        %v599 = vmul.f32 %v479, %v593
        %v600 = vmul.f32 %v481, %v589
        %v601 = vmul.f32 %v483, %v593
        %v602 = vmul.f32 %v487, %v589
        %v603 = vmul.f32 %v489, %v593
        %v604 = vmul.f32 %v491, %v589
        %v605 = vmul.f32 %v493, %v593
        %v606 = vmul.f32 %v497, %v589
        %v607 = vmul.f32 %v499, %v593
        %v608 = vmul.f32 %v501, %v589
        %v609 = vmul.f32 %v503, %v593
        %v610 = vmul.f32 %v507, %v589
        %v611 = vmul.f32 %v509, %v593
        %v612 = vmul.f32 %v511, %v589
        %v613 = vmul.f32 %v513, %v593
        %v614 = vmul.f32 %v517, %v589
        %v615 = vmul.f32 %v519, %v593
        %v616 = vmul.f32 %v521, %v589
        %v617 = vmul.f32 %v523, %v593
        %v618 = vmul.f32 %v527, %v589
        %v619 = vmul.f32 %v529, %v593
        %v620 = vmul.f32 %v531, %v589
        %v621 = vmul.f32 %v533, %v593
        %v622 = vmul.f32 %v537, %v589
        %v623 = vmul.f32 %v539, %v593
        %v624 = vmul.f32 %v541, %v589
        %v625 = vmul.f32 %v543, %v593
        %v626 = vmul.f32 %v547, %v589
        %v627 = vmul.f32 %v549, %v593
        %v628 = vmul.f32 %v551, %v589
        %v629 = vmul.f32 %v553, %v593
        %v630 = vmul.f32 %v557, %v589
        %v631 = vmul.f32 %v559, %v593
        %v632 = vmul.f32 %v561, %v589
        %v633 = vmul.f32 %v563, %v593
        %v634 = vmul.f32 %v567, %v589
        %v635 = vmul.f32 %v569, %v593
        %v636 = vmul.f32 %v571, %v589
        %v637 = vmul.f32 %v573, %v593
        %v639 = vlaneseq
        %v640 = vshrl.u32 %v639, 7
        %v641 = vsub.s32 0, %v640
        %v642 = vrot.slane %v351, %v641
        %v643 = vlaneseq
        %v644 = vshrl.u32 %v643, 7
        %v645 = vsub.s32 4, %v644
        %v646 = vrot.slane %v351, %v645
        %v649 = vlaneseq
        %v650 = vshrl.u32 %v649, 7
        %v651 = vsub.s32 0, %v650
        %v652 = vrot.slane %v642, %v651
        %v653 = vlaneseq
        %v654 = vshrl.u32 %v653, 7
        %v655 = vsub.s32 0, %v654
        %v656 = vrot.slane %v646, %v655
        %v657 = vadd.f32 %v594, %v652
        %v658 = vadd.f32 %v595, %v656
        %v659 = vadd.f32 %v596, %v652
        %v660 = vadd.f32 %v597, %v656
        %v661 = vadd.f32 %v598, %v652
        %v662 = vadd.f32 %v599, %v656
        %v663 = vadd.f32 %v600, %v652
        %v664 = vadd.f32 %v601, %v656
        %v665 = vadd.f32 %v602, %v652
        %v666 = vadd.f32 %v603, %v656
        %v667 = vadd.f32 %v604, %v652
        %v668 = vadd.f32 %v605, %v656
        %v669 = vadd.f32 %v606, %v652
        %v670 = vadd.f32 %v607, %v656
        %v671 = vadd.f32 %v608, %v652
        %v672 = vadd.f32 %v609, %v656
        %v673 = vadd.f32 %v610, %v652
        %v674 = vadd.f32 %v611, %v656
        %v675 = vadd.f32 %v612, %v652
        %v676 = vadd.f32 %v613, %v656
        %v677 = vadd.f32 %v614, %v652
        %v678 = vadd.f32 %v615, %v656
        %v679 = vadd.f32 %v616, %v652
        %v680 = vadd.f32 %v617, %v656
        %v681 = vadd.f32 %v618, %v652
        %v682 = vadd.f32 %v619, %v656
        %v683 = vadd.f32 %v620, %v652
        %v684 = vadd.f32 %v621, %v656
        %v685 = vadd.f32 %v622, %v652
        %v686 = vadd.f32 %v623, %v656
        %v687 = vadd.f32 %v624, %v652
        %v688 = vadd.f32 %v625, %v656
        %v689 = vadd.f32 %v626, %v652
        %v690 = vadd.f32 %v627, %v656
        %v691 = vadd.f32 %v628, %v652
        %v692 = vadd.f32 %v629, %v656
        %v693 = vadd.f32 %v630, %v652
        %v694 = vadd.f32 %v631, %v656
        %v695 = vadd.f32 %v632, %v652
        %v696 = vadd.f32 %v633, %v656
        %v697 = vadd.f32 %v634, %v652
        %v698 = vadd.f32 %v635, %v656
        %v699 = vadd.f32 %v636, %v652
        %v700 = vadd.f32 %v637, %v656
        %v701 = vmax.f32 %v657, 0.0
        %v702 = vmax.f32 %v658, 0.0
        %v703 = vmax.f32 %v659, 0.0
        %v704 = vmax.f32 %v660, 0.0
        %v705 = vmax.f32 %v661, 0.0
        %v706 = vmax.f32 %v662, 0.0
        %v707 = vmax.f32 %v663, 0.0
        %v708 = vmax.f32 %v664, 0.0
        %v709 = vmax.f32 %v665, 0.0
        %v710 = vmax.f32 %v666, 0.0
        %v711 = vmax.f32 %v667, 0.0
        %v712 = vmax.f32 %v668, 0.0
        %v713 = vmax.f32 %v669, 0.0
        %v714 = vmax.f32 %v670, 0.0
        %v715 = vmax.f32 %v671, 0.0
        %v716 = vmax.f32 %v672, 0.0
        %v717 = vmax.f32 %v673, 0.0
        %v718 = vmax.f32 %v674, 0.0
        %v719 = vmax.f32 %v675, 0.0
        %v720 = vmax.f32 %v676, 0.0
        %v721 = vmax.f32 %v677, 0.0
        %v722 = vmax.f32 %v678, 0.0
        %v723 = vmax.f32 %v679, 0.0
        %v724 = vmax.f32 %v680, 0.0
        %v725 = vmax.f32 %v681, 0.0
        %v726 = vmax.f32 %v682, 0.0
        %v727 = vmax.f32 %v683, 0.0
        %v728 = vmax.f32 %v684, 0.0
        %v729 = vmax.f32 %v685, 0.0
        %v730 = vmax.f32 %v686, 0.0
        %v731 = vmax.f32 %v687, 0.0
        %v732 = vmax.f32 %v688, 0.0
        %v733 = vmax.f32 %v689, 0.0
        %v734 = vmax.f32 %v690, 0.0
        %v735 = vmax.f32 %v691, 0.0
        %v736 = vmax.f32 %v692, 0.0
        %v737 = vmax.f32 %v693, 0.0
        %v738 = vmax.f32 %v694, 0.0
        %v739 = vmax.f32 %v695, 0.0
        %v740 = vmax.f32 %v696, 0.0
        %v741 = vmax.f32 %v697, 0.0
        %v742 = vmax.f32 %v698, 0.0
        %v743 = vmax.f32 %v699, 0.0
        %v744 = vmax.f32 %v700, 0.0
        %v745 = vpack.c.bf16 %v703, %v701
        %v746 = vpack.c.bf16 %v704, %v702
        %v747 = vpack.c.bf16 %v707, %v705
        %v748 = vpack.c.bf16 %v708, %v706
        %v749 = vpack.c.bf16 %v711, %v709
        %v750 = vpack.c.bf16 %v712, %v710
        %v751 = vpack.c.bf16 %v715, %v713
        %v752 = vpack.c.bf16 %v716, %v714
        %v753 = vpack.c.bf16 %v719, %v717
        %v754 = vpack.c.bf16 %v720, %v718
        %v755 = vpack.c.bf16 %v723, %v721
        %v756 = vpack.c.bf16 %v724, %v722
        %v757 = vpack.c.bf16 %v727, %v725
        %v758 = vpack.c.bf16 %v728, %v726
        %v759 = vpack.c.bf16 %v731, %v729
        %v760 = vpack.c.bf16 %v732, %v730
        %v761 = vpack.c.bf16 %v735, %v733
        %v762 = vpack.c.bf16 %v736, %v734
        %v763 = vpack.c.bf16 %v739, %v737
        %v764 = vpack.c.bf16 %v740, %v738
        %v765 = vpack.c.bf16 %v743, %v741
        %v766 = vpack.c.bf16 %v744, %v742
        %v767 = vld [vmem:[%s3] sm:$0xff]
        %v768 = vld [vmem:[%s3 + $0x8] sm:$0xff]
        %v769 = vld [vmem:[%s3 + $0x10] sm:$0xff]
        %v770 = vld [vmem:[%s3 + $0x18] sm:$0xff]
        %v771 = vld [vmem:[%s3 + $0x20] sm:$0xff]
        %v772 = vld [vmem:[%s3 + $0x28] sm:$0xff]
        %v773 = vld [vmem:[%s3 + $0x30] sm:$0xff]
        %v774 = vld [vmem:[%s3 + $0x38] sm:$0xff]
        %v775 = vld [vmem:[%s3 + $0x40] sm:$0xff]
        %v776 = vld [vmem:[%s3 + $0x48] sm:$0xff]
        %v777 = vld [vmem:[%s3 + $0x50] sm:$0xff]
        %v778 = vld [vmem:[%s3 + $0x58] sm:$0xff]
        %v779 = vld [vmem:[%s3 + $0x60] sm:$0xff]
        %v780 = vld [vmem:[%s3 + $0x68] sm:$0xff]
        %v781 = vld [vmem:[%s3 + $0x70] sm:$0xff]
        %v782 = vld [vmem:[%s3 + $0x78] sm:$0xff]
        %v783 = vld [vmem:[%s3 + $0x80] sm:$0xff]
        %v784 = vld [vmem:[%s3 + $0x88] sm:$0xff]
        %v785 = vld [vmem:[%s3 + $0x90] sm:$0xff]
        %v786 = vld [vmem:[%s3 + $0x98] sm:$0xff]
        %v787 = vld [vmem:[%s3 + $0xa0] sm:$0xff]
        %v788 = vld [vmem:[%s3 + $0xa8] sm:$0xff]
        %v789 = vld [vmem:[%s3 + $0xb0] sm:$0xff]
        %v790 = vld [vmem:[%s3 + $0xb8] sm:$0xff]
        %v791 = vld [vmem:[%s3 + $0xc0] sm:$0xff]
        %v792 = vld [vmem:[%s3 + $0xc8] sm:$0xff]
        %v793 = vld [vmem:[%s3 + $0xd0] sm:$0xff]
        %v794 = vld [vmem:[%s3 + $0xd8] sm:$0xff]
        %v795 = vld [vmem:[%s3 + $0xe0] sm:$0xff]
        %v796 = vld [vmem:[%s3 + $0xe8] sm:$0xff]
        %v797 = vld [vmem:[%s3 + $0xf0] sm:$0xff]
        %v798 = vld [vmem:[%s3 + $0xf8] sm:$0xff]
        %v799 = vld [vmem:[%s344 + $0x2e] sm:$0xff]
        %v800 = vld [vmem:[%s344 + $0x36] sm:$0xff]
        %v801 = vld [vmem:[%s344 + $0x3e] sm:$0xff]
        %v802 = vld [vmem:[%s344 + $0x46] sm:$0xff]
        %v803 = vld [vmem:[%s344 + $0x4e] sm:$0xff]
        %v804 = vld [vmem:[%s344 + $0x56] sm:$0xff]
        %v805 = vld [vmem:[%s344 + $0x5e] sm:$0xff]
        %v806 = vld [vmem:[%s344 + $0x66] sm:$0xff]
        %v807 = vld [vmem:[%s344 + $0x6e] sm:$0xff]
        %v808 = vld [vmem:[%s344 + $0x76] sm:$0xff]
        %v809 = vld [vmem:[%s344 + $0x7e] sm:$0xff]
        %v810 = vld [vmem:[%s344 + $0x86] sm:$0xff]
        %v811 = vld [vmem:[%s344 + $0x8e] sm:$0xff]
        %v812 = vld [vmem:[%s344 + $0x96] sm:$0xff]
        %v813 = vld [vmem:[%s344 + $0x9e] sm:$0xff]
        %v814 = vld [vmem:[%s344 + $0xa6] sm:$0xff]
        %v815 = vld [vmem:[%s344 + $0xae] sm:$0xff]
        %v816 = vld [vmem:[%s344 + $0xb6] sm:$0xff]
        %v817 = vld [vmem:[%s344 + $0xbe] sm:$0xff]
        %v818 = vld [vmem:[%s344 + $0xc6] sm:$0xff]
        %v819 = vld [vmem:[%s344 + $0xce] sm:$0xff]
        %v820 = vld [vmem:[%s344 + $0xd6] sm:$0xff]
        %v821 = vpack.c.bf16 %v800, %v799
        %v822 = vpack.c.bf16 %v802, %v801
        %v823 = vpack.c.bf16 %v804, %v803
        %v824 = vpack.c.bf16 %v806, %v805
        %v825 = vpack.c.bf16 %v808, %v807
        %v826 = vpack.c.bf16 %v810, %v809
        %v827 = vpack.c.bf16 %v812, %v811
        %v828 = vpack.c.bf16 %v814, %v813
        %v829 = vpack.c.bf16 %v816, %v815
        %v830 = vpack.c.bf16 %v818, %v817
        %v831 = vpack.c.bf16 %v820, %v819
        %v832 = vld [vmem:[%s2] sm:$0xff]
        %v833 = vld [vmem:[%s344 + $0x2f] sm:$0xff]
        %v834 = vld [vmem:[%s344 + $0x37] sm:$0xff]
        %v835 = vld [vmem:[%s344 + $0x3f] sm:$0xff]
        %v836 = vld [vmem:[%s344 + $0x47] sm:$0xff]
        %v837 = vld [vmem:[%s344 + $0x4f] sm:$0xff]
        %v838 = vld [vmem:[%s344 + $0x57] sm:$0xff]
        %v839 = vld [vmem:[%s344 + $0x5f] sm:$0xff]
        %v840 = vld [vmem:[%s344 + $0x67] sm:$0xff]
        %v841 = vld [vmem:[%s344 + $0x6f] sm:$0xff]
        %v842 = vld [vmem:[%s344 + $0x77] sm:$0xff]
        %v843 = vld [vmem:[%s344 + $0x7f] sm:$0xff]
        %v844 = vld [vmem:[%s344 + $0x87] sm:$0xff]
        %v845 = vld [vmem:[%s344 + $0x8f] sm:$0xff]
        %v846 = vld [vmem:[%s344 + $0x97] sm:$0xff]
        %v847 = vld [vmem:[%s344 + $0x9f] sm:$0xff]
        %v848 = vld [vmem:[%s344 + $0xa7] sm:$0xff]
        %v849 = vld [vmem:[%s344 + $0xaf] sm:$0xff]
        %v850 = vld [vmem:[%s344 + $0xb7] sm:$0xff]
        %v851 = vld [vmem:[%s344 + $0xbf] sm:$0xff]
        %v852 = vld [vmem:[%s344 + $0xc7] sm:$0xff]
        %v853 = vld [vmem:[%s344 + $0xcf] sm:$0xff]
        %v854 = vld [vmem:[%s344 + $0xd7] sm:$0xff]
        %v855 = vpack.c.bf16 %v834, %v833
        %v856 = vpack.c.bf16 %v836, %v835
        %v857 = vpack.c.bf16 %v838, %v837
        %v858 = vpack.c.bf16 %v840, %v839
        %v859 = vpack.c.bf16 %v842, %v841
        %v860 = vpack.c.bf16 %v844, %v843
        %v861 = vpack.c.bf16 %v846, %v845
        %v862 = vpack.c.bf16 %v848, %v847
        %v863 = vpack.c.bf16 %v850, %v849
        %v864 = vpack.c.bf16 %v852, %v851
        %v865 = vpack.c.bf16 %v854, %v853
        %s866 = scalar_lea.vmem %s2, 8
        %v867 = vld [vmem:[%s866] sm:$0xff]
        %v869 = vunpack.c.l.b16 %v867
        %v870 = vunpack.c.h.b16 %v867
        %v871 = vpack.c.b16 %v869, %v869
        %v872 = vpack.c.b16 %v870, %v870
        %v874 = vsel %vm391, %v855, 0
        %v877 = vsel %vm391, %v856, 0
        %v880 = vsel %vm391, %v857, 0
        %v883 = vsel %vm391, %v858, 0
        %v886 = vsel %vm391, %v859, 0
        %v889 = vsel %vm391, %v860, 0
        %v892 = vsel %vm391, %v861, 0
        %v895 = vsel %vm391, %v862, 0
        %v898 = vsel %vm391, %v863, 0
        %v901 = vsel %vm391, %v864, 0
        %v904 = vsel %vm391, %v865, 0
        %v907 = vsel %vm425, %v871, 0
        %v910 = vsel %vm425, %v872, 0
        %912 = vmatprep.subr.bf16.mxu0 0
        %913 = vmatpush1.bf16.msra.mxu0 0
        %914 = vmatprep.subr.bf16.mxu0 0
        %915 = vmatpush1.bf16.msra.mxu0 0
        %916 = vmatprep.subr.bf16.mxu0 0
        %917 = vmatpush1.bf16.msra.mxu0 0
        %918 = vmatprep.subr.bf16.mxu0 0
        %919 = vmatpush1.bf16.msra.mxu0 0
        %920 = vmatprep.subr.bf16.mxu0 0
        %921 = vmatpush1.bf16.msra.mxu0 0
        %922 = vmatprep.subr.bf16.mxu0 0
        %923 = vmatpush1.bf16.msra.mxu0 0
        %924 = vmatprep.subr.bf16.mxu0 0
        %925 = vmatpush1.bf16.msra.mxu0 0
        %926 = vmatprep.subr.bf16.mxu0 %v910
        %927 = vmatpush1.bf16.msra.mxu0 %v907
        %928 = vmatprep.subr.bf16.mxu0 0
        %929 = vmatpush2.bf16.msra.mxu0 0
        %930 = vmatprep.subr.bf16.mxu0 0
        %931 = vmatpush2.bf16.msra.mxu0 0
        %932 = vmatprep.subr.bf16.mxu0 0
        %933 = vmatpush2.bf16.msra.mxu0 0
        %934 = vmatprep.subr.bf16.mxu0 0
        %935 = vmatpush2.bf16.msra.mxu0 0
        %936 = vmatprep.subr.bf16.mxu0 0
        %937 = vmatpush2.bf16.msra.mxu0 0
        %938 = vmatprep.subr.bf16.mxu0 0
        %939 = vmatpush2.bf16.msra.mxu0 0
        %940 = vmatprep.subr.bf16.mxu0 0
        %941 = vmatpush2.bf16.msra.mxu0 0
        %942 = vmatprep.subr.bf16.mxu0 0
        %943 = vmatpush2.bf16.msra.mxu0 0
        %944 = vmatprep.mubr.bf16.mxu0 0
        %945 = vmatmul.mubr.bf16.gmra.mxu0 %v874
        %v946 = vpop.f32.mrf.mxu0
        %v947 = vadd.f32 0.0, %v946
        %v948 = vpop.f32.mrf.mxu0
        %v949 = vadd.f32 0.0, %v948
        %v950 = vpop.f32.mrf.mxu0
        %v951 = vadd.f32 0.0, %v950
        %v952 = vpop.f32.mrf.mxu0
        %v953 = vadd.f32 0.0, %v952
        %954 = vmatprep.mubr.bf16.mxu0 0
        %955 = vmatmul.mubr.bf16.gmra.mxu0 %v877
        %v956 = vpop.f32.mrf.mxu0
        %v957 = vadd.f32 0.0, %v956
        %v958 = vpop.f32.mrf.mxu0
        %v959 = vadd.f32 0.0, %v958
        %v960 = vpop.f32.mrf.mxu0
        %v961 = vadd.f32 0.0, %v960
        %v962 = vpop.f32.mrf.mxu0
        %v963 = vadd.f32 0.0, %v962
        %964 = vmatprep.mubr.bf16.mxu0 0
        %965 = vmatmul.mubr.bf16.gmra.mxu0 %v880
        %v966 = vpop.f32.mrf.mxu0
        %v967 = vadd.f32 0.0, %v966
        %v968 = vpop.f32.mrf.mxu0
        %v969 = vadd.f32 0.0, %v968
        %v970 = vpop.f32.mrf.mxu0
        %v971 = vadd.f32 0.0, %v970
        %v972 = vpop.f32.mrf.mxu0
        %v973 = vadd.f32 0.0, %v972
        %974 = vmatprep.mubr.bf16.mxu0 0
        %975 = vmatmul.mubr.bf16.gmra.mxu0 %v883
        %v976 = vpop.f32.mrf.mxu0
        %v977 = vadd.f32 0.0, %v976
        %v978 = vpop.f32.mrf.mxu0
        %v979 = vadd.f32 0.0, %v978
        %v980 = vpop.f32.mrf.mxu0
        %v981 = vadd.f32 0.0, %v980
        %v982 = vpop.f32.mrf.mxu0
        %v983 = vadd.f32 0.0, %v982
        %984 = vmatprep.mubr.bf16.mxu0 0
        %985 = vmatmul.mubr.bf16.gmra.mxu0 %v886
        %v986 = vpop.f32.mrf.mxu0
        %v987 = vadd.f32 0.0, %v986
        %v988 = vpop.f32.mrf.mxu0
        %v989 = vadd.f32 0.0, %v988
        %v990 = vpop.f32.mrf.mxu0
        %v991 = vadd.f32 0.0, %v990
        %v992 = vpop.f32.mrf.mxu0
        %v993 = vadd.f32 0.0, %v992
        %994 = vmatprep.mubr.bf16.mxu0 0
        %995 = vmatmul.mubr.bf16.gmra.mxu0 %v889
        %v996 = vpop.f32.mrf.mxu0
        %v997 = vadd.f32 0.0, %v996
        %v998 = vpop.f32.mrf.mxu0
        %v999 = vadd.f32 0.0, %v998
        %v1000 = vpop.f32.mrf.mxu0
        %v1001 = vadd.f32 0.0, %v1000
        %v1002 = vpop.f32.mrf.mxu0
        %v1003 = vadd.f32 0.0, %v1002
        %1004 = vmatprep.mubr.bf16.mxu0 0
        %1005 = vmatmul.mubr.bf16.gmra.mxu0 %v892
        %v1006 = vpop.f32.mrf.mxu0
        %v1007 = vadd.f32 0.0, %v1006
        %v1008 = vpop.f32.mrf.mxu0
        %v1009 = vadd.f32 0.0, %v1008
        %v1010 = vpop.f32.mrf.mxu0
        %v1011 = vadd.f32 0.0, %v1010
        %v1012 = vpop.f32.mrf.mxu0
        %v1013 = vadd.f32 0.0, %v1012
        %1014 = vmatprep.mubr.bf16.mxu0 0
        %1015 = vmatmul.mubr.bf16.gmra.mxu0 %v895
        %v1016 = vpop.f32.mrf.mxu0
        %v1017 = vadd.f32 0.0, %v1016
        %v1018 = vpop.f32.mrf.mxu0
        %v1019 = vadd.f32 0.0, %v1018
        %v1020 = vpop.f32.mrf.mxu0
        %v1021 = vadd.f32 0.0, %v1020
        %v1022 = vpop.f32.mrf.mxu0
        %v1023 = vadd.f32 0.0, %v1022
        %1024 = vmatprep.mubr.bf16.mxu0 0
        %1025 = vmatmul.mubr.bf16.gmra.mxu0 %v898
        %v1026 = vpop.f32.mrf.mxu0
        %v1027 = vadd.f32 0.0, %v1026
        %v1028 = vpop.f32.mrf.mxu0
        %v1029 = vadd.f32 0.0, %v1028
        %v1030 = vpop.f32.mrf.mxu0
        %v1031 = vadd.f32 0.0, %v1030
        %v1032 = vpop.f32.mrf.mxu0
        %v1033 = vadd.f32 0.0, %v1032
        %1034 = vmatprep.mubr.bf16.mxu0 0
        %1035 = vmatmul.mubr.bf16.gmra.mxu0 %v901
        %v1036 = vpop.f32.mrf.mxu0
        %v1037 = vadd.f32 0.0, %v1036
        %v1038 = vpop.f32.mrf.mxu0
        %v1039 = vadd.f32 0.0, %v1038
        %v1040 = vpop.f32.mrf.mxu0
        %v1041 = vadd.f32 0.0, %v1040
        %v1042 = vpop.f32.mrf.mxu0
        %v1043 = vadd.f32 0.0, %v1042
        %1044 = vmatprep.mubr.bf16.mxu0 0
        %1045 = vmatmul.mubr.bf16.gmra.mxu0 %v904
        %v1046 = vpop.f32.mrf.mxu0
        %v1047 = vadd.f32 0.0, %v1046
        %v1048 = vpop.f32.mrf.mxu0
        %v1049 = vadd.f32 0.0, %v1048
        %v1050 = vpop.f32.mrf.mxu0
        %v1051 = vadd.f32 0.0, %v1050
        %v1052 = vpop.f32.mrf.mxu0
        %v1053 = vadd.f32 0.0, %v1052
        %1054 = vdwg.mxu0
        %v1056 = vunpack.c.l.b16 %v832
        %v1057 = vunpack.c.h.b16 %v832
        %v1058 = vpack.c.b16 %v1056, %v1056
        %v1059 = vpack.c.b16 %v1057, %v1057
        %v1061 = vsel %vm391, %v821, 0
        %v1064 = vsel %vm391, %v822, 0
        %v1067 = vsel %vm391, %v823, 0
        %v1070 = vsel %vm391, %v824, 0
        %v1073 = vsel %vm391, %v825, 0
        %v1076 = vsel %vm391, %v826, 0
        %v1079 = vsel %vm391, %v827, 0
        %v1082 = vsel %vm391, %v828, 0
        %v1085 = vsel %vm391, %v829, 0
        %v1088 = vsel %vm391, %v830, 0
        %v1091 = vsel %vm391, %v831, 0
        %v1094 = vsel %vm425, %v1058, 0
        %v1097 = vsel %vm425, %v1059, 0
        %1099 = vmatprep.subr.bf16.mxu0 0
        %1100 = vmatpush1.bf16.msra.mxu0 0
        %1101 = vmatprep.subr.bf16.mxu0 0
        %1102 = vmatpush1.bf16.msra.mxu0 0
        %1103 = vmatprep.subr.bf16.mxu0 0
        %1104 = vmatpush1.bf16.msra.mxu0 0
        %1105 = vmatprep.subr.bf16.mxu0 0
        %1106 = vmatpush1.bf16.msra.mxu0 0
        %1107 = vmatprep.subr.bf16.mxu0 0
        %1108 = vmatpush1.bf16.msra.mxu0 0
        %1109 = vmatprep.subr.bf16.mxu0 0
        %1110 = vmatpush1.bf16.msra.mxu0 0
        %1111 = vmatprep.subr.bf16.mxu0 0
        %1112 = vmatpush1.bf16.msra.mxu0 0
        %1113 = vmatprep.subr.bf16.mxu0 %v1097
        %1114 = vmatpush1.bf16.msra.mxu0 %v1094
        %1115 = vmatprep.subr.bf16.mxu0 0
        %1116 = vmatpush2.bf16.msra.mxu0 0
        %1117 = vmatprep.subr.bf16.mxu0 0
        %1118 = vmatpush2.bf16.msra.mxu0 0
        %1119 = vmatprep.subr.bf16.mxu0 0
        %1120 = vmatpush2.bf16.msra.mxu0 0
        %1121 = vmatprep.subr.bf16.mxu0 0
        %1122 = vmatpush2.bf16.msra.mxu0 0
        %1123 = vmatprep.subr.bf16.mxu0 0
        %1124 = vmatpush2.bf16.msra.mxu0 0
        %1125 = vmatprep.subr.bf16.mxu0 0
        %1126 = vmatpush2.bf16.msra.mxu0 0
        %1127 = vmatprep.subr.bf16.mxu0 0
        %1128 = vmatpush2.bf16.msra.mxu0 0
        %1129 = vmatprep.subr.bf16.mxu0 0
        %1130 = vmatpush2.bf16.msra.mxu0 0
        %1131 = vmatprep.mubr.bf16.mxu0 0
        %1132 = vmatmul.mubr.bf16.gmra.mxu0 %v1061
        %v1133 = vpop.f32.mrf.mxu0
        %v1134 = vadd.f32 %v947, %v1133
        %v1135 = vpop.f32.mrf.mxu0
        %v1136 = vadd.f32 %v949, %v1135
        %v1137 = vpop.f32.mrf.mxu0
        %v1138 = vadd.f32 %v951, %v1137
        %v1139 = vpop.f32.mrf.mxu0
        %v1140 = vadd.f32 %v953, %v1139
        %1141 = vmatprep.mubr.bf16.mxu0 0
        %1142 = vmatmul.mubr.bf16.gmra.mxu0 %v1064
        %v1143 = vpop.f32.mrf.mxu0
        %v1144 = vadd.f32 %v957, %v1143
        %v1145 = vpop.f32.mrf.mxu0
        %v1146 = vadd.f32 %v959, %v1145
        %v1147 = vpop.f32.mrf.mxu0
        %v1148 = vadd.f32 %v961, %v1147
        %v1149 = vpop.f32.mrf.mxu0
        %v1150 = vadd.f32 %v963, %v1149
        %1151 = vmatprep.mubr.bf16.mxu0 0
        %1152 = vmatmul.mubr.bf16.gmra.mxu0 %v1067
        %v1153 = vpop.f32.mrf.mxu0
        %v1154 = vadd.f32 %v967, %v1153
        %v1155 = vpop.f32.mrf.mxu0
        %v1156 = vadd.f32 %v969, %v1155
        %v1157 = vpop.f32.mrf.mxu0
        %v1158 = vadd.f32 %v971, %v1157
        %v1159 = vpop.f32.mrf.mxu0
        %v1160 = vadd.f32 %v973, %v1159
        %1161 = vmatprep.mubr.bf16.mxu0 0
        %1162 = vmatmul.mubr.bf16.gmra.mxu0 %v1070
        %v1163 = vpop.f32.mrf.mxu0
        %v1164 = vadd.f32 %v977, %v1163
        %v1165 = vpop.f32.mrf.mxu0
        %v1166 = vadd.f32 %v979, %v1165
        %v1167 = vpop.f32.mrf.mxu0
        %v1168 = vadd.f32 %v981, %v1167
        %v1169 = vpop.f32.mrf.mxu0
        %v1170 = vadd.f32 %v983, %v1169
        %1171 = vmatprep.mubr.bf16.mxu0 0
        %1172 = vmatmul.mubr.bf16.gmra.mxu0 %v1073
        %v1173 = vpop.f32.mrf.mxu0
        %v1174 = vadd.f32 %v987, %v1173
        %v1175 = vpop.f32.mrf.mxu0
        %v1176 = vadd.f32 %v989, %v1175
        %v1177 = vpop.f32.mrf.mxu0
        %v1178 = vadd.f32 %v991, %v1177
        %v1179 = vpop.f32.mrf.mxu0
        %v1180 = vadd.f32 %v993, %v1179
        %1181 = vmatprep.mubr.bf16.mxu0 0
        %1182 = vmatmul.mubr.bf16.gmra.mxu0 %v1076
        %v1183 = vpop.f32.mrf.mxu0
        %v1184 = vadd.f32 %v997, %v1183
        %v1185 = vpop.f32.mrf.mxu0
        %v1186 = vadd.f32 %v999, %v1185
        %v1187 = vpop.f32.mrf.mxu0
        %v1188 = vadd.f32 %v1001, %v1187
        %v1189 = vpop.f32.mrf.mxu0
        %v1190 = vadd.f32 %v1003, %v1189
        %1191 = vmatprep.mubr.bf16.mxu0 0
        %1192 = vmatmul.mubr.bf16.gmra.mxu0 %v1079
        %v1193 = vpop.f32.mrf.mxu0
        %v1194 = vadd.f32 %v1007, %v1193
        %v1195 = vpop.f32.mrf.mxu0
        %v1196 = vadd.f32 %v1009, %v1195
        %v1197 = vpop.f32.mrf.mxu0
        %v1198 = vadd.f32 %v1011, %v1197
        %v1199 = vpop.f32.mrf.mxu0
        %v1200 = vadd.f32 %v1013, %v1199
        %1201 = vmatprep.mubr.bf16.mxu0 0
        %1202 = vmatmul.mubr.bf16.gmra.mxu0 %v1082
        %v1203 = vpop.f32.mrf.mxu0
        %v1204 = vadd.f32 %v1017, %v1203
        %v1205 = vpop.f32.mrf.mxu0
        %v1206 = vadd.f32 %v1019, %v1205
        %v1207 = vpop.f32.mrf.mxu0
        %v1208 = vadd.f32 %v1021, %v1207
        %v1209 = vpop.f32.mrf.mxu0
        %v1210 = vadd.f32 %v1023, %v1209
        %1211 = vmatprep.mubr.bf16.mxu0 0
        %1212 = vmatmul.mubr.bf16.gmra.mxu0 %v1085
        %v1213 = vpop.f32.mrf.mxu0
        %v1214 = vadd.f32 %v1027, %v1213
        %v1215 = vpop.f32.mrf.mxu0
        %v1216 = vadd.f32 %v1029, %v1215
        %v1217 = vpop.f32.mrf.mxu0
        %v1218 = vadd.f32 %v1031, %v1217
        %v1219 = vpop.f32.mrf.mxu0
        %v1220 = vadd.f32 %v1033, %v1219
        %1221 = vmatprep.mubr.bf16.mxu0 0
        %1222 = vmatmul.mubr.bf16.gmra.mxu0 %v1088
        %v1223 = vpop.f32.mrf.mxu0
        %v1224 = vadd.f32 %v1037, %v1223
        %v1225 = vpop.f32.mrf.mxu0
        %v1226 = vadd.f32 %v1039, %v1225
        %v1227 = vpop.f32.mrf.mxu0
        %v1228 = vadd.f32 %v1041, %v1227
        %v1229 = vpop.f32.mrf.mxu0
        %v1230 = vadd.f32 %v1043, %v1229
        %1231 = vmatprep.mubr.bf16.mxu0 0
        %1232 = vmatmul.mubr.bf16.gmra.mxu0 %v1091
        %v1233 = vpop.f32.mrf.mxu0
        %v1234 = vadd.f32 %v1047, %v1233
        %v1235 = vpop.f32.mrf.mxu0
        %v1236 = vadd.f32 %v1049, %v1235
        %v1237 = vpop.f32.mrf.mxu0
        %v1238 = vadd.f32 %v1051, %v1237
        %v1239 = vpop.f32.mrf.mxu0
        %v1240 = vadd.f32 %v1053, %v1239
        %1241 = vdwg.mxu0
        %v1242 = vld [vmem:[%s344 + $0x30] sm:$0xff]
        %v1243 = vld [vmem:[%s344 + $0x38] sm:$0xff]
        %v1244 = vld [vmem:[%s344 + $0x40] sm:$0xff]
        %v1245 = vld [vmem:[%s344 + $0x48] sm:$0xff]
        %v1246 = vld [vmem:[%s344 + $0x50] sm:$0xff]
        %v1247 = vld [vmem:[%s344 + $0x58] sm:$0xff]
        %v1248 = vld [vmem:[%s344 + $0x60] sm:$0xff]
        %v1249 = vld [vmem:[%s344 + $0x68] sm:$0xff]
        %v1250 = vld [vmem:[%s344 + $0x70] sm:$0xff]
        %v1251 = vld [vmem:[%s344 + $0x78] sm:$0xff]
        %v1252 = vld [vmem:[%s344 + $0x80] sm:$0xff]
        %v1253 = vld [vmem:[%s344 + $0x88] sm:$0xff]
        %v1254 = vld [vmem:[%s344 + $0x90] sm:$0xff]
        %v1255 = vld [vmem:[%s344 + $0x98] sm:$0xff]
        %v1256 = vld [vmem:[%s344 + $0xa0] sm:$0xff]
        %v1257 = vld [vmem:[%s344 + $0xa8] sm:$0xff]
        %v1258 = vld [vmem:[%s344 + $0xb0] sm:$0xff]
        %v1259 = vld [vmem:[%s344 + $0xb8] sm:$0xff]
        %v1260 = vld [vmem:[%s344 + $0xc0] sm:$0xff]
        %v1261 = vld [vmem:[%s344 + $0xc8] sm:$0xff]
        %v1262 = vld [vmem:[%s344 + $0xd0] sm:$0xff]
        %v1263 = vld [vmem:[%s344 + $0xd8] sm:$0xff]
        %v1264 = vpack.c.bf16 %v1243, %v1242
        %v1265 = vpack.c.bf16 %v1245, %v1244
        %v1266 = vpack.c.bf16 %v1247, %v1246
        %v1267 = vpack.c.bf16 %v1249, %v1248
        %v1268 = vpack.c.bf16 %v1251, %v1250
        %v1269 = vpack.c.bf16 %v1253, %v1252
        %v1270 = vpack.c.bf16 %v1255, %v1254
        %v1271 = vpack.c.bf16 %v1257, %v1256
        %v1272 = vpack.c.bf16 %v1259, %v1258
        %v1273 = vpack.c.bf16 %v1261, %v1260
        %v1274 = vpack.c.bf16 %v1263, %v1262
        %s1275 = scalar_lea.vmem %s2, 16
        %v1276 = vld [vmem:[%s1275] sm:$0xff]
        %v1278 = vunpack.c.l.b16 %v1276
        %v1279 = vunpack.c.h.b16 %v1276
        %v1280 = vpack.c.b16 %v1278, %v1278
        %v1281 = vpack.c.b16 %v1279, %v1279
        %v1283 = vsel %vm391, %v1264, 0
        %v1286 = vsel %vm391, %v1265, 0
        %v1289 = vsel %vm391, %v1266, 0
        %v1292 = vsel %vm391, %v1267, 0
        %v1295 = vsel %vm391, %v1268, 0
        %v1298 = vsel %vm391, %v1269, 0
        %v1301 = vsel %vm391, %v1270, 0
        %v1304 = vsel %vm391, %v1271, 0
        %v1307 = vsel %vm391, %v1272, 0
        %v1310 = vsel %vm391, %v1273, 0
        %v1313 = vsel %vm391, %v1274, 0
        %v1316 = vsel %vm425, %v1280, 0
        %v1319 = vsel %vm425, %v1281, 0
        %1321 = vmatprep.subr.bf16.mxu0 0
        %1322 = vmatpush1.bf16.msra.mxu0 0
        %1323 = vmatprep.subr.bf16.mxu0 0
        %1324 = vmatpush1.bf16.msra.mxu0 0
        %1325 = vmatprep.subr.bf16.mxu0 0
        %1326 = vmatpush1.bf16.msra.mxu0 0
        %1327 = vmatprep.subr.bf16.mxu0 0
        %1328 = vmatpush1.bf16.msra.mxu0 0
        %1329 = vmatprep.subr.bf16.mxu0 0
        %1330 = vmatpush1.bf16.msra.mxu0 0
        %1331 = vmatprep.subr.bf16.mxu0 0
        %1332 = vmatpush1.bf16.msra.mxu0 0
        %1333 = vmatprep.subr.bf16.mxu0 0
        %1334 = vmatpush1.bf16.msra.mxu0 0
        %1335 = vmatprep.subr.bf16.mxu0 %v1319
        %1336 = vmatpush1.bf16.msra.mxu0 %v1316
        %1337 = vmatprep.subr.bf16.mxu0 0
        %1338 = vmatpush2.bf16.msra.mxu0 0
        %1339 = vmatprep.subr.bf16.mxu0 0
        %1340 = vmatpush2.bf16.msra.mxu0 0
        %1341 = vmatprep.subr.bf16.mxu0 0
        %1342 = vmatpush2.bf16.msra.mxu0 0
        %1343 = vmatprep.subr.bf16.mxu0 0
        %1344 = vmatpush2.bf16.msra.mxu0 0
        %1345 = vmatprep.subr.bf16.mxu0 0
        %1346 = vmatpush2.bf16.msra.mxu0 0
        %1347 = vmatprep.subr.bf16.mxu0 0
        %1348 = vmatpush2.bf16.msra.mxu0 0
        %1349 = vmatprep.subr.bf16.mxu0 0
        %1350 = vmatpush2.bf16.msra.mxu0 0
        %1351 = vmatprep.subr.bf16.mxu0 0
        %1352 = vmatpush2.bf16.msra.mxu0 0
        %1353 = vmatprep.mubr.bf16.mxu0 0
        %1354 = vmatmul.mubr.bf16.gmra.mxu0 %v1283
        %v1355 = vpop.f32.mrf.mxu0
        %v1356 = vadd.f32 0.0, %v1355
        %v1357 = vpop.f32.mrf.mxu0
        %v1358 = vadd.f32 0.0, %v1357
        %v1359 = vpop.f32.mrf.mxu0
        %v1360 = vadd.f32 0.0, %v1359
        %v1361 = vpop.f32.mrf.mxu0
        %v1362 = vadd.f32 0.0, %v1361
        %1363 = vmatprep.mubr.bf16.mxu0 0
        %1364 = vmatmul.mubr.bf16.gmra.mxu0 %v1286
        %v1365 = vpop.f32.mrf.mxu0
        %v1366 = vadd.f32 0.0, %v1365
        %v1367 = vpop.f32.mrf.mxu0
        %v1368 = vadd.f32 0.0, %v1367
        %v1369 = vpop.f32.mrf.mxu0
        %v1370 = vadd.f32 0.0, %v1369
        %v1371 = vpop.f32.mrf.mxu0
        %v1372 = vadd.f32 0.0, %v1371
        %1373 = vmatprep.mubr.bf16.mxu0 0
        %1374 = vmatmul.mubr.bf16.gmra.mxu0 %v1289
        %v1375 = vpop.f32.mrf.mxu0
        %v1376 = vadd.f32 0.0, %v1375
        %v1377 = vpop.f32.mrf.mxu0
        %v1378 = vadd.f32 0.0, %v1377
        %v1379 = vpop.f32.mrf.mxu0
        %v1380 = vadd.f32 0.0, %v1379
        %v1381 = vpop.f32.mrf.mxu0
        %v1382 = vadd.f32 0.0, %v1381
        %1383 = vmatprep.mubr.bf16.mxu0 0
        %1384 = vmatmul.mubr.bf16.gmra.mxu0 %v1292
        %v1385 = vpop.f32.mrf.mxu0
        %v1386 = vadd.f32 0.0, %v1385
        %v1387 = vpop.f32.mrf.mxu0
        %v1388 = vadd.f32 0.0, %v1387
        %v1389 = vpop.f32.mrf.mxu0
        %v1390 = vadd.f32 0.0, %v1389
        %v1391 = vpop.f32.mrf.mxu0
        %v1392 = vadd.f32 0.0, %v1391
        %1393 = vmatprep.mubr.bf16.mxu0 0
        %1394 = vmatmul.mubr.bf16.gmra.mxu0 %v1295
        %v1395 = vpop.f32.mrf.mxu0
        %v1396 = vadd.f32 0.0, %v1395
        %v1397 = vpop.f32.mrf.mxu0
        %v1398 = vadd.f32 0.0, %v1397
        %v1399 = vpop.f32.mrf.mxu0
        %v1400 = vadd.f32 0.0, %v1399
        %v1401 = vpop.f32.mrf.mxu0
        %v1402 = vadd.f32 0.0, %v1401
        %1403 = vmatprep.mubr.bf16.mxu0 0
        %1404 = vmatmul.mubr.bf16.gmra.mxu0 %v1298
        %v1405 = vpop.f32.mrf.mxu0
        %v1406 = vadd.f32 0.0, %v1405
        %v1407 = vpop.f32.mrf.mxu0
        %v1408 = vadd.f32 0.0, %v1407
        %v1409 = vpop.f32.mrf.mxu0
        %v1410 = vadd.f32 0.0, %v1409
        %v1411 = vpop.f32.mrf.mxu0
        %v1412 = vadd.f32 0.0, %v1411
        %1413 = vmatprep.mubr.bf16.mxu0 0
        %1414 = vmatmul.mubr.bf16.gmra.mxu0 %v1301
        %v1415 = vpop.f32.mrf.mxu0
        %v1416 = vadd.f32 0.0, %v1415
        %v1417 = vpop.f32.mrf.mxu0
        %v1418 = vadd.f32 0.0, %v1417
        %v1419 = vpop.f32.mrf.mxu0
        %v1420 = vadd.f32 0.0, %v1419
        %v1421 = vpop.f32.mrf.mxu0
        %v1422 = vadd.f32 0.0, %v1421
        %1423 = vmatprep.mubr.bf16.mxu0 0
        %1424 = vmatmul.mubr.bf16.gmra.mxu0 %v1304
        %v1425 = vpop.f32.mrf.mxu0
        %v1426 = vadd.f32 0.0, %v1425
        %v1427 = vpop.f32.mrf.mxu0
        %v1428 = vadd.f32 0.0, %v1427
        %v1429 = vpop.f32.mrf.mxu0
        %v1430 = vadd.f32 0.0, %v1429
        %v1431 = vpop.f32.mrf.mxu0
        %v1432 = vadd.f32 0.0, %v1431
        %1433 = vmatprep.mubr.bf16.mxu0 0
        %1434 = vmatmul.mubr.bf16.gmra.mxu0 %v1307
        %v1435 = vpop.f32.mrf.mxu0
        %v1436 = vadd.f32 0.0, %v1435
        %v1437 = vpop.f32.mrf.mxu0
        %v1438 = vadd.f32 0.0, %v1437
        %v1439 = vpop.f32.mrf.mxu0
        %v1440 = vadd.f32 0.0, %v1439
        %v1441 = vpop.f32.mrf.mxu0
        %v1442 = vadd.f32 0.0, %v1441
        %1443 = vmatprep.mubr.bf16.mxu0 0
        %1444 = vmatmul.mubr.bf16.gmra.mxu0 %v1310
        %v1445 = vpop.f32.mrf.mxu0
        %v1446 = vadd.f32 0.0, %v1445
        %v1447 = vpop.f32.mrf.mxu0
        %v1448 = vadd.f32 0.0, %v1447
        %v1449 = vpop.f32.mrf.mxu0
        %v1450 = vadd.f32 0.0, %v1449
        %v1451 = vpop.f32.mrf.mxu0
        %v1452 = vadd.f32 0.0, %v1451
        %1453 = vmatprep.mubr.bf16.mxu0 0
        %1454 = vmatmul.mubr.bf16.gmra.mxu0 %v1313
        %v1455 = vpop.f32.mrf.mxu0
        %v1456 = vadd.f32 0.0, %v1455
        %v1457 = vpop.f32.mrf.mxu0
        %v1458 = vadd.f32 0.0, %v1457
        %v1459 = vpop.f32.mrf.mxu0
        %v1460 = vadd.f32 0.0, %v1459
        %v1461 = vpop.f32.mrf.mxu0
        %v1462 = vadd.f32 0.0, %v1461
        %1463 = vdwg.mxu0
        %v1464 = vadd.f32 %v1134, %v1356
        %v1465 = vadd.f32 %v1136, %v1358
        %v1466 = vadd.f32 %v1138, %v1360
        %v1467 = vadd.f32 %v1140, %v1362
        %v1468 = vadd.f32 %v1144, %v1366
        %v1469 = vadd.f32 %v1146, %v1368
        %v1470 = vadd.f32 %v1148, %v1370
        %v1471 = vadd.f32 %v1150, %v1372
        %v1472 = vadd.f32 %v1154, %v1376
        %v1473 = vadd.f32 %v1156, %v1378
        %v1474 = vadd.f32 %v1158, %v1380
        %v1475 = vadd.f32 %v1160, %v1382
        %v1476 = vadd.f32 %v1164, %v1386
        %v1477 = vadd.f32 %v1166, %v1388
        %v1478 = vadd.f32 %v1168, %v1390
        %v1479 = vadd.f32 %v1170, %v1392
        %v1480 = vadd.f32 %v1174, %v1396
        %v1481 = vadd.f32 %v1176, %v1398
        %v1482 = vadd.f32 %v1178, %v1400
        %v1483 = vadd.f32 %v1180, %v1402
        %v1484 = vadd.f32 %v1184, %v1406
        %v1485 = vadd.f32 %v1186, %v1408
        %v1486 = vadd.f32 %v1188, %v1410
        %v1487 = vadd.f32 %v1190, %v1412
        %v1488 = vadd.f32 %v1194, %v1416
        %v1489 = vadd.f32 %v1196, %v1418
        %v1490 = vadd.f32 %v1198, %v1420
        %v1491 = vadd.f32 %v1200, %v1422
        %v1492 = vadd.f32 %v1204, %v1426
        %v1493 = vadd.f32 %v1206, %v1428
        %v1494 = vadd.f32 %v1208, %v1430
        %v1495 = vadd.f32 %v1210, %v1432
        %v1496 = vadd.f32 %v1214, %v1436
        %v1497 = vadd.f32 %v1216, %v1438
        %v1498 = vadd.f32 %v1218, %v1440
        %v1499 = vadd.f32 %v1220, %v1442
        %v1500 = vadd.f32 %v1224, %v1446
        %v1501 = vadd.f32 %v1226, %v1448
        %v1502 = vadd.f32 %v1228, %v1450
        %v1503 = vadd.f32 %v1230, %v1452
        %v1504 = vadd.f32 %v1234, %v1456
        %v1505 = vadd.f32 %v1236, %v1458
        %v1506 = vadd.f32 %v1238, %v1460
        %v1507 = vadd.f32 %v1240, %v1462
        %v1508 = vld [vmem:[%s344 + $0x44] sm:$0xff]
        %v1509 = vld [vmem:[%s344 + $0x4c] sm:$0xff]
        %v1510 = vld [vmem:[%s344 + $0x54] sm:$0xff]
        %v1511 = vld [vmem:[%s344 + $0x5c] sm:$0xff]
        %v1512 = vld [vmem:[%s344 + $0x64] sm:$0xff]
        %v1513 = vld [vmem:[%s344 + $0x6c] sm:$0xff]
        %v1514 = vld [vmem:[%s344 + $0x74] sm:$0xff]
        %v1515 = vld [vmem:[%s344 + $0x7c] sm:$0xff]
        %v1516 = vld [vmem:[%s344 + $0x84] sm:$0xff]
        %v1517 = vld [vmem:[%s344 + $0x8c] sm:$0xff]
        %v1518 = vld [vmem:[%s344 + $0x94] sm:$0xff]
        %v1519 = vld [vmem:[%s344 + $0x9c] sm:$0xff]
        %v1520 = vld [vmem:[%s344 + $0xa4] sm:$0xff]
        %v1521 = vld [vmem:[%s344 + $0xac] sm:$0xff]
        %v1522 = vld [vmem:[%s344 + $0xb4] sm:$0xff]
        %v1523 = vld [vmem:[%s344 + $0xbc] sm:$0xff]
        %v1524 = vld [vmem:[%s344 + $0xc4] sm:$0xff]
        %v1525 = vld [vmem:[%s344 + $0xcc] sm:$0xff]
        %v1526 = vld [vmem:[%s344 + $0xd4] sm:$0xff]
        %v1527 = vld [vmem:[%s344 + $0xdc] sm:$0xff]
        %v1528 = vld [vmem:[%s344 + $0xe4] sm:$0xff]
        %v1529 = vld [vmem:[%s344 + $0xec] sm:$0xff]
        %v1530 = vpack.c.bf16 %v1509, %v1508
        %v1531 = vpack.c.bf16 %v1511, %v1510
        %v1532 = vpack.c.bf16 %v1513, %v1512
        %v1533 = vpack.c.bf16 %v1515, %v1514
        %v1534 = vpack.c.bf16 %v1517, %v1516
        %v1535 = vpack.c.bf16 %v1519, %v1518
        %v1536 = vpack.c.bf16 %v1521, %v1520
        %v1537 = vpack.c.bf16 %v1523, %v1522
        %v1538 = vpack.c.bf16 %v1525, %v1524
        %v1539 = vpack.c.bf16 %v1527, %v1526
        %v1540 = vpack.c.bf16 %v1529, %v1528
        %s1541 = scalar_lea.vmem %s2, 24
        %v1542 = vld [vmem:[%s1541] sm:$0xff]
        %v1544 = vunpack.c.l.b16 %v1542
        %v1545 = vunpack.c.h.b16 %v1542
        %v1546 = vpack.c.b16 %v1544, %v1544
        %v1547 = vpack.c.b16 %v1545, %v1545
        %v1549 = vsel %vm391, %v1530, 0
        %v1552 = vsel %vm391, %v1531, 0
        %v1555 = vsel %vm391, %v1532, 0
        %v1558 = vsel %vm391, %v1533, 0
        %v1561 = vsel %vm391, %v1534, 0
        %v1564 = vsel %vm391, %v1535, 0
        %v1567 = vsel %vm391, %v1536, 0
        %v1570 = vsel %vm391, %v1537, 0
        %v1573 = vsel %vm391, %v1538, 0
        %v1576 = vsel %vm391, %v1539, 0
        %v1579 = vsel %vm391, %v1540, 0
        %v1582 = vsel %vm425, %v1546, 0
        %v1585 = vsel %vm425, %v1547, 0
        %1587 = vmatprep.subr.bf16.mxu0 0
        %1588 = vmatpush1.bf16.msra.mxu0 0
        %1589 = vmatprep.subr.bf16.mxu0 0
        %1590 = vmatpush1.bf16.msra.mxu0 0
        %1591 = vmatprep.subr.bf16.mxu0 0
        %1592 = vmatpush1.bf16.msra.mxu0 0
        %1593 = vmatprep.subr.bf16.mxu0 0
        %1594 = vmatpush1.bf16.msra.mxu0 0
        %1595 = vmatprep.subr.bf16.mxu0 0
        %1596 = vmatpush1.bf16.msra.mxu0 0
        %1597 = vmatprep.subr.bf16.mxu0 0
        %1598 = vmatpush1.bf16.msra.mxu0 0
        %1599 = vmatprep.subr.bf16.mxu0 0
        %1600 = vmatpush1.bf16.msra.mxu0 0
        %1601 = vmatprep.subr.bf16.mxu0 %v1585
        %1602 = vmatpush1.bf16.msra.mxu0 %v1582
        %1603 = vmatprep.subr.bf16.mxu0 0
        %1604 = vmatpush2.bf16.msra.mxu0 0
        %1605 = vmatprep.subr.bf16.mxu0 0
        %1606 = vmatpush2.bf16.msra.mxu0 0
        %1607 = vmatprep.subr.bf16.mxu0 0
        %1608 = vmatpush2.bf16.msra.mxu0 0
        %1609 = vmatprep.subr.bf16.mxu0 0
        %1610 = vmatpush2.bf16.msra.mxu0 0
        %1611 = vmatprep.subr.bf16.mxu0 0
        %1612 = vmatpush2.bf16.msra.mxu0 0
        %1613 = vmatprep.subr.bf16.mxu0 0
        %1614 = vmatpush2.bf16.msra.mxu0 0
        %1615 = vmatprep.subr.bf16.mxu0 0
        %1616 = vmatpush2.bf16.msra.mxu0 0
        %1617 = vmatprep.subr.bf16.mxu0 0
        %1618 = vmatpush2.bf16.msra.mxu0 0
        %1619 = vmatprep.mubr.bf16.mxu0 0
        %1620 = vmatmul.mubr.bf16.gmra.mxu0 %v1549
        %v1621 = vpop.f32.mrf.mxu0
        %v1622 = vadd.f32 0.0, %v1621
        %v1623 = vpop.f32.mrf.mxu0
        %v1624 = vadd.f32 0.0, %v1623
        %v1625 = vpop.f32.mrf.mxu0
        %v1626 = vadd.f32 0.0, %v1625
        %v1627 = vpop.f32.mrf.mxu0
        %v1628 = vadd.f32 0.0, %v1627
        %1629 = vmatprep.mubr.bf16.mxu0 0
        %1630 = vmatmul.mubr.bf16.gmra.mxu0 %v1552
        %v1631 = vpop.f32.mrf.mxu0
        %v1632 = vadd.f32 0.0, %v1631
        %v1633 = vpop.f32.mrf.mxu0
        %v1634 = vadd.f32 0.0, %v1633
        %v1635 = vpop.f32.mrf.mxu0
        %v1636 = vadd.f32 0.0, %v1635
        %v1637 = vpop.f32.mrf.mxu0
        %v1638 = vadd.f32 0.0, %v1637
        %1639 = vmatprep.mubr.bf16.mxu0 0
        %1640 = vmatmul.mubr.bf16.gmra.mxu0 %v1555
        %v1641 = vpop.f32.mrf.mxu0
        %v1642 = vadd.f32 0.0, %v1641
        %v1643 = vpop.f32.mrf.mxu0
        %v1644 = vadd.f32 0.0, %v1643
        %v1645 = vpop.f32.mrf.mxu0
        %v1646 = vadd.f32 0.0, %v1645
        %v1647 = vpop.f32.mrf.mxu0
        %v1648 = vadd.f32 0.0, %v1647
        %1649 = vmatprep.mubr.bf16.mxu0 0
        %1650 = vmatmul.mubr.bf16.gmra.mxu0 %v1558
        %v1651 = vpop.f32.mrf.mxu0
        %v1652 = vadd.f32 0.0, %v1651
        %v1653 = vpop.f32.mrf.mxu0
        %v1654 = vadd.f32 0.0, %v1653
        %v1655 = vpop.f32.mrf.mxu0
        %v1656 = vadd.f32 0.0, %v1655
        %v1657 = vpop.f32.mrf.mxu0
        %v1658 = vadd.f32 0.0, %v1657
        %1659 = vmatprep.mubr.bf16.mxu0 0
        %1660 = vmatmul.mubr.bf16.gmra.mxu0 %v1561
        %v1661 = vpop.f32.mrf.mxu0
        %v1662 = vadd.f32 0.0, %v1661
        %v1663 = vpop.f32.mrf.mxu0
        %v1664 = vadd.f32 0.0, %v1663
        %v1665 = vpop.f32.mrf.mxu0
        %v1666 = vadd.f32 0.0, %v1665
        %v1667 = vpop.f32.mrf.mxu0
        %v1668 = vadd.f32 0.0, %v1667
        %1669 = vmatprep.mubr.bf16.mxu0 0
        %1670 = vmatmul.mubr.bf16.gmra.mxu0 %v1564
        %v1671 = vpop.f32.mrf.mxu0
        %v1672 = vadd.f32 0.0, %v1671
        %v1673 = vpop.f32.mrf.mxu0
        %v1674 = vadd.f32 0.0, %v1673
        %v1675 = vpop.f32.mrf.mxu0
        %v1676 = vadd.f32 0.0, %v1675
        %v1677 = vpop.f32.mrf.mxu0
        %v1678 = vadd.f32 0.0, %v1677
        %1679 = vmatprep.mubr.bf16.mxu0 0
        %1680 = vmatmul.mubr.bf16.gmra.mxu0 %v1567
        %v1681 = vpop.f32.mrf.mxu0
        %v1682 = vadd.f32 0.0, %v1681
        %v1683 = vpop.f32.mrf.mxu0
        %v1684 = vadd.f32 0.0, %v1683
        %v1685 = vpop.f32.mrf.mxu0
        %v1686 = vadd.f32 0.0, %v1685
        %v1687 = vpop.f32.mrf.mxu0
        %v1688 = vadd.f32 0.0, %v1687
        %1689 = vmatprep.mubr.bf16.mxu0 0
        %1690 = vmatmul.mubr.bf16.gmra.mxu0 %v1570
        %v1691 = vpop.f32.mrf.mxu0
        %v1692 = vadd.f32 0.0, %v1691
        %v1693 = vpop.f32.mrf.mxu0
        %v1694 = vadd.f32 0.0, %v1693
        %v1695 = vpop.f32.mrf.mxu0
        %v1696 = vadd.f32 0.0, %v1695
        %v1697 = vpop.f32.mrf.mxu0
        %v1698 = vadd.f32 0.0, %v1697
        %1699 = vmatprep.mubr.bf16.mxu0 0
        %1700 = vmatmul.mubr.bf16.gmra.mxu0 %v1573
        %v1701 = vpop.f32.mrf.mxu0
        %v1702 = vadd.f32 0.0, %v1701
        %v1703 = vpop.f32.mrf.mxu0
        %v1704 = vadd.f32 0.0, %v1703
        %v1705 = vpop.f32.mrf.mxu0
        %v1706 = vadd.f32 0.0, %v1705
        %v1707 = vpop.f32.mrf.mxu0
        %v1708 = vadd.f32 0.0, %v1707
        %1709 = vmatprep.mubr.bf16.mxu0 0
        %1710 = vmatmul.mubr.bf16.gmra.mxu0 %v1576
        %v1711 = vpop.f32.mrf.mxu0
        %v1712 = vadd.f32 0.0, %v1711
        %v1713 = vpop.f32.mrf.mxu0
        %v1714 = vadd.f32 0.0, %v1713
        %v1715 = vpop.f32.mrf.mxu0
        %v1716 = vadd.f32 0.0, %v1715
        %v1717 = vpop.f32.mrf.mxu0
        %v1718 = vadd.f32 0.0, %v1717
        %1719 = vmatprep.mubr.bf16.mxu0 0
        %1720 = vmatmul.mubr.bf16.gmra.mxu0 %v1579
        %v1721 = vpop.f32.mrf.mxu0
        %v1722 = vadd.f32 0.0, %v1721
        %v1723 = vpop.f32.mrf.mxu0
        %v1724 = vadd.f32 0.0, %v1723
        %v1725 = vpop.f32.mrf.mxu0
        %v1726 = vadd.f32 0.0, %v1725
        %v1727 = vpop.f32.mrf.mxu0
        %v1728 = vadd.f32 0.0, %v1727
        %1729 = vdwg.mxu0
        %v1730 = vadd.f32 %v1464, %v1622
        %v1731 = vadd.f32 %v1465, %v1624
        %v1732 = vadd.f32 %v1466, %v1626
        %v1733 = vadd.f32 %v1467, %v1628
        %v1734 = vadd.f32 %v1468, %v1632
        %v1735 = vadd.f32 %v1469, %v1634
        %v1736 = vadd.f32 %v1470, %v1636
        %v1737 = vadd.f32 %v1471, %v1638
        %v1738 = vadd.f32 %v1472, %v1642
        %v1739 = vadd.f32 %v1473, %v1644
        %v1740 = vadd.f32 %v1474, %v1646
        %v1741 = vadd.f32 %v1475, %v1648
        %v1742 = vadd.f32 %v1476, %v1652
        %v1743 = vadd.f32 %v1477, %v1654
        %v1744 = vadd.f32 %v1478, %v1656
        %v1745 = vadd.f32 %v1479, %v1658
        %v1746 = vadd.f32 %v1480, %v1662
        %v1747 = vadd.f32 %v1481, %v1664
        %v1748 = vadd.f32 %v1482, %v1666
        %v1749 = vadd.f32 %v1483, %v1668
        %v1750 = vadd.f32 %v1484, %v1672
        %v1751 = vadd.f32 %v1485, %v1674
        %v1752 = vadd.f32 %v1486, %v1676
        %v1753 = vadd.f32 %v1487, %v1678
        %v1754 = vadd.f32 %v1488, %v1682
        %v1755 = vadd.f32 %v1489, %v1684
        %v1756 = vadd.f32 %v1490, %v1686
        %v1757 = vadd.f32 %v1491, %v1688
        %v1758 = vadd.f32 %v1492, %v1692
        %v1759 = vadd.f32 %v1493, %v1694
        %v1760 = vadd.f32 %v1494, %v1696
        %v1761 = vadd.f32 %v1495, %v1698
        %v1762 = vadd.f32 %v1496, %v1702
        %v1763 = vadd.f32 %v1497, %v1704
        %v1764 = vadd.f32 %v1498, %v1706
        %v1765 = vadd.f32 %v1499, %v1708
        %v1766 = vadd.f32 %v1500, %v1712
        %v1767 = vadd.f32 %v1501, %v1714
        %v1768 = vadd.f32 %v1502, %v1716
        %v1769 = vadd.f32 %v1503, %v1718
        %v1770 = vadd.f32 %v1504, %v1722
        %v1771 = vadd.f32 %v1505, %v1724
        %v1772 = vadd.f32 %v1506, %v1726
        %v1773 = vadd.f32 %v1507, %v1728
        %s1774 = scalar_lea.vmem %s2, 32
        %v1775 = vld [vmem:[%s1774] sm:$0xff]
        %v1777 = vunpack.c.l.b16 %v1775
        %v1778 = vunpack.c.h.b16 %v1775
        %v1779 = vpack.c.b16 %v1777, %v1777
        %v1780 = vpack.c.b16 %v1778, %v1778
        %v1782 = vsel %vm425, %v1779, 0
        %v1785 = vsel %vm425, %v1780, 0
        %1787 = vmatprep.subr.bf16.mxu0 0
        %1788 = vmatpush1.bf16.msra.mxu0 0
        %1789 = vmatprep.subr.bf16.mxu0 0
        %1790 = vmatpush1.bf16.msra.mxu0 0
        %1791 = vmatprep.subr.bf16.mxu0 0
        %1792 = vmatpush1.bf16.msra.mxu0 0
        %1793 = vmatprep.subr.bf16.mxu0 0
        %1794 = vmatpush1.bf16.msra.mxu0 0
        %1795 = vmatprep.subr.bf16.mxu0 0
        %1796 = vmatpush1.bf16.msra.mxu0 0
        %1797 = vmatprep.subr.bf16.mxu0 0
        %1798 = vmatpush1.bf16.msra.mxu0 0
        %1799 = vmatprep.subr.bf16.mxu0 0
        %1800 = vmatpush1.bf16.msra.mxu0 0
        %1801 = vmatprep.subr.bf16.mxu0 %v1785
        %1802 = vmatpush1.bf16.msra.mxu0 %v1782
        %1803 = vmatprep.subr.bf16.mxu0 0
        %1804 = vmatpush2.bf16.msra.mxu0 0
        %1805 = vmatprep.subr.bf16.mxu0 0
        %1806 = vmatpush2.bf16.msra.mxu0 0
        %1807 = vmatprep.subr.bf16.mxu0 0
        %1808 = vmatpush2.bf16.msra.mxu0 0
        %1809 = vmatprep.subr.bf16.mxu0 0
        %1810 = vmatpush2.bf16.msra.mxu0 0
        %1811 = vmatprep.subr.bf16.mxu0 0
        %1812 = vmatpush2.bf16.msra.mxu0 0
        %1813 = vmatprep.subr.bf16.mxu0 0
        %1814 = vmatpush2.bf16.msra.mxu0 0
        %1815 = vmatprep.subr.bf16.mxu0 0
        %1816 = vmatpush2.bf16.msra.mxu0 0
        %1817 = vmatprep.subr.bf16.mxu0 0
        %1818 = vmatpush2.bf16.msra.mxu0 0
        %1819 = vmatprep.mubr.bf16.mxu0 0
        %1820 = vmatmul.mubr.bf16.gmra.mxu0 %v393
        %v1821 = vpop.f32.mrf.mxu0
        %v1822 = vadd.f32 0.0, %v1821
        %v1823 = vpop.f32.mrf.mxu0
        %v1824 = vadd.f32 0.0, %v1823
        %v1825 = vpop.f32.mrf.mxu0
        %v1826 = vadd.f32 0.0, %v1825
        %v1827 = vpop.f32.mrf.mxu0
        %v1828 = vadd.f32 0.0, %v1827
        %1829 = vmatprep.mubr.bf16.mxu0 0
        %1830 = vmatmul.mubr.bf16.gmra.mxu0 %v396
        %v1831 = vpop.f32.mrf.mxu0
        %v1832 = vadd.f32 0.0, %v1831
        %v1833 = vpop.f32.mrf.mxu0
        %v1834 = vadd.f32 0.0, %v1833
        %v1835 = vpop.f32.mrf.mxu0
        %v1836 = vadd.f32 0.0, %v1835
        %v1837 = vpop.f32.mrf.mxu0
        %v1838 = vadd.f32 0.0, %v1837
        %1839 = vmatprep.mubr.bf16.mxu0 0
        %1840 = vmatmul.mubr.bf16.gmra.mxu0 %v399
        %v1841 = vpop.f32.mrf.mxu0
        %v1842 = vadd.f32 0.0, %v1841
        %v1843 = vpop.f32.mrf.mxu0
        %v1844 = vadd.f32 0.0, %v1843
        %v1845 = vpop.f32.mrf.mxu0
        %v1846 = vadd.f32 0.0, %v1845
        %v1847 = vpop.f32.mrf.mxu0
        %v1848 = vadd.f32 0.0, %v1847
        %1849 = vmatprep.mubr.bf16.mxu0 0
        %1850 = vmatmul.mubr.bf16.gmra.mxu0 %v402
        %v1851 = vpop.f32.mrf.mxu0
        %v1852 = vadd.f32 0.0, %v1851
        %v1853 = vpop.f32.mrf.mxu0
        %v1854 = vadd.f32 0.0, %v1853
        %v1855 = vpop.f32.mrf.mxu0
        %v1856 = vadd.f32 0.0, %v1855
        %v1857 = vpop.f32.mrf.mxu0
        %v1858 = vadd.f32 0.0, %v1857
        %1859 = vmatprep.mubr.bf16.mxu0 0
        %1860 = vmatmul.mubr.bf16.gmra.mxu0 %v405
        %v1861 = vpop.f32.mrf.mxu0
        %v1862 = vadd.f32 0.0, %v1861
        %v1863 = vpop.f32.mrf.mxu0
        %v1864 = vadd.f32 0.0, %v1863
        %v1865 = vpop.f32.mrf.mxu0
        %v1866 = vadd.f32 0.0, %v1865
        %v1867 = vpop.f32.mrf.mxu0
        %v1868 = vadd.f32 0.0, %v1867
        %1869 = vmatprep.mubr.bf16.mxu0 0
        %1870 = vmatmul.mubr.bf16.gmra.mxu0 %v408
        %v1871 = vpop.f32.mrf.mxu0
        %v1872 = vadd.f32 0.0, %v1871
        %v1873 = vpop.f32.mrf.mxu0
        %v1874 = vadd.f32 0.0, %v1873
        %v1875 = vpop.f32.mrf.mxu0
        %v1876 = vadd.f32 0.0, %v1875
        %v1877 = vpop.f32.mrf.mxu0
        %v1878 = vadd.f32 0.0, %v1877
        %1879 = vmatprep.mubr.bf16.mxu0 0
        %1880 = vmatmul.mubr.bf16.gmra.mxu0 %v411
        %v1881 = vpop.f32.mrf.mxu0
        %v1882 = vadd.f32 0.0, %v1881
        %v1883 = vpop.f32.mrf.mxu0
        %v1884 = vadd.f32 0.0, %v1883
        %v1885 = vpop.f32.mrf.mxu0
        %v1886 = vadd.f32 0.0, %v1885
        %v1887 = vpop.f32.mrf.mxu0
        %v1888 = vadd.f32 0.0, %v1887
        %1889 = vmatprep.mubr.bf16.mxu0 0
        %1890 = vmatmul.mubr.bf16.gmra.mxu0 %v414
        %v1891 = vpop.f32.mrf.mxu0
        %v1892 = vadd.f32 0.0, %v1891
        %v1893 = vpop.f32.mrf.mxu0
        %v1894 = vadd.f32 0.0, %v1893
        %v1895 = vpop.f32.mrf.mxu0
        %v1896 = vadd.f32 0.0, %v1895
        %v1897 = vpop.f32.mrf.mxu0
        %v1898 = vadd.f32 0.0, %v1897
        %1899 = vmatprep.mubr.bf16.mxu0 0
        %1900 = vmatmul.mubr.bf16.gmra.mxu0 %v417
        %v1901 = vpop.f32.mrf.mxu0
        %v1902 = vadd.f32 0.0, %v1901
        %v1903 = vpop.f32.mrf.mxu0
        %v1904 = vadd.f32 0.0, %v1903
        %v1905 = vpop.f32.mrf.mxu0
        %v1906 = vadd.f32 0.0, %v1905
        %v1907 = vpop.f32.mrf.mxu0
        %v1908 = vadd.f32 0.0, %v1907
        %1909 = vmatprep.mubr.bf16.mxu0 0
        %1910 = vmatmul.mubr.bf16.gmra.mxu0 %v420
        %v1911 = vpop.f32.mrf.mxu0
        %v1912 = vadd.f32 0.0, %v1911
        %v1913 = vpop.f32.mrf.mxu0
        %v1914 = vadd.f32 0.0, %v1913
        %v1915 = vpop.f32.mrf.mxu0
        %v1916 = vadd.f32 0.0, %v1915
        %v1917 = vpop.f32.mrf.mxu0
        %v1918 = vadd.f32 0.0, %v1917
        %1919 = vmatprep.mubr.bf16.mxu0 0
        %1920 = vmatmul.mubr.bf16.gmra.mxu0 %v423
        %v1921 = vpop.f32.mrf.mxu0
        %v1922 = vadd.f32 0.0, %v1921
        %v1923 = vpop.f32.mrf.mxu0
        %v1924 = vadd.f32 0.0, %v1923
        %v1925 = vpop.f32.mrf.mxu0
        %v1926 = vadd.f32 0.0, %v1925
        %v1927 = vpop.f32.mrf.mxu0
        %v1928 = vadd.f32 0.0, %v1927
        %1929 = vdwg.mxu0
        %v1930 = vadd.f32 %v1730, %v1822
        %v1931 = vadd.f32 %v1731, %v1824
        %v1932 = vadd.f32 %v1732, %v1826
        %v1933 = vadd.f32 %v1733, %v1828
        %v1934 = vadd.f32 %v1734, %v1832
        %v1935 = vadd.f32 %v1735, %v1834
        %v1936 = vadd.f32 %v1736, %v1836
        %v1937 = vadd.f32 %v1737, %v1838
        %v1938 = vadd.f32 %v1738, %v1842
        %v1939 = vadd.f32 %v1739, %v1844
        %v1940 = vadd.f32 %v1740, %v1846
        %v1941 = vadd.f32 %v1741, %v1848
        %v1942 = vadd.f32 %v1742, %v1852
        %v1943 = vadd.f32 %v1743, %v1854
        %v1944 = vadd.f32 %v1744, %v1856
        %v1945 = vadd.f32 %v1745, %v1858
        %v1946 = vadd.f32 %v1746, %v1862
        %v1947 = vadd.f32 %v1747, %v1864
        %v1948 = vadd.f32 %v1748, %v1866
        %v1949 = vadd.f32 %v1749, %v1868
        %v1950 = vadd.f32 %v1750, %v1872
        %v1951 = vadd.f32 %v1751, %v1874
        %v1952 = vadd.f32 %v1752, %v1876
        %v1953 = vadd.f32 %v1753, %v1878
        %v1954 = vadd.f32 %v1754, %v1882
        %v1955 = vadd.f32 %v1755, %v1884
        %v1956 = vadd.f32 %v1756, %v1886
        %v1957 = vadd.f32 %v1757, %v1888
        %v1958 = vadd.f32 %v1758, %v1892
        %v1959 = vadd.f32 %v1759, %v1894
        %v1960 = vadd.f32 %v1760, %v1896
        %v1961 = vadd.f32 %v1761, %v1898
        %v1962 = vadd.f32 %v1762, %v1902
        %v1963 = vadd.f32 %v1763, %v1904
        %v1964 = vadd.f32 %v1764, %v1906
        %v1965 = vadd.f32 %v1765, %v1908
        %v1966 = vadd.f32 %v1766, %v1912
        %v1967 = vadd.f32 %v1767, %v1914
        %v1968 = vadd.f32 %v1768, %v1916
        %v1969 = vadd.f32 %v1769, %v1918
        %v1970 = vadd.f32 %v1770, %v1922
        %v1971 = vadd.f32 %v1771, %v1924
        %v1972 = vadd.f32 %v1772, %v1926
        %v1973 = vadd.f32 %v1773, %v1928
        %v1974 = vld [vmem:[%s344 + $0x46] sm:$0xff]
        %v1975 = vld [vmem:[%s344 + $0x4e] sm:$0xff]
        %v1976 = vld [vmem:[%s344 + $0x56] sm:$0xff]
        %v1977 = vld [vmem:[%s344 + $0x5e] sm:$0xff]
        %v1978 = vld [vmem:[%s344 + $0x66] sm:$0xff]
        %v1979 = vld [vmem:[%s344 + $0x6e] sm:$0xff]
        %v1980 = vld [vmem:[%s344 + $0x76] sm:$0xff]
        %v1981 = vld [vmem:[%s344 + $0x7e] sm:$0xff]
        %v1982 = vld [vmem:[%s344 + $0x86] sm:$0xff]
        %v1983 = vld [vmem:[%s344 + $0x8e] sm:$0xff]
        %v1984 = vld [vmem:[%s344 + $0x96] sm:$0xff]
        %v1985 = vld [vmem:[%s344 + $0x9e] sm:$0xff]
        %v1986 = vld [vmem:[%s344 + $0xa6] sm:$0xff]
        %v1987 = vld [vmem:[%s344 + $0xae] sm:$0xff]
        %v1988 = vld [vmem:[%s344 + $0xb6] sm:$0xff]
        %v1989 = vld [vmem:[%s344 + $0xbe] sm:$0xff]
        %v1990 = vld [vmem:[%s344 + $0xc6] sm:$0xff]
        %v1991 = vld [vmem:[%s344 + $0xce] sm:$0xff]
        %v1992 = vld [vmem:[%s344 + $0xd6] sm:$0xff]
        %v1993 = vld [vmem:[%s344 + $0xde] sm:$0xff]
        %v1994 = vld [vmem:[%s344 + $0xe6] sm:$0xff]
        %v1995 = vld [vmem:[%s344 + $0xee] sm:$0xff]
        %v1996 = vpack.c.bf16 %v1975, %v1974
        %v1997 = vpack.c.bf16 %v1977, %v1976
        %v1998 = vpack.c.bf16 %v1979, %v1978
        %v1999 = vpack.c.bf16 %v1981, %v1980
        %v2000 = vpack.c.bf16 %v1983, %v1982
        %v2001 = vpack.c.bf16 %v1985, %v1984
        %v2002 = vpack.c.bf16 %v1987, %v1986
        %v2003 = vpack.c.bf16 %v1989, %v1988
        %v2004 = vpack.c.bf16 %v1991, %v1990
        %v2005 = vpack.c.bf16 %v1993, %v1992
        %v2006 = vpack.c.bf16 %v1995, %v1994
        %s2007 = scalar_lea.vmem %s2, 40
        %v2008 = vld [vmem:[%s2007] sm:$0xff]
        %v2010 = vunpack.c.l.b16 %v2008
        %v2011 = vunpack.c.h.b16 %v2008
        %v2012 = vpack.c.b16 %v2010, %v2010
        %v2013 = vpack.c.b16 %v2011, %v2011
        %v2015 = vsel %vm391, %v1996, 0
        %v2018 = vsel %vm391, %v1997, 0
        %v2021 = vsel %vm391, %v1998, 0
        %v2024 = vsel %vm391, %v1999, 0
        %v2027 = vsel %vm391, %v2000, 0
        %v2030 = vsel %vm391, %v2001, 0
        %v2033 = vsel %vm391, %v2002, 0
        %v2036 = vsel %vm391, %v2003, 0
        %v2039 = vsel %vm391, %v2004, 0
        %v2042 = vsel %vm391, %v2005, 0
        %v2045 = vsel %vm391, %v2006, 0
        %v2048 = vsel %vm425, %v2012, 0
        %v2051 = vsel %vm425, %v2013, 0
        %2053 = vmatprep.subr.bf16.mxu0 0
        %2054 = vmatpush1.bf16.msra.mxu0 0
        %2055 = vmatprep.subr.bf16.mxu0 0
        %2056 = vmatpush1.bf16.msra.mxu0 0
        %2057 = vmatprep.subr.bf16.mxu0 0
        %2058 = vmatpush1.bf16.msra.mxu0 0
        %2059 = vmatprep.subr.bf16.mxu0 0
        %2060 = vmatpush1.bf16.msra.mxu0 0
        %2061 = vmatprep.subr.bf16.mxu0 0
        %2062 = vmatpush1.bf16.msra.mxu0 0
        %2063 = vmatprep.subr.bf16.mxu0 0
        %2064 = vmatpush1.bf16.msra.mxu0 0
        %2065 = vmatprep.subr.bf16.mxu0 0
        %2066 = vmatpush1.bf16.msra.mxu0 0
        %2067 = vmatprep.subr.bf16.mxu0 %v2051
        %2068 = vmatpush1.bf16.msra.mxu0 %v2048
        %2069 = vmatprep.subr.bf16.mxu0 0
        %2070 = vmatpush2.bf16.msra.mxu0 0
        %2071 = vmatprep.subr.bf16.mxu0 0
        %2072 = vmatpush2.bf16.msra.mxu0 0
        %2073 = vmatprep.subr.bf16.mxu0 0
        %2074 = vmatpush2.bf16.msra.mxu0 0
        %2075 = vmatprep.subr.bf16.mxu0 0
        %2076 = vmatpush2.bf16.msra.mxu0 0
        %2077 = vmatprep.subr.bf16.mxu0 0
        %2078 = vmatpush2.bf16.msra.mxu0 0
        %2079 = vmatprep.subr.bf16.mxu0 0
        %2080 = vmatpush2.bf16.msra.mxu0 0
        %2081 = vmatprep.subr.bf16.mxu0 0
        %2082 = vmatpush2.bf16.msra.mxu0 0
        %2083 = vmatprep.subr.bf16.mxu0 0
        %2084 = vmatpush2.bf16.msra.mxu0 0
        %2085 = vmatprep.mubr.bf16.mxu0 0
        %2086 = vmatmul.mubr.bf16.gmra.mxu0 %v2015
        %v2087 = vpop.f32.mrf.mxu0
        %v2088 = vadd.f32 0.0, %v2087
        %v2089 = vpop.f32.mrf.mxu0
        %v2090 = vadd.f32 0.0, %v2089
        %v2091 = vpop.f32.mrf.mxu0
        %v2092 = vadd.f32 0.0, %v2091
        %v2093 = vpop.f32.mrf.mxu0
        %v2094 = vadd.f32 0.0, %v2093
        %2095 = vmatprep.mubr.bf16.mxu0 0
        %2096 = vmatmul.mubr.bf16.gmra.mxu0 %v2018
        %v2097 = vpop.f32.mrf.mxu0
        %v2098 = vadd.f32 0.0, %v2097
        %v2099 = vpop.f32.mrf.mxu0
        %v2100 = vadd.f32 0.0, %v2099
        %v2101 = vpop.f32.mrf.mxu0
        %v2102 = vadd.f32 0.0, %v2101
        %v2103 = vpop.f32.mrf.mxu0
        %v2104 = vadd.f32 0.0, %v2103
        %2105 = vmatprep.mubr.bf16.mxu0 0
        %2106 = vmatmul.mubr.bf16.gmra.mxu0 %v2021
        %v2107 = vpop.f32.mrf.mxu0
        %v2108 = vadd.f32 0.0, %v2107
        %v2109 = vpop.f32.mrf.mxu0
        %v2110 = vadd.f32 0.0, %v2109
        %v2111 = vpop.f32.mrf.mxu0
        %v2112 = vadd.f32 0.0, %v2111
        %v2113 = vpop.f32.mrf.mxu0
        %v2114 = vadd.f32 0.0, %v2113
        %2115 = vmatprep.mubr.bf16.mxu0 0
        %2116 = vmatmul.mubr.bf16.gmra.mxu0 %v2024
        %v2117 = vpop.f32.mrf.mxu0
        %v2118 = vadd.f32 0.0, %v2117
        %v2119 = vpop.f32.mrf.mxu0
        %v2120 = vadd.f32 0.0, %v2119
        %v2121 = vpop.f32.mrf.mxu0
        %v2122 = vadd.f32 0.0, %v2121
        %v2123 = vpop.f32.mrf.mxu0
        %v2124 = vadd.f32 0.0, %v2123
        %2125 = vmatprep.mubr.bf16.mxu0 0
        %2126 = vmatmul.mubr.bf16.gmra.mxu0 %v2027
        %v2127 = vpop.f32.mrf.mxu0
        %v2128 = vadd.f32 0.0, %v2127
        %v2129 = vpop.f32.mrf.mxu0
        %v2130 = vadd.f32 0.0, %v2129
        %v2131 = vpop.f32.mrf.mxu0
        %v2132 = vadd.f32 0.0, %v2131
        %v2133 = vpop.f32.mrf.mxu0
        %v2134 = vadd.f32 0.0, %v2133
        %2135 = vmatprep.mubr.bf16.mxu0 0
        %2136 = vmatmul.mubr.bf16.gmra.mxu0 %v2030
        %v2137 = vpop.f32.mrf.mxu0
        %v2138 = vadd.f32 0.0, %v2137
        %v2139 = vpop.f32.mrf.mxu0
        %v2140 = vadd.f32 0.0, %v2139
        %v2141 = vpop.f32.mrf.mxu0
        %v2142 = vadd.f32 0.0, %v2141
        %v2143 = vpop.f32.mrf.mxu0
        %v2144 = vadd.f32 0.0, %v2143
        %2145 = vmatprep.mubr.bf16.mxu0 0
        %2146 = vmatmul.mubr.bf16.gmra.mxu0 %v2033
        %v2147 = vpop.f32.mrf.mxu0
        %v2148 = vadd.f32 0.0, %v2147
        %v2149 = vpop.f32.mrf.mxu0
        %v2150 = vadd.f32 0.0, %v2149
        %v2151 = vpop.f32.mrf.mxu0
        %v2152 = vadd.f32 0.0, %v2151
        %v2153 = vpop.f32.mrf.mxu0
        %v2154 = vadd.f32 0.0, %v2153
        %2155 = vmatprep.mubr.bf16.mxu0 0
        %2156 = vmatmul.mubr.bf16.gmra.mxu0 %v2036
        %v2157 = vpop.f32.mrf.mxu0
        %v2158 = vadd.f32 0.0, %v2157
        %v2159 = vpop.f32.mrf.mxu0
        %v2160 = vadd.f32 0.0, %v2159
        %v2161 = vpop.f32.mrf.mxu0
        %v2162 = vadd.f32 0.0, %v2161
        %v2163 = vpop.f32.mrf.mxu0
        %v2164 = vadd.f32 0.0, %v2163
        %2165 = vmatprep.mubr.bf16.mxu0 0
        %2166 = vmatmul.mubr.bf16.gmra.mxu0 %v2039
        %v2167 = vpop.f32.mrf.mxu0
        %v2168 = vadd.f32 0.0, %v2167
        %v2169 = vpop.f32.mrf.mxu0
        %v2170 = vadd.f32 0.0, %v2169
        %v2171 = vpop.f32.mrf.mxu0
        %v2172 = vadd.f32 0.0, %v2171
        %v2173 = vpop.f32.mrf.mxu0
        %v2174 = vadd.f32 0.0, %v2173
        %2175 = vmatprep.mubr.bf16.mxu0 0
        %2176 = vmatmul.mubr.bf16.gmra.mxu0 %v2042
        %v2177 = vpop.f32.mrf.mxu0
        %v2178 = vadd.f32 0.0, %v2177
        %v2179 = vpop.f32.mrf.mxu0
        %v2180 = vadd.f32 0.0, %v2179
        %v2181 = vpop.f32.mrf.mxu0
        %v2182 = vadd.f32 0.0, %v2181
        %v2183 = vpop.f32.mrf.mxu0
        %v2184 = vadd.f32 0.0, %v2183
        %2185 = vmatprep.mubr.bf16.mxu0 0
        %2186 = vmatmul.mubr.bf16.gmra.mxu0 %v2045
        %v2187 = vpop.f32.mrf.mxu0
        %v2188 = vadd.f32 0.0, %v2187
        %v2189 = vpop.f32.mrf.mxu0
        %v2190 = vadd.f32 0.0, %v2189
        %v2191 = vpop.f32.mrf.mxu0
        %v2192 = vadd.f32 0.0, %v2191
        %v2193 = vpop.f32.mrf.mxu0
        %v2194 = vadd.f32 0.0, %v2193
        %2195 = vdwg.mxu0
        %v2196 = vadd.f32 %v1930, %v2088
        %v2197 = vadd.f32 %v1931, %v2090
        %v2198 = vadd.f32 %v1932, %v2092
        %v2199 = vadd.f32 %v1933, %v2094
        %v2200 = vadd.f32 %v1934, %v2098
        %v2201 = vadd.f32 %v1935, %v2100
        %v2202 = vadd.f32 %v1936, %v2102
        %v2203 = vadd.f32 %v1937, %v2104
        %v2204 = vadd.f32 %v1938, %v2108
        %v2205 = vadd.f32 %v1939, %v2110
        %v2206 = vadd.f32 %v1940, %v2112
        %v2207 = vadd.f32 %v1941, %v2114
        %v2208 = vadd.f32 %v1942, %v2118
        %v2209 = vadd.f32 %v1943, %v2120
        %v2210 = vadd.f32 %v1944, %v2122
        %v2211 = vadd.f32 %v1945, %v2124
        %v2212 = vadd.f32 %v1946, %v2128
        %v2213 = vadd.f32 %v1947, %v2130
        %v2214 = vadd.f32 %v1948, %v2132
        %v2215 = vadd.f32 %v1949, %v2134
        %v2216 = vadd.f32 %v1950, %v2138
        %v2217 = vadd.f32 %v1951, %v2140
        %v2218 = vadd.f32 %v1952, %v2142
        %v2219 = vadd.f32 %v1953, %v2144
        %v2220 = vadd.f32 %v1954, %v2148
        %v2221 = vadd.f32 %v1955, %v2150
        %v2222 = vadd.f32 %v1956, %v2152
        %v2223 = vadd.f32 %v1957, %v2154
        %v2224 = vadd.f32 %v1958, %v2158
        %v2225 = vadd.f32 %v1959, %v2160
        %v2226 = vadd.f32 %v1960, %v2162
        %v2227 = vadd.f32 %v1961, %v2164
        %v2228 = vadd.f32 %v1962, %v2168
        %v2229 = vadd.f32 %v1963, %v2170
        %v2230 = vadd.f32 %v1964, %v2172
        %v2231 = vadd.f32 %v1965, %v2174
        %v2232 = vadd.f32 %v1966, %v2178
        %v2233 = vadd.f32 %v1967, %v2180
        %v2234 = vadd.f32 %v1968, %v2182
        %v2235 = vadd.f32 %v1969, %v2184
        %v2236 = vadd.f32 %v1970, %v2188
        %v2237 = vadd.f32 %v1971, %v2190
        %v2238 = vadd.f32 %v1972, %v2192
        %v2239 = vadd.f32 %v1973, %v2194
        %v2240 = vld [vmem:[%s344 + $0x5a] sm:$0xff]
        %v2241 = vld [vmem:[%s344 + $0x62] sm:$0xff]
        %v2242 = vld [vmem:[%s344 + $0x6a] sm:$0xff]
        %v2243 = vld [vmem:[%s344 + $0x72] sm:$0xff]
        %v2244 = vld [vmem:[%s344 + $0x7a] sm:$0xff]
        %v2245 = vld [vmem:[%s344 + $0x82] sm:$0xff]
        %v2246 = vld [vmem:[%s344 + $0x8a] sm:$0xff]
        %v2247 = vld [vmem:[%s344 + $0x92] sm:$0xff]
        %v2248 = vld [vmem:[%s344 + $0x9a] sm:$0xff]
        %v2249 = vld [vmem:[%s344 + $0xa2] sm:$0xff]
        %v2250 = vld [vmem:[%s344 + $0xaa] sm:$0xff]
        %v2251 = vld [vmem:[%s344 + $0xb2] sm:$0xff]
        %v2252 = vld [vmem:[%s344 + $0xba] sm:$0xff]
        %v2253 = vld [vmem:[%s344 + $0xc2] sm:$0xff]
        %v2254 = vld [vmem:[%s344 + $0xca] sm:$0xff]
        %v2255 = vld [vmem:[%s344 + $0xd2] sm:$0xff]
        %v2256 = vld [vmem:[%s344 + $0xda] sm:$0xff]
        %v2257 = vld [vmem:[%s344 + $0xe2] sm:$0xff]
        %v2258 = vld [vmem:[%s344 + $0xea] sm:$0xff]
        %v2259 = vld [vmem:[%s344 + $0xf2] sm:$0xff]
        %v2260 = vld [vmem:[%s344 + $0xfa] sm:$0xff]
        %v2261 = vld [vmem:[%s344 + $0x102] sm:$0xff]
        %v2262 = vpack.c.bf16 %v2241, %v2240
        %v2263 = vpack.c.bf16 %v2243, %v2242
        %v2264 = vpack.c.bf16 %v2245, %v2244
        %v2265 = vpack.c.bf16 %v2247, %v2246
        %v2266 = vpack.c.bf16 %v2249, %v2248
        %v2267 = vpack.c.bf16 %v2251, %v2250
        %v2268 = vpack.c.bf16 %v2253, %v2252
        %v2269 = vpack.c.bf16 %v2255, %v2254
        %v2270 = vpack.c.bf16 %v2257, %v2256
        %v2271 = vpack.c.bf16 %v2259, %v2258
        %v2272 = vpack.c.bf16 %v2261, %v2260
        %s2273 = scalar_lea.vmem %s2, 48
        %v2274 = vld [vmem:[%s2273] sm:$0xff]
        %v2276 = vunpack.c.l.b16 %v2274
        %v2277 = vunpack.c.h.b16 %v2274
        %v2278 = vpack.c.b16 %v2276, %v2276
        %v2279 = vpack.c.b16 %v2277, %v2277
        %v2281 = vsel %vm391, %v2262, 0
        %v2284 = vsel %vm391, %v2263, 0
        %v2287 = vsel %vm391, %v2264, 0
        %v2290 = vsel %vm391, %v2265, 0
        %v2293 = vsel %vm391, %v2266, 0
        %v2296 = vsel %vm391, %v2267, 0
        %v2299 = vsel %vm391, %v2268, 0
        %v2302 = vsel %vm391, %v2269, 0
        %v2305 = vsel %vm391, %v2270, 0
        %v2308 = vsel %vm391, %v2271, 0
        %v2311 = vsel %vm391, %v2272, 0
        %v2314 = vsel %vm425, %v2278, 0
        %v2317 = vsel %vm425, %v2279, 0
        %2319 = vmatprep.subr.bf16.mxu0 0
        %2320 = vmatpush1.bf16.msra.mxu0 0
        %2321 = vmatprep.subr.bf16.mxu0 0
        %2322 = vmatpush1.bf16.msra.mxu0 0
        %2323 = vmatprep.subr.bf16.mxu0 0
        %2324 = vmatpush1.bf16.msra.mxu0 0
        %2325 = vmatprep.subr.bf16.mxu0 0
        %2326 = vmatpush1.bf16.msra.mxu0 0
        %2327 = vmatprep.subr.bf16.mxu0 0
        %2328 = vmatpush1.bf16.msra.mxu0 0
        %2329 = vmatprep.subr.bf16.mxu0 0
        %2330 = vmatpush1.bf16.msra.mxu0 0
        %2331 = vmatprep.subr.bf16.mxu0 0
        %2332 = vmatpush1.bf16.msra.mxu0 0
        %2333 = vmatprep.subr.bf16.mxu0 %v2317
        %2334 = vmatpush1.bf16.msra.mxu0 %v2314
        %2335 = vmatprep.subr.bf16.mxu0 0
        %2336 = vmatpush2.bf16.msra.mxu0 0
        %2337 = vmatprep.subr.bf16.mxu0 0
        %2338 = vmatpush2.bf16.msra.mxu0 0
        %2339 = vmatprep.subr.bf16.mxu0 0
        %2340 = vmatpush2.bf16.msra.mxu0 0
        %2341 = vmatprep.subr.bf16.mxu0 0
        %2342 = vmatpush2.bf16.msra.mxu0 0
        %2343 = vmatprep.subr.bf16.mxu0 0
        %2344 = vmatpush2.bf16.msra.mxu0 0
        %2345 = vmatprep.subr.bf16.mxu0 0
        %2346 = vmatpush2.bf16.msra.mxu0 0
        %2347 = vmatprep.subr.bf16.mxu0 0
        %2348 = vmatpush2.bf16.msra.mxu0 0
        %2349 = vmatprep.subr.bf16.mxu0 0
        %2350 = vmatpush2.bf16.msra.mxu0 0
        %2351 = vmatprep.mubr.bf16.mxu0 0
        %2352 = vmatmul.mubr.bf16.gmra.mxu0 %v2281
        %v2353 = vpop.f32.mrf.mxu0
        %v2354 = vadd.f32 0.0, %v2353
        %v2355 = vpop.f32.mrf.mxu0
        %v2356 = vadd.f32 0.0, %v2355
        %v2357 = vpop.f32.mrf.mxu0
        %v2358 = vadd.f32 0.0, %v2357
        %v2359 = vpop.f32.mrf.mxu0
        %v2360 = vadd.f32 0.0, %v2359
        %2361 = vmatprep.mubr.bf16.mxu0 0
        %2362 = vmatmul.mubr.bf16.gmra.mxu0 %v2284
        %v2363 = vpop.f32.mrf.mxu0
        %v2364 = vadd.f32 0.0, %v2363
        %v2365 = vpop.f32.mrf.mxu0
        %v2366 = vadd.f32 0.0, %v2365
        %v2367 = vpop.f32.mrf.mxu0
        %v2368 = vadd.f32 0.0, %v2367
        %v2369 = vpop.f32.mrf.mxu0
        %v2370 = vadd.f32 0.0, %v2369
        %2371 = vmatprep.mubr.bf16.mxu0 0
        %2372 = vmatmul.mubr.bf16.gmra.mxu0 %v2287
        %v2373 = vpop.f32.mrf.mxu0
        %v2374 = vadd.f32 0.0, %v2373
        %v2375 = vpop.f32.mrf.mxu0
        %v2376 = vadd.f32 0.0, %v2375
        %v2377 = vpop.f32.mrf.mxu0
        %v2378 = vadd.f32 0.0, %v2377
        %v2379 = vpop.f32.mrf.mxu0
        %v2380 = vadd.f32 0.0, %v2379
        %2381 = vmatprep.mubr.bf16.mxu0 0
        %2382 = vmatmul.mubr.bf16.gmra.mxu0 %v2290
        %v2383 = vpop.f32.mrf.mxu0
        %v2384 = vadd.f32 0.0, %v2383
        %v2385 = vpop.f32.mrf.mxu0
        %v2386 = vadd.f32 0.0, %v2385
        %v2387 = vpop.f32.mrf.mxu0
        %v2388 = vadd.f32 0.0, %v2387
        %v2389 = vpop.f32.mrf.mxu0
        %v2390 = vadd.f32 0.0, %v2389
        %2391 = vmatprep.mubr.bf16.mxu0 0
        %2392 = vmatmul.mubr.bf16.gmra.mxu0 %v2293
        %v2393 = vpop.f32.mrf.mxu0
        %v2394 = vadd.f32 0.0, %v2393
        %v2395 = vpop.f32.mrf.mxu0
        %v2396 = vadd.f32 0.0, %v2395
        %v2397 = vpop.f32.mrf.mxu0
        %v2398 = vadd.f32 0.0, %v2397
        %v2399 = vpop.f32.mrf.mxu0
        %v2400 = vadd.f32 0.0, %v2399
        %2401 = vmatprep.mubr.bf16.mxu0 0
        %2402 = vmatmul.mubr.bf16.gmra.mxu0 %v2296
        %v2403 = vpop.f32.mrf.mxu0
        %v2404 = vadd.f32 0.0, %v2403
        %v2405 = vpop.f32.mrf.mxu0
        %v2406 = vadd.f32 0.0, %v2405
        %v2407 = vpop.f32.mrf.mxu0
        %v2408 = vadd.f32 0.0, %v2407
        %v2409 = vpop.f32.mrf.mxu0
        %v2410 = vadd.f32 0.0, %v2409
        %2411 = vmatprep.mubr.bf16.mxu0 0
        %2412 = vmatmul.mubr.bf16.gmra.mxu0 %v2299
        %v2413 = vpop.f32.mrf.mxu0
        %v2414 = vadd.f32 0.0, %v2413
        %v2415 = vpop.f32.mrf.mxu0
        %v2416 = vadd.f32 0.0, %v2415
        %v2417 = vpop.f32.mrf.mxu0
        %v2418 = vadd.f32 0.0, %v2417
        %v2419 = vpop.f32.mrf.mxu0
        %v2420 = vadd.f32 0.0, %v2419
        %2421 = vmatprep.mubr.bf16.mxu0 0
        %2422 = vmatmul.mubr.bf16.gmra.mxu0 %v2302
        %v2423 = vpop.f32.mrf.mxu0
        %v2424 = vadd.f32 0.0, %v2423
        %v2425 = vpop.f32.mrf.mxu0
        %v2426 = vadd.f32 0.0, %v2425
        %v2427 = vpop.f32.mrf.mxu0
        %v2428 = vadd.f32 0.0, %v2427
        %v2429 = vpop.f32.mrf.mxu0
        %v2430 = vadd.f32 0.0, %v2429
        %2431 = vmatprep.mubr.bf16.mxu0 0
        %2432 = vmatmul.mubr.bf16.gmra.mxu0 %v2305
        %v2433 = vpop.f32.mrf.mxu0
        %v2434 = vadd.f32 0.0, %v2433
        %v2435 = vpop.f32.mrf.mxu0
        %v2436 = vadd.f32 0.0, %v2435
        %v2437 = vpop.f32.mrf.mxu0
        %v2438 = vadd.f32 0.0, %v2437
        %v2439 = vpop.f32.mrf.mxu0
        %v2440 = vadd.f32 0.0, %v2439
        %2441 = vmatprep.mubr.bf16.mxu0 0
        %2442 = vmatmul.mubr.bf16.gmra.mxu0 %v2308
        %v2443 = vpop.f32.mrf.mxu0
        %v2444 = vadd.f32 0.0, %v2443
        %v2445 = vpop.f32.mrf.mxu0
        %v2446 = vadd.f32 0.0, %v2445
        %v2447 = vpop.f32.mrf.mxu0
        %v2448 = vadd.f32 0.0, %v2447
        %v2449 = vpop.f32.mrf.mxu0
        %v2450 = vadd.f32 0.0, %v2449
        %2451 = vmatprep.mubr.bf16.mxu0 0
        %2452 = vmatmul.mubr.bf16.gmra.mxu0 %v2311
        %v2453 = vpop.f32.mrf.mxu0
        %v2454 = vadd.f32 0.0, %v2453
        %v2455 = vpop.f32.mrf.mxu0
        %v2456 = vadd.f32 0.0, %v2455
        %v2457 = vpop.f32.mrf.mxu0
        %v2458 = vadd.f32 0.0, %v2457
        %v2459 = vpop.f32.mrf.mxu0
        %v2460 = vadd.f32 0.0, %v2459
        %2461 = vdwg.mxu0
        %v2462 = vadd.f32 %v2196, %v2354
        %v2463 = vadd.f32 %v2197, %v2356
        %v2464 = vadd.f32 %v2198, %v2358
        %v2465 = vadd.f32 %v2199, %v2360
        %v2466 = vadd.f32 %v2200, %v2364
        %v2467 = vadd.f32 %v2201, %v2366
        %v2468 = vadd.f32 %v2202, %v2368
        %v2469 = vadd.f32 %v2203, %v2370
        %v2470 = vadd.f32 %v2204, %v2374
        %v2471 = vadd.f32 %v2205, %v2376
        %v2472 = vadd.f32 %v2206, %v2378
        %v2473 = vadd.f32 %v2207, %v2380
        %v2474 = vadd.f32 %v2208, %v2384
        %v2475 = vadd.f32 %v2209, %v2386
        %v2476 = vadd.f32 %v2210, %v2388
        %v2477 = vadd.f32 %v2211, %v2390
        %v2478 = vadd.f32 %v2212, %v2394
        %v2479 = vadd.f32 %v2213, %v2396
        %v2480 = vadd.f32 %v2214, %v2398
        %v2481 = vadd.f32 %v2215, %v2400
        %v2482 = vadd.f32 %v2216, %v2404
        %v2483 = vadd.f32 %v2217, %v2406
        %v2484 = vadd.f32 %v2218, %v2408
        %v2485 = vadd.f32 %v2219, %v2410
        %v2486 = vadd.f32 %v2220, %v2414
        %v2487 = vadd.f32 %v2221, %v2416
        %v2488 = vadd.f32 %v2222, %v2418
        %v2489 = vadd.f32 %v2223, %v2420
        %v2490 = vadd.f32 %v2224, %v2424
        %v2491 = vadd.f32 %v2225, %v2426
        %v2492 = vadd.f32 %v2226, %v2428
        %v2493 = vadd.f32 %v2227, %v2430
        %v2494 = vadd.f32 %v2228, %v2434
        %v2495 = vadd.f32 %v2229, %v2436
        %v2496 = vadd.f32 %v2230, %v2438
        %v2497 = vadd.f32 %v2231, %v2440
        %v2498 = vadd.f32 %v2232, %v2444
        %v2499 = vadd.f32 %v2233, %v2446
        %v2500 = vadd.f32 %v2234, %v2448
        %v2501 = vadd.f32 %v2235, %v2450
        %v2502 = vadd.f32 %v2236, %v2454
        %v2503 = vadd.f32 %v2237, %v2456
        %v2504 = vadd.f32 %v2238, %v2458
        %v2505 = vadd.f32 %v2239, %v2460
        %v2506 = vld [vmem:[%s344 + $0x5b] sm:$0xff]
        %v2507 = vld [vmem:[%s344 + $0x63] sm:$0xff]
        %v2508 = vld [vmem:[%s344 + $0x6b] sm:$0xff]
        %v2509 = vld [vmem:[%s344 + $0x73] sm:$0xff]
        %v2510 = vld [vmem:[%s344 + $0x7b] sm:$0xff]
        %v2511 = vld [vmem:[%s344 + $0x83] sm:$0xff]
        %v2512 = vld [vmem:[%s344 + $0x8b] sm:$0xff]
        %v2513 = vld [vmem:[%s344 + $0x93] sm:$0xff]
        %v2514 = vld [vmem:[%s344 + $0x9b] sm:$0xff]
        %v2515 = vld [vmem:[%s344 + $0xa3] sm:$0xff]
        %v2516 = vld [vmem:[%s344 + $0xab] sm:$0xff]
        %v2517 = vld [vmem:[%s344 + $0xb3] sm:$0xff]
        %v2518 = vld [vmem:[%s344 + $0xbb] sm:$0xff]
        %v2519 = vld [vmem:[%s344 + $0xc3] sm:$0xff]
        %v2520 = vld [vmem:[%s344 + $0xcb] sm:$0xff]
        %v2521 = vld [vmem:[%s344 + $0xd3] sm:$0xff]
        %v2522 = vld [vmem:[%s344 + $0xdb] sm:$0xff]
        %v2523 = vld [vmem:[%s344 + $0xe3] sm:$0xff]
        %v2524 = vld [vmem:[%s344 + $0xeb] sm:$0xff]
        %v2525 = vld [vmem:[%s344 + $0xf3] sm:$0xff]
        %v2526 = vld [vmem:[%s344 + $0xfb] sm:$0xff]
        %v2527 = vld [vmem:[%s344 + $0x103] sm:$0xff]
        %v2528 = vpack.c.bf16 %v2507, %v2506
        %v2529 = vpack.c.bf16 %v2509, %v2508
        %v2530 = vpack.c.bf16 %v2511, %v2510
        %v2531 = vpack.c.bf16 %v2513, %v2512
        %v2532 = vpack.c.bf16 %v2515, %v2514
        %v2533 = vpack.c.bf16 %v2517, %v2516
        %v2534 = vpack.c.bf16 %v2519, %v2518
        %v2535 = vpack.c.bf16 %v2521, %v2520
        %v2536 = vpack.c.bf16 %v2523, %v2522
        %v2537 = vpack.c.bf16 %v2525, %v2524
        %v2538 = vpack.c.bf16 %v2527, %v2526
        %s2539 = scalar_lea.vmem %s2, 56
        %v2540 = vld [vmem:[%s2539] sm:$0xff]
        %v2542 = vunpack.c.l.b16 %v2540
        %v2543 = vunpack.c.h.b16 %v2540
        %v2544 = vpack.c.b16 %v2542, %v2542
        %v2545 = vpack.c.b16 %v2543, %v2543
        %v2547 = vsel %vm391, %v2528, 0
        %v2550 = vsel %vm391, %v2529, 0
        %v2553 = vsel %vm391, %v2530, 0
        %v2556 = vsel %vm391, %v2531, 0
        %v2559 = vsel %vm391, %v2532, 0
        %v2562 = vsel %vm391, %v2533, 0
        %v2565 = vsel %vm391, %v2534, 0
        %v2568 = vsel %vm391, %v2535, 0
        %v2571 = vsel %vm391, %v2536, 0
        %v2574 = vsel %vm391, %v2537, 0
        %v2577 = vsel %vm391, %v2538, 0
        %v2580 = vsel %vm425, %v2544, 0
        %v2583 = vsel %vm425, %v2545, 0
        %2585 = vmatprep.subr.bf16.mxu0 0
        %2586 = vmatpush1.bf16.msra.mxu0 0
        %2587 = vmatprep.subr.bf16.mxu0 0
        %2588 = vmatpush1.bf16.msra.mxu0 0
        %2589 = vmatprep.subr.bf16.mxu0 0
        %2590 = vmatpush1.bf16.msra.mxu0 0
        %2591 = vmatprep.subr.bf16.mxu0 0
        %2592 = vmatpush1.bf16.msra.mxu0 0
        %2593 = vmatprep.subr.bf16.mxu0 0
        %2594 = vmatpush1.bf16.msra.mxu0 0
        %2595 = vmatprep.subr.bf16.mxu0 0
        %2596 = vmatpush1.bf16.msra.mxu0 0
        %2597 = vmatprep.subr.bf16.mxu0 0
        %2598 = vmatpush1.bf16.msra.mxu0 0
        %2599 = vmatprep.subr.bf16.mxu0 %v2583
        %2600 = vmatpush1.bf16.msra.mxu0 %v2580
        %2601 = vmatprep.subr.bf16.mxu0 0
        %2602 = vmatpush2.bf16.msra.mxu0 0
        %2603 = vmatprep.subr.bf16.mxu0 0
        %2604 = vmatpush2.bf16.msra.mxu0 0
        %2605 = vmatprep.subr.bf16.mxu0 0
        %2606 = vmatpush2.bf16.msra.mxu0 0
        %2607 = vmatprep.subr.bf16.mxu0 0
        %2608 = vmatpush2.bf16.msra.mxu0 0
        %2609 = vmatprep.subr.bf16.mxu0 0
        %2610 = vmatpush2.bf16.msra.mxu0 0
        %2611 = vmatprep.subr.bf16.mxu0 0
        %2612 = vmatpush2.bf16.msra.mxu0 0
        %2613 = vmatprep.subr.bf16.mxu0 0
        %2614 = vmatpush2.bf16.msra.mxu0 0
        %2615 = vmatprep.subr.bf16.mxu0 0
        %2616 = vmatpush2.bf16.msra.mxu0 0
        %2617 = vmatprep.mubr.bf16.mxu0 0
        %2618 = vmatmul.mubr.bf16.gmra.mxu0 %v2547
        %v2619 = vpop.f32.mrf.mxu0
        %v2620 = vadd.f32 0.0, %v2619
        %v2621 = vpop.f32.mrf.mxu0
        %v2622 = vadd.f32 0.0, %v2621
        %v2623 = vpop.f32.mrf.mxu0
        %v2624 = vadd.f32 0.0, %v2623
        %v2625 = vpop.f32.mrf.mxu0
        %v2626 = vadd.f32 0.0, %v2625
        %2627 = vmatprep.mubr.bf16.mxu0 0
        %2628 = vmatmul.mubr.bf16.gmra.mxu0 %v2550
        %v2629 = vpop.f32.mrf.mxu0
        %v2630 = vadd.f32 0.0, %v2629
        %v2631 = vpop.f32.mrf.mxu0
        %v2632 = vadd.f32 0.0, %v2631
        %v2633 = vpop.f32.mrf.mxu0
        %v2634 = vadd.f32 0.0, %v2633
        %v2635 = vpop.f32.mrf.mxu0
        %v2636 = vadd.f32 0.0, %v2635
        %2637 = vmatprep.mubr.bf16.mxu0 0
        %2638 = vmatmul.mubr.bf16.gmra.mxu0 %v2553
        %v2639 = vpop.f32.mrf.mxu0
        %v2640 = vadd.f32 0.0, %v2639
        %v2641 = vpop.f32.mrf.mxu0
        %v2642 = vadd.f32 0.0, %v2641
        %v2643 = vpop.f32.mrf.mxu0
        %v2644 = vadd.f32 0.0, %v2643
        %v2645 = vpop.f32.mrf.mxu0
        %v2646 = vadd.f32 0.0, %v2645
        %2647 = vmatprep.mubr.bf16.mxu0 0
        %2648 = vmatmul.mubr.bf16.gmra.mxu0 %v2556
        %v2649 = vpop.f32.mrf.mxu0
        %v2650 = vadd.f32 0.0, %v2649
        %v2651 = vpop.f32.mrf.mxu0
        %v2652 = vadd.f32 0.0, %v2651
        %v2653 = vpop.f32.mrf.mxu0
        %v2654 = vadd.f32 0.0, %v2653
        %v2655 = vpop.f32.mrf.mxu0
        %v2656 = vadd.f32 0.0, %v2655
        %2657 = vmatprep.mubr.bf16.mxu0 0
        %2658 = vmatmul.mubr.bf16.gmra.mxu0 %v2559
        %v2659 = vpop.f32.mrf.mxu0
        %v2660 = vadd.f32 0.0, %v2659
        %v2661 = vpop.f32.mrf.mxu0
        %v2662 = vadd.f32 0.0, %v2661
        %v2663 = vpop.f32.mrf.mxu0
        %v2664 = vadd.f32 0.0, %v2663
        %v2665 = vpop.f32.mrf.mxu0
        %v2666 = vadd.f32 0.0, %v2665
        %2667 = vmatprep.mubr.bf16.mxu0 0
        %2668 = vmatmul.mubr.bf16.gmra.mxu0 %v2562
        %v2669 = vpop.f32.mrf.mxu0
        %v2670 = vadd.f32 0.0, %v2669
        %v2671 = vpop.f32.mrf.mxu0
        %v2672 = vadd.f32 0.0, %v2671
        %v2673 = vpop.f32.mrf.mxu0
        %v2674 = vadd.f32 0.0, %v2673
        %v2675 = vpop.f32.mrf.mxu0
        %v2676 = vadd.f32 0.0, %v2675
        %2677 = vmatprep.mubr.bf16.mxu0 0
        %2678 = vmatmul.mubr.bf16.gmra.mxu0 %v2565
        %v2679 = vpop.f32.mrf.mxu0
        %v2680 = vadd.f32 0.0, %v2679
        %v2681 = vpop.f32.mrf.mxu0
        %v2682 = vadd.f32 0.0, %v2681
        %v2683 = vpop.f32.mrf.mxu0
        %v2684 = vadd.f32 0.0, %v2683
        %v2685 = vpop.f32.mrf.mxu0
        %v2686 = vadd.f32 0.0, %v2685
        %2687 = vmatprep.mubr.bf16.mxu0 0
        %2688 = vmatmul.mubr.bf16.gmra.mxu0 %v2568
        %v2689 = vpop.f32.mrf.mxu0
        %v2690 = vadd.f32 0.0, %v2689
        %v2691 = vpop.f32.mrf.mxu0
        %v2692 = vadd.f32 0.0, %v2691
        %v2693 = vpop.f32.mrf.mxu0
        %v2694 = vadd.f32 0.0, %v2693
        %v2695 = vpop.f32.mrf.mxu0
        %v2696 = vadd.f32 0.0, %v2695
        %2697 = vmatprep.mubr.bf16.mxu0 0
        %2698 = vmatmul.mubr.bf16.gmra.mxu0 %v2571
        %v2699 = vpop.f32.mrf.mxu0
        %v2700 = vadd.f32 0.0, %v2699
        %v2701 = vpop.f32.mrf.mxu0
        %v2702 = vadd.f32 0.0, %v2701
        %v2703 = vpop.f32.mrf.mxu0
        %v2704 = vadd.f32 0.0, %v2703
        %v2705 = vpop.f32.mrf.mxu0
        %v2706 = vadd.f32 0.0, %v2705
        %2707 = vmatprep.mubr.bf16.mxu0 0
        %2708 = vmatmul.mubr.bf16.gmra.mxu0 %v2574
        %v2709 = vpop.f32.mrf.mxu0
        %v2710 = vadd.f32 0.0, %v2709
        %v2711 = vpop.f32.mrf.mxu0
        %v2712 = vadd.f32 0.0, %v2711
        %v2713 = vpop.f32.mrf.mxu0
        %v2714 = vadd.f32 0.0, %v2713
        %v2715 = vpop.f32.mrf.mxu0
        %v2716 = vadd.f32 0.0, %v2715
        %2717 = vmatprep.mubr.bf16.mxu0 0
        %2718 = vmatmul.mubr.bf16.gmra.mxu0 %v2577
        %v2719 = vpop.f32.mrf.mxu0
        %v2720 = vadd.f32 0.0, %v2719
        %v2721 = vpop.f32.mrf.mxu0
        %v2722 = vadd.f32 0.0, %v2721
        %v2723 = vpop.f32.mrf.mxu0
        %v2724 = vadd.f32 0.0, %v2723
        %v2725 = vpop.f32.mrf.mxu0
        %v2726 = vadd.f32 0.0, %v2725
        %2727 = vdwg.mxu0
        %v2728 = vadd.f32 %v2462, %v2620
        %v2729 = vadd.f32 %v2463, %v2622
        %v2730 = vadd.f32 %v2464, %v2624
        %v2731 = vadd.f32 %v2465, %v2626
        %v2732 = vadd.f32 %v2466, %v2630
        %v2733 = vadd.f32 %v2467, %v2632
        %v2734 = vadd.f32 %v2468, %v2634
        %v2735 = vadd.f32 %v2469, %v2636
        %v2736 = vadd.f32 %v2470, %v2640
        %v2737 = vadd.f32 %v2471, %v2642
        %v2738 = vadd.f32 %v2472, %v2644
        %v2739 = vadd.f32 %v2473, %v2646
        %v2740 = vadd.f32 %v2474, %v2650
        %v2741 = vadd.f32 %v2475, %v2652
        %v2742 = vadd.f32 %v2476, %v2654
        %v2743 = vadd.f32 %v2477, %v2656
        %v2744 = vadd.f32 %v2478, %v2660
        %v2745 = vadd.f32 %v2479, %v2662
        %v2746 = vadd.f32 %v2480, %v2664
        %v2747 = vadd.f32 %v2481, %v2666
        %v2748 = vadd.f32 %v2482, %v2670
        %v2749 = vadd.f32 %v2483, %v2672
        %v2750 = vadd.f32 %v2484, %v2674
        %v2751 = vadd.f32 %v2485, %v2676
        %v2752 = vadd.f32 %v2486, %v2680
        %v2753 = vadd.f32 %v2487, %v2682
        %v2754 = vadd.f32 %v2488, %v2684
        %v2755 = vadd.f32 %v2489, %v2686
        %v2756 = vadd.f32 %v2490, %v2690
        %v2757 = vadd.f32 %v2491, %v2692
        %v2758 = vadd.f32 %v2492, %v2694
        %v2759 = vadd.f32 %v2493, %v2696
        %v2760 = vadd.f32 %v2494, %v2700
        %v2761 = vadd.f32 %v2495, %v2702
        %v2762 = vadd.f32 %v2496, %v2704
        %v2763 = vadd.f32 %v2497, %v2706
        %v2764 = vadd.f32 %v2498, %v2710
        %v2765 = vadd.f32 %v2499, %v2712
        %v2766 = vadd.f32 %v2500, %v2714
        %v2767 = vadd.f32 %v2501, %v2716
        %v2768 = vadd.f32 %v2502, %v2720
        %v2769 = vadd.f32 %v2503, %v2722
        %v2770 = vadd.f32 %v2504, %v2724
        %v2771 = vadd.f32 %v2505, %v2726
        %v2772 = vld [vmem:[%s344 + $0x5c] sm:$0xff]
        %v2773 = vld [vmem:[%s344 + $0x64] sm:$0xff]
        %v2774 = vld [vmem:[%s344 + $0x6c] sm:$0xff]
        %v2775 = vld [vmem:[%s344 + $0x74] sm:$0xff]
        %v2776 = vld [vmem:[%s344 + $0x7c] sm:$0xff]
        %v2777 = vld [vmem:[%s344 + $0x84] sm:$0xff]
        %v2778 = vld [vmem:[%s344 + $0x8c] sm:$0xff]
        %v2779 = vld [vmem:[%s344 + $0x94] sm:$0xff]
        %v2780 = vld [vmem:[%s344 + $0x9c] sm:$0xff]
        %v2781 = vld [vmem:[%s344 + $0xa4] sm:$0xff]
        %v2782 = vld [vmem:[%s344 + $0xac] sm:$0xff]
        %v2783 = vld [vmem:[%s344 + $0xb4] sm:$0xff]
        %v2784 = vld [vmem:[%s344 + $0xbc] sm:$0xff]
        %v2785 = vld [vmem:[%s344 + $0xc4] sm:$0xff]
        %v2786 = vld [vmem:[%s344 + $0xcc] sm:$0xff]
        %v2787 = vld [vmem:[%s344 + $0xd4] sm:$0xff]
        %v2788 = vld [vmem:[%s344 + $0xdc] sm:$0xff]
        %v2789 = vld [vmem:[%s344 + $0xe4] sm:$0xff]
        %v2790 = vld [vmem:[%s344 + $0xec] sm:$0xff]
        %v2791 = vld [vmem:[%s344 + $0xf4] sm:$0xff]
        %v2792 = vld [vmem:[%s344 + $0xfc] sm:$0xff]
        %v2793 = vld [vmem:[%s344 + $0x104] sm:$0xff]
        %v2794 = vpack.c.bf16 %v2773, %v2772
        %v2795 = vpack.c.bf16 %v2775, %v2774
        %v2796 = vpack.c.bf16 %v2777, %v2776
        %v2797 = vpack.c.bf16 %v2779, %v2778
        %v2798 = vpack.c.bf16 %v2781, %v2780
        %v2799 = vpack.c.bf16 %v2783, %v2782
        %v2800 = vpack.c.bf16 %v2785, %v2784
        %v2801 = vpack.c.bf16 %v2787, %v2786
        %v2802 = vpack.c.bf16 %v2789, %v2788
        %v2803 = vpack.c.bf16 %v2791, %v2790
        %v2804 = vpack.c.bf16 %v2793, %v2792
        %s2805 = scalar_lea.vmem %s2, 64
        %v2806 = vld [vmem:[%s2805] sm:$0xff]
        %v2808 = vunpack.c.l.b16 %v2806
        %v2809 = vunpack.c.h.b16 %v2806
        %v2810 = vpack.c.b16 %v2808, %v2808
        %v2811 = vpack.c.b16 %v2809, %v2809
        %v2813 = vsel %vm391, %v2794, 0
        %v2816 = vsel %vm391, %v2795, 0
        %v2819 = vsel %vm391, %v2796, 0
        %v2822 = vsel %vm391, %v2797, 0
        %v2825 = vsel %vm391, %v2798, 0
        %v2828 = vsel %vm391, %v2799, 0
        %v2831 = vsel %vm391, %v2800, 0
        %v2834 = vsel %vm391, %v2801, 0
        %v2837 = vsel %vm391, %v2802, 0
        %v2840 = vsel %vm391, %v2803, 0
        %v2843 = vsel %vm391, %v2804, 0
        %v2846 = vsel %vm425, %v2810, 0
        %v2849 = vsel %vm425, %v2811, 0
        %2851 = vmatprep.subr.bf16.mxu0 0
        %2852 = vmatpush1.bf16.msra.mxu0 0
        %2853 = vmatprep.subr.bf16.mxu0 0
        %2854 = vmatpush1.bf16.msra.mxu0 0
        %2855 = vmatprep.subr.bf16.mxu0 0
        %2856 = vmatpush1.bf16.msra.mxu0 0
        %2857 = vmatprep.subr.bf16.mxu0 0
        %2858 = vmatpush1.bf16.msra.mxu0 0
        %2859 = vmatprep.subr.bf16.mxu0 0
        %2860 = vmatpush1.bf16.msra.mxu0 0
        %2861 = vmatprep.subr.bf16.mxu0 0
        %2862 = vmatpush1.bf16.msra.mxu0 0
        %2863 = vmatprep.subr.bf16.mxu0 0
        %2864 = vmatpush1.bf16.msra.mxu0 0
        %2865 = vmatprep.subr.bf16.mxu0 %v2849
        %2866 = vmatpush1.bf16.msra.mxu0 %v2846
        %2867 = vmatprep.subr.bf16.mxu0 0
        %2868 = vmatpush2.bf16.msra.mxu0 0
        %2869 = vmatprep.subr.bf16.mxu0 0
        %2870 = vmatpush2.bf16.msra.mxu0 0
        %2871 = vmatprep.subr.bf16.mxu0 0
        %2872 = vmatpush2.bf16.msra.mxu0 0
        %2873 = vmatprep.subr.bf16.mxu0 0
        %2874 = vmatpush2.bf16.msra.mxu0 0
        %2875 = vmatprep.subr.bf16.mxu0 0
        %2876 = vmatpush2.bf16.msra.mxu0 0
        %2877 = vmatprep.subr.bf16.mxu0 0
        %2878 = vmatpush2.bf16.msra.mxu0 0
        %2879 = vmatprep.subr.bf16.mxu0 0
        %2880 = vmatpush2.bf16.msra.mxu0 0
        %2881 = vmatprep.subr.bf16.mxu0 0
        %2882 = vmatpush2.bf16.msra.mxu0 0
        %2883 = vmatprep.mubr.bf16.mxu0 0
        %2884 = vmatmul.mubr.bf16.gmra.mxu0 %v2813
        %v2885 = vpop.f32.mrf.mxu0
        %v2886 = vadd.f32 0.0, %v2885
        %v2887 = vpop.f32.mrf.mxu0
        %v2888 = vadd.f32 0.0, %v2887
        %v2889 = vpop.f32.mrf.mxu0
        %v2890 = vadd.f32 0.0, %v2889
        %v2891 = vpop.f32.mrf.mxu0
        %v2892 = vadd.f32 0.0, %v2891
        %2893 = vmatprep.mubr.bf16.mxu0 0
        %2894 = vmatmul.mubr.bf16.gmra.mxu0 %v2816
        %v2895 = vpop.f32.mrf.mxu0
        %v2896 = vadd.f32 0.0, %v2895
        %v2897 = vpop.f32.mrf.mxu0
        %v2898 = vadd.f32 0.0, %v2897
        %v2899 = vpop.f32.mrf.mxu0
        %v2900 = vadd.f32 0.0, %v2899
        %v2901 = vpop.f32.mrf.mxu0
        %v2902 = vadd.f32 0.0, %v2901
        %2903 = vmatprep.mubr.bf16.mxu0 0
        %2904 = vmatmul.mubr.bf16.gmra.mxu0 %v2819
        %v2905 = vpop.f32.mrf.mxu0
        %v2906 = vadd.f32 0.0, %v2905
        %v2907 = vpop.f32.mrf.mxu0
        %v2908 = vadd.f32 0.0, %v2907
        %v2909 = vpop.f32.mrf.mxu0
        %v2910 = vadd.f32 0.0, %v2909
        %v2911 = vpop.f32.mrf.mxu0
        %v2912 = vadd.f32 0.0, %v2911
        %2913 = vmatprep.mubr.bf16.mxu0 0
        %2914 = vmatmul.mubr.bf16.gmra.mxu0 %v2822
        %v2915 = vpop.f32.mrf.mxu0
        %v2916 = vadd.f32 0.0, %v2915
        %v2917 = vpop.f32.mrf.mxu0
        %v2918 = vadd.f32 0.0, %v2917
        %v2919 = vpop.f32.mrf.mxu0
        %v2920 = vadd.f32 0.0, %v2919
        %v2921 = vpop.f32.mrf.mxu0
        %v2922 = vadd.f32 0.0, %v2921
        %2923 = vmatprep.mubr.bf16.mxu0 0
        %2924 = vmatmul.mubr.bf16.gmra.mxu0 %v2825
        %v2925 = vpop.f32.mrf.mxu0
        %v2926 = vadd.f32 0.0, %v2925
        %v2927 = vpop.f32.mrf.mxu0
        %v2928 = vadd.f32 0.0, %v2927
        %v2929 = vpop.f32.mrf.mxu0
        %v2930 = vadd.f32 0.0, %v2929
        %v2931 = vpop.f32.mrf.mxu0
        %v2932 = vadd.f32 0.0, %v2931
        %2933 = vmatprep.mubr.bf16.mxu0 0
        %2934 = vmatmul.mubr.bf16.gmra.mxu0 %v2828
        %v2935 = vpop.f32.mrf.mxu0
        %v2936 = vadd.f32 0.0, %v2935
        %v2937 = vpop.f32.mrf.mxu0
        %v2938 = vadd.f32 0.0, %v2937
        %v2939 = vpop.f32.mrf.mxu0
        %v2940 = vadd.f32 0.0, %v2939
        %v2941 = vpop.f32.mrf.mxu0
        %v2942 = vadd.f32 0.0, %v2941
        %2943 = vmatprep.mubr.bf16.mxu0 0
        %2944 = vmatmul.mubr.bf16.gmra.mxu0 %v2831
        %v2945 = vpop.f32.mrf.mxu0
        %v2946 = vadd.f32 0.0, %v2945
        %v2947 = vpop.f32.mrf.mxu0
        %v2948 = vadd.f32 0.0, %v2947
        %v2949 = vpop.f32.mrf.mxu0
        %v2950 = vadd.f32 0.0, %v2949
        %v2951 = vpop.f32.mrf.mxu0
        %v2952 = vadd.f32 0.0, %v2951
        %2953 = vmatprep.mubr.bf16.mxu0 0
        %2954 = vmatmul.mubr.bf16.gmra.mxu0 %v2834
        %v2955 = vpop.f32.mrf.mxu0
        %v2956 = vadd.f32 0.0, %v2955
        %v2957 = vpop.f32.mrf.mxu0
        %v2958 = vadd.f32 0.0, %v2957
        %v2959 = vpop.f32.mrf.mxu0
        %v2960 = vadd.f32 0.0, %v2959
        %v2961 = vpop.f32.mrf.mxu0
        %v2962 = vadd.f32 0.0, %v2961
        %2963 = vmatprep.mubr.bf16.mxu0 0
        %2964 = vmatmul.mubr.bf16.gmra.mxu0 %v2837
        %v2965 = vpop.f32.mrf.mxu0
        %v2966 = vadd.f32 0.0, %v2965
        %v2967 = vpop.f32.mrf.mxu0
        %v2968 = vadd.f32 0.0, %v2967
        %v2969 = vpop.f32.mrf.mxu0
        %v2970 = vadd.f32 0.0, %v2969
        %v2971 = vpop.f32.mrf.mxu0
        %v2972 = vadd.f32 0.0, %v2971
        %2973 = vmatprep.mubr.bf16.mxu0 0
        %2974 = vmatmul.mubr.bf16.gmra.mxu0 %v2840
        %v2975 = vpop.f32.mrf.mxu0
        %v2976 = vadd.f32 0.0, %v2975
        %v2977 = vpop.f32.mrf.mxu0
        %v2978 = vadd.f32 0.0, %v2977
        %v2979 = vpop.f32.mrf.mxu0
        %v2980 = vadd.f32 0.0, %v2979
        %v2981 = vpop.f32.mrf.mxu0
        %v2982 = vadd.f32 0.0, %v2981
        %2983 = vmatprep.mubr.bf16.mxu0 0
        %2984 = vmatmul.mubr.bf16.gmra.mxu0 %v2843
        %v2985 = vpop.f32.mrf.mxu0
        %v2986 = vadd.f32 0.0, %v2985
        %v2987 = vpop.f32.mrf.mxu0
        %v2988 = vadd.f32 0.0, %v2987
        %v2989 = vpop.f32.mrf.mxu0
        %v2990 = vadd.f32 0.0, %v2989
        %v2991 = vpop.f32.mrf.mxu0
        %v2992 = vadd.f32 0.0, %v2991
        %2993 = vdwg.mxu0
        %v2994 = vadd.f32 %v2728, %v2886
        %v2995 = vadd.f32 %v2729, %v2888
        %v2996 = vadd.f32 %v2730, %v2890
        %v2997 = vadd.f32 %v2731, %v2892
        %v2998 = vadd.f32 %v2732, %v2896
        %v2999 = vadd.f32 %v2733, %v2898
        %v3000 = vadd.f32 %v2734, %v2900
        %v3001 = vadd.f32 %v2735, %v2902
        %v3002 = vadd.f32 %v2736, %v2906
        %v3003 = vadd.f32 %v2737, %v2908
        %v3004 = vadd.f32 %v2738, %v2910
        %v3005 = vadd.f32 %v2739, %v2912
        %v3006 = vadd.f32 %v2740, %v2916
        %v3007 = vadd.f32 %v2741, %v2918
        %v3008 = vadd.f32 %v2742, %v2920
        %v3009 = vadd.f32 %v2743, %v2922
        %v3010 = vadd.f32 %v2744, %v2926
        %v3011 = vadd.f32 %v2745, %v2928
        %v3012 = vadd.f32 %v2746, %v2930
        %v3013 = vadd.f32 %v2747, %v2932
        %v3014 = vadd.f32 %v2748, %v2936
        %v3015 = vadd.f32 %v2749, %v2938
        %v3016 = vadd.f32 %v2750, %v2940
        %v3017 = vadd.f32 %v2751, %v2942
        %v3018 = vadd.f32 %v2752, %v2946
        %v3019 = vadd.f32 %v2753, %v2948
        %v3020 = vadd.f32 %v2754, %v2950
        %v3021 = vadd.f32 %v2755, %v2952
        %v3022 = vadd.f32 %v2756, %v2956
        %v3023 = vadd.f32 %v2757, %v2958
        %v3024 = vadd.f32 %v2758, %v2960
        %v3025 = vadd.f32 %v2759, %v2962
        %v3026 = vadd.f32 %v2760, %v2966
        %v3027 = vadd.f32 %v2761, %v2968
        %v3028 = vadd.f32 %v2762, %v2970
        %v3029 = vadd.f32 %v2763, %v2972
        %v3030 = vadd.f32 %v2764, %v2976
        %v3031 = vadd.f32 %v2765, %v2978
        %v3032 = vadd.f32 %v2766, %v2980
        %v3033 = vadd.f32 %v2767, %v2982
        %v3034 = vadd.f32 %v2768, %v2986
        %v3035 = vadd.f32 %v2769, %v2988
        %v3036 = vadd.f32 %v2770, %v2990
        %v3037 = vadd.f32 %v2771, %v2992
        %v3038 = vlaneseq
        %v3039 = vshrl.u32 %v3038, 7
        %v3040 = vsub.s32 1, %v3039
        %v3041 = vrot.slane %v350, %v3040
        %v3042 = vlaneseq
        %v3043 = vshrl.u32 %v3042, 7
        %v3044 = vsub.s32 5, %v3043
        %v3045 = vrot.slane %v350, %v3044
        %v3048 = vlaneseq
        %v3049 = vshrl.u32 %v3048, 7
        %v3050 = vsub.s32 1, %v3049
        %v3051 = vrot.slane %v3041, %v3050
        %v3052 = vlaneseq
        %v3053 = vshrl.u32 %v3052, 7
        %v3054 = vsub.s32 1, %v3053
        %v3055 = vrot.slane %v3045, %v3054
        %v3056 = vmul.f32 %v2994, %v3051
        %v3057 = vmul.f32 %v2995, %v3055
        %v3058 = vmul.f32 %v2996, %v3051
        %v3059 = vmul.f32 %v2997, %v3055
        %v3060 = vmul.f32 %v2998, %v3051
        %v3061 = vmul.f32 %v2999, %v3055
        %v3062 = vmul.f32 %v3000, %v3051
        %v3063 = vmul.f32 %v3001, %v3055
        %v3064 = vmul.f32 %v3002, %v3051
        %v3065 = vmul.f32 %v3003, %v3055
        %v3066 = vmul.f32 %v3004, %v3051
        %v3067 = vmul.f32 %v3005, %v3055
        %v3068 = vmul.f32 %v3006, %v3051
        %v3069 = vmul.f32 %v3007, %v3055
        %v3070 = vmul.f32 %v3008, %v3051
        %v3071 = vmul.f32 %v3009, %v3055
        %v3072 = vmul.f32 %v3010, %v3051
        %v3073 = vmul.f32 %v3011, %v3055
        %v3074 = vmul.f32 %v3012, %v3051
        %v3075 = vmul.f32 %v3013, %v3055
        %v3076 = vmul.f32 %v3014, %v3051
        %v3077 = vmul.f32 %v3015, %v3055
        %v3078 = vmul.f32 %v3016, %v3051
        %v3079 = vmul.f32 %v3017, %v3055
        %v3080 = vmul.f32 %v3018, %v3051
        %v3081 = vmul.f32 %v3019, %v3055
        %v3082 = vmul.f32 %v3020, %v3051
        %v3083 = vmul.f32 %v3021, %v3055
        %v3084 = vmul.f32 %v3022, %v3051
        %v3085 = vmul.f32 %v3023, %v3055
        %v3086 = vmul.f32 %v3024, %v3051
        %v3087 = vmul.f32 %v3025, %v3055
        %v3088 = vmul.f32 %v3026, %v3051
        %v3089 = vmul.f32 %v3027, %v3055
        %v3090 = vmul.f32 %v3028, %v3051
        %v3091 = vmul.f32 %v3029, %v3055
        %v3092 = vmul.f32 %v3030, %v3051
        %v3093 = vmul.f32 %v3031, %v3055
        %v3094 = vmul.f32 %v3032, %v3051
        %v3095 = vmul.f32 %v3033, %v3055
        %v3096 = vmul.f32 %v3034, %v3051
        %v3097 = vmul.f32 %v3035, %v3055
        %v3098 = vmul.f32 %v3036, %v3051
        %v3099 = vmul.f32 %v3037, %v3055
        %v3100 = vlaneseq
        %v3101 = vshrl.u32 %v3100, 7
        %v3102 = vsub.s32 1, %v3101
        %v3103 = vrot.slane %v351, %v3102
        %v3104 = vlaneseq
        %v3105 = vshrl.u32 %v3104, 7
        %v3106 = vsub.s32 5, %v3105
        %v3107 = vrot.slane %v351, %v3106
        %v3110 = vlaneseq
        %v3111 = vshrl.u32 %v3110, 7
        %v3112 = vsub.s32 1, %v3111
        %v3113 = vrot.slane %v3103, %v3112
        %v3114 = vlaneseq
        %v3115 = vshrl.u32 %v3114, 7
        %v3116 = vsub.s32 1, %v3115
        %v3117 = vrot.slane %v3107, %v3116
        %v3118 = vadd.f32 %v3056, %v3113
        %v3119 = vadd.f32 %v3057, %v3117
        %v3120 = vadd.f32 %v3058, %v3113
        %v3121 = vadd.f32 %v3059, %v3117
        %v3122 = vadd.f32 %v3060, %v3113
        %v3123 = vadd.f32 %v3061, %v3117
        %v3124 = vadd.f32 %v3062, %v3113
        %v3125 = vadd.f32 %v3063, %v3117
        %v3126 = vadd.f32 %v3064, %v3113
        %v3127 = vadd.f32 %v3065, %v3117
        %v3128 = vadd.f32 %v3066, %v3113
        %v3129 = vadd.f32 %v3067, %v3117
        %v3130 = vadd.f32 %v3068, %v3113
        %v3131 = vadd.f32 %v3069, %v3117
        %v3132 = vadd.f32 %v3070, %v3113
        %v3133 = vadd.f32 %v3071, %v3117
        %v3134 = vadd.f32 %v3072, %v3113
        %v3135 = vadd.f32 %v3073, %v3117
        %v3136 = vadd.f32 %v3074, %v3113
        %v3137 = vadd.f32 %v3075, %v3117
        %v3138 = vadd.f32 %v3076, %v3113
        %v3139 = vadd.f32 %v3077, %v3117
        %v3140 = vadd.f32 %v3078, %v3113
        %v3141 = vadd.f32 %v3079, %v3117
        %v3142 = vadd.f32 %v3080, %v3113
        %v3143 = vadd.f32 %v3081, %v3117
        %v3144 = vadd.f32 %v3082, %v3113
        %v3145 = vadd.f32 %v3083, %v3117
        %v3146 = vadd.f32 %v3084, %v3113
        %v3147 = vadd.f32 %v3085, %v3117
        %v3148 = vadd.f32 %v3086, %v3113
        %v3149 = vadd.f32 %v3087, %v3117
        %v3150 = vadd.f32 %v3088, %v3113
        %v3151 = vadd.f32 %v3089, %v3117
        %v3152 = vadd.f32 %v3090, %v3113
        %v3153 = vadd.f32 %v3091, %v3117
        %v3154 = vadd.f32 %v3092, %v3113
        %v3155 = vadd.f32 %v3093, %v3117
        %v3156 = vadd.f32 %v3094, %v3113
        %v3157 = vadd.f32 %v3095, %v3117
        %v3158 = vadd.f32 %v3096, %v3113
        %v3159 = vadd.f32 %v3097, %v3117
        %v3160 = vadd.f32 %v3098, %v3113
        %v3161 = vadd.f32 %v3099, %v3117
        %v3162 = vmax.f32 %v3118, 0.0
        %v3163 = vmax.f32 %v3119, 0.0
        %v3164 = vmax.f32 %v3120, 0.0
        %v3165 = vmax.f32 %v3121, 0.0
        %v3166 = vmax.f32 %v3122, 0.0
        %v3167 = vmax.f32 %v3123, 0.0
        %v3168 = vmax.f32 %v3124, 0.0
        %v3169 = vmax.f32 %v3125, 0.0
        %v3170 = vmax.f32 %v3126, 0.0
        %v3171 = vmax.f32 %v3127, 0.0
        %v3172 = vmax.f32 %v3128, 0.0
        %v3173 = vmax.f32 %v3129, 0.0
        %v3174 = vmax.f32 %v3130, 0.0
        %v3175 = vmax.f32 %v3131, 0.0
        %v3176 = vmax.f32 %v3132, 0.0
        %v3177 = vmax.f32 %v3133, 0.0
        %v3178 = vmax.f32 %v3134, 0.0
        %v3179 = vmax.f32 %v3135, 0.0
        %v3180 = vmax.f32 %v3136, 0.0
        %v3181 = vmax.f32 %v3137, 0.0
        %v3182 = vmax.f32 %v3138, 0.0
        %v3183 = vmax.f32 %v3139, 0.0
        %v3184 = vmax.f32 %v3140, 0.0
        %v3185 = vmax.f32 %v3141, 0.0
        %v3186 = vmax.f32 %v3142, 0.0
        %v3187 = vmax.f32 %v3143, 0.0
        %v3188 = vmax.f32 %v3144, 0.0
        %v3189 = vmax.f32 %v3145, 0.0
        %v3190 = vmax.f32 %v3146, 0.0
        %v3191 = vmax.f32 %v3147, 0.0
        %v3192 = vmax.f32 %v3148, 0.0
        %v3193 = vmax.f32 %v3149, 0.0
        %v3194 = vmax.f32 %v3150, 0.0
        %v3195 = vmax.f32 %v3151, 0.0
        %v3196 = vmax.f32 %v3152, 0.0
        %v3197 = vmax.f32 %v3153, 0.0
        %v3198 = vmax.f32 %v3154, 0.0
        %v3199 = vmax.f32 %v3155, 0.0
        %v3200 = vmax.f32 %v3156, 0.0
        %v3201 = vmax.f32 %v3157, 0.0
        %v3202 = vmax.f32 %v3158, 0.0
        %v3203 = vmax.f32 %v3159, 0.0
        %v3204 = vmax.f32 %v3160, 0.0
        %v3205 = vmax.f32 %v3161, 0.0
        %v3206 = vpack.c.bf16 %v3164, %v3162
        %v3207 = vpack.c.bf16 %v3165, %v3163
        %v3208 = vpack.c.bf16 %v3168, %v3166
        %v3209 = vpack.c.bf16 %v3169, %v3167
        %v3210 = vpack.c.bf16 %v3172, %v3170
        %v3211 = vpack.c.bf16 %v3173, %v3171
        %v3212 = vpack.c.bf16 %v3176, %v3174
        %v3213 = vpack.c.bf16 %v3177, %v3175
        %v3214 = vpack.c.bf16 %v3180, %v3178
        %v3215 = vpack.c.bf16 %v3181, %v3179
        %v3216 = vpack.c.bf16 %v3184, %v3182
        %v3217 = vpack.c.bf16 %v3185, %v3183
        %v3218 = vpack.c.bf16 %v3188, %v3186
        %v3219 = vpack.c.bf16 %v3189, %v3187
        %v3220 = vpack.c.bf16 %v3192, %v3190
        %v3221 = vpack.c.bf16 %v3193, %v3191
        %v3222 = vpack.c.bf16 %v3196, %v3194
        %v3223 = vpack.c.bf16 %v3197, %v3195
        %v3224 = vpack.c.bf16 %v3200, %v3198
        %v3225 = vpack.c.bf16 %v3201, %v3199
        %v3226 = vpack.c.bf16 %v3204, %v3202
        %v3227 = vpack.c.bf16 %v3205, %v3203
        %s3228 = scalar_lea.vmem %s3, 256
        %v3229 = vld [vmem:[%s3228] sm:$0xff]
        %v3230 = vld [vmem:[%s3228 + $0x8] sm:$0xff]
        %v3231 = vld [vmem:[%s3228 + $0x10] sm:$0xff]
        %v3232 = vld [vmem:[%s3228 + $0x18] sm:$0xff]
        %v3233 = vld [vmem:[%s3228 + $0x20] sm:$0xff]
        %v3234 = vld [vmem:[%s3228 + $0x28] sm:$0xff]
        %v3235 = vld [vmem:[%s3228 + $0x30] sm:$0xff]
        %v3236 = vld [vmem:[%s3228 + $0x38] sm:$0xff]
        %v3237 = vld [vmem:[%s3228 + $0x40] sm:$0xff]
        %v3238 = vld [vmem:[%s3228 + $0x48] sm:$0xff]
        %v3239 = vld [vmem:[%s3228 + $0x50] sm:$0xff]
        %v3240 = vld [vmem:[%s3228 + $0x58] sm:$0xff]
        %v3241 = vld [vmem:[%s3228 + $0x60] sm:$0xff]
        %v3242 = vld [vmem:[%s3228 + $0x68] sm:$0xff]
        %v3243 = vld [vmem:[%s3228 + $0x70] sm:$0xff]
        %v3244 = vld [vmem:[%s3228 + $0x78] sm:$0xff]
        %v3245 = vld [vmem:[%s3228 + $0x80] sm:$0xff]
        %v3246 = vld [vmem:[%s3228 + $0x88] sm:$0xff]
        %v3247 = vld [vmem:[%s3228 + $0x90] sm:$0xff]
        %v3248 = vld [vmem:[%s3228 + $0x98] sm:$0xff]
        %v3249 = vld [vmem:[%s3228 + $0xa0] sm:$0xff]
        %v3250 = vld [vmem:[%s3228 + $0xa8] sm:$0xff]
        %v3251 = vld [vmem:[%s3228 + $0xb0] sm:$0xff]
        %v3252 = vld [vmem:[%s3228 + $0xb8] sm:$0xff]
        %v3253 = vld [vmem:[%s3228 + $0xc0] sm:$0xff]
        %v3254 = vld [vmem:[%s3228 + $0xc8] sm:$0xff]
        %v3255 = vld [vmem:[%s3228 + $0xd0] sm:$0xff]
        %v3256 = vld [vmem:[%s3228 + $0xd8] sm:$0xff]
        %v3257 = vld [vmem:[%s3228 + $0xe0] sm:$0xff]
        %v3258 = vld [vmem:[%s3228 + $0xe8] sm:$0xff]
        %v3259 = vld [vmem:[%s3228 + $0xf0] sm:$0xff]
        %v3260 = vld [vmem:[%s3228 + $0xf8] sm:$0xff]
        %v3293 = vunpack.c.l.b16 %v3229
        %v3294 = vunpack.c.h.b16 %v3229
        %v3295 = vunpack.c.l.b16 %v3230
        %v3296 = vunpack.c.h.b16 %v3230
        %v3297 = vunpack.c.l.b16 %v3231
        %v3298 = vunpack.c.h.b16 %v3231
        %v3299 = vunpack.c.l.b16 %v3232
        %v3300 = vunpack.c.h.b16 %v3232
        %v3301 = vunpack.c.l.b16 %v3233
        %v3302 = vunpack.c.h.b16 %v3233
        %v3303 = vunpack.c.l.b16 %v3234
        %v3304 = vunpack.c.h.b16 %v3234
        %v3305 = vunpack.c.l.b16 %v3235
        %v3306 = vunpack.c.h.b16 %v3235
        %v3307 = vunpack.c.l.b16 %v3236
        %v3308 = vunpack.c.h.b16 %v3236
        %v3309 = vunpack.c.l.b16 %v3237
        %v3310 = vunpack.c.h.b16 %v3237
        %v3311 = vunpack.c.l.b16 %v3238
        %v3312 = vunpack.c.h.b16 %v3238
        %v3313 = vunpack.c.l.b16 %v3239
        %v3314 = vunpack.c.h.b16 %v3239
        %v3315 = vunpack.c.l.b16 %v3240
        %v3316 = vunpack.c.h.b16 %v3240
        %v3317 = vunpack.c.l.b16 %v3241
        %v3318 = vunpack.c.h.b16 %v3241
        %v3319 = vunpack.c.l.b16 %v3242
        %v3320 = vunpack.c.h.b16 %v3242
        %v3321 = vunpack.c.l.b16 %v3243
        %v3322 = vunpack.c.h.b16 %v3243
        %v3323 = vunpack.c.l.b16 %v3244
        %v3324 = vunpack.c.h.b16 %v3244
        %v3325 = vunpack.c.l.b16 %v3245
        %v3326 = vunpack.c.h.b16 %v3245
        %v3327 = vunpack.c.l.b16 %v3246
        %v3328 = vunpack.c.h.b16 %v3246
        %v3329 = vunpack.c.l.b16 %v3247
        %v3330 = vunpack.c.h.b16 %v3247
        %v3331 = vunpack.c.l.b16 %v3248
        %v3332 = vunpack.c.h.b16 %v3248
        %v3333 = vunpack.c.l.b16 %v3249
        %v3334 = vunpack.c.h.b16 %v3249
        %v3335 = vunpack.c.l.b16 %v3250
        %v3336 = vunpack.c.h.b16 %v3250
        %v3337 = vunpack.c.l.b16 %v3251
        %v3338 = vunpack.c.h.b16 %v3251
        %v3339 = vunpack.c.l.b16 %v3252
        %v3340 = vunpack.c.h.b16 %v3252
        %v3341 = vunpack.c.l.b16 %v3253
        %v3342 = vunpack.c.h.b16 %v3253
        %v3343 = vunpack.c.l.b16 %v3254
        %v3344 = vunpack.c.h.b16 %v3254
        %v3345 = vunpack.c.l.b16 %v3255
        %v3346 = vunpack.c.h.b16 %v3255
        %v3347 = vunpack.c.l.b16 %v3256
        %v3348 = vunpack.c.h.b16 %v3256
        %v3349 = vunpack.c.l.b16 %v3257
        %v3350 = vunpack.c.h.b16 %v3257
        %v3351 = vunpack.c.l.b16 %v3258
        %v3352 = vunpack.c.h.b16 %v3258
        %v3353 = vunpack.c.l.b16 %v3259
        %v3354 = vunpack.c.h.b16 %v3259
        %v3355 = vunpack.c.l.b16 %v3260
        %v3356 = vunpack.c.h.b16 %v3260
        %v3357 = vpack.c.b16 %v3295, %v3293
        %v3358 = vpack.c.b16 %v3296, %v3294
        %v3359 = vpack.c.b16 %v3299, %v3297
        %v3360 = vpack.c.b16 %v3300, %v3298
        %v3361 = vpack.c.b16 %v3303, %v3301
        %v3362 = vpack.c.b16 %v3304, %v3302
        %v3363 = vpack.c.b16 %v3307, %v3305
        %v3364 = vpack.c.b16 %v3308, %v3306
        %v3365 = vpack.c.b16 %v3311, %v3309
        %v3366 = vpack.c.b16 %v3312, %v3310
        %v3367 = vpack.c.b16 %v3315, %v3313
        %v3368 = vpack.c.b16 %v3316, %v3314
        %v3369 = vpack.c.b16 %v3319, %v3317
        %v3370 = vpack.c.b16 %v3320, %v3318
        %v3371 = vpack.c.b16 %v3323, %v3321
        %v3372 = vpack.c.b16 %v3324, %v3322
        %v3373 = vpack.c.b16 %v3327, %v3325
        %v3374 = vpack.c.b16 %v3328, %v3326
        %v3375 = vpack.c.b16 %v3331, %v3329
        %v3376 = vpack.c.b16 %v3332, %v3330
        %v3377 = vpack.c.b16 %v3335, %v3333
        %v3378 = vpack.c.b16 %v3336, %v3334
        %v3379 = vpack.c.b16 %v3339, %v3337
        %v3380 = vpack.c.b16 %v3340, %v3338
        %v3381 = vpack.c.b16 %v3343, %v3341
        %v3382 = vpack.c.b16 %v3344, %v3342
        %v3383 = vpack.c.b16 %v3347, %v3345
        %v3384 = vpack.c.b16 %v3348, %v3346
        %v3385 = vpack.c.b16 %v3351, %v3349
        %v3386 = vpack.c.b16 %v3352, %v3350
        %v3387 = vpack.c.b16 %v3355, %v3353
        %v3388 = vpack.c.b16 %v3356, %v3354
        %3421 = vmatprep.subr.bf16.mxu0 %v3372
        %3422 = vmatpush1.bf16.msra.mxu0 %v3371
        %3423 = vmatprep.subr.bf16.mxu0 %v3370
        %3424 = vmatpush1.bf16.msra.mxu0 %v3369
        %3425 = vmatprep.subr.bf16.mxu0 %v3368
        %3426 = vmatpush1.bf16.msra.mxu0 %v3367
        %3427 = vmatprep.subr.bf16.mxu0 %v3366
        %3428 = vmatpush1.bf16.msra.mxu0 %v3365
        %3429 = vmatprep.subr.bf16.mxu0 %v3364
        %3430 = vmatpush1.bf16.msra.mxu0 %v3363
        %3431 = vmatprep.subr.bf16.mxu0 %v3362
        %3432 = vmatpush1.bf16.msra.mxu0 %v3361
        %3433 = vmatprep.subr.bf16.mxu0 %v3360
        %3434 = vmatpush1.bf16.msra.mxu0 %v3359
        %3435 = vmatprep.subr.bf16.mxu0 %v3358
        %3436 = vmatpush1.bf16.msra.mxu0 %v3357
        %3437 = vmatprep.subr.bf16.mxu0 %v3388
        %3438 = vmatpush2.bf16.msra.mxu0 %v3387
        %3439 = vmatprep.subr.bf16.mxu0 %v3386
        %3440 = vmatpush2.bf16.msra.mxu0 %v3385
        %3441 = vmatprep.subr.bf16.mxu0 %v3384
        %3442 = vmatpush2.bf16.msra.mxu0 %v3383
        %3443 = vmatprep.subr.bf16.mxu0 %v3382
        %3444 = vmatpush2.bf16.msra.mxu0 %v3381
        %3445 = vmatprep.subr.bf16.mxu0 %v3380
        %3446 = vmatpush2.bf16.msra.mxu0 %v3379
        %3447 = vmatprep.subr.bf16.mxu0 %v3378
        %3448 = vmatpush2.bf16.msra.mxu0 %v3377
        %3449 = vmatprep.subr.bf16.mxu0 %v3376
        %3450 = vmatpush2.bf16.msra.mxu0 %v3375
        %3451 = vmatprep.subr.bf16.mxu0 %v3374
        %3452 = vmatpush2.bf16.msra.mxu0 %v3373
        %3453 = vmatprep.mubr.bf16.mxu0 %v3207
        %3454 = vmatmul.mubr.bf16.gmra.mxu0 %v3206
        %v3455 = vpop.f32.mrf.mxu0
        %v3456 = vadd.f32 0.0, %v3455
        %v3457 = vpop.f32.mrf.mxu0
        %v3458 = vadd.f32 0.0, %v3457
        %v3459 = vpop.f32.mrf.mxu0
        %v3460 = vadd.f32 0.0, %v3459
        %v3461 = vpop.f32.mrf.mxu0
        %v3462 = vadd.f32 0.0, %v3461
        %3463 = vmatprep.mubr.bf16.mxu0 %v3209
        %3464 = vmatmul.mubr.bf16.gmra.mxu0 %v3208
        %v3465 = vpop.f32.mrf.mxu0
        %v3466 = vadd.f32 0.0, %v3465
        %v3467 = vpop.f32.mrf.mxu0
        %v3468 = vadd.f32 0.0, %v3467
        %v3469 = vpop.f32.mrf.mxu0
        %v3470 = vadd.f32 0.0, %v3469
        %v3471 = vpop.f32.mrf.mxu0
        %v3472 = vadd.f32 0.0, %v3471
        %3473 = vmatprep.mubr.bf16.mxu0 %v3211
        %3474 = vmatmul.mubr.bf16.gmra.mxu0 %v3210
        %v3475 = vpop.f32.mrf.mxu0
        %v3476 = vadd.f32 0.0, %v3475
        %v3477 = vpop.f32.mrf.mxu0
        %v3478 = vadd.f32 0.0, %v3477
        %v3479 = vpop.f32.mrf.mxu0
        %v3480 = vadd.f32 0.0, %v3479
        %v3481 = vpop.f32.mrf.mxu0
        %v3482 = vadd.f32 0.0, %v3481
        %3483 = vmatprep.mubr.bf16.mxu0 %v3213
        %3484 = vmatmul.mubr.bf16.gmra.mxu0 %v3212
        %v3485 = vpop.f32.mrf.mxu0
        %v3486 = vadd.f32 0.0, %v3485
        %v3487 = vpop.f32.mrf.mxu0
        %v3488 = vadd.f32 0.0, %v3487
        %v3489 = vpop.f32.mrf.mxu0
        %v3490 = vadd.f32 0.0, %v3489
        %v3491 = vpop.f32.mrf.mxu0
        %v3492 = vadd.f32 0.0, %v3491
        %3493 = vmatprep.mubr.bf16.mxu0 %v3215
        %3494 = vmatmul.mubr.bf16.gmra.mxu0 %v3214
        %v3495 = vpop.f32.mrf.mxu0
        %v3496 = vadd.f32 0.0, %v3495
        %v3497 = vpop.f32.mrf.mxu0
        %v3498 = vadd.f32 0.0, %v3497
        %v3499 = vpop.f32.mrf.mxu0
        %v3500 = vadd.f32 0.0, %v3499
        %v3501 = vpop.f32.mrf.mxu0
        %v3502 = vadd.f32 0.0, %v3501
        %3503 = vmatprep.mubr.bf16.mxu0 %v3217
        %3504 = vmatmul.mubr.bf16.gmra.mxu0 %v3216
        %v3505 = vpop.f32.mrf.mxu0
        %v3506 = vadd.f32 0.0, %v3505
        %v3507 = vpop.f32.mrf.mxu0
        %v3508 = vadd.f32 0.0, %v3507
        %v3509 = vpop.f32.mrf.mxu0
        %v3510 = vadd.f32 0.0, %v3509
        %v3511 = vpop.f32.mrf.mxu0
        %v3512 = vadd.f32 0.0, %v3511
        %3513 = vmatprep.mubr.bf16.mxu0 %v3219
        %3514 = vmatmul.mubr.bf16.gmra.mxu0 %v3218
        %v3515 = vpop.f32.mrf.mxu0
        %v3516 = vadd.f32 0.0, %v3515
        %v3517 = vpop.f32.mrf.mxu0
        %v3518 = vadd.f32 0.0, %v3517
        %v3519 = vpop.f32.mrf.mxu0
        %v3520 = vadd.f32 0.0, %v3519
        %v3521 = vpop.f32.mrf.mxu0
        %v3522 = vadd.f32 0.0, %v3521
        %3523 = vmatprep.mubr.bf16.mxu0 %v3221
        %3524 = vmatmul.mubr.bf16.gmra.mxu0 %v3220
        %v3525 = vpop.f32.mrf.mxu0
        %v3526 = vadd.f32 0.0, %v3525
        %v3527 = vpop.f32.mrf.mxu0
        %v3528 = vadd.f32 0.0, %v3527
        %v3529 = vpop.f32.mrf.mxu0
        %v3530 = vadd.f32 0.0, %v3529
        %v3531 = vpop.f32.mrf.mxu0
        %v3532 = vadd.f32 0.0, %v3531
        %3533 = vmatprep.mubr.bf16.mxu0 %v3223
        %3534 = vmatmul.mubr.bf16.gmra.mxu0 %v3222
        %v3535 = vpop.f32.mrf.mxu0
        %v3536 = vadd.f32 0.0, %v3535
        %v3537 = vpop.f32.mrf.mxu0
        %v3538 = vadd.f32 0.0, %v3537
        %v3539 = vpop.f32.mrf.mxu0
        %v3540 = vadd.f32 0.0, %v3539
        %v3541 = vpop.f32.mrf.mxu0
        %v3542 = vadd.f32 0.0, %v3541
        %3543 = vmatprep.mubr.bf16.mxu0 %v3225
        %3544 = vmatmul.mubr.bf16.gmra.mxu0 %v3224
        %v3545 = vpop.f32.mrf.mxu0
        %v3546 = vadd.f32 0.0, %v3545
        %v3547 = vpop.f32.mrf.mxu0
        %v3548 = vadd.f32 0.0, %v3547
        %v3549 = vpop.f32.mrf.mxu0
        %v3550 = vadd.f32 0.0, %v3549
        %v3551 = vpop.f32.mrf.mxu0
        %v3552 = vadd.f32 0.0, %v3551
        %3553 = vmatprep.mubr.bf16.mxu0 %v3227
        %3554 = vmatmul.mubr.bf16.gmra.mxu0 %v3226
        %v3555 = vpop.f32.mrf.mxu0
        %v3556 = vadd.f32 0.0, %v3555
        %v3557 = vpop.f32.mrf.mxu0
        %v3558 = vadd.f32 0.0, %v3557
        %v3559 = vpop.f32.mrf.mxu0
        %v3560 = vadd.f32 0.0, %v3559
        %v3561 = vpop.f32.mrf.mxu0
        %v3562 = vadd.f32 0.0, %v3561
        %3563 = vdwg.mxu0
        %v3596 = vunpack.c.l.b16 %v767
        %v3597 = vunpack.c.h.b16 %v767
        %v3598 = vunpack.c.l.b16 %v768
        %v3599 = vunpack.c.h.b16 %v768
        %v3600 = vunpack.c.l.b16 %v769
        %v3601 = vunpack.c.h.b16 %v769
        %v3602 = vunpack.c.l.b16 %v770
        %v3603 = vunpack.c.h.b16 %v770
        %v3604 = vunpack.c.l.b16 %v771
        %v3605 = vunpack.c.h.b16 %v771
        %v3606 = vunpack.c.l.b16 %v772
        %v3607 = vunpack.c.h.b16 %v772
        %v3608 = vunpack.c.l.b16 %v773
        %v3609 = vunpack.c.h.b16 %v773
        %v3610 = vunpack.c.l.b16 %v774
        %v3611 = vunpack.c.h.b16 %v774
        %v3612 = vunpack.c.l.b16 %v775
        %v3613 = vunpack.c.h.b16 %v775
        %v3614 = vunpack.c.l.b16 %v776
        %v3615 = vunpack.c.h.b16 %v776
        %v3616 = vunpack.c.l.b16 %v777
        %v3617 = vunpack.c.h.b16 %v777
        %v3618 = vunpack.c.l.b16 %v778
        %v3619 = vunpack.c.h.b16 %v778
        %v3620 = vunpack.c.l.b16 %v779
        %v3621 = vunpack.c.h.b16 %v779
        %v3622 = vunpack.c.l.b16 %v780
        %v3623 = vunpack.c.h.b16 %v780
        %v3624 = vunpack.c.l.b16 %v781
        %v3625 = vunpack.c.h.b16 %v781
        %v3626 = vunpack.c.l.b16 %v782
        %v3627 = vunpack.c.h.b16 %v782
        %v3628 = vunpack.c.l.b16 %v783
        %v3629 = vunpack.c.h.b16 %v783
        %v3630 = vunpack.c.l.b16 %v784
        %v3631 = vunpack.c.h.b16 %v784
        %v3632 = vunpack.c.l.b16 %v785
        %v3633 = vunpack.c.h.b16 %v785
        %v3634 = vunpack.c.l.b16 %v786
        %v3635 = vunpack.c.h.b16 %v786
        %v3636 = vunpack.c.l.b16 %v787
        %v3637 = vunpack.c.h.b16 %v787
        %v3638 = vunpack.c.l.b16 %v788
        %v3639 = vunpack.c.h.b16 %v788
        %v3640 = vunpack.c.l.b16 %v789
        %v3641 = vunpack.c.h.b16 %v789
        %v3642 = vunpack.c.l.b16 %v790
        %v3643 = vunpack.c.h.b16 %v790
        %v3644 = vunpack.c.l.b16 %v791
        %v3645 = vunpack.c.h.b16 %v791
        %v3646 = vunpack.c.l.b16 %v792
        %v3647 = vunpack.c.h.b16 %v792
        %v3648 = vunpack.c.l.b16 %v793
        %v3649 = vunpack.c.h.b16 %v793
        %v3650 = vunpack.c.l.b16 %v794
        %v3651 = vunpack.c.h.b16 %v794
        %v3652 = vunpack.c.l.b16 %v795
        %v3653 = vunpack.c.h.b16 %v795
        %v3654 = vunpack.c.l.b16 %v796
        %v3655 = vunpack.c.h.b16 %v796
        %v3656 = vunpack.c.l.b16 %v797
        %v3657 = vunpack.c.h.b16 %v797
        %v3658 = vunpack.c.l.b16 %v798
        %v3659 = vunpack.c.h.b16 %v798
        %v3660 = vpack.c.b16 %v3598, %v3596
        %v3661 = vpack.c.b16 %v3599, %v3597
        %v3662 = vpack.c.b16 %v3602, %v3600
        %v3663 = vpack.c.b16 %v3603, %v3601
        %v3664 = vpack.c.b16 %v3606, %v3604
        %v3665 = vpack.c.b16 %v3607, %v3605
        %v3666 = vpack.c.b16 %v3610, %v3608
        %v3667 = vpack.c.b16 %v3611, %v3609
        %v3668 = vpack.c.b16 %v3614, %v3612
        %v3669 = vpack.c.b16 %v3615, %v3613
        %v3670 = vpack.c.b16 %v3618, %v3616
        %v3671 = vpack.c.b16 %v3619, %v3617
        %v3672 = vpack.c.b16 %v3622, %v3620
        %v3673 = vpack.c.b16 %v3623, %v3621
        %v3674 = vpack.c.b16 %v3626, %v3624
        %v3675 = vpack.c.b16 %v3627, %v3625
        %v3676 = vpack.c.b16 %v3630, %v3628
        %v3677 = vpack.c.b16 %v3631, %v3629
        %v3678 = vpack.c.b16 %v3634, %v3632
        %v3679 = vpack.c.b16 %v3635, %v3633
        %v3680 = vpack.c.b16 %v3638, %v3636
        %v3681 = vpack.c.b16 %v3639, %v3637
        %v3682 = vpack.c.b16 %v3642, %v3640
        %v3683 = vpack.c.b16 %v3643, %v3641
        %v3684 = vpack.c.b16 %v3646, %v3644
        %v3685 = vpack.c.b16 %v3647, %v3645
        %v3686 = vpack.c.b16 %v3650, %v3648
        %v3687 = vpack.c.b16 %v3651, %v3649
        %v3688 = vpack.c.b16 %v3654, %v3652
        %v3689 = vpack.c.b16 %v3655, %v3653
        %v3690 = vpack.c.b16 %v3658, %v3656
        %v3691 = vpack.c.b16 %v3659, %v3657
        %3724 = vmatprep.subr.bf16.mxu0 %v3675
        %3725 = vmatpush1.bf16.msra.mxu0 %v3674
        %3726 = vmatprep.subr.bf16.mxu0 %v3673
        %3727 = vmatpush1.bf16.msra.mxu0 %v3672
        %3728 = vmatprep.subr.bf16.mxu0 %v3671
        %3729 = vmatpush1.bf16.msra.mxu0 %v3670
        %3730 = vmatprep.subr.bf16.mxu0 %v3669
        %3731 = vmatpush1.bf16.msra.mxu0 %v3668
        %3732 = vmatprep.subr.bf16.mxu0 %v3667
        %3733 = vmatpush1.bf16.msra.mxu0 %v3666
        %3734 = vmatprep.subr.bf16.mxu0 %v3665
        %3735 = vmatpush1.bf16.msra.mxu0 %v3664
        %3736 = vmatprep.subr.bf16.mxu0 %v3663
        %3737 = vmatpush1.bf16.msra.mxu0 %v3662
        %3738 = vmatprep.subr.bf16.mxu0 %v3661
        %3739 = vmatpush1.bf16.msra.mxu0 %v3660
        %3740 = vmatprep.subr.bf16.mxu0 %v3691
        %3741 = vmatpush2.bf16.msra.mxu0 %v3690
        %3742 = vmatprep.subr.bf16.mxu0 %v3689
        %3743 = vmatpush2.bf16.msra.mxu0 %v3688
        %3744 = vmatprep.subr.bf16.mxu0 %v3687
        %3745 = vmatpush2.bf16.msra.mxu0 %v3686
        %3746 = vmatprep.subr.bf16.mxu0 %v3685
        %3747 = vmatpush2.bf16.msra.mxu0 %v3684
        %3748 = vmatprep.subr.bf16.mxu0 %v3683
        %3749 = vmatpush2.bf16.msra.mxu0 %v3682
        %3750 = vmatprep.subr.bf16.mxu0 %v3681
        %3751 = vmatpush2.bf16.msra.mxu0 %v3680
        %3752 = vmatprep.subr.bf16.mxu0 %v3679
        %3753 = vmatpush2.bf16.msra.mxu0 %v3678
        %3754 = vmatprep.subr.bf16.mxu0 %v3677
        %3755 = vmatpush2.bf16.msra.mxu0 %v3676
        %3756 = vmatprep.mubr.bf16.mxu0 %v746
        %3757 = vmatmul.mubr.bf16.gmra.mxu0 %v745
        %v3758 = vpop.f32.mrf.mxu0
        %v3759 = vadd.f32 %v3456, %v3758
        %v3760 = vpop.f32.mrf.mxu0
        %v3761 = vadd.f32 %v3458, %v3760
        %v3762 = vpop.f32.mrf.mxu0
        %v3763 = vadd.f32 %v3460, %v3762
        %v3764 = vpop.f32.mrf.mxu0
        %v3765 = vadd.f32 %v3462, %v3764
        %3766 = vmatprep.mubr.bf16.mxu0 %v748
        %3767 = vmatmul.mubr.bf16.gmra.mxu0 %v747
        %v3768 = vpop.f32.mrf.mxu0
        %v3769 = vadd.f32 %v3466, %v3768
        %v3770 = vpop.f32.mrf.mxu0
        %v3771 = vadd.f32 %v3468, %v3770
        %v3772 = vpop.f32.mrf.mxu0
        %v3773 = vadd.f32 %v3470, %v3772
        %v3774 = vpop.f32.mrf.mxu0
        %v3775 = vadd.f32 %v3472, %v3774
        %3776 = vmatprep.mubr.bf16.mxu0 %v750
        %3777 = vmatmul.mubr.bf16.gmra.mxu0 %v749
        %v3778 = vpop.f32.mrf.mxu0
        %v3779 = vadd.f32 %v3476, %v3778
        %v3780 = vpop.f32.mrf.mxu0
        %v3781 = vadd.f32 %v3478, %v3780
        %v3782 = vpop.f32.mrf.mxu0
        %v3783 = vadd.f32 %v3480, %v3782
        %v3784 = vpop.f32.mrf.mxu0
        %v3785 = vadd.f32 %v3482, %v3784
        %3786 = vmatprep.mubr.bf16.mxu0 %v752
        %3787 = vmatmul.mubr.bf16.gmra.mxu0 %v751
        %v3788 = vpop.f32.mrf.mxu0
        %v3789 = vadd.f32 %v3486, %v3788
        %v3790 = vpop.f32.mrf.mxu0
        %v3791 = vadd.f32 %v3488, %v3790
        %v3792 = vpop.f32.mrf.mxu0
        %v3793 = vadd.f32 %v3490, %v3792
        %v3794 = vpop.f32.mrf.mxu0
        %v3795 = vadd.f32 %v3492, %v3794
        %3796 = vmatprep.mubr.bf16.mxu0 %v754
        %3797 = vmatmul.mubr.bf16.gmra.mxu0 %v753
        %v3798 = vpop.f32.mrf.mxu0
        %v3799 = vadd.f32 %v3496, %v3798
        %v3800 = vpop.f32.mrf.mxu0
        %v3801 = vadd.f32 %v3498, %v3800
        %v3802 = vpop.f32.mrf.mxu0
        %v3803 = vadd.f32 %v3500, %v3802
        %v3804 = vpop.f32.mrf.mxu0
        %v3805 = vadd.f32 %v3502, %v3804
        %3806 = vmatprep.mubr.bf16.mxu0 %v756
        %3807 = vmatmul.mubr.bf16.gmra.mxu0 %v755
        %v3808 = vpop.f32.mrf.mxu0
        %v3809 = vadd.f32 %v3506, %v3808
        %v3810 = vpop.f32.mrf.mxu0
        %v3811 = vadd.f32 %v3508, %v3810
        %v3812 = vpop.f32.mrf.mxu0
        %v3813 = vadd.f32 %v3510, %v3812
        %v3814 = vpop.f32.mrf.mxu0
        %v3815 = vadd.f32 %v3512, %v3814
        %3816 = vmatprep.mubr.bf16.mxu0 %v758
        %3817 = vmatmul.mubr.bf16.gmra.mxu0 %v757
        %v3818 = vpop.f32.mrf.mxu0
        %v3819 = vadd.f32 %v3516, %v3818
        %v3820 = vpop.f32.mrf.mxu0
        %v3821 = vadd.f32 %v3518, %v3820
        %v3822 = vpop.f32.mrf.mxu0
        %v3823 = vadd.f32 %v3520, %v3822
        %v3824 = vpop.f32.mrf.mxu0
        %v3825 = vadd.f32 %v3522, %v3824
        %3826 = vmatprep.mubr.bf16.mxu0 %v760
        %3827 = vmatmul.mubr.bf16.gmra.mxu0 %v759
        %v3828 = vpop.f32.mrf.mxu0
        %v3829 = vadd.f32 %v3526, %v3828
        %v3830 = vpop.f32.mrf.mxu0
        %v3831 = vadd.f32 %v3528, %v3830
        %v3832 = vpop.f32.mrf.mxu0
        %v3833 = vadd.f32 %v3530, %v3832
        %v3834 = vpop.f32.mrf.mxu0
        %v3835 = vadd.f32 %v3532, %v3834
        %3836 = vmatprep.mubr.bf16.mxu0 %v762
        %3837 = vmatmul.mubr.bf16.gmra.mxu0 %v761
        %v3838 = vpop.f32.mrf.mxu0
        %v3839 = vadd.f32 %v3536, %v3838
        %v3840 = vpop.f32.mrf.mxu0
        %v3841 = vadd.f32 %v3538, %v3840
        %v3842 = vpop.f32.mrf.mxu0
        %v3843 = vadd.f32 %v3540, %v3842
        %v3844 = vpop.f32.mrf.mxu0
        %v3845 = vadd.f32 %v3542, %v3844
        %3846 = vmatprep.mubr.bf16.mxu0 %v764
        %3847 = vmatmul.mubr.bf16.gmra.mxu0 %v763
        %v3848 = vpop.f32.mrf.mxu0
        %v3849 = vadd.f32 %v3546, %v3848
        %v3850 = vpop.f32.mrf.mxu0
        %v3851 = vadd.f32 %v3548, %v3850
        %v3852 = vpop.f32.mrf.mxu0
        %v3853 = vadd.f32 %v3550, %v3852
        %v3854 = vpop.f32.mrf.mxu0
        %v3855 = vadd.f32 %v3552, %v3854
        %3856 = vmatprep.mubr.bf16.mxu0 %v766
        %3857 = vmatmul.mubr.bf16.gmra.mxu0 %v765
        %v3858 = vpop.f32.mrf.mxu0
        %v3859 = vadd.f32 %v3556, %v3858
        %v3860 = vpop.f32.mrf.mxu0
        %v3861 = vadd.f32 %v3558, %v3860
        %v3862 = vpop.f32.mrf.mxu0
        %v3863 = vadd.f32 %v3560, %v3862
        %v3864 = vpop.f32.mrf.mxu0
        %v3865 = vadd.f32 %v3562, %v3864
        %3866 = vdwg.mxu0
        %v3867 = vld [vmem:[%s344 + $0x17] sm:$0xff]
        %v3868 = vld [vmem:[%s344 + $0x1f] sm:$0xff]
        %v3869 = vld [vmem:[%s344 + $0x27] sm:$0xff]
        %v3870 = vld [vmem:[%s344 + $0x2f] sm:$0xff]
        %v3871 = vld [vmem:[%s344 + $0x37] sm:$0xff]
        %v3872 = vld [vmem:[%s344 + $0x3f] sm:$0xff]
        %v3873 = vld [vmem:[%s344 + $0x47] sm:$0xff]
        %v3874 = vld [vmem:[%s344 + $0x4f] sm:$0xff]
        %v3875 = vld [vmem:[%s344 + $0x57] sm:$0xff]
        %v3876 = vld [vmem:[%s344 + $0x5f] sm:$0xff]
        %v3877 = vld [vmem:[%s344 + $0x67] sm:$0xff]
        %v3878 = vld [vmem:[%s344 + $0x6f] sm:$0xff]
        %v3879 = vld [vmem:[%s344 + $0x77] sm:$0xff]
        %v3880 = vld [vmem:[%s344 + $0x7f] sm:$0xff]
        %v3881 = vld [vmem:[%s344 + $0x87] sm:$0xff]
        %v3882 = vld [vmem:[%s344 + $0x8f] sm:$0xff]
        %v3883 = vld [vmem:[%s344 + $0x97] sm:$0xff]
        %v3884 = vld [vmem:[%s344 + $0x9f] sm:$0xff]
        %v3885 = vld [vmem:[%s344 + $0xa7] sm:$0xff]
        %v3886 = vld [vmem:[%s344 + $0xaf] sm:$0xff]
        %v3887 = vld [vmem:[%s344 + $0xb7] sm:$0xff]
        %v3888 = vld [vmem:[%s344 + $0xbf] sm:$0xff]
        %v3889 = vpack.c.bf16 %v3868, %v3867
        %v3890 = vpack.c.bf16 %v3870, %v3869
        %v3891 = vpack.c.bf16 %v3872, %v3871
        %v3892 = vpack.c.bf16 %v3874, %v3873
        %v3893 = vpack.c.bf16 %v3876, %v3875
        %v3894 = vpack.c.bf16 %v3878, %v3877
        %v3895 = vpack.c.bf16 %v3880, %v3879
        %v3896 = vpack.c.bf16 %v3882, %v3881
        %v3897 = vpack.c.bf16 %v3884, %v3883
        %v3898 = vpack.c.bf16 %v3886, %v3885
        %v3899 = vpack.c.bf16 %v3888, %v3887
        %s3900 = scalar_lea.vmem %s2, 72
        %v3901 = vld [vmem:[%s3900] sm:$0xff]
        %v3902 = vld [vmem:[%s344 + $0x19] sm:$0xff]
        %v3903 = vld [vmem:[%s344 + $0x21] sm:$0xff]
        %v3904 = vld [vmem:[%s344 + $0x29] sm:$0xff]
        %v3905 = vld [vmem:[%s344 + $0x31] sm:$0xff]
        %v3906 = vld [vmem:[%s344 + $0x39] sm:$0xff]
        %v3907 = vld [vmem:[%s344 + $0x41] sm:$0xff]
        %v3908 = vld [vmem:[%s344 + $0x49] sm:$0xff]
        %v3909 = vld [vmem:[%s344 + $0x51] sm:$0xff]
        %v3910 = vld [vmem:[%s344 + $0x59] sm:$0xff]
        %v3911 = vld [vmem:[%s344 + $0x61] sm:$0xff]
        %v3912 = vld [vmem:[%s344 + $0x69] sm:$0xff]
        %v3913 = vld [vmem:[%s344 + $0x71] sm:$0xff]
        %v3914 = vld [vmem:[%s344 + $0x79] sm:$0xff]
        %v3915 = vld [vmem:[%s344 + $0x81] sm:$0xff]
        %v3916 = vld [vmem:[%s344 + $0x89] sm:$0xff]
        %v3917 = vld [vmem:[%s344 + $0x91] sm:$0xff]
        %v3918 = vld [vmem:[%s344 + $0x99] sm:$0xff]
        %v3919 = vld [vmem:[%s344 + $0xa1] sm:$0xff]
        %v3920 = vld [vmem:[%s344 + $0xa9] sm:$0xff]
        %v3921 = vld [vmem:[%s344 + $0xb1] sm:$0xff]
        %v3922 = vld [vmem:[%s344 + $0xb9] sm:$0xff]
        %v3923 = vld [vmem:[%s344 + $0xc1] sm:$0xff]
        %v3924 = vpack.c.bf16 %v3903, %v3902
        %v3925 = vpack.c.bf16 %v3905, %v3904
        %v3926 = vpack.c.bf16 %v3907, %v3906
        %v3927 = vpack.c.bf16 %v3909, %v3908
        %v3928 = vpack.c.bf16 %v3911, %v3910
        %v3929 = vpack.c.bf16 %v3913, %v3912
        %v3930 = vpack.c.bf16 %v3915, %v3914
        %v3931 = vpack.c.bf16 %v3917, %v3916
        %v3932 = vpack.c.bf16 %v3919, %v3918
        %v3933 = vpack.c.bf16 %v3921, %v3920
        %v3934 = vpack.c.bf16 %v3923, %v3922
        %s3935 = scalar_lea.vmem %s2, 80
        %v3936 = vld [vmem:[%s3935] sm:$0xff]
        %v3938 = vunpack.c.l.b16 %v3936
        %v3939 = vunpack.c.h.b16 %v3936
        %v3940 = vpack.c.b16 %v3938, %v3938
        %v3941 = vpack.c.b16 %v3939, %v3939
        %v3943 = vsel %vm391, %v3924, 0
        %v3946 = vsel %vm391, %v3925, 0
        %v3949 = vsel %vm391, %v3926, 0
        %v3952 = vsel %vm391, %v3927, 0
        %v3955 = vsel %vm391, %v3928, 0
        %v3958 = vsel %vm391, %v3929, 0
        %v3961 = vsel %vm391, %v3930, 0
        %v3964 = vsel %vm391, %v3931, 0
        %v3967 = vsel %vm391, %v3932, 0
        %v3970 = vsel %vm391, %v3933, 0
        %v3973 = vsel %vm391, %v3934, 0
        %v3976 = vsel %vm425, %v3940, 0
        %v3979 = vsel %vm425, %v3941, 0
        %3981 = vmatprep.subr.bf16.mxu0 0
        %3982 = vmatpush1.bf16.msra.mxu0 0
        %3983 = vmatprep.subr.bf16.mxu0 0
        %3984 = vmatpush1.bf16.msra.mxu0 0
        %3985 = vmatprep.subr.bf16.mxu0 0
        %3986 = vmatpush1.bf16.msra.mxu0 0
        %3987 = vmatprep.subr.bf16.mxu0 0
        %3988 = vmatpush1.bf16.msra.mxu0 0
        %3989 = vmatprep.subr.bf16.mxu0 0
        %3990 = vmatpush1.bf16.msra.mxu0 0
        %3991 = vmatprep.subr.bf16.mxu0 0
        %3992 = vmatpush1.bf16.msra.mxu0 0
        %3993 = vmatprep.subr.bf16.mxu0 0
        %3994 = vmatpush1.bf16.msra.mxu0 0
        %3995 = vmatprep.subr.bf16.mxu0 %v3979
        %3996 = vmatpush1.bf16.msra.mxu0 %v3976
        %3997 = vmatprep.subr.bf16.mxu0 0
        %3998 = vmatpush2.bf16.msra.mxu0 0
        %3999 = vmatprep.subr.bf16.mxu0 0
        %4000 = vmatpush2.bf16.msra.mxu0 0
        %4001 = vmatprep.subr.bf16.mxu0 0
        %4002 = vmatpush2.bf16.msra.mxu0 0
        %4003 = vmatprep.subr.bf16.mxu0 0
        %4004 = vmatpush2.bf16.msra.mxu0 0
        %4005 = vmatprep.subr.bf16.mxu0 0
        %4006 = vmatpush2.bf16.msra.mxu0 0
        %4007 = vmatprep.subr.bf16.mxu0 0
        %4008 = vmatpush2.bf16.msra.mxu0 0
        %4009 = vmatprep.subr.bf16.mxu0 0
        %4010 = vmatpush2.bf16.msra.mxu0 0
        %4011 = vmatprep.subr.bf16.mxu0 0
        %4012 = vmatpush2.bf16.msra.mxu0 0
        %4013 = vmatprep.mubr.bf16.mxu0 0
        %4014 = vmatmul.mubr.bf16.gmra.mxu0 %v3943
        %v4015 = vpop.f32.mrf.mxu0
        %v4016 = vadd.f32 0.0, %v4015
        %v4017 = vpop.f32.mrf.mxu0
        %v4018 = vadd.f32 0.0, %v4017
        %v4019 = vpop.f32.mrf.mxu0
        %v4020 = vadd.f32 0.0, %v4019
        %v4021 = vpop.f32.mrf.mxu0
        %v4022 = vadd.f32 0.0, %v4021
        %4023 = vmatprep.mubr.bf16.mxu0 0
        %4024 = vmatmul.mubr.bf16.gmra.mxu0 %v3946
        %v4025 = vpop.f32.mrf.mxu0
        %v4026 = vadd.f32 0.0, %v4025
        %v4027 = vpop.f32.mrf.mxu0
        %v4028 = vadd.f32 0.0, %v4027
        %v4029 = vpop.f32.mrf.mxu0
        %v4030 = vadd.f32 0.0, %v4029
        %v4031 = vpop.f32.mrf.mxu0
        %v4032 = vadd.f32 0.0, %v4031
        %4033 = vmatprep.mubr.bf16.mxu0 0
        %4034 = vmatmul.mubr.bf16.gmra.mxu0 %v3949
        %v4035 = vpop.f32.mrf.mxu0
        %v4036 = vadd.f32 0.0, %v4035
        %v4037 = vpop.f32.mrf.mxu0
        %v4038 = vadd.f32 0.0, %v4037
        %v4039 = vpop.f32.mrf.mxu0
        %v4040 = vadd.f32 0.0, %v4039
        %v4041 = vpop.f32.mrf.mxu0
        %v4042 = vadd.f32 0.0, %v4041
        %4043 = vmatprep.mubr.bf16.mxu0 0
        %4044 = vmatmul.mubr.bf16.gmra.mxu0 %v3952
        %v4045 = vpop.f32.mrf.mxu0
        %v4046 = vadd.f32 0.0, %v4045
        %v4047 = vpop.f32.mrf.mxu0
        %v4048 = vadd.f32 0.0, %v4047
        %v4049 = vpop.f32.mrf.mxu0
        %v4050 = vadd.f32 0.0, %v4049
        %v4051 = vpop.f32.mrf.mxu0
        %v4052 = vadd.f32 0.0, %v4051
        %4053 = vmatprep.mubr.bf16.mxu0 0
        %4054 = vmatmul.mubr.bf16.gmra.mxu0 %v3955
        %v4055 = vpop.f32.mrf.mxu0
        %v4056 = vadd.f32 0.0, %v4055
        %v4057 = vpop.f32.mrf.mxu0
        %v4058 = vadd.f32 0.0, %v4057
        %v4059 = vpop.f32.mrf.mxu0
        %v4060 = vadd.f32 0.0, %v4059
        %v4061 = vpop.f32.mrf.mxu0
        %v4062 = vadd.f32 0.0, %v4061
        %4063 = vmatprep.mubr.bf16.mxu0 0
        %4064 = vmatmul.mubr.bf16.gmra.mxu0 %v3958
        %v4065 = vpop.f32.mrf.mxu0
        %v4066 = vadd.f32 0.0, %v4065
        %v4067 = vpop.f32.mrf.mxu0
        %v4068 = vadd.f32 0.0, %v4067
        %v4069 = vpop.f32.mrf.mxu0
        %v4070 = vadd.f32 0.0, %v4069
        %v4071 = vpop.f32.mrf.mxu0
        %v4072 = vadd.f32 0.0, %v4071
        %4073 = vmatprep.mubr.bf16.mxu0 0
        %4074 = vmatmul.mubr.bf16.gmra.mxu0 %v3961
        %v4075 = vpop.f32.mrf.mxu0
        %v4076 = vadd.f32 0.0, %v4075
        %v4077 = vpop.f32.mrf.mxu0
        %v4078 = vadd.f32 0.0, %v4077
        %v4079 = vpop.f32.mrf.mxu0
        %v4080 = vadd.f32 0.0, %v4079
        %v4081 = vpop.f32.mrf.mxu0
        %v4082 = vadd.f32 0.0, %v4081
        %4083 = vmatprep.mubr.bf16.mxu0 0
        %4084 = vmatmul.mubr.bf16.gmra.mxu0 %v3964
        %v4085 = vpop.f32.mrf.mxu0
        %v4086 = vadd.f32 0.0, %v4085
        %v4087 = vpop.f32.mrf.mxu0
        %v4088 = vadd.f32 0.0, %v4087
        %v4089 = vpop.f32.mrf.mxu0
        %v4090 = vadd.f32 0.0, %v4089
        %v4091 = vpop.f32.mrf.mxu0
        %v4092 = vadd.f32 0.0, %v4091
        %4093 = vmatprep.mubr.bf16.mxu0 0
        %4094 = vmatmul.mubr.bf16.gmra.mxu0 %v3967
        %v4095 = vpop.f32.mrf.mxu0
        %v4096 = vadd.f32 0.0, %v4095
        %v4097 = vpop.f32.mrf.mxu0
        %v4098 = vadd.f32 0.0, %v4097
        %v4099 = vpop.f32.mrf.mxu0
        %v4100 = vadd.f32 0.0, %v4099
        %v4101 = vpop.f32.mrf.mxu0
        %v4102 = vadd.f32 0.0, %v4101
        %4103 = vmatprep.mubr.bf16.mxu0 0
        %4104 = vmatmul.mubr.bf16.gmra.mxu0 %v3970
        %v4105 = vpop.f32.mrf.mxu0
        %v4106 = vadd.f32 0.0, %v4105
        %v4107 = vpop.f32.mrf.mxu0
        %v4108 = vadd.f32 0.0, %v4107
        %v4109 = vpop.f32.mrf.mxu0
        %v4110 = vadd.f32 0.0, %v4109
        %v4111 = vpop.f32.mrf.mxu0
        %v4112 = vadd.f32 0.0, %v4111
        %4113 = vmatprep.mubr.bf16.mxu0 0
        %4114 = vmatmul.mubr.bf16.gmra.mxu0 %v3973
        %v4115 = vpop.f32.mrf.mxu0
        %v4116 = vadd.f32 0.0, %v4115
        %v4117 = vpop.f32.mrf.mxu0
        %v4118 = vadd.f32 0.0, %v4117
        %v4119 = vpop.f32.mrf.mxu0
        %v4120 = vadd.f32 0.0, %v4119
        %v4121 = vpop.f32.mrf.mxu0
        %v4122 = vadd.f32 0.0, %v4121
        %4123 = vdwg.mxu0
        %v4125 = vunpack.c.l.b16 %v3901
        %v4126 = vunpack.c.h.b16 %v3901
        %v4127 = vpack.c.b16 %v4125, %v4125
        %v4128 = vpack.c.b16 %v4126, %v4126
        %v4130 = vsel %vm391, %v3889, 0
        %v4133 = vsel %vm391, %v3890, 0
        %v4136 = vsel %vm391, %v3891, 0
        %v4139 = vsel %vm391, %v3892, 0
        %v4142 = vsel %vm391, %v3893, 0
        %v4145 = vsel %vm391, %v3894, 0
        %v4148 = vsel %vm391, %v3895, 0
        %v4151 = vsel %vm391, %v3896, 0
        %v4154 = vsel %vm391, %v3897, 0
        %v4157 = vsel %vm391, %v3898, 0
        %v4160 = vsel %vm391, %v3899, 0
        %v4163 = vsel %vm425, %v4127, 0
        %v4166 = vsel %vm425, %v4128, 0
        %4168 = vmatprep.subr.bf16.mxu0 0
        %4169 = vmatpush1.bf16.msra.mxu0 0
        %4170 = vmatprep.subr.bf16.mxu0 0
        %4171 = vmatpush1.bf16.msra.mxu0 0
        %4172 = vmatprep.subr.bf16.mxu0 0
        %4173 = vmatpush1.bf16.msra.mxu0 0
        %4174 = vmatprep.subr.bf16.mxu0 0
        %4175 = vmatpush1.bf16.msra.mxu0 0
        %4176 = vmatprep.subr.bf16.mxu0 0
        %4177 = vmatpush1.bf16.msra.mxu0 0
        %4178 = vmatprep.subr.bf16.mxu0 0
        %4179 = vmatpush1.bf16.msra.mxu0 0
        %4180 = vmatprep.subr.bf16.mxu0 0
        %4181 = vmatpush1.bf16.msra.mxu0 0
        %4182 = vmatprep.subr.bf16.mxu0 %v4166
        %4183 = vmatpush1.bf16.msra.mxu0 %v4163
        %4184 = vmatprep.subr.bf16.mxu0 0
        %4185 = vmatpush2.bf16.msra.mxu0 0
        %4186 = vmatprep.subr.bf16.mxu0 0
        %4187 = vmatpush2.bf16.msra.mxu0 0
        %4188 = vmatprep.subr.bf16.mxu0 0
        %4189 = vmatpush2.bf16.msra.mxu0 0
        %4190 = vmatprep.subr.bf16.mxu0 0
        %4191 = vmatpush2.bf16.msra.mxu0 0
        %4192 = vmatprep.subr.bf16.mxu0 0
        %4193 = vmatpush2.bf16.msra.mxu0 0
        %4194 = vmatprep.subr.bf16.mxu0 0
        %4195 = vmatpush2.bf16.msra.mxu0 0
        %4196 = vmatprep.subr.bf16.mxu0 0
        %4197 = vmatpush2.bf16.msra.mxu0 0
        %4198 = vmatprep.subr.bf16.mxu0 0
        %4199 = vmatpush2.bf16.msra.mxu0 0
        %4200 = vmatprep.mubr.bf16.mxu0 0
        %4201 = vmatmul.mubr.bf16.gmra.mxu0 %v4130
        %v4202 = vpop.f32.mrf.mxu0
        %v4203 = vadd.f32 %v4016, %v4202
        %v4204 = vpop.f32.mrf.mxu0
        %v4205 = vadd.f32 %v4018, %v4204
        %v4206 = vpop.f32.mrf.mxu0
        %v4207 = vadd.f32 %v4020, %v4206
        %v4208 = vpop.f32.mrf.mxu0
        %v4209 = vadd.f32 %v4022, %v4208
        %4210 = vmatprep.mubr.bf16.mxu0 0
        %4211 = vmatmul.mubr.bf16.gmra.mxu0 %v4133
        %v4212 = vpop.f32.mrf.mxu0
        %v4213 = vadd.f32 %v4026, %v4212
        %v4214 = vpop.f32.mrf.mxu0
        %v4215 = vadd.f32 %v4028, %v4214
        %v4216 = vpop.f32.mrf.mxu0
        %v4217 = vadd.f32 %v4030, %v4216
        %v4218 = vpop.f32.mrf.mxu0
        %v4219 = vadd.f32 %v4032, %v4218
        %4220 = vmatprep.mubr.bf16.mxu0 0
        %4221 = vmatmul.mubr.bf16.gmra.mxu0 %v4136
        %v4222 = vpop.f32.mrf.mxu0
        %v4223 = vadd.f32 %v4036, %v4222
        %v4224 = vpop.f32.mrf.mxu0
        %v4225 = vadd.f32 %v4038, %v4224
        %v4226 = vpop.f32.mrf.mxu0
        %v4227 = vadd.f32 %v4040, %v4226
        %v4228 = vpop.f32.mrf.mxu0
        %v4229 = vadd.f32 %v4042, %v4228
        %4230 = vmatprep.mubr.bf16.mxu0 0
        %4231 = vmatmul.mubr.bf16.gmra.mxu0 %v4139
        %v4232 = vpop.f32.mrf.mxu0
        %v4233 = vadd.f32 %v4046, %v4232
        %v4234 = vpop.f32.mrf.mxu0
        %v4235 = vadd.f32 %v4048, %v4234
        %v4236 = vpop.f32.mrf.mxu0
        %v4237 = vadd.f32 %v4050, %v4236
        %v4238 = vpop.f32.mrf.mxu0
        %v4239 = vadd.f32 %v4052, %v4238
        %4240 = vmatprep.mubr.bf16.mxu0 0
        %4241 = vmatmul.mubr.bf16.gmra.mxu0 %v4142
        %v4242 = vpop.f32.mrf.mxu0
        %v4243 = vadd.f32 %v4056, %v4242
        %v4244 = vpop.f32.mrf.mxu0
        %v4245 = vadd.f32 %v4058, %v4244
        %v4246 = vpop.f32.mrf.mxu0
        %v4247 = vadd.f32 %v4060, %v4246
        %v4248 = vpop.f32.mrf.mxu0
        %v4249 = vadd.f32 %v4062, %v4248
        %4250 = vmatprep.mubr.bf16.mxu0 0
        %4251 = vmatmul.mubr.bf16.gmra.mxu0 %v4145
        %v4252 = vpop.f32.mrf.mxu0
        %v4253 = vadd.f32 %v4066, %v4252
        %v4254 = vpop.f32.mrf.mxu0
        %v4255 = vadd.f32 %v4068, %v4254
        %v4256 = vpop.f32.mrf.mxu0
        %v4257 = vadd.f32 %v4070, %v4256
        %v4258 = vpop.f32.mrf.mxu0
        %v4259 = vadd.f32 %v4072, %v4258
        %4260 = vmatprep.mubr.bf16.mxu0 0
        %4261 = vmatmul.mubr.bf16.gmra.mxu0 %v4148
        %v4262 = vpop.f32.mrf.mxu0
        %v4263 = vadd.f32 %v4076, %v4262
        %v4264 = vpop.f32.mrf.mxu0
        %v4265 = vadd.f32 %v4078, %v4264
        %v4266 = vpop.f32.mrf.mxu0
        %v4267 = vadd.f32 %v4080, %v4266
        %v4268 = vpop.f32.mrf.mxu0
        %v4269 = vadd.f32 %v4082, %v4268
        %4270 = vmatprep.mubr.bf16.mxu0 0
        %4271 = vmatmul.mubr.bf16.gmra.mxu0 %v4151
        %v4272 = vpop.f32.mrf.mxu0
        %v4273 = vadd.f32 %v4086, %v4272
        %v4274 = vpop.f32.mrf.mxu0
        %v4275 = vadd.f32 %v4088, %v4274
        %v4276 = vpop.f32.mrf.mxu0
        %v4277 = vadd.f32 %v4090, %v4276
        %v4278 = vpop.f32.mrf.mxu0
        %v4279 = vadd.f32 %v4092, %v4278
        %4280 = vmatprep.mubr.bf16.mxu0 0
        %4281 = vmatmul.mubr.bf16.gmra.mxu0 %v4154
        %v4282 = vpop.f32.mrf.mxu0
        %v4283 = vadd.f32 %v4096, %v4282
        %v4284 = vpop.f32.mrf.mxu0
        %v4285 = vadd.f32 %v4098, %v4284
        %v4286 = vpop.f32.mrf.mxu0
        %v4287 = vadd.f32 %v4100, %v4286
        %v4288 = vpop.f32.mrf.mxu0
        %v4289 = vadd.f32 %v4102, %v4288
        %4290 = vmatprep.mubr.bf16.mxu0 0
        %4291 = vmatmul.mubr.bf16.gmra.mxu0 %v4157
        %v4292 = vpop.f32.mrf.mxu0
        %v4293 = vadd.f32 %v4106, %v4292
        %v4294 = vpop.f32.mrf.mxu0
        %v4295 = vadd.f32 %v4108, %v4294
        %v4296 = vpop.f32.mrf.mxu0
        %v4297 = vadd.f32 %v4110, %v4296
        %v4298 = vpop.f32.mrf.mxu0
        %v4299 = vadd.f32 %v4112, %v4298
        %4300 = vmatprep.mubr.bf16.mxu0 0
        %4301 = vmatmul.mubr.bf16.gmra.mxu0 %v4160
        %v4302 = vpop.f32.mrf.mxu0
        %v4303 = vadd.f32 %v4116, %v4302
        %v4304 = vpop.f32.mrf.mxu0
        %v4305 = vadd.f32 %v4118, %v4304
        %v4306 = vpop.f32.mrf.mxu0
        %v4307 = vadd.f32 %v4120, %v4306
        %v4308 = vpop.f32.mrf.mxu0
        %v4309 = vadd.f32 %v4122, %v4308
        %4310 = vdwg.mxu0
        %v4311 = vld [vmem:[%s344 + $0x1b] sm:$0xff]
        %v4312 = vld [vmem:[%s344 + $0x23] sm:$0xff]
        %v4313 = vld [vmem:[%s344 + $0x2b] sm:$0xff]
        %v4314 = vld [vmem:[%s344 + $0x33] sm:$0xff]
        %v4315 = vld [vmem:[%s344 + $0x3b] sm:$0xff]
        %v4316 = vld [vmem:[%s344 + $0x43] sm:$0xff]
        %v4317 = vld [vmem:[%s344 + $0x4b] sm:$0xff]
        %v4318 = vld [vmem:[%s344 + $0x53] sm:$0xff]
        %v4319 = vld [vmem:[%s344 + $0x5b] sm:$0xff]
        %v4320 = vld [vmem:[%s344 + $0x63] sm:$0xff]
        %v4321 = vld [vmem:[%s344 + $0x6b] sm:$0xff]
        %v4322 = vld [vmem:[%s344 + $0x73] sm:$0xff]
        %v4323 = vld [vmem:[%s344 + $0x7b] sm:$0xff]
        %v4324 = vld [vmem:[%s344 + $0x83] sm:$0xff]
        %v4325 = vld [vmem:[%s344 + $0x8b] sm:$0xff]
        %v4326 = vld [vmem:[%s344 + $0x93] sm:$0xff]
        %v4327 = vld [vmem:[%s344 + $0x9b] sm:$0xff]
        %v4328 = vld [vmem:[%s344 + $0xa3] sm:$0xff]
        %v4329 = vld [vmem:[%s344 + $0xab] sm:$0xff]
        %v4330 = vld [vmem:[%s344 + $0xb3] sm:$0xff]
        %v4331 = vld [vmem:[%s344 + $0xbb] sm:$0xff]
        %v4332 = vld [vmem:[%s344 + $0xc3] sm:$0xff]
        %v4333 = vpack.c.bf16 %v4312, %v4311
        %v4334 = vpack.c.bf16 %v4314, %v4313
        %v4335 = vpack.c.bf16 %v4316, %v4315
        %v4336 = vpack.c.bf16 %v4318, %v4317
        %v4337 = vpack.c.bf16 %v4320, %v4319
        %v4338 = vpack.c.bf16 %v4322, %v4321
        %v4339 = vpack.c.bf16 %v4324, %v4323
        %v4340 = vpack.c.bf16 %v4326, %v4325
        %v4341 = vpack.c.bf16 %v4328, %v4327
        %v4342 = vpack.c.bf16 %v4330, %v4329
        %v4343 = vpack.c.bf16 %v4332, %v4331
        %s4344 = scalar_lea.vmem %s2, 88
        %v4345 = vld [vmem:[%s4344] sm:$0xff]
        %v4347 = vunpack.c.l.b16 %v4345
        %v4348 = vunpack.c.h.b16 %v4345
        %v4349 = vpack.c.b16 %v4347, %v4347
        %v4350 = vpack.c.b16 %v4348, %v4348
        %v4352 = vsel %vm391, %v4333, 0
        %v4355 = vsel %vm391, %v4334, 0
        %v4358 = vsel %vm391, %v4335, 0
        %v4361 = vsel %vm391, %v4336, 0
        %v4364 = vsel %vm391, %v4337, 0
        %v4367 = vsel %vm391, %v4338, 0
        %v4370 = vsel %vm391, %v4339, 0
        %v4373 = vsel %vm391, %v4340, 0
        %v4376 = vsel %vm391, %v4341, 0
        %v4379 = vsel %vm391, %v4342, 0
        %v4382 = vsel %vm391, %v4343, 0
        %v4385 = vsel %vm425, %v4349, 0
        %v4388 = vsel %vm425, %v4350, 0
        %4390 = vmatprep.subr.bf16.mxu0 0
        %4391 = vmatpush1.bf16.msra.mxu0 0
        %4392 = vmatprep.subr.bf16.mxu0 0
        %4393 = vmatpush1.bf16.msra.mxu0 0
        %4394 = vmatprep.subr.bf16.mxu0 0
        %4395 = vmatpush1.bf16.msra.mxu0 0
        %4396 = vmatprep.subr.bf16.mxu0 0
        %4397 = vmatpush1.bf16.msra.mxu0 0
        %4398 = vmatprep.subr.bf16.mxu0 0
        %4399 = vmatpush1.bf16.msra.mxu0 0
        %4400 = vmatprep.subr.bf16.mxu0 0
        %4401 = vmatpush1.bf16.msra.mxu0 0
        %4402 = vmatprep.subr.bf16.mxu0 0
        %4403 = vmatpush1.bf16.msra.mxu0 0
        %4404 = vmatprep.subr.bf16.mxu0 %v4388
        %4405 = vmatpush1.bf16.msra.mxu0 %v4385
        %4406 = vmatprep.subr.bf16.mxu0 0
        %4407 = vmatpush2.bf16.msra.mxu0 0
        %4408 = vmatprep.subr.bf16.mxu0 0
        %4409 = vmatpush2.bf16.msra.mxu0 0
        %4410 = vmatprep.subr.bf16.mxu0 0
        %4411 = vmatpush2.bf16.msra.mxu0 0
        %4412 = vmatprep.subr.bf16.mxu0 0
        %4413 = vmatpush2.bf16.msra.mxu0 0
        %4414 = vmatprep.subr.bf16.mxu0 0
        %4415 = vmatpush2.bf16.msra.mxu0 0
        %4416 = vmatprep.subr.bf16.mxu0 0
        %4417 = vmatpush2.bf16.msra.mxu0 0
        %4418 = vmatprep.subr.bf16.mxu0 0
        %4419 = vmatpush2.bf16.msra.mxu0 0
        %4420 = vmatprep.subr.bf16.mxu0 0
        %4421 = vmatpush2.bf16.msra.mxu0 0
        %4422 = vmatprep.mubr.bf16.mxu0 0
        %4423 = vmatmul.mubr.bf16.gmra.mxu0 %v4352
        %v4424 = vpop.f32.mrf.mxu0
        %v4425 = vadd.f32 0.0, %v4424
        %v4426 = vpop.f32.mrf.mxu0
        %v4427 = vadd.f32 0.0, %v4426
        %v4428 = vpop.f32.mrf.mxu0
        %v4429 = vadd.f32 0.0, %v4428
        %v4430 = vpop.f32.mrf.mxu0
        %v4431 = vadd.f32 0.0, %v4430
        %4432 = vmatprep.mubr.bf16.mxu0 0
        %4433 = vmatmul.mubr.bf16.gmra.mxu0 %v4355
        %v4434 = vpop.f32.mrf.mxu0
        %v4435 = vadd.f32 0.0, %v4434
        %v4436 = vpop.f32.mrf.mxu0
        %v4437 = vadd.f32 0.0, %v4436
        %v4438 = vpop.f32.mrf.mxu0
        %v4439 = vadd.f32 0.0, %v4438
        %v4440 = vpop.f32.mrf.mxu0
        %v4441 = vadd.f32 0.0, %v4440
        %4442 = vmatprep.mubr.bf16.mxu0 0
        %4443 = vmatmul.mubr.bf16.gmra.mxu0 %v4358
        %v4444 = vpop.f32.mrf.mxu0
        %v4445 = vadd.f32 0.0, %v4444
        %v4446 = vpop.f32.mrf.mxu0
        %v4447 = vadd.f32 0.0, %v4446
        %v4448 = vpop.f32.mrf.mxu0
        %v4449 = vadd.f32 0.0, %v4448
        %v4450 = vpop.f32.mrf.mxu0
        %v4451 = vadd.f32 0.0, %v4450
        %4452 = vmatprep.mubr.bf16.mxu0 0
        %4453 = vmatmul.mubr.bf16.gmra.mxu0 %v4361
        %v4454 = vpop.f32.mrf.mxu0
        %v4455 = vadd.f32 0.0, %v4454
        %v4456 = vpop.f32.mrf.mxu0
        %v4457 = vadd.f32 0.0, %v4456
        %v4458 = vpop.f32.mrf.mxu0
        %v4459 = vadd.f32 0.0, %v4458
        %v4460 = vpop.f32.mrf.mxu0
        %v4461 = vadd.f32 0.0, %v4460
        %4462 = vmatprep.mubr.bf16.mxu0 0
        %4463 = vmatmul.mubr.bf16.gmra.mxu0 %v4364
        %v4464 = vpop.f32.mrf.mxu0
        %v4465 = vadd.f32 0.0, %v4464
        %v4466 = vpop.f32.mrf.mxu0
        %v4467 = vadd.f32 0.0, %v4466
        %v4468 = vpop.f32.mrf.mxu0
        %v4469 = vadd.f32 0.0, %v4468
        %v4470 = vpop.f32.mrf.mxu0
        %v4471 = vadd.f32 0.0, %v4470
        %4472 = vmatprep.mubr.bf16.mxu0 0
        %4473 = vmatmul.mubr.bf16.gmra.mxu0 %v4367
        %v4474 = vpop.f32.mrf.mxu0
        %v4475 = vadd.f32 0.0, %v4474
        %v4476 = vpop.f32.mrf.mxu0
        %v4477 = vadd.f32 0.0, %v4476
        %v4478 = vpop.f32.mrf.mxu0
        %v4479 = vadd.f32 0.0, %v4478
        %v4480 = vpop.f32.mrf.mxu0
        %v4481 = vadd.f32 0.0, %v4480
        %4482 = vmatprep.mubr.bf16.mxu0 0
        %4483 = vmatmul.mubr.bf16.gmra.mxu0 %v4370
        %v4484 = vpop.f32.mrf.mxu0
        %v4485 = vadd.f32 0.0, %v4484
        %v4486 = vpop.f32.mrf.mxu0
        %v4487 = vadd.f32 0.0, %v4486
        %v4488 = vpop.f32.mrf.mxu0
        %v4489 = vadd.f32 0.0, %v4488
        %v4490 = vpop.f32.mrf.mxu0
        %v4491 = vadd.f32 0.0, %v4490
        %4492 = vmatprep.mubr.bf16.mxu0 0
        %4493 = vmatmul.mubr.bf16.gmra.mxu0 %v4373
        %v4494 = vpop.f32.mrf.mxu0
        %v4495 = vadd.f32 0.0, %v4494
        %v4496 = vpop.f32.mrf.mxu0
        %v4497 = vadd.f32 0.0, %v4496
        %v4498 = vpop.f32.mrf.mxu0
        %v4499 = vadd.f32 0.0, %v4498
        %v4500 = vpop.f32.mrf.mxu0
        %v4501 = vadd.f32 0.0, %v4500
        %4502 = vmatprep.mubr.bf16.mxu0 0
        %4503 = vmatmul.mubr.bf16.gmra.mxu0 %v4376
        %v4504 = vpop.f32.mrf.mxu0
        %v4505 = vadd.f32 0.0, %v4504
        %v4506 = vpop.f32.mrf.mxu0
        %v4507 = vadd.f32 0.0, %v4506
        %v4508 = vpop.f32.mrf.mxu0
        %v4509 = vadd.f32 0.0, %v4508
        %v4510 = vpop.f32.mrf.mxu0
        %v4511 = vadd.f32 0.0, %v4510
        %4512 = vmatprep.mubr.bf16.mxu0 0
        %4513 = vmatmul.mubr.bf16.gmra.mxu0 %v4379
        %v4514 = vpop.f32.mrf.mxu0
        %v4515 = vadd.f32 0.0, %v4514
        %v4516 = vpop.f32.mrf.mxu0
        %v4517 = vadd.f32 0.0, %v4516
        %v4518 = vpop.f32.mrf.mxu0
        %v4519 = vadd.f32 0.0, %v4518
        %v4520 = vpop.f32.mrf.mxu0
        %v4521 = vadd.f32 0.0, %v4520
        %4522 = vmatprep.mubr.bf16.mxu0 0
        %4523 = vmatmul.mubr.bf16.gmra.mxu0 %v4382
        %v4524 = vpop.f32.mrf.mxu0
        %v4525 = vadd.f32 0.0, %v4524
        %v4526 = vpop.f32.mrf.mxu0
        %v4527 = vadd.f32 0.0, %v4526
        %v4528 = vpop.f32.mrf.mxu0
        %v4529 = vadd.f32 0.0, %v4528
        %v4530 = vpop.f32.mrf.mxu0
        %v4531 = vadd.f32 0.0, %v4530
        %4532 = vdwg.mxu0
        %v4533 = vadd.f32 %v4203, %v4425
        %v4534 = vadd.f32 %v4205, %v4427
        %v4535 = vadd.f32 %v4207, %v4429
        %v4536 = vadd.f32 %v4209, %v4431
        %v4537 = vadd.f32 %v4213, %v4435
        %v4538 = vadd.f32 %v4215, %v4437
        %v4539 = vadd.f32 %v4217, %v4439
        %v4540 = vadd.f32 %v4219, %v4441
        %v4541 = vadd.f32 %v4223, %v4445
        %v4542 = vadd.f32 %v4225, %v4447
        %v4543 = vadd.f32 %v4227, %v4449
        %v4544 = vadd.f32 %v4229, %v4451
        %v4545 = vadd.f32 %v4233, %v4455
        %v4546 = vadd.f32 %v4235, %v4457
        %v4547 = vadd.f32 %v4237, %v4459
        %v4548 = vadd.f32 %v4239, %v4461
        %v4549 = vadd.f32 %v4243, %v4465
        %v4550 = vadd.f32 %v4245, %v4467
        %v4551 = vadd.f32 %v4247, %v4469
        %v4552 = vadd.f32 %v4249, %v4471
        %v4553 = vadd.f32 %v4253, %v4475
        %v4554 = vadd.f32 %v4255, %v4477
        %v4555 = vadd.f32 %v4257, %v4479
        %v4556 = vadd.f32 %v4259, %v4481
        %v4557 = vadd.f32 %v4263, %v4485
        %v4558 = vadd.f32 %v4265, %v4487
        %v4559 = vadd.f32 %v4267, %v4489
        %v4560 = vadd.f32 %v4269, %v4491
        %v4561 = vadd.f32 %v4273, %v4495
        %v4562 = vadd.f32 %v4275, %v4497
        %v4563 = vadd.f32 %v4277, %v4499
        %v4564 = vadd.f32 %v4279, %v4501
        %v4565 = vadd.f32 %v4283, %v4505
        %v4566 = vadd.f32 %v4285, %v4507
        %v4567 = vadd.f32 %v4287, %v4509
        %v4568 = vadd.f32 %v4289, %v4511
        %v4569 = vadd.f32 %v4293, %v4515
        %v4570 = vadd.f32 %v4295, %v4517
        %v4571 = vadd.f32 %v4297, %v4519
        %v4572 = vadd.f32 %v4299, %v4521
        %v4573 = vadd.f32 %v4303, %v4525
        %v4574 = vadd.f32 %v4305, %v4527
        %v4575 = vadd.f32 %v4307, %v4529
        %v4576 = vadd.f32 %v4309, %v4531
        %v4577 = vld [vmem:[%s344 + $0x43] sm:$0xff]
        %v4578 = vld [vmem:[%s344 + $0x4b] sm:$0xff]
        %v4579 = vld [vmem:[%s344 + $0x53] sm:$0xff]
        %v4580 = vld [vmem:[%s344 + $0x5b] sm:$0xff]
        %v4581 = vld [vmem:[%s344 + $0x63] sm:$0xff]
        %v4582 = vld [vmem:[%s344 + $0x6b] sm:$0xff]
        %v4583 = vld [vmem:[%s344 + $0x73] sm:$0xff]
        %v4584 = vld [vmem:[%s344 + $0x7b] sm:$0xff]
        %v4585 = vld [vmem:[%s344 + $0x83] sm:$0xff]
        %v4586 = vld [vmem:[%s344 + $0x8b] sm:$0xff]
        %v4587 = vld [vmem:[%s344 + $0x93] sm:$0xff]
        %v4588 = vld [vmem:[%s344 + $0x9b] sm:$0xff]
        %v4589 = vld [vmem:[%s344 + $0xa3] sm:$0xff]
        %v4590 = vld [vmem:[%s344 + $0xab] sm:$0xff]
        %v4591 = vld [vmem:[%s344 + $0xb3] sm:$0xff]
        %v4592 = vld [vmem:[%s344 + $0xbb] sm:$0xff]
        %v4593 = vld [vmem:[%s344 + $0xc3] sm:$0xff]
        %v4594 = vld [vmem:[%s344 + $0xcb] sm:$0xff]
        %v4595 = vld [vmem:[%s344 + $0xd3] sm:$0xff]
        %v4596 = vld [vmem:[%s344 + $0xdb] sm:$0xff]
        %v4597 = vld [vmem:[%s344 + $0xe3] sm:$0xff]
        %v4598 = vld [vmem:[%s344 + $0xeb] sm:$0xff]
        %v4599 = vpack.c.bf16 %v4578, %v4577
        %v4600 = vpack.c.bf16 %v4580, %v4579
        %v4601 = vpack.c.bf16 %v4582, %v4581
        %v4602 = vpack.c.bf16 %v4584, %v4583
        %v4603 = vpack.c.bf16 %v4586, %v4585
        %v4604 = vpack.c.bf16 %v4588, %v4587
        %v4605 = vpack.c.bf16 %v4590, %v4589
        %v4606 = vpack.c.bf16 %v4592, %v4591
        %v4607 = vpack.c.bf16 %v4594, %v4593
        %v4608 = vpack.c.bf16 %v4596, %v4595
        %v4609 = vpack.c.bf16 %v4598, %v4597
        %s4610 = scalar_lea.vmem %s2, 96
        %v4611 = vld [vmem:[%s4610] sm:$0xff]
        %v4613 = vunpack.c.l.b16 %v4611
        %v4614 = vunpack.c.h.b16 %v4611
        %v4615 = vpack.c.b16 %v4613, %v4613
        %v4616 = vpack.c.b16 %v4614, %v4614
        %v4618 = vsel %vm391, %v4599, 0
        %v4621 = vsel %vm391, %v4600, 0
        %v4624 = vsel %vm391, %v4601, 0
        %v4627 = vsel %vm391, %v4602, 0
        %v4630 = vsel %vm391, %v4603, 0
        %v4633 = vsel %vm391, %v4604, 0
        %v4636 = vsel %vm391, %v4605, 0
        %v4639 = vsel %vm391, %v4606, 0
        %v4642 = vsel %vm391, %v4607, 0
        %v4645 = vsel %vm391, %v4608, 0
        %v4648 = vsel %vm391, %v4609, 0
        %v4651 = vsel %vm425, %v4615, 0
        %v4654 = vsel %vm425, %v4616, 0
        %4656 = vmatprep.subr.bf16.mxu0 0
        %4657 = vmatpush1.bf16.msra.mxu0 0
        %4658 = vmatprep.subr.bf16.mxu0 0
        %4659 = vmatpush1.bf16.msra.mxu0 0
        %4660 = vmatprep.subr.bf16.mxu0 0
        %4661 = vmatpush1.bf16.msra.mxu0 0
        %4662 = vmatprep.subr.bf16.mxu0 0
        %4663 = vmatpush1.bf16.msra.mxu0 0
        %4664 = vmatprep.subr.bf16.mxu0 0
        %4665 = vmatpush1.bf16.msra.mxu0 0
        %4666 = vmatprep.subr.bf16.mxu0 0
        %4667 = vmatpush1.bf16.msra.mxu0 0
        %4668 = vmatprep.subr.bf16.mxu0 0
        %4669 = vmatpush1.bf16.msra.mxu0 0
        %4670 = vmatprep.subr.bf16.mxu0 %v4654
        %4671 = vmatpush1.bf16.msra.mxu0 %v4651
        %4672 = vmatprep.subr.bf16.mxu0 0
        %4673 = vmatpush2.bf16.msra.mxu0 0
        %4674 = vmatprep.subr.bf16.mxu0 0
        %4675 = vmatpush2.bf16.msra.mxu0 0
        %4676 = vmatprep.subr.bf16.mxu0 0
        %4677 = vmatpush2.bf16.msra.mxu0 0
        %4678 = vmatprep.subr.bf16.mxu0 0
        %4679 = vmatpush2.bf16.msra.mxu0 0
        %4680 = vmatprep.subr.bf16.mxu0 0
        %4681 = vmatpush2.bf16.msra.mxu0 0
        %4682 = vmatprep.subr.bf16.mxu0 0
        %4683 = vmatpush2.bf16.msra.mxu0 0
        %4684 = vmatprep.subr.bf16.mxu0 0
        %4685 = vmatpush2.bf16.msra.mxu0 0
        %4686 = vmatprep.subr.bf16.mxu0 0
        %4687 = vmatpush2.bf16.msra.mxu0 0
        %4688 = vmatprep.mubr.bf16.mxu0 0
        %4689 = vmatmul.mubr.bf16.gmra.mxu0 %v4618
        %v4690 = vpop.f32.mrf.mxu0
        %v4691 = vadd.f32 0.0, %v4690
        %v4692 = vpop.f32.mrf.mxu0
        %v4693 = vadd.f32 0.0, %v4692
        %v4694 = vpop.f32.mrf.mxu0
        %v4695 = vadd.f32 0.0, %v4694
        %v4696 = vpop.f32.mrf.mxu0
        %v4697 = vadd.f32 0.0, %v4696
        %4698 = vmatprep.mubr.bf16.mxu0 0
        %4699 = vmatmul.mubr.bf16.gmra.mxu0 %v4621
        %v4700 = vpop.f32.mrf.mxu0
        %v4701 = vadd.f32 0.0, %v4700
        %v4702 = vpop.f32.mrf.mxu0
        %v4703 = vadd.f32 0.0, %v4702
        %v4704 = vpop.f32.mrf.mxu0
        %v4705 = vadd.f32 0.0, %v4704
        %v4706 = vpop.f32.mrf.mxu0
        %v4707 = vadd.f32 0.0, %v4706
        %4708 = vmatprep.mubr.bf16.mxu0 0
        %4709 = vmatmul.mubr.bf16.gmra.mxu0 %v4624
        %v4710 = vpop.f32.mrf.mxu0
        %v4711 = vadd.f32 0.0, %v4710
        %v4712 = vpop.f32.mrf.mxu0
        %v4713 = vadd.f32 0.0, %v4712
        %v4714 = vpop.f32.mrf.mxu0
        %v4715 = vadd.f32 0.0, %v4714
        %v4716 = vpop.f32.mrf.mxu0
        %v4717 = vadd.f32 0.0, %v4716
        %4718 = vmatprep.mubr.bf16.mxu0 0
        %4719 = vmatmul.mubr.bf16.gmra.mxu0 %v4627
        %v4720 = vpop.f32.mrf.mxu0
        %v4721 = vadd.f32 0.0, %v4720
        %v4722 = vpop.f32.mrf.mxu0
        %v4723 = vadd.f32 0.0, %v4722
        %v4724 = vpop.f32.mrf.mxu0
        %v4725 = vadd.f32 0.0, %v4724
        %v4726 = vpop.f32.mrf.mxu0
        %v4727 = vadd.f32 0.0, %v4726
        %4728 = vmatprep.mubr.bf16.mxu0 0
        %4729 = vmatmul.mubr.bf16.gmra.mxu0 %v4630
        %v4730 = vpop.f32.mrf.mxu0
        %v4731 = vadd.f32 0.0, %v4730
        %v4732 = vpop.f32.mrf.mxu0
        %v4733 = vadd.f32 0.0, %v4732
        %v4734 = vpop.f32.mrf.mxu0
        %v4735 = vadd.f32 0.0, %v4734
        %v4736 = vpop.f32.mrf.mxu0
        %v4737 = vadd.f32 0.0, %v4736
        %4738 = vmatprep.mubr.bf16.mxu0 0
        %4739 = vmatmul.mubr.bf16.gmra.mxu0 %v4633
        %v4740 = vpop.f32.mrf.mxu0
        %v4741 = vadd.f32 0.0, %v4740
        %v4742 = vpop.f32.mrf.mxu0
        %v4743 = vadd.f32 0.0, %v4742
        %v4744 = vpop.f32.mrf.mxu0
        %v4745 = vadd.f32 0.0, %v4744
        %v4746 = vpop.f32.mrf.mxu0
        %v4747 = vadd.f32 0.0, %v4746
        %4748 = vmatprep.mubr.bf16.mxu0 0
        %4749 = vmatmul.mubr.bf16.gmra.mxu0 %v4636
        %v4750 = vpop.f32.mrf.mxu0
        %v4751 = vadd.f32 0.0, %v4750
        %v4752 = vpop.f32.mrf.mxu0
        %v4753 = vadd.f32 0.0, %v4752
        %v4754 = vpop.f32.mrf.mxu0
        %v4755 = vadd.f32 0.0, %v4754
        %v4756 = vpop.f32.mrf.mxu0
        %v4757 = vadd.f32 0.0, %v4756
        %4758 = vmatprep.mubr.bf16.mxu0 0
        %4759 = vmatmul.mubr.bf16.gmra.mxu0 %v4639
        %v4760 = vpop.f32.mrf.mxu0
        %v4761 = vadd.f32 0.0, %v4760
        %v4762 = vpop.f32.mrf.mxu0
        %v4763 = vadd.f32 0.0, %v4762
        %v4764 = vpop.f32.mrf.mxu0
        %v4765 = vadd.f32 0.0, %v4764
        %v4766 = vpop.f32.mrf.mxu0
        %v4767 = vadd.f32 0.0, %v4766
        %4768 = vmatprep.mubr.bf16.mxu0 0
        %4769 = vmatmul.mubr.bf16.gmra.mxu0 %v4642
        %v4770 = vpop.f32.mrf.mxu0
        %v4771 = vadd.f32 0.0, %v4770
        %v4772 = vpop.f32.mrf.mxu0
        %v4773 = vadd.f32 0.0, %v4772
        %v4774 = vpop.f32.mrf.mxu0
        %v4775 = vadd.f32 0.0, %v4774
        %v4776 = vpop.f32.mrf.mxu0
        %v4777 = vadd.f32 0.0, %v4776
        %4778 = vmatprep.mubr.bf16.mxu0 0
        %4779 = vmatmul.mubr.bf16.gmra.mxu0 %v4645
        %v4780 = vpop.f32.mrf.mxu0
        %v4781 = vadd.f32 0.0, %v4780
        %v4782 = vpop.f32.mrf.mxu0
        %v4783 = vadd.f32 0.0, %v4782
        %v4784 = vpop.f32.mrf.mxu0
        %v4785 = vadd.f32 0.0, %v4784
        %v4786 = vpop.f32.mrf.mxu0
        %v4787 = vadd.f32 0.0, %v4786
        %4788 = vmatprep.mubr.bf16.mxu0 0
        %4789 = vmatmul.mubr.bf16.gmra.mxu0 %v4648
        %v4790 = vpop.f32.mrf.mxu0
        %v4791 = vadd.f32 0.0, %v4790
        %v4792 = vpop.f32.mrf.mxu0
        %v4793 = vadd.f32 0.0, %v4792
        %v4794 = vpop.f32.mrf.mxu0
        %v4795 = vadd.f32 0.0, %v4794
        %v4796 = vpop.f32.mrf.mxu0
        %v4797 = vadd.f32 0.0, %v4796
        %4798 = vdwg.mxu0
        %v4799 = vadd.f32 %v4533, %v4691
        %v4800 = vadd.f32 %v4534, %v4693
        %v4801 = vadd.f32 %v4535, %v4695
        %v4802 = vadd.f32 %v4536, %v4697
        %v4803 = vadd.f32 %v4537, %v4701
        %v4804 = vadd.f32 %v4538, %v4703
        %v4805 = vadd.f32 %v4539, %v4705
        %v4806 = vadd.f32 %v4540, %v4707
        %v4807 = vadd.f32 %v4541, %v4711
        %v4808 = vadd.f32 %v4542, %v4713
        %v4809 = vadd.f32 %v4543, %v4715
        %v4810 = vadd.f32 %v4544, %v4717
        %v4811 = vadd.f32 %v4545, %v4721
        %v4812 = vadd.f32 %v4546, %v4723
        %v4813 = vadd.f32 %v4547, %v4725
        %v4814 = vadd.f32 %v4548, %v4727
        %v4815 = vadd.f32 %v4549, %v4731
        %v4816 = vadd.f32 %v4550, %v4733
        %v4817 = vadd.f32 %v4551, %v4735
        %v4818 = vadd.f32 %v4552, %v4737
        %v4819 = vadd.f32 %v4553, %v4741
        %v4820 = vadd.f32 %v4554, %v4743
        %v4821 = vadd.f32 %v4555, %v4745
        %v4822 = vadd.f32 %v4556, %v4747
        %v4823 = vadd.f32 %v4557, %v4751
        %v4824 = vadd.f32 %v4558, %v4753
        %v4825 = vadd.f32 %v4559, %v4755
        %v4826 = vadd.f32 %v4560, %v4757
        %v4827 = vadd.f32 %v4561, %v4761
        %v4828 = vadd.f32 %v4562, %v4763
        %v4829 = vadd.f32 %v4563, %v4765
        %v4830 = vadd.f32 %v4564, %v4767
        %v4831 = vadd.f32 %v4565, %v4771
        %v4832 = vadd.f32 %v4566, %v4773
        %v4833 = vadd.f32 %v4567, %v4775
        %v4834 = vadd.f32 %v4568, %v4777
        %v4835 = vadd.f32 %v4569, %v4781
        %v4836 = vadd.f32 %v4570, %v4783
        %v4837 = vadd.f32 %v4571, %v4785
        %v4838 = vadd.f32 %v4572, %v4787
        %v4839 = vadd.f32 %v4573, %v4791
        %v4840 = vadd.f32 %v4574, %v4793
        %v4841 = vadd.f32 %v4575, %v4795
        %v4842 = vadd.f32 %v4576, %v4797
        %s4843 = scalar_lea.vmem %s2, 104
        %v4844 = vld [vmem:[%s4843] sm:$0xff]
        %v4846 = vunpack.c.l.b16 %v4844
        %v4847 = vunpack.c.h.b16 %v4844
        %v4848 = vpack.c.b16 %v4846, %v4846
        %v4849 = vpack.c.b16 %v4847, %v4847
        %v4851 = vsel %vm425, %v4848, 0
        %v4854 = vsel %vm425, %v4849, 0
        %4856 = vmatprep.subr.bf16.mxu0 0
        %4857 = vmatpush1.bf16.msra.mxu0 0
        %4858 = vmatprep.subr.bf16.mxu0 0
        %4859 = vmatpush1.bf16.msra.mxu0 0
        %4860 = vmatprep.subr.bf16.mxu0 0
        %4861 = vmatpush1.bf16.msra.mxu0 0
        %4862 = vmatprep.subr.bf16.mxu0 0
        %4863 = vmatpush1.bf16.msra.mxu0 0
        %4864 = vmatprep.subr.bf16.mxu0 0
        %4865 = vmatpush1.bf16.msra.mxu0 0
        %4866 = vmatprep.subr.bf16.mxu0 0
        %4867 = vmatpush1.bf16.msra.mxu0 0
        %4868 = vmatprep.subr.bf16.mxu0 0
        %4869 = vmatpush1.bf16.msra.mxu0 0
        %4870 = vmatprep.subr.bf16.mxu0 %v4854
        %4871 = vmatpush1.bf16.msra.mxu0 %v4851
        %4872 = vmatprep.subr.bf16.mxu0 0
        %4873 = vmatpush2.bf16.msra.mxu0 0
        %4874 = vmatprep.subr.bf16.mxu0 0
        %4875 = vmatpush2.bf16.msra.mxu0 0
        %4876 = vmatprep.subr.bf16.mxu0 0
        %4877 = vmatpush2.bf16.msra.mxu0 0
        %4878 = vmatprep.subr.bf16.mxu0 0
        %4879 = vmatpush2.bf16.msra.mxu0 0
        %4880 = vmatprep.subr.bf16.mxu0 0
        %4881 = vmatpush2.bf16.msra.mxu0 0
        %4882 = vmatprep.subr.bf16.mxu0 0
        %4883 = vmatpush2.bf16.msra.mxu0 0
        %4884 = vmatprep.subr.bf16.mxu0 0
        %4885 = vmatpush2.bf16.msra.mxu0 0
        %4886 = vmatprep.subr.bf16.mxu0 0
        %4887 = vmatpush2.bf16.msra.mxu0 0
        %4888 = vmatprep.mubr.bf16.mxu0 0
        %4889 = vmatmul.mubr.bf16.gmra.mxu0 %v393
        %v4890 = vpop.f32.mrf.mxu0
        %v4891 = vadd.f32 0.0, %v4890
        %v4892 = vpop.f32.mrf.mxu0
        %v4893 = vadd.f32 0.0, %v4892
        %v4894 = vpop.f32.mrf.mxu0
        %v4895 = vadd.f32 0.0, %v4894
        %v4896 = vpop.f32.mrf.mxu0
        %v4897 = vadd.f32 0.0, %v4896
        %4898 = vmatprep.mubr.bf16.mxu0 0
        %4899 = vmatmul.mubr.bf16.gmra.mxu0 %v396
        %v4900 = vpop.f32.mrf.mxu0
        %v4901 = vadd.f32 0.0, %v4900
        %v4902 = vpop.f32.mrf.mxu0
        %v4903 = vadd.f32 0.0, %v4902
        %v4904 = vpop.f32.mrf.mxu0
        %v4905 = vadd.f32 0.0, %v4904
        %v4906 = vpop.f32.mrf.mxu0
        %v4907 = vadd.f32 0.0, %v4906
        %4908 = vmatprep.mubr.bf16.mxu0 0
        %4909 = vmatmul.mubr.bf16.gmra.mxu0 %v399
        %v4910 = vpop.f32.mrf.mxu0
        %v4911 = vadd.f32 0.0, %v4910
        %v4912 = vpop.f32.mrf.mxu0
        %v4913 = vadd.f32 0.0, %v4912
        %v4914 = vpop.f32.mrf.mxu0
        %v4915 = vadd.f32 0.0, %v4914
        %v4916 = vpop.f32.mrf.mxu0
        %v4917 = vadd.f32 0.0, %v4916
        %4918 = vmatprep.mubr.bf16.mxu0 0
        %4919 = vmatmul.mubr.bf16.gmra.mxu0 %v402
        %v4920 = vpop.f32.mrf.mxu0
        %v4921 = vadd.f32 0.0, %v4920
        %v4922 = vpop.f32.mrf.mxu0
        %v4923 = vadd.f32 0.0, %v4922
        %v4924 = vpop.f32.mrf.mxu0
        %v4925 = vadd.f32 0.0, %v4924
        %v4926 = vpop.f32.mrf.mxu0
        %v4927 = vadd.f32 0.0, %v4926
        %4928 = vmatprep.mubr.bf16.mxu0 0
        %4929 = vmatmul.mubr.bf16.gmra.mxu0 %v405
        %v4930 = vpop.f32.mrf.mxu0
        %v4931 = vadd.f32 0.0, %v4930
        %v4932 = vpop.f32.mrf.mxu0
        %v4933 = vadd.f32 0.0, %v4932
        %v4934 = vpop.f32.mrf.mxu0
        %v4935 = vadd.f32 0.0, %v4934
        %v4936 = vpop.f32.mrf.mxu0
        %v4937 = vadd.f32 0.0, %v4936
        %4938 = vmatprep.mubr.bf16.mxu0 0
        %4939 = vmatmul.mubr.bf16.gmra.mxu0 %v408
        %v4940 = vpop.f32.mrf.mxu0
        %v4941 = vadd.f32 0.0, %v4940
        %v4942 = vpop.f32.mrf.mxu0
        %v4943 = vadd.f32 0.0, %v4942
        %v4944 = vpop.f32.mrf.mxu0
        %v4945 = vadd.f32 0.0, %v4944
        %v4946 = vpop.f32.mrf.mxu0
        %v4947 = vadd.f32 0.0, %v4946
        %4948 = vmatprep.mubr.bf16.mxu0 0
        %4949 = vmatmul.mubr.bf16.gmra.mxu0 %v411
        %v4950 = vpop.f32.mrf.mxu0
        %v4951 = vadd.f32 0.0, %v4950
        %v4952 = vpop.f32.mrf.mxu0
        %v4953 = vadd.f32 0.0, %v4952
        %v4954 = vpop.f32.mrf.mxu0
        %v4955 = vadd.f32 0.0, %v4954
        %v4956 = vpop.f32.mrf.mxu0
        %v4957 = vadd.f32 0.0, %v4956
        %4958 = vmatprep.mubr.bf16.mxu0 0
        %4959 = vmatmul.mubr.bf16.gmra.mxu0 %v414
        %v4960 = vpop.f32.mrf.mxu0
        %v4961 = vadd.f32 0.0, %v4960
        %v4962 = vpop.f32.mrf.mxu0
        %v4963 = vadd.f32 0.0, %v4962
        %v4964 = vpop.f32.mrf.mxu0
        %v4965 = vadd.f32 0.0, %v4964
        %v4966 = vpop.f32.mrf.mxu0
        %v4967 = vadd.f32 0.0, %v4966
        %4968 = vmatprep.mubr.bf16.mxu0 0
        %4969 = vmatmul.mubr.bf16.gmra.mxu0 %v417
        %v4970 = vpop.f32.mrf.mxu0
        %v4971 = vadd.f32 0.0, %v4970
        %v4972 = vpop.f32.mrf.mxu0
        %v4973 = vadd.f32 0.0, %v4972
        %v4974 = vpop.f32.mrf.mxu0
        %v4975 = vadd.f32 0.0, %v4974
        %v4976 = vpop.f32.mrf.mxu0
        %v4977 = vadd.f32 0.0, %v4976
        %4978 = vmatprep.mubr.bf16.mxu0 0
        %4979 = vmatmul.mubr.bf16.gmra.mxu0 %v420
        %v4980 = vpop.f32.mrf.mxu0
        %v4981 = vadd.f32 0.0, %v4980
        %v4982 = vpop.f32.mrf.mxu0
        %v4983 = vadd.f32 0.0, %v4982
        %v4984 = vpop.f32.mrf.mxu0
        %v4985 = vadd.f32 0.0, %v4984
        %v4986 = vpop.f32.mrf.mxu0
        %v4987 = vadd.f32 0.0, %v4986
        %4988 = vmatprep.mubr.bf16.mxu0 0
        %4989 = vmatmul.mubr.bf16.gmra.mxu0 %v423
        %v4990 = vpop.f32.mrf.mxu0
        %v4991 = vadd.f32 0.0, %v4990
        %v4992 = vpop.f32.mrf.mxu0
        %v4993 = vadd.f32 0.0, %v4992
        %v4994 = vpop.f32.mrf.mxu0
        %v4995 = vadd.f32 0.0, %v4994
        %v4996 = vpop.f32.mrf.mxu0
        %v4997 = vadd.f32 0.0, %v4996
        %4998 = vdwg.mxu0
        %v4999 = vadd.f32 %v4799, %v4891
        %v5000 = vadd.f32 %v4800, %v4893
        %v5001 = vadd.f32 %v4801, %v4895
        %v5002 = vadd.f32 %v4802, %v4897
        %v5003 = vadd.f32 %v4803, %v4901
        %v5004 = vadd.f32 %v4804, %v4903
        %v5005 = vadd.f32 %v4805, %v4905
        %v5006 = vadd.f32 %v4806, %v4907
        %v5007 = vadd.f32 %v4807, %v4911
        %v5008 = vadd.f32 %v4808, %v4913
        %v5009 = vadd.f32 %v4809, %v4915
        %v5010 = vadd.f32 %v4810, %v4917
        %v5011 = vadd.f32 %v4811, %v4921
        %v5012 = vadd.f32 %v4812, %v4923
        %v5013 = vadd.f32 %v4813, %v4925
        %v5014 = vadd.f32 %v4814, %v4927
        %v5015 = vadd.f32 %v4815, %v4931
        %v5016 = vadd.f32 %v4816, %v4933
        %v5017 = vadd.f32 %v4817, %v4935
        %v5018 = vadd.f32 %v4818, %v4937
        %v5019 = vadd.f32 %v4819, %v4941
        %v5020 = vadd.f32 %v4820, %v4943
        %v5021 = vadd.f32 %v4821, %v4945
        %v5022 = vadd.f32 %v4822, %v4947
        %v5023 = vadd.f32 %v4823, %v4951
        %v5024 = vadd.f32 %v4824, %v4953
        %v5025 = vadd.f32 %v4825, %v4955
        %v5026 = vadd.f32 %v4826, %v4957
        %v5027 = vadd.f32 %v4827, %v4961
        %v5028 = vadd.f32 %v4828, %v4963
        %v5029 = vadd.f32 %v4829, %v4965
        %v5030 = vadd.f32 %v4830, %v4967
        %v5031 = vadd.f32 %v4831, %v4971
        %v5032 = vadd.f32 %v4832, %v4973
        %v5033 = vadd.f32 %v4833, %v4975
        %v5034 = vadd.f32 %v4834, %v4977
        %v5035 = vadd.f32 %v4835, %v4981
        %v5036 = vadd.f32 %v4836, %v4983
        %v5037 = vadd.f32 %v4837, %v4985
        %v5038 = vadd.f32 %v4838, %v4987
        %v5039 = vadd.f32 %v4839, %v4991
        %v5040 = vadd.f32 %v4840, %v4993
        %v5041 = vadd.f32 %v4841, %v4995
        %v5042 = vadd.f32 %v4842, %v4997
        %v5043 = vld [vmem:[%s344 + $0x47] sm:$0xff]
        %v5044 = vld [vmem:[%s344 + $0x4f] sm:$0xff]
        %v5045 = vld [vmem:[%s344 + $0x57] sm:$0xff]
        %v5046 = vld [vmem:[%s344 + $0x5f] sm:$0xff]
        %v5047 = vld [vmem:[%s344 + $0x67] sm:$0xff]
        %v5048 = vld [vmem:[%s344 + $0x6f] sm:$0xff]
        %v5049 = vld [vmem:[%s344 + $0x77] sm:$0xff]
        %v5050 = vld [vmem:[%s344 + $0x7f] sm:$0xff]
        %v5051 = vld [vmem:[%s344 + $0x87] sm:$0xff]
        %v5052 = vld [vmem:[%s344 + $0x8f] sm:$0xff]
        %v5053 = vld [vmem:[%s344 + $0x97] sm:$0xff]
        %v5054 = vld [vmem:[%s344 + $0x9f] sm:$0xff]
        %v5055 = vld [vmem:[%s344 + $0xa7] sm:$0xff]
        %v5056 = vld [vmem:[%s344 + $0xaf] sm:$0xff]
        %v5057 = vld [vmem:[%s344 + $0xb7] sm:$0xff]
        %v5058 = vld [vmem:[%s344 + $0xbf] sm:$0xff]
        %v5059 = vld [vmem:[%s344 + $0xc7] sm:$0xff]
        %v5060 = vld [vmem:[%s344 + $0xcf] sm:$0xff]
        %v5061 = vld [vmem:[%s344 + $0xd7] sm:$0xff]
        %v5062 = vld [vmem:[%s344 + $0xdf] sm:$0xff]
        %v5063 = vld [vmem:[%s344 + $0xe7] sm:$0xff]
        %v5064 = vld [vmem:[%s344 + $0xef] sm:$0xff]
        %v5065 = vpack.c.bf16 %v5044, %v5043
        %v5066 = vpack.c.bf16 %v5046, %v5045
        %v5067 = vpack.c.bf16 %v5048, %v5047
        %v5068 = vpack.c.bf16 %v5050, %v5049
        %v5069 = vpack.c.bf16 %v5052, %v5051
        %v5070 = vpack.c.bf16 %v5054, %v5053
        %v5071 = vpack.c.bf16 %v5056, %v5055
        %v5072 = vpack.c.bf16 %v5058, %v5057
        %v5073 = vpack.c.bf16 %v5060, %v5059
        %v5074 = vpack.c.bf16 %v5062, %v5061
        %v5075 = vpack.c.bf16 %v5064, %v5063
        %s5076 = scalar_lea.vmem %s2, 112
        %v5077 = vld [vmem:[%s5076] sm:$0xff]
        %v5079 = vunpack.c.l.b16 %v5077
        %v5080 = vunpack.c.h.b16 %v5077
        %v5081 = vpack.c.b16 %v5079, %v5079
        %v5082 = vpack.c.b16 %v5080, %v5080
        %v5084 = vsel %vm391, %v5065, 0
        %v5087 = vsel %vm391, %v5066, 0
        %v5090 = vsel %vm391, %v5067, 0
        %v5093 = vsel %vm391, %v5068, 0
        %v5096 = vsel %vm391, %v5069, 0
        %v5099 = vsel %vm391, %v5070, 0
        %v5102 = vsel %vm391, %v5071, 0
        %v5105 = vsel %vm391, %v5072, 0
        %v5108 = vsel %vm391, %v5073, 0
        %v5111 = vsel %vm391, %v5074, 0
        %v5114 = vsel %vm391, %v5075, 0
        %v5117 = vsel %vm425, %v5081, 0
        %v5120 = vsel %vm425, %v5082, 0
        %5122 = vmatprep.subr.bf16.mxu0 0
        %5123 = vmatpush1.bf16.msra.mxu0 0
        %5124 = vmatprep.subr.bf16.mxu0 0
        %5125 = vmatpush1.bf16.msra.mxu0 0
        %5126 = vmatprep.subr.bf16.mxu0 0
        %5127 = vmatpush1.bf16.msra.mxu0 0
        %5128 = vmatprep.subr.bf16.mxu0 0
        %5129 = vmatpush1.bf16.msra.mxu0 0
        %5130 = vmatprep.subr.bf16.mxu0 0
        %5131 = vmatpush1.bf16.msra.mxu0 0
        %5132 = vmatprep.subr.bf16.mxu0 0
        %5133 = vmatpush1.bf16.msra.mxu0 0
        %5134 = vmatprep.subr.bf16.mxu0 0
        %5135 = vmatpush1.bf16.msra.mxu0 0
        %5136 = vmatprep.subr.bf16.mxu0 %v5120
        %5137 = vmatpush1.bf16.msra.mxu0 %v5117
        %5138 = vmatprep.subr.bf16.mxu0 0
        %5139 = vmatpush2.bf16.msra.mxu0 0
        %5140 = vmatprep.subr.bf16.mxu0 0
        %5141 = vmatpush2.bf16.msra.mxu0 0
        %5142 = vmatprep.subr.bf16.mxu0 0
        %5143 = vmatpush2.bf16.msra.mxu0 0
        %5144 = vmatprep.subr.bf16.mxu0 0
        %5145 = vmatpush2.bf16.msra.mxu0 0
        %5146 = vmatprep.subr.bf16.mxu0 0
        %5147 = vmatpush2.bf16.msra.mxu0 0
        %5148 = vmatprep.subr.bf16.mxu0 0
        %5149 = vmatpush2.bf16.msra.mxu0 0
        %5150 = vmatprep.subr.bf16.mxu0 0
        %5151 = vmatpush2.bf16.msra.mxu0 0
        %5152 = vmatprep.subr.bf16.mxu0 0
        %5153 = vmatpush2.bf16.msra.mxu0 0
        %5154 = vmatprep.mubr.bf16.mxu0 0
        %5155 = vmatmul.mubr.bf16.gmra.mxu0 %v5084
        %v5156 = vpop.f32.mrf.mxu0
        %v5157 = vadd.f32 0.0, %v5156
        %v5158 = vpop.f32.mrf.mxu0
        %v5159 = vadd.f32 0.0, %v5158
        %v5160 = vpop.f32.mrf.mxu0
        %v5161 = vadd.f32 0.0, %v5160
        %v5162 = vpop.f32.mrf.mxu0
        %v5163 = vadd.f32 0.0, %v5162
        %5164 = vmatprep.mubr.bf16.mxu0 0
        %5165 = vmatmul.mubr.bf16.gmra.mxu0 %v5087
        %v5166 = vpop.f32.mrf.mxu0
        %v5167 = vadd.f32 0.0, %v5166
        %v5168 = vpop.f32.mrf.mxu0
        %v5169 = vadd.f32 0.0, %v5168
        %v5170 = vpop.f32.mrf.mxu0
        %v5171 = vadd.f32 0.0, %v5170
        %v5172 = vpop.f32.mrf.mxu0
        %v5173 = vadd.f32 0.0, %v5172
        %5174 = vmatprep.mubr.bf16.mxu0 0
        %5175 = vmatmul.mubr.bf16.gmra.mxu0 %v5090
        %v5176 = vpop.f32.mrf.mxu0
        %v5177 = vadd.f32 0.0, %v5176
        %v5178 = vpop.f32.mrf.mxu0
        %v5179 = vadd.f32 0.0, %v5178
        %v5180 = vpop.f32.mrf.mxu0
        %v5181 = vadd.f32 0.0, %v5180
        %v5182 = vpop.f32.mrf.mxu0
        %v5183 = vadd.f32 0.0, %v5182
        %5184 = vmatprep.mubr.bf16.mxu0 0
        %5185 = vmatmul.mubr.bf16.gmra.mxu0 %v5093
        %v5186 = vpop.f32.mrf.mxu0
        %v5187 = vadd.f32 0.0, %v5186
        %v5188 = vpop.f32.mrf.mxu0
        %v5189 = vadd.f32 0.0, %v5188
        %v5190 = vpop.f32.mrf.mxu0
        %v5191 = vadd.f32 0.0, %v5190
        %v5192 = vpop.f32.mrf.mxu0
        %v5193 = vadd.f32 0.0, %v5192
        %5194 = vmatprep.mubr.bf16.mxu0 0
        %5195 = vmatmul.mubr.bf16.gmra.mxu0 %v5096
        %v5196 = vpop.f32.mrf.mxu0
        %v5197 = vadd.f32 0.0, %v5196
        %v5198 = vpop.f32.mrf.mxu0
        %v5199 = vadd.f32 0.0, %v5198
        %v5200 = vpop.f32.mrf.mxu0
        %v5201 = vadd.f32 0.0, %v5200
        %v5202 = vpop.f32.mrf.mxu0
        %v5203 = vadd.f32 0.0, %v5202
        %5204 = vmatprep.mubr.bf16.mxu0 0
        %5205 = vmatmul.mubr.bf16.gmra.mxu0 %v5099
        %v5206 = vpop.f32.mrf.mxu0
        %v5207 = vadd.f32 0.0, %v5206
        %v5208 = vpop.f32.mrf.mxu0
        %v5209 = vadd.f32 0.0, %v5208
        %v5210 = vpop.f32.mrf.mxu0
        %v5211 = vadd.f32 0.0, %v5210
        %v5212 = vpop.f32.mrf.mxu0
        %v5213 = vadd.f32 0.0, %v5212
        %5214 = vmatprep.mubr.bf16.mxu0 0
        %5215 = vmatmul.mubr.bf16.gmra.mxu0 %v5102
        %v5216 = vpop.f32.mrf.mxu0
        %v5217 = vadd.f32 0.0, %v5216
        %v5218 = vpop.f32.mrf.mxu0
        %v5219 = vadd.f32 0.0, %v5218
        %v5220 = vpop.f32.mrf.mxu0
        %v5221 = vadd.f32 0.0, %v5220
        %v5222 = vpop.f32.mrf.mxu0
        %v5223 = vadd.f32 0.0, %v5222
        %5224 = vmatprep.mubr.bf16.mxu0 0
        %5225 = vmatmul.mubr.bf16.gmra.mxu0 %v5105
        %v5226 = vpop.f32.mrf.mxu0
        %v5227 = vadd.f32 0.0, %v5226
        %v5228 = vpop.f32.mrf.mxu0
        %v5229 = vadd.f32 0.0, %v5228
        %v5230 = vpop.f32.mrf.mxu0
        %v5231 = vadd.f32 0.0, %v5230
        %v5232 = vpop.f32.mrf.mxu0
        %v5233 = vadd.f32 0.0, %v5232
        %5234 = vmatprep.mubr.bf16.mxu0 0
        %5235 = vmatmul.mubr.bf16.gmra.mxu0 %v5108
        %v5236 = vpop.f32.mrf.mxu0
        %v5237 = vadd.f32 0.0, %v5236
        %v5238 = vpop.f32.mrf.mxu0
        %v5239 = vadd.f32 0.0, %v5238
        %v5240 = vpop.f32.mrf.mxu0
        %v5241 = vadd.f32 0.0, %v5240
        %v5242 = vpop.f32.mrf.mxu0
        %v5243 = vadd.f32 0.0, %v5242
        %5244 = vmatprep.mubr.bf16.mxu0 0
        %5245 = vmatmul.mubr.bf16.gmra.mxu0 %v5111
        %v5246 = vpop.f32.mrf.mxu0
        %v5247 = vadd.f32 0.0, %v5246
        %v5248 = vpop.f32.mrf.mxu0
        %v5249 = vadd.f32 0.0, %v5248
        %v5250 = vpop.f32.mrf.mxu0
        %v5251 = vadd.f32 0.0, %v5250
        %v5252 = vpop.f32.mrf.mxu0
        %v5253 = vadd.f32 0.0, %v5252
        %5254 = vmatprep.mubr.bf16.mxu0 0
        %5255 = vmatmul.mubr.bf16.gmra.mxu0 %v5114
        %v5256 = vpop.f32.mrf.mxu0
        %v5257 = vadd.f32 0.0, %v5256
        %v5258 = vpop.f32.mrf.mxu0
        %v5259 = vadd.f32 0.0, %v5258
        %v5260 = vpop.f32.mrf.mxu0
        %v5261 = vadd.f32 0.0, %v5260
        %v5262 = vpop.f32.mrf.mxu0
        %v5263 = vadd.f32 0.0, %v5262
        %5264 = vdwg.mxu0
        %v5265 = vadd.f32 %v4999, %v5157
        %v5266 = vadd.f32 %v5000, %v5159
        %v5267 = vadd.f32 %v5001, %v5161
        %v5268 = vadd.f32 %v5002, %v5163
        %v5269 = vadd.f32 %v5003, %v5167
        %v5270 = vadd.f32 %v5004, %v5169
        %v5271 = vadd.f32 %v5005, %v5171
        %v5272 = vadd.f32 %v5006, %v5173
        %v5273 = vadd.f32 %v5007, %v5177
        %v5274 = vadd.f32 %v5008, %v5179
        %v5275 = vadd.f32 %v5009, %v5181
        %v5276 = vadd.f32 %v5010, %v5183
        %v5277 = vadd.f32 %v5011, %v5187
        %v5278 = vadd.f32 %v5012, %v5189
        %v5279 = vadd.f32 %v5013, %v5191
        %v5280 = vadd.f32 %v5014, %v5193
        %v5281 = vadd.f32 %v5015, %v5197
        %v5282 = vadd.f32 %v5016, %v5199
        %v5283 = vadd.f32 %v5017, %v5201
        %v5284 = vadd.f32 %v5018, %v5203
        %v5285 = vadd.f32 %v5019, %v5207
        %v5286 = vadd.f32 %v5020, %v5209
        %v5287 = vadd.f32 %v5021, %v5211
        %v5288 = vadd.f32 %v5022, %v5213
        %v5289 = vadd.f32 %v5023, %v5217
        %v5290 = vadd.f32 %v5024, %v5219
        %v5291 = vadd.f32 %v5025, %v5221
        %v5292 = vadd.f32 %v5026, %v5223
        %v5293 = vadd.f32 %v5027, %v5227
        %v5294 = vadd.f32 %v5028, %v5229
        %v5295 = vadd.f32 %v5029, %v5231
        %v5296 = vadd.f32 %v5030, %v5233
        %v5297 = vadd.f32 %v5031, %v5237
        %v5298 = vadd.f32 %v5032, %v5239
        %v5299 = vadd.f32 %v5033, %v5241
        %v5300 = vadd.f32 %v5034, %v5243
        %v5301 = vadd.f32 %v5035, %v5247
        %v5302 = vadd.f32 %v5036, %v5249
        %v5303 = vadd.f32 %v5037, %v5251
        %v5304 = vadd.f32 %v5038, %v5253
        %v5305 = vadd.f32 %v5039, %v5257
        %v5306 = vadd.f32 %v5040, %v5259
        %v5307 = vadd.f32 %v5041, %v5261
        %v5308 = vadd.f32 %v5042, %v5263
        %v5309 = vld [vmem:[%s344 + $0x6f] sm:$0xff]
        %v5310 = vld [vmem:[%s344 + $0x77] sm:$0xff]
        %v5311 = vld [vmem:[%s344 + $0x7f] sm:$0xff]
        %v5312 = vld [vmem:[%s344 + $0x87] sm:$0xff]
        %v5313 = vld [vmem:[%s344 + $0x8f] sm:$0xff]
        %v5314 = vld [vmem:[%s344 + $0x97] sm:$0xff]
        %v5315 = vld [vmem:[%s344 + $0x9f] sm:$0xff]
        %v5316 = vld [vmem:[%s344 + $0xa7] sm:$0xff]
        %v5317 = vld [vmem:[%s344 + $0xaf] sm:$0xff]
        %v5318 = vld [vmem:[%s344 + $0xb7] sm:$0xff]
        %v5319 = vld [vmem:[%s344 + $0xbf] sm:$0xff]
        %v5320 = vld [vmem:[%s344 + $0xc7] sm:$0xff]
        %v5321 = vld [vmem:[%s344 + $0xcf] sm:$0xff]
        %v5322 = vld [vmem:[%s344 + $0xd7] sm:$0xff]
        %v5323 = vld [vmem:[%s344 + $0xdf] sm:$0xff]
        %v5324 = vld [vmem:[%s344 + $0xe7] sm:$0xff]
        %v5325 = vld [vmem:[%s344 + $0xef] sm:$0xff]
        %v5326 = vld [vmem:[%s344 + $0xf7] sm:$0xff]
        %v5327 = vld [vmem:[%s344 + $0xff] sm:$0xff]
        %v5328 = vld [vmem:[%s344 + $0x107] sm:$0xff]
        %v5329 = vld [vmem:[%s344 + $0x10f] sm:$0xff]
        %v5330 = vld [vmem:[%s344 + $0x117] sm:$0xff]
        %v5331 = vpack.c.bf16 %v5310, %v5309
        %v5332 = vpack.c.bf16 %v5312, %v5311
        %v5333 = vpack.c.bf16 %v5314, %v5313
        %v5334 = vpack.c.bf16 %v5316, %v5315
        %v5335 = vpack.c.bf16 %v5318, %v5317
        %v5336 = vpack.c.bf16 %v5320, %v5319
        %v5337 = vpack.c.bf16 %v5322, %v5321
        %v5338 = vpack.c.bf16 %v5324, %v5323
        %v5339 = vpack.c.bf16 %v5326, %v5325
        %v5340 = vpack.c.bf16 %v5328, %v5327
        %v5341 = vpack.c.bf16 %v5330, %v5329
        %s5342 = scalar_lea.vmem %s2, 120
        %v5343 = vld [vmem:[%s5342] sm:$0xff]
        %v5345 = vunpack.c.l.b16 %v5343
        %v5346 = vunpack.c.h.b16 %v5343
        %v5347 = vpack.c.b16 %v5345, %v5345
        %v5348 = vpack.c.b16 %v5346, %v5346
        %v5350 = vsel %vm391, %v5331, 0
        %v5353 = vsel %vm391, %v5332, 0
        %v5356 = vsel %vm391, %v5333, 0
        %v5359 = vsel %vm391, %v5334, 0
        %v5362 = vsel %vm391, %v5335, 0
        %v5365 = vsel %vm391, %v5336, 0
        %v5368 = vsel %vm391, %v5337, 0
        %v5371 = vsel %vm391, %v5338, 0
        %v5374 = vsel %vm391, %v5339, 0
        %v5377 = vsel %vm391, %v5340, 0
        %v5380 = vsel %vm391, %v5341, 0
        %v5383 = vsel %vm425, %v5347, 0
        %v5386 = vsel %vm425, %v5348, 0
        %5388 = vmatprep.subr.bf16.mxu0 0
        %5389 = vmatpush1.bf16.msra.mxu0 0
        %5390 = vmatprep.subr.bf16.mxu0 0
        %5391 = vmatpush1.bf16.msra.mxu0 0
        %5392 = vmatprep.subr.bf16.mxu0 0
        %5393 = vmatpush1.bf16.msra.mxu0 0
        %5394 = vmatprep.subr.bf16.mxu0 0
        %5395 = vmatpush1.bf16.msra.mxu0 0
        %5396 = vmatprep.subr.bf16.mxu0 0
        %5397 = vmatpush1.bf16.msra.mxu0 0
        %5398 = vmatprep.subr.bf16.mxu0 0
        %5399 = vmatpush1.bf16.msra.mxu0 0
        %5400 = vmatprep.subr.bf16.mxu0 0
        %5401 = vmatpush1.bf16.msra.mxu0 0
        %5402 = vmatprep.subr.bf16.mxu0 %v5386
        %5403 = vmatpush1.bf16.msra.mxu0 %v5383
        %5404 = vmatprep.subr.bf16.mxu0 0
        %5405 = vmatpush2.bf16.msra.mxu0 0
        %5406 = vmatprep.subr.bf16.mxu0 0
        %5407 = vmatpush2.bf16.msra.mxu0 0
        %5408 = vmatprep.subr.bf16.mxu0 0
        %5409 = vmatpush2.bf16.msra.mxu0 0
        %5410 = vmatprep.subr.bf16.mxu0 0
        %5411 = vmatpush2.bf16.msra.mxu0 0
        %5412 = vmatprep.subr.bf16.mxu0 0
        %5413 = vmatpush2.bf16.msra.mxu0 0
        %5414 = vmatprep.subr.bf16.mxu0 0
        %5415 = vmatpush2.bf16.msra.mxu0 0
        %5416 = vmatprep.subr.bf16.mxu0 0
        %5417 = vmatpush2.bf16.msra.mxu0 0
        %5418 = vmatprep.subr.bf16.mxu0 0
        %5419 = vmatpush2.bf16.msra.mxu0 0
        %5420 = vmatprep.mubr.bf16.mxu0 0
        %5421 = vmatmul.mubr.bf16.gmra.mxu0 %v5350
        %v5422 = vpop.f32.mrf.mxu0
        %v5423 = vadd.f32 0.0, %v5422
        %v5424 = vpop.f32.mrf.mxu0
        %v5425 = vadd.f32 0.0, %v5424
        %v5426 = vpop.f32.mrf.mxu0
        %v5427 = vadd.f32 0.0, %v5426
        %v5428 = vpop.f32.mrf.mxu0
        %v5429 = vadd.f32 0.0, %v5428
        %5430 = vmatprep.mubr.bf16.mxu0 0
        %5431 = vmatmul.mubr.bf16.gmra.mxu0 %v5353
        %v5432 = vpop.f32.mrf.mxu0
        %v5433 = vadd.f32 0.0, %v5432
        %v5434 = vpop.f32.mrf.mxu0
        %v5435 = vadd.f32 0.0, %v5434
        %v5436 = vpop.f32.mrf.mxu0
        %v5437 = vadd.f32 0.0, %v5436
        %v5438 = vpop.f32.mrf.mxu0
        %v5439 = vadd.f32 0.0, %v5438
        %5440 = vmatprep.mubr.bf16.mxu0 0
        %5441 = vmatmul.mubr.bf16.gmra.mxu0 %v5356
        %v5442 = vpop.f32.mrf.mxu0
        %v5443 = vadd.f32 0.0, %v5442
        %v5444 = vpop.f32.mrf.mxu0
        %v5445 = vadd.f32 0.0, %v5444
        %v5446 = vpop.f32.mrf.mxu0
        %v5447 = vadd.f32 0.0, %v5446
        %v5448 = vpop.f32.mrf.mxu0
        %v5449 = vadd.f32 0.0, %v5448
        %5450 = vmatprep.mubr.bf16.mxu0 0
        %5451 = vmatmul.mubr.bf16.gmra.mxu0 %v5359
        %v5452 = vpop.f32.mrf.mxu0
        %v5453 = vadd.f32 0.0, %v5452
        %v5454 = vpop.f32.mrf.mxu0
        %v5455 = vadd.f32 0.0, %v5454
        %v5456 = vpop.f32.mrf.mxu0
        %v5457 = vadd.f32 0.0, %v5456
        %v5458 = vpop.f32.mrf.mxu0
        %v5459 = vadd.f32 0.0, %v5458
        %5460 = vmatprep.mubr.bf16.mxu0 0
        %5461 = vmatmul.mubr.bf16.gmra.mxu0 %v5362
        %v5462 = vpop.f32.mrf.mxu0
        %v5463 = vadd.f32 0.0, %v5462
        %v5464 = vpop.f32.mrf.mxu0
        %v5465 = vadd.f32 0.0, %v5464
        %v5466 = vpop.f32.mrf.mxu0
        %v5467 = vadd.f32 0.0, %v5466
        %v5468 = vpop.f32.mrf.mxu0
        %v5469 = vadd.f32 0.0, %v5468
        %5470 = vmatprep.mubr.bf16.mxu0 0
        %5471 = vmatmul.mubr.bf16.gmra.mxu0 %v5365
        %v5472 = vpop.f32.mrf.mxu0
        %v5473 = vadd.f32 0.0, %v5472
        %v5474 = vpop.f32.mrf.mxu0
        %v5475 = vadd.f32 0.0, %v5474
        %v5476 = vpop.f32.mrf.mxu0
        %v5477 = vadd.f32 0.0, %v5476
        %v5478 = vpop.f32.mrf.mxu0
        %v5479 = vadd.f32 0.0, %v5478
        %5480 = vmatprep.mubr.bf16.mxu0 0
        %5481 = vmatmul.mubr.bf16.gmra.mxu0 %v5368
        %v5482 = vpop.f32.mrf.mxu0
        %v5483 = vadd.f32 0.0, %v5482
        %v5484 = vpop.f32.mrf.mxu0
        %v5485 = vadd.f32 0.0, %v5484
        %v5486 = vpop.f32.mrf.mxu0
        %v5487 = vadd.f32 0.0, %v5486
        %v5488 = vpop.f32.mrf.mxu0
        %v5489 = vadd.f32 0.0, %v5488
        %5490 = vmatprep.mubr.bf16.mxu0 0
        %5491 = vmatmul.mubr.bf16.gmra.mxu0 %v5371
        %v5492 = vpop.f32.mrf.mxu0
        %v5493 = vadd.f32 0.0, %v5492
        %v5494 = vpop.f32.mrf.mxu0
        %v5495 = vadd.f32 0.0, %v5494
        %v5496 = vpop.f32.mrf.mxu0
        %v5497 = vadd.f32 0.0, %v5496
        %v5498 = vpop.f32.mrf.mxu0
        %v5499 = vadd.f32 0.0, %v5498
        %5500 = vmatprep.mubr.bf16.mxu0 0
        %5501 = vmatmul.mubr.bf16.gmra.mxu0 %v5374
        %v5502 = vpop.f32.mrf.mxu0
        %v5503 = vadd.f32 0.0, %v5502
        %v5504 = vpop.f32.mrf.mxu0
        %v5505 = vadd.f32 0.0, %v5504
        %v5506 = vpop.f32.mrf.mxu0
        %v5507 = vadd.f32 0.0, %v5506
        %v5508 = vpop.f32.mrf.mxu0
        %v5509 = vadd.f32 0.0, %v5508
        %5510 = vmatprep.mubr.bf16.mxu0 0
        %5511 = vmatmul.mubr.bf16.gmra.mxu0 %v5377
        %v5512 = vpop.f32.mrf.mxu0
        %v5513 = vadd.f32 0.0, %v5512
        %v5514 = vpop.f32.mrf.mxu0
        %v5515 = vadd.f32 0.0, %v5514
        %v5516 = vpop.f32.mrf.mxu0
        %v5517 = vadd.f32 0.0, %v5516
        %v5518 = vpop.f32.mrf.mxu0
        %v5519 = vadd.f32 0.0, %v5518
        %5520 = vmatprep.mubr.bf16.mxu0 0
        %5521 = vmatmul.mubr.bf16.gmra.mxu0 %v5380
        %v5522 = vpop.f32.mrf.mxu0
        %v5523 = vadd.f32 0.0, %v5522
        %v5524 = vpop.f32.mrf.mxu0
        %v5525 = vadd.f32 0.0, %v5524
        %v5526 = vpop.f32.mrf.mxu0
        %v5527 = vadd.f32 0.0, %v5526
        %v5528 = vpop.f32.mrf.mxu0
        %v5529 = vadd.f32 0.0, %v5528
        %5530 = vdwg.mxu0
        %v5531 = vadd.f32 %v5265, %v5423
        %v5532 = vadd.f32 %v5266, %v5425
        %v5533 = vadd.f32 %v5267, %v5427
        %v5534 = vadd.f32 %v5268, %v5429
        %v5535 = vadd.f32 %v5269, %v5433
        %v5536 = vadd.f32 %v5270, %v5435
        %v5537 = vadd.f32 %v5271, %v5437
        %v5538 = vadd.f32 %v5272, %v5439
        %v5539 = vadd.f32 %v5273, %v5443
        %v5540 = vadd.f32 %v5274, %v5445
        %v5541 = vadd.f32 %v5275, %v5447
        %v5542 = vadd.f32 %v5276, %v5449
        %v5543 = vadd.f32 %v5277, %v5453
        %v5544 = vadd.f32 %v5278, %v5455
        %v5545 = vadd.f32 %v5279, %v5457
        %v5546 = vadd.f32 %v5280, %v5459
        %v5547 = vadd.f32 %v5281, %v5463
        %v5548 = vadd.f32 %v5282, %v5465
        %v5549 = vadd.f32 %v5283, %v5467
        %v5550 = vadd.f32 %v5284, %v5469
        %v5551 = vadd.f32 %v5285, %v5473
        %v5552 = vadd.f32 %v5286, %v5475
        %v5553 = vadd.f32 %v5287, %v5477
        %v5554 = vadd.f32 %v5288, %v5479
        %v5555 = vadd.f32 %v5289, %v5483
        %v5556 = vadd.f32 %v5290, %v5485
        %v5557 = vadd.f32 %v5291, %v5487
        %v5558 = vadd.f32 %v5292, %v5489
        %v5559 = vadd.f32 %v5293, %v5493
        %v5560 = vadd.f32 %v5294, %v5495
        %v5561 = vadd.f32 %v5295, %v5497
        %v5562 = vadd.f32 %v5296, %v5499
        %v5563 = vadd.f32 %v5297, %v5503
        %v5564 = vadd.f32 %v5298, %v5505
        %v5565 = vadd.f32 %v5299, %v5507
        %v5566 = vadd.f32 %v5300, %v5509
        %v5567 = vadd.f32 %v5301, %v5513
        %v5568 = vadd.f32 %v5302, %v5515
        %v5569 = vadd.f32 %v5303, %v5517
        %v5570 = vadd.f32 %v5304, %v5519
        %v5571 = vadd.f32 %v5305, %v5523
        %v5572 = vadd.f32 %v5306, %v5525
        %v5573 = vadd.f32 %v5307, %v5527
        %v5574 = vadd.f32 %v5308, %v5529
        %v5575 = vld [vmem:[%s344 + $0x71] sm:$0xff]
        %v5576 = vld [vmem:[%s344 + $0x79] sm:$0xff]
        %v5577 = vld [vmem:[%s344 + $0x81] sm:$0xff]
        %v5578 = vld [vmem:[%s344 + $0x89] sm:$0xff]
        %v5579 = vld [vmem:[%s344 + $0x91] sm:$0xff]
        %v5580 = vld [vmem:[%s344 + $0x99] sm:$0xff]
        %v5581 = vld [vmem:[%s344 + $0xa1] sm:$0xff]
        %v5582 = vld [vmem:[%s344 + $0xa9] sm:$0xff]
        %v5583 = vld [vmem:[%s344 + $0xb1] sm:$0xff]
        %v5584 = vld [vmem:[%s344 + $0xb9] sm:$0xff]
        %v5585 = vld [vmem:[%s344 + $0xc1] sm:$0xff]
        %v5586 = vld [vmem:[%s344 + $0xc9] sm:$0xff]
        %v5587 = vld [vmem:[%s344 + $0xd1] sm:$0xff]
        %v5588 = vld [vmem:[%s344 + $0xd9] sm:$0xff]
        %v5589 = vld [vmem:[%s344 + $0xe1] sm:$0xff]
        %v5590 = vld [vmem:[%s344 + $0xe9] sm:$0xff]
        %v5591 = vld [vmem:[%s344 + $0xf1] sm:$0xff]
        %v5592 = vld [vmem:[%s344 + $0xf9] sm:$0xff]
        %v5593 = vld [vmem:[%s344 + $0x101] sm:$0xff]
        %v5594 = vld [vmem:[%s344 + $0x109] sm:$0xff]
        %v5595 = vld [vmem:[%s344 + $0x111] sm:$0xff]
        %v5596 = vld [vmem:[%s344 + $0x119] sm:$0xff]
        %v5597 = vpack.c.bf16 %v5576, %v5575
        %v5598 = vpack.c.bf16 %v5578, %v5577
        %v5599 = vpack.c.bf16 %v5580, %v5579
        %v5600 = vpack.c.bf16 %v5582, %v5581
        %v5601 = vpack.c.bf16 %v5584, %v5583
        %v5602 = vpack.c.bf16 %v5586, %v5585
        %v5603 = vpack.c.bf16 %v5588, %v5587
        %v5604 = vpack.c.bf16 %v5590, %v5589
        %v5605 = vpack.c.bf16 %v5592, %v5591
        %v5606 = vpack.c.bf16 %v5594, %v5593
        %v5607 = vpack.c.bf16 %v5596, %v5595
        %s5608 = scalar_lea.vmem %s2, 128
        %v5609 = vld [vmem:[%s5608] sm:$0xff]
        %v5611 = vunpack.c.l.b16 %v5609
        %v5612 = vunpack.c.h.b16 %v5609
        %v5613 = vpack.c.b16 %v5611, %v5611
        %v5614 = vpack.c.b16 %v5612, %v5612
        %v5616 = vsel %vm391, %v5597, 0
        %v5619 = vsel %vm391, %v5598, 0
        %v5622 = vsel %vm391, %v5599, 0
        %v5625 = vsel %vm391, %v5600, 0
        %v5628 = vsel %vm391, %v5601, 0
        %v5631 = vsel %vm391, %v5602, 0
        %v5634 = vsel %vm391, %v5603, 0
        %v5637 = vsel %vm391, %v5604, 0
        %v5640 = vsel %vm391, %v5605, 0
        %v5643 = vsel %vm391, %v5606, 0
        %v5646 = vsel %vm391, %v5607, 0
        %v5649 = vsel %vm425, %v5613, 0
        %v5652 = vsel %vm425, %v5614, 0
        %5654 = vmatprep.subr.bf16.mxu0 0
        %5655 = vmatpush1.bf16.msra.mxu0 0
        %5656 = vmatprep.subr.bf16.mxu0 0
        %5657 = vmatpush1.bf16.msra.mxu0 0
        %5658 = vmatprep.subr.bf16.mxu0 0
        %5659 = vmatpush1.bf16.msra.mxu0 0
        %5660 = vmatprep.subr.bf16.mxu0 0
        %5661 = vmatpush1.bf16.msra.mxu0 0
        %5662 = vmatprep.subr.bf16.mxu0 0
        %5663 = vmatpush1.bf16.msra.mxu0 0
        %5664 = vmatprep.subr.bf16.mxu0 0
        %5665 = vmatpush1.bf16.msra.mxu0 0
        %5666 = vmatprep.subr.bf16.mxu0 0
        %5667 = vmatpush1.bf16.msra.mxu0 0
        %5668 = vmatprep.subr.bf16.mxu0 %v5652
        %5669 = vmatpush1.bf16.msra.mxu0 %v5649
        %5670 = vmatprep.subr.bf16.mxu0 0
        %5671 = vmatpush2.bf16.msra.mxu0 0
        %5672 = vmatprep.subr.bf16.mxu0 0
        %5673 = vmatpush2.bf16.msra.mxu0 0
        %5674 = vmatprep.subr.bf16.mxu0 0
        %5675 = vmatpush2.bf16.msra.mxu0 0
        %5676 = vmatprep.subr.bf16.mxu0 0
        %5677 = vmatpush2.bf16.msra.mxu0 0
        %5678 = vmatprep.subr.bf16.mxu0 0
        %5679 = vmatpush2.bf16.msra.mxu0 0
        %5680 = vmatprep.subr.bf16.mxu0 0
        %5681 = vmatpush2.bf16.msra.mxu0 0
        %5682 = vmatprep.subr.bf16.mxu0 0
        %5683 = vmatpush2.bf16.msra.mxu0 0
        %5684 = vmatprep.subr.bf16.mxu0 0
        %5685 = vmatpush2.bf16.msra.mxu0 0
        %5686 = vmatprep.mubr.bf16.mxu0 0
        %5687 = vmatmul.mubr.bf16.gmra.mxu0 %v5616
        %v5688 = vpop.f32.mrf.mxu0
        %v5689 = vadd.f32 0.0, %v5688
        %v5690 = vpop.f32.mrf.mxu0
        %v5691 = vadd.f32 0.0, %v5690
        %v5692 = vpop.f32.mrf.mxu0
        %v5693 = vadd.f32 0.0, %v5692
        %v5694 = vpop.f32.mrf.mxu0
        %v5695 = vadd.f32 0.0, %v5694
        %5696 = vmatprep.mubr.bf16.mxu0 0
        %5697 = vmatmul.mubr.bf16.gmra.mxu0 %v5619
        %v5698 = vpop.f32.mrf.mxu0
        %v5699 = vadd.f32 0.0, %v5698
        %v5700 = vpop.f32.mrf.mxu0
        %v5701 = vadd.f32 0.0, %v5700
        %v5702 = vpop.f32.mrf.mxu0
        %v5703 = vadd.f32 0.0, %v5702
        %v5704 = vpop.f32.mrf.mxu0
        %v5705 = vadd.f32 0.0, %v5704
        %5706 = vmatprep.mubr.bf16.mxu0 0
        %5707 = vmatmul.mubr.bf16.gmra.mxu0 %v5622
        %v5708 = vpop.f32.mrf.mxu0
        %v5709 = vadd.f32 0.0, %v5708
        %v5710 = vpop.f32.mrf.mxu0
        %v5711 = vadd.f32 0.0, %v5710
        %v5712 = vpop.f32.mrf.mxu0
        %v5713 = vadd.f32 0.0, %v5712
        %v5714 = vpop.f32.mrf.mxu0
        %v5715 = vadd.f32 0.0, %v5714
        %5716 = vmatprep.mubr.bf16.mxu0 0
        %5717 = vmatmul.mubr.bf16.gmra.mxu0 %v5625
        %v5718 = vpop.f32.mrf.mxu0
        %v5719 = vadd.f32 0.0, %v5718
        %v5720 = vpop.f32.mrf.mxu0
        %v5721 = vadd.f32 0.0, %v5720
        %v5722 = vpop.f32.mrf.mxu0
        %v5723 = vadd.f32 0.0, %v5722
        %v5724 = vpop.f32.mrf.mxu0
        %v5725 = vadd.f32 0.0, %v5724
        %5726 = vmatprep.mubr.bf16.mxu0 0
        %5727 = vmatmul.mubr.bf16.gmra.mxu0 %v5628
        %v5728 = vpop.f32.mrf.mxu0
        %v5729 = vadd.f32 0.0, %v5728
        %v5730 = vpop.f32.mrf.mxu0
        %v5731 = vadd.f32 0.0, %v5730
        %v5732 = vpop.f32.mrf.mxu0
        %v5733 = vadd.f32 0.0, %v5732
        %v5734 = vpop.f32.mrf.mxu0
        %v5735 = vadd.f32 0.0, %v5734
        %5736 = vmatprep.mubr.bf16.mxu0 0
        %5737 = vmatmul.mubr.bf16.gmra.mxu0 %v5631
        %v5738 = vpop.f32.mrf.mxu0
        %v5739 = vadd.f32 0.0, %v5738
        %v5740 = vpop.f32.mrf.mxu0
        %v5741 = vadd.f32 0.0, %v5740
        %v5742 = vpop.f32.mrf.mxu0
        %v5743 = vadd.f32 0.0, %v5742
        %v5744 = vpop.f32.mrf.mxu0
        %v5745 = vadd.f32 0.0, %v5744
        %5746 = vmatprep.mubr.bf16.mxu0 0
        %5747 = vmatmul.mubr.bf16.gmra.mxu0 %v5634
        %v5748 = vpop.f32.mrf.mxu0
        %v5749 = vadd.f32 0.0, %v5748
        %v5750 = vpop.f32.mrf.mxu0
        %v5751 = vadd.f32 0.0, %v5750
        %v5752 = vpop.f32.mrf.mxu0
        %v5753 = vadd.f32 0.0, %v5752
        %v5754 = vpop.f32.mrf.mxu0
        %v5755 = vadd.f32 0.0, %v5754
        %5756 = vmatprep.mubr.bf16.mxu0 0
        %5757 = vmatmul.mubr.bf16.gmra.mxu0 %v5637
        %v5758 = vpop.f32.mrf.mxu0
        %v5759 = vadd.f32 0.0, %v5758
        %v5760 = vpop.f32.mrf.mxu0
        %v5761 = vadd.f32 0.0, %v5760
        %v5762 = vpop.f32.mrf.mxu0
        %v5763 = vadd.f32 0.0, %v5762
        %v5764 = vpop.f32.mrf.mxu0
        %v5765 = vadd.f32 0.0, %v5764
        %5766 = vmatprep.mubr.bf16.mxu0 0
        %5767 = vmatmul.mubr.bf16.gmra.mxu0 %v5640
        %v5768 = vpop.f32.mrf.mxu0
        %v5769 = vadd.f32 0.0, %v5768
        %v5770 = vpop.f32.mrf.mxu0
        %v5771 = vadd.f32 0.0, %v5770
        %v5772 = vpop.f32.mrf.mxu0
        %v5773 = vadd.f32 0.0, %v5772
        %v5774 = vpop.f32.mrf.mxu0
        %v5775 = vadd.f32 0.0, %v5774
        %5776 = vmatprep.mubr.bf16.mxu0 0
        %5777 = vmatmul.mubr.bf16.gmra.mxu0 %v5643
        %v5778 = vpop.f32.mrf.mxu0
        %v5779 = vadd.f32 0.0, %v5778
        %v5780 = vpop.f32.mrf.mxu0
        %v5781 = vadd.f32 0.0, %v5780
        %v5782 = vpop.f32.mrf.mxu0
        %v5783 = vadd.f32 0.0, %v5782
        %v5784 = vpop.f32.mrf.mxu0
        %v5785 = vadd.f32 0.0, %v5784
        %5786 = vmatprep.mubr.bf16.mxu0 0
        %5787 = vmatmul.mubr.bf16.gmra.mxu0 %v5646
        %v5788 = vpop.f32.mrf.mxu0
        %v5789 = vadd.f32 0.0, %v5788
        %v5790 = vpop.f32.mrf.mxu0
        %v5791 = vadd.f32 0.0, %v5790
        %v5792 = vpop.f32.mrf.mxu0
        %v5793 = vadd.f32 0.0, %v5792
        %v5794 = vpop.f32.mrf.mxu0
        %v5795 = vadd.f32 0.0, %v5794
        %5796 = vdwg.mxu0
        %v5797 = vadd.f32 %v5531, %v5689
        %v5798 = vadd.f32 %v5532, %v5691
        %v5799 = vadd.f32 %v5533, %v5693
        %v5800 = vadd.f32 %v5534, %v5695
        %v5801 = vadd.f32 %v5535, %v5699
        %v5802 = vadd.f32 %v5536, %v5701
        %v5803 = vadd.f32 %v5537, %v5703
        %v5804 = vadd.f32 %v5538, %v5705
        %v5805 = vadd.f32 %v5539, %v5709
        %v5806 = vadd.f32 %v5540, %v5711
        %v5807 = vadd.f32 %v5541, %v5713
        %v5808 = vadd.f32 %v5542, %v5715
        %v5809 = vadd.f32 %v5543, %v5719
        %v5810 = vadd.f32 %v5544, %v5721
        %v5811 = vadd.f32 %v5545, %v5723
        %v5812 = vadd.f32 %v5546, %v5725
        %v5813 = vadd.f32 %v5547, %v5729
        %v5814 = vadd.f32 %v5548, %v5731
        %v5815 = vadd.f32 %v5549, %v5733
        %v5816 = vadd.f32 %v5550, %v5735
        %v5817 = vadd.f32 %v5551, %v5739
        %v5818 = vadd.f32 %v5552, %v5741
        %v5819 = vadd.f32 %v5553, %v5743
        %v5820 = vadd.f32 %v5554, %v5745
        %v5821 = vadd.f32 %v5555, %v5749
        %v5822 = vadd.f32 %v5556, %v5751
        %v5823 = vadd.f32 %v5557, %v5753
        %v5824 = vadd.f32 %v5558, %v5755
        %v5825 = vadd.f32 %v5559, %v5759
        %v5826 = vadd.f32 %v5560, %v5761
        %v5827 = vadd.f32 %v5561, %v5763
        %v5828 = vadd.f32 %v5562, %v5765
        %v5829 = vadd.f32 %v5563, %v5769
        %v5830 = vadd.f32 %v5564, %v5771
        %v5831 = vadd.f32 %v5565, %v5773
        %v5832 = vadd.f32 %v5566, %v5775
        %v5833 = vadd.f32 %v5567, %v5779
        %v5834 = vadd.f32 %v5568, %v5781
        %v5835 = vadd.f32 %v5569, %v5783
        %v5836 = vadd.f32 %v5570, %v5785
        %v5837 = vadd.f32 %v5571, %v5789
        %v5838 = vadd.f32 %v5572, %v5791
        %v5839 = vadd.f32 %v5573, %v5793
        %v5840 = vadd.f32 %v5574, %v5795
        %v5841 = vld [vmem:[%s344 + $0x73] sm:$0xff]
        %v5842 = vld [vmem:[%s344 + $0x7b] sm:$0xff]
        %v5843 = vld [vmem:[%s344 + $0x83] sm:$0xff]
        %v5844 = vld [vmem:[%s344 + $0x8b] sm:$0xff]
        %v5845 = vld [vmem:[%s344 + $0x93] sm:$0xff]
        %v5846 = vld [vmem:[%s344 + $0x9b] sm:$0xff]
        %v5847 = vld [vmem:[%s344 + $0xa3] sm:$0xff]
        %v5848 = vld [vmem:[%s344 + $0xab] sm:$0xff]
        %v5849 = vld [vmem:[%s344 + $0xb3] sm:$0xff]
        %v5850 = vld [vmem:[%s344 + $0xbb] sm:$0xff]
        %v5851 = vld [vmem:[%s344 + $0xc3] sm:$0xff]
        %v5852 = vld [vmem:[%s344 + $0xcb] sm:$0xff]
        %v5853 = vld [vmem:[%s344 + $0xd3] sm:$0xff]
        %v5854 = vld [vmem:[%s344 + $0xdb] sm:$0xff]
        %v5855 = vld [vmem:[%s344 + $0xe3] sm:$0xff]
        %v5856 = vld [vmem:[%s344 + $0xeb] sm:$0xff]
        %v5857 = vld [vmem:[%s344 + $0xf3] sm:$0xff]
        %v5858 = vld [vmem:[%s344 + $0xfb] sm:$0xff]
        %v5859 = vld [vmem:[%s344 + $0x103] sm:$0xff]
        %v5860 = vld [vmem:[%s344 + $0x10b] sm:$0xff]
        %v5861 = vld [vmem:[%s344 + $0x113] sm:$0xff]
        %v5862 = vld [vmem:[%s344 + $0x11b] sm:$0xff]
        %v5863 = vpack.c.bf16 %v5842, %v5841
        %v5864 = vpack.c.bf16 %v5844, %v5843
        %v5865 = vpack.c.bf16 %v5846, %v5845
        %v5866 = vpack.c.bf16 %v5848, %v5847
        %v5867 = vpack.c.bf16 %v5850, %v5849
        %v5868 = vpack.c.bf16 %v5852, %v5851
        %v5869 = vpack.c.bf16 %v5854, %v5853
        %v5870 = vpack.c.bf16 %v5856, %v5855
        %v5871 = vpack.c.bf16 %v5858, %v5857
        %v5872 = vpack.c.bf16 %v5860, %v5859
        %v5873 = vpack.c.bf16 %v5862, %v5861
        %s5874 = scalar_lea.vmem %s2, 136
        %v5875 = vld [vmem:[%s5874] sm:$0xff]
        %v5877 = vunpack.c.l.b16 %v5875
        %v5878 = vunpack.c.h.b16 %v5875
        %v5879 = vpack.c.b16 %v5877, %v5877
        %v5880 = vpack.c.b16 %v5878, %v5878
        %v5882 = vsel %vm391, %v5863, 0
        %v5885 = vsel %vm391, %v5864, 0
        %v5888 = vsel %vm391, %v5865, 0
        %v5891 = vsel %vm391, %v5866, 0
        %v5894 = vsel %vm391, %v5867, 0
        %v5897 = vsel %vm391, %v5868, 0
        %v5900 = vsel %vm391, %v5869, 0
        %v5903 = vsel %vm391, %v5870, 0
        %v5906 = vsel %vm391, %v5871, 0
        %v5909 = vsel %vm391, %v5872, 0
        %v5912 = vsel %vm391, %v5873, 0
        %v5915 = vsel %vm425, %v5879, 0
        %v5918 = vsel %vm425, %v5880, 0
        %5920 = vmatprep.subr.bf16.mxu0 0
        %5921 = vmatpush1.bf16.msra.mxu0 0
        %5922 = vmatprep.subr.bf16.mxu0 0
        %5923 = vmatpush1.bf16.msra.mxu0 0
        %5924 = vmatprep.subr.bf16.mxu0 0
        %5925 = vmatpush1.bf16.msra.mxu0 0
        %5926 = vmatprep.subr.bf16.mxu0 0
        %5927 = vmatpush1.bf16.msra.mxu0 0
        %5928 = vmatprep.subr.bf16.mxu0 0
        %5929 = vmatpush1.bf16.msra.mxu0 0
        %5930 = vmatprep.subr.bf16.mxu0 0
        %5931 = vmatpush1.bf16.msra.mxu0 0
        %5932 = vmatprep.subr.bf16.mxu0 0
        %5933 = vmatpush1.bf16.msra.mxu0 0
        %5934 = vmatprep.subr.bf16.mxu0 %v5918
        %5935 = vmatpush1.bf16.msra.mxu0 %v5915
        %5936 = vmatprep.subr.bf16.mxu0 0
        %5937 = vmatpush2.bf16.msra.mxu0 0
        %5938 = vmatprep.subr.bf16.mxu0 0
        %5939 = vmatpush2.bf16.msra.mxu0 0
        %5940 = vmatprep.subr.bf16.mxu0 0
        %5941 = vmatpush2.bf16.msra.mxu0 0
        %5942 = vmatprep.subr.bf16.mxu0 0
        %5943 = vmatpush2.bf16.msra.mxu0 0
        %5944 = vmatprep.subr.bf16.mxu0 0
        %5945 = vmatpush2.bf16.msra.mxu0 0
        %5946 = vmatprep.subr.bf16.mxu0 0
        %5947 = vmatpush2.bf16.msra.mxu0 0
        %5948 = vmatprep.subr.bf16.mxu0 0
        %5949 = vmatpush2.bf16.msra.mxu0 0
        %5950 = vmatprep.subr.bf16.mxu0 0
        %5951 = vmatpush2.bf16.msra.mxu0 0
        %5952 = vmatprep.mubr.bf16.mxu0 0
        %5953 = vmatmul.mubr.bf16.gmra.mxu0 %v5882
        %v5954 = vpop.f32.mrf.mxu0
        %v5955 = vadd.f32 0.0, %v5954
        %v5956 = vpop.f32.mrf.mxu0
        %v5957 = vadd.f32 0.0, %v5956
        %v5958 = vpop.f32.mrf.mxu0
        %v5959 = vadd.f32 0.0, %v5958
        %v5960 = vpop.f32.mrf.mxu0
        %v5961 = vadd.f32 0.0, %v5960
        %5962 = vmatprep.mubr.bf16.mxu0 0
        %5963 = vmatmul.mubr.bf16.gmra.mxu0 %v5885
        %v5964 = vpop.f32.mrf.mxu0
        %v5965 = vadd.f32 0.0, %v5964
        %v5966 = vpop.f32.mrf.mxu0
        %v5967 = vadd.f32 0.0, %v5966
        %v5968 = vpop.f32.mrf.mxu0
        %v5969 = vadd.f32 0.0, %v5968
        %v5970 = vpop.f32.mrf.mxu0
        %v5971 = vadd.f32 0.0, %v5970
        %5972 = vmatprep.mubr.bf16.mxu0 0
        %5973 = vmatmul.mubr.bf16.gmra.mxu0 %v5888
        %v5974 = vpop.f32.mrf.mxu0
        %v5975 = vadd.f32 0.0, %v5974
        %v5976 = vpop.f32.mrf.mxu0
        %v5977 = vadd.f32 0.0, %v5976
        %v5978 = vpop.f32.mrf.mxu0
        %v5979 = vadd.f32 0.0, %v5978
        %v5980 = vpop.f32.mrf.mxu0
        %v5981 = vadd.f32 0.0, %v5980
        %5982 = vmatprep.mubr.bf16.mxu0 0
        %5983 = vmatmul.mubr.bf16.gmra.mxu0 %v5891
        %v5984 = vpop.f32.mrf.mxu0
        %v5985 = vadd.f32 0.0, %v5984
        %v5986 = vpop.f32.mrf.mxu0
        %v5987 = vadd.f32 0.0, %v5986
        %v5988 = vpop.f32.mrf.mxu0
        %v5989 = vadd.f32 0.0, %v5988
        %v5990 = vpop.f32.mrf.mxu0
        %v5991 = vadd.f32 0.0, %v5990
        %5992 = vmatprep.mubr.bf16.mxu0 0
        %5993 = vmatmul.mubr.bf16.gmra.mxu0 %v5894
        %v5994 = vpop.f32.mrf.mxu0
        %v5995 = vadd.f32 0.0, %v5994
        %v5996 = vpop.f32.mrf.mxu0
        %v5997 = vadd.f32 0.0, %v5996
        %v5998 = vpop.f32.mrf.mxu0
        %v5999 = vadd.f32 0.0, %v5998
        %v6000 = vpop.f32.mrf.mxu0
        %v6001 = vadd.f32 0.0, %v6000
        %6002 = vmatprep.mubr.bf16.mxu0 0
        %6003 = vmatmul.mubr.bf16.gmra.mxu0 %v5897
        %v6004 = vpop.f32.mrf.mxu0
        %v6005 = vadd.f32 0.0, %v6004
        %v6006 = vpop.f32.mrf.mxu0
        %v6007 = vadd.f32 0.0, %v6006
        %v6008 = vpop.f32.mrf.mxu0
        %v6009 = vadd.f32 0.0, %v6008
        %v6010 = vpop.f32.mrf.mxu0
        %v6011 = vadd.f32 0.0, %v6010
        %6012 = vmatprep.mubr.bf16.mxu0 0
        %6013 = vmatmul.mubr.bf16.gmra.mxu0 %v5900
        %v6014 = vpop.f32.mrf.mxu0
        %v6015 = vadd.f32 0.0, %v6014
        %v6016 = vpop.f32.mrf.mxu0
        %v6017 = vadd.f32 0.0, %v6016
        %v6018 = vpop.f32.mrf.mxu0
        %v6019 = vadd.f32 0.0, %v6018
        %v6020 = vpop.f32.mrf.mxu0
        %v6021 = vadd.f32 0.0, %v6020
        %6022 = vmatprep.mubr.bf16.mxu0 0
        %6023 = vmatmul.mubr.bf16.gmra.mxu0 %v5903
        %v6024 = vpop.f32.mrf.mxu0
        %v6025 = vadd.f32 0.0, %v6024
        %v6026 = vpop.f32.mrf.mxu0
        %v6027 = vadd.f32 0.0, %v6026
        %v6028 = vpop.f32.mrf.mxu0
        %v6029 = vadd.f32 0.0, %v6028
        %v6030 = vpop.f32.mrf.mxu0
        %v6031 = vadd.f32 0.0, %v6030
        %6032 = vmatprep.mubr.bf16.mxu0 0
        %6033 = vmatmul.mubr.bf16.gmra.mxu0 %v5906
        %v6034 = vpop.f32.mrf.mxu0
        %v6035 = vadd.f32 0.0, %v6034
        %v6036 = vpop.f32.mrf.mxu0
        %v6037 = vadd.f32 0.0, %v6036
        %v6038 = vpop.f32.mrf.mxu0
        %v6039 = vadd.f32 0.0, %v6038
        %v6040 = vpop.f32.mrf.mxu0
        %v6041 = vadd.f32 0.0, %v6040
        %6042 = vmatprep.mubr.bf16.mxu0 0
        %6043 = vmatmul.mubr.bf16.gmra.mxu0 %v5909
        %v6044 = vpop.f32.mrf.mxu0
        %v6045 = vadd.f32 0.0, %v6044
        %v6046 = vpop.f32.mrf.mxu0
        %v6047 = vadd.f32 0.0, %v6046
        %v6048 = vpop.f32.mrf.mxu0
        %v6049 = vadd.f32 0.0, %v6048
        %v6050 = vpop.f32.mrf.mxu0
        %v6051 = vadd.f32 0.0, %v6050
        %6052 = vmatprep.mubr.bf16.mxu0 0
        %6053 = vmatmul.mubr.bf16.gmra.mxu0 %v5912
        %v6054 = vpop.f32.mrf.mxu0
        %v6055 = vadd.f32 0.0, %v6054
        %v6056 = vpop.f32.mrf.mxu0
        %v6057 = vadd.f32 0.0, %v6056
        %v6058 = vpop.f32.mrf.mxu0
        %v6059 = vadd.f32 0.0, %v6058
        %v6060 = vpop.f32.mrf.mxu0
        %v6061 = vadd.f32 0.0, %v6060
        %6062 = vdwg.mxu0
        %v6063 = vadd.f32 %v5797, %v5955
        %v6064 = vadd.f32 %v5798, %v5957
        %v6065 = vadd.f32 %v5799, %v5959
        %v6066 = vadd.f32 %v5800, %v5961
        %v6067 = vadd.f32 %v5801, %v5965
        %v6068 = vadd.f32 %v5802, %v5967
        %v6069 = vadd.f32 %v5803, %v5969
        %v6070 = vadd.f32 %v5804, %v5971
        %v6071 = vadd.f32 %v5805, %v5975
        %v6072 = vadd.f32 %v5806, %v5977
        %v6073 = vadd.f32 %v5807, %v5979
        %v6074 = vadd.f32 %v5808, %v5981
        %v6075 = vadd.f32 %v5809, %v5985
        %v6076 = vadd.f32 %v5810, %v5987
        %v6077 = vadd.f32 %v5811, %v5989
        %v6078 = vadd.f32 %v5812, %v5991
        %v6079 = vadd.f32 %v5813, %v5995
        %v6080 = vadd.f32 %v5814, %v5997
        %v6081 = vadd.f32 %v5815, %v5999
        %v6082 = vadd.f32 %v5816, %v6001
        %v6083 = vadd.f32 %v5817, %v6005
        %v6084 = vadd.f32 %v5818, %v6007
        %v6085 = vadd.f32 %v5819, %v6009
        %v6086 = vadd.f32 %v5820, %v6011
        %v6087 = vadd.f32 %v5821, %v6015
        %v6088 = vadd.f32 %v5822, %v6017
        %v6089 = vadd.f32 %v5823, %v6019
        %v6090 = vadd.f32 %v5824, %v6021
        %v6091 = vadd.f32 %v5825, %v6025
        %v6092 = vadd.f32 %v5826, %v6027
        %v6093 = vadd.f32 %v5827, %v6029
        %v6094 = vadd.f32 %v5828, %v6031
        %v6095 = vadd.f32 %v5829, %v6035
        %v6096 = vadd.f32 %v5830, %v6037
        %v6097 = vadd.f32 %v5831, %v6039
        %v6098 = vadd.f32 %v5832, %v6041
        %v6099 = vadd.f32 %v5833, %v6045
        %v6100 = vadd.f32 %v5834, %v6047
        %v6101 = vadd.f32 %v5835, %v6049
        %v6102 = vadd.f32 %v5836, %v6051
        %v6103 = vadd.f32 %v5837, %v6055
        %v6104 = vadd.f32 %v5838, %v6057
        %v6105 = vadd.f32 %v5839, %v6059
        %v6106 = vadd.f32 %v5840, %v6061
        %v6107 = vlaneseq
        %v6108 = vshrl.u32 %v6107, 7
        %v6109 = vsub.s32 2, %v6108
        %v6110 = vrot.slane %v350, %v6109
        %v6111 = vlaneseq
        %v6112 = vshrl.u32 %v6111, 7
        %v6113 = vsub.s32 6, %v6112
        %v6114 = vrot.slane %v350, %v6113
        %v6117 = vlaneseq
        %v6118 = vshrl.u32 %v6117, 7
        %v6119 = vsub.s32 2, %v6118
        %v6120 = vrot.slane %v6110, %v6119
        %v6121 = vlaneseq
        %v6122 = vshrl.u32 %v6121, 7
        %v6123 = vsub.s32 2, %v6122
        %v6124 = vrot.slane %v6114, %v6123
        %v6125 = vmul.f32 %v6063, %v6120
        %v6126 = vmul.f32 %v6064, %v6124
        %v6127 = vmul.f32 %v6065, %v6120
        %v6128 = vmul.f32 %v6066, %v6124
        %v6129 = vmul.f32 %v6067, %v6120
        %v6130 = vmul.f32 %v6068, %v6124
        %v6131 = vmul.f32 %v6069, %v6120
        %v6132 = vmul.f32 %v6070, %v6124
        %v6133 = vmul.f32 %v6071, %v6120
        %v6134 = vmul.f32 %v6072, %v6124
        %v6135 = vmul.f32 %v6073, %v6120
        %v6136 = vmul.f32 %v6074, %v6124
        %v6137 = vmul.f32 %v6075, %v6120
        %v6138 = vmul.f32 %v6076, %v6124
        %v6139 = vmul.f32 %v6077, %v6120
        %v6140 = vmul.f32 %v6078, %v6124
        %v6141 = vmul.f32 %v6079, %v6120
        %v6142 = vmul.f32 %v6080, %v6124
        %v6143 = vmul.f32 %v6081, %v6120
        %v6144 = vmul.f32 %v6082, %v6124
        %v6145 = vmul.f32 %v6083, %v6120
        %v6146 = vmul.f32 %v6084, %v6124
        %v6147 = vmul.f32 %v6085, %v6120
        %v6148 = vmul.f32 %v6086, %v6124
        %v6149 = vmul.f32 %v6087, %v6120
        %v6150 = vmul.f32 %v6088, %v6124
        %v6151 = vmul.f32 %v6089, %v6120
        %v6152 = vmul.f32 %v6090, %v6124
        %v6153 = vmul.f32 %v6091, %v6120
        %v6154 = vmul.f32 %v6092, %v6124
        %v6155 = vmul.f32 %v6093, %v6120
        %v6156 = vmul.f32 %v6094, %v6124
        %v6157 = vmul.f32 %v6095, %v6120
        %v6158 = vmul.f32 %v6096, %v6124
        %v6159 = vmul.f32 %v6097, %v6120
        %v6160 = vmul.f32 %v6098, %v6124
        %v6161 = vmul.f32 %v6099, %v6120
        %v6162 = vmul.f32 %v6100, %v6124
        %v6163 = vmul.f32 %v6101, %v6120
        %v6164 = vmul.f32 %v6102, %v6124
        %v6165 = vmul.f32 %v6103, %v6120
        %v6166 = vmul.f32 %v6104, %v6124
        %v6167 = vmul.f32 %v6105, %v6120
        %v6168 = vmul.f32 %v6106, %v6124
        %v6169 = vlaneseq
        %v6170 = vshrl.u32 %v6169, 7
        %v6171 = vsub.s32 2, %v6170
        %v6172 = vrot.slane %v351, %v6171
        %v6173 = vlaneseq
        %v6174 = vshrl.u32 %v6173, 7
        %v6175 = vsub.s32 6, %v6174
        %v6176 = vrot.slane %v351, %v6175
        %v6179 = vlaneseq
        %v6180 = vshrl.u32 %v6179, 7
        %v6181 = vsub.s32 2, %v6180
        %v6182 = vrot.slane %v6172, %v6181
        %v6183 = vlaneseq
        %v6184 = vshrl.u32 %v6183, 7
        %v6185 = vsub.s32 2, %v6184
        %v6186 = vrot.slane %v6176, %v6185
        %v6187 = vadd.f32 %v6125, %v6182
        %v6188 = vadd.f32 %v6126, %v6186
        %v6189 = vadd.f32 %v6127, %v6182
        %v6190 = vadd.f32 %v6128, %v6186
        %v6191 = vadd.f32 %v6129, %v6182
        %v6192 = vadd.f32 %v6130, %v6186
        %v6193 = vadd.f32 %v6131, %v6182
        %v6194 = vadd.f32 %v6132, %v6186
        %v6195 = vadd.f32 %v6133, %v6182
        %v6196 = vadd.f32 %v6134, %v6186
        %v6197 = vadd.f32 %v6135, %v6182
        %v6198 = vadd.f32 %v6136, %v6186
        %v6199 = vadd.f32 %v6137, %v6182
        %v6200 = vadd.f32 %v6138, %v6186
        %v6201 = vadd.f32 %v6139, %v6182
        %v6202 = vadd.f32 %v6140, %v6186
        %v6203 = vadd.f32 %v6141, %v6182
        %v6204 = vadd.f32 %v6142, %v6186
        %v6205 = vadd.f32 %v6143, %v6182
        %v6206 = vadd.f32 %v6144, %v6186
        %v6207 = vadd.f32 %v6145, %v6182
        %v6208 = vadd.f32 %v6146, %v6186
        %v6209 = vadd.f32 %v6147, %v6182
        %v6210 = vadd.f32 %v6148, %v6186
        %v6211 = vadd.f32 %v6149, %v6182
        %v6212 = vadd.f32 %v6150, %v6186
        %v6213 = vadd.f32 %v6151, %v6182
        %v6214 = vadd.f32 %v6152, %v6186
        %v6215 = vadd.f32 %v6153, %v6182
        %v6216 = vadd.f32 %v6154, %v6186
        %v6217 = vadd.f32 %v6155, %v6182
        %v6218 = vadd.f32 %v6156, %v6186
        %v6219 = vadd.f32 %v6157, %v6182
        %v6220 = vadd.f32 %v6158, %v6186
        %v6221 = vadd.f32 %v6159, %v6182
        %v6222 = vadd.f32 %v6160, %v6186
        %v6223 = vadd.f32 %v6161, %v6182
        %v6224 = vadd.f32 %v6162, %v6186
        %v6225 = vadd.f32 %v6163, %v6182
        %v6226 = vadd.f32 %v6164, %v6186
        %v6227 = vadd.f32 %v6165, %v6182
        %v6228 = vadd.f32 %v6166, %v6186
        %v6229 = vadd.f32 %v6167, %v6182
        %v6230 = vadd.f32 %v6168, %v6186
        %v6231 = vmax.f32 %v6187, 0.0
        %v6232 = vmax.f32 %v6188, 0.0
        %v6233 = vmax.f32 %v6189, 0.0
        %v6234 = vmax.f32 %v6190, 0.0
        %v6235 = vmax.f32 %v6191, 0.0
        %v6236 = vmax.f32 %v6192, 0.0
        %v6237 = vmax.f32 %v6193, 0.0
        %v6238 = vmax.f32 %v6194, 0.0
        %v6239 = vmax.f32 %v6195, 0.0
        %v6240 = vmax.f32 %v6196, 0.0
        %v6241 = vmax.f32 %v6197, 0.0
        %v6242 = vmax.f32 %v6198, 0.0
        %v6243 = vmax.f32 %v6199, 0.0
        %v6244 = vmax.f32 %v6200, 0.0
        %v6245 = vmax.f32 %v6201, 0.0
        %v6246 = vmax.f32 %v6202, 0.0
        %v6247 = vmax.f32 %v6203, 0.0
        %v6248 = vmax.f32 %v6204, 0.0
        %v6249 = vmax.f32 %v6205, 0.0
        %v6250 = vmax.f32 %v6206, 0.0
        %v6251 = vmax.f32 %v6207, 0.0
        %v6252 = vmax.f32 %v6208, 0.0
        %v6253 = vmax.f32 %v6209, 0.0
        %v6254 = vmax.f32 %v6210, 0.0
        %v6255 = vmax.f32 %v6211, 0.0
        %v6256 = vmax.f32 %v6212, 0.0
        %v6257 = vmax.f32 %v6213, 0.0
        %v6258 = vmax.f32 %v6214, 0.0
        %v6259 = vmax.f32 %v6215, 0.0
        %v6260 = vmax.f32 %v6216, 0.0
        %v6261 = vmax.f32 %v6217, 0.0
        %v6262 = vmax.f32 %v6218, 0.0
        %v6263 = vmax.f32 %v6219, 0.0
        %v6264 = vmax.f32 %v6220, 0.0
        %v6265 = vmax.f32 %v6221, 0.0
        %v6266 = vmax.f32 %v6222, 0.0
        %v6267 = vmax.f32 %v6223, 0.0
        %v6268 = vmax.f32 %v6224, 0.0
        %v6269 = vmax.f32 %v6225, 0.0
        %v6270 = vmax.f32 %v6226, 0.0
        %v6271 = vmax.f32 %v6227, 0.0
        %v6272 = vmax.f32 %v6228, 0.0
        %v6273 = vmax.f32 %v6229, 0.0
        %v6274 = vmax.f32 %v6230, 0.0
        %v6275 = vpack.c.bf16 %v6233, %v6231
        %v6276 = vpack.c.bf16 %v6234, %v6232
        %v6277 = vpack.c.bf16 %v6237, %v6235
        %v6278 = vpack.c.bf16 %v6238, %v6236
        %v6279 = vpack.c.bf16 %v6241, %v6239
        %v6280 = vpack.c.bf16 %v6242, %v6240
        %v6281 = vpack.c.bf16 %v6245, %v6243
        %v6282 = vpack.c.bf16 %v6246, %v6244
        %v6283 = vpack.c.bf16 %v6249, %v6247
        %v6284 = vpack.c.bf16 %v6250, %v6248
        %v6285 = vpack.c.bf16 %v6253, %v6251
        %v6286 = vpack.c.bf16 %v6254, %v6252
        %v6287 = vpack.c.bf16 %v6257, %v6255
        %v6288 = vpack.c.bf16 %v6258, %v6256
        %v6289 = vpack.c.bf16 %v6261, %v6259
        %v6290 = vpack.c.bf16 %v6262, %v6260
        %v6291 = vpack.c.bf16 %v6265, %v6263
        %v6292 = vpack.c.bf16 %v6266, %v6264
        %v6293 = vpack.c.bf16 %v6269, %v6267
        %v6294 = vpack.c.bf16 %v6270, %v6268
        %v6295 = vpack.c.bf16 %v6273, %v6271
        %v6296 = vpack.c.bf16 %v6274, %v6272
        %s6297 = scalar_lea.vmem %s3, 512
        %v6298 = vld [vmem:[%s6297] sm:$0xff]
        %v6299 = vld [vmem:[%s6297 + $0x8] sm:$0xff]
        %v6300 = vld [vmem:[%s6297 + $0x10] sm:$0xff]
        %v6301 = vld [vmem:[%s6297 + $0x18] sm:$0xff]
        %v6302 = vld [vmem:[%s6297 + $0x20] sm:$0xff]
        %v6303 = vld [vmem:[%s6297 + $0x28] sm:$0xff]
        %v6304 = vld [vmem:[%s6297 + $0x30] sm:$0xff]
        %v6305 = vld [vmem:[%s6297 + $0x38] sm:$0xff]
        %v6306 = vld [vmem:[%s6297 + $0x40] sm:$0xff]
        %v6307 = vld [vmem:[%s6297 + $0x48] sm:$0xff]
        %v6308 = vld [vmem:[%s6297 + $0x50] sm:$0xff]
        %v6309 = vld [vmem:[%s6297 + $0x58] sm:$0xff]
        %v6310 = vld [vmem:[%s6297 + $0x60] sm:$0xff]
        %v6311 = vld [vmem:[%s6297 + $0x68] sm:$0xff]
        %v6312 = vld [vmem:[%s6297 + $0x70] sm:$0xff]
        %v6313 = vld [vmem:[%s6297 + $0x78] sm:$0xff]
        %v6314 = vld [vmem:[%s6297 + $0x80] sm:$0xff]
        %v6315 = vld [vmem:[%s6297 + $0x88] sm:$0xff]
        %v6316 = vld [vmem:[%s6297 + $0x90] sm:$0xff]
        %v6317 = vld [vmem:[%s6297 + $0x98] sm:$0xff]
        %v6318 = vld [vmem:[%s6297 + $0xa0] sm:$0xff]
        %v6319 = vld [vmem:[%s6297 + $0xa8] sm:$0xff]
        %v6320 = vld [vmem:[%s6297 + $0xb0] sm:$0xff]
        %v6321 = vld [vmem:[%s6297 + $0xb8] sm:$0xff]
        %v6322 = vld [vmem:[%s6297 + $0xc0] sm:$0xff]
        %v6323 = vld [vmem:[%s6297 + $0xc8] sm:$0xff]
        %v6324 = vld [vmem:[%s6297 + $0xd0] sm:$0xff]
        %v6325 = vld [vmem:[%s6297 + $0xd8] sm:$0xff]
        %v6326 = vld [vmem:[%s6297 + $0xe0] sm:$0xff]
        %v6327 = vld [vmem:[%s6297 + $0xe8] sm:$0xff]
        %v6328 = vld [vmem:[%s6297 + $0xf0] sm:$0xff]
        %v6329 = vld [vmem:[%s6297 + $0xf8] sm:$0xff]
        %v6362 = vunpack.c.l.b16 %v6298
        %v6363 = vunpack.c.h.b16 %v6298
        %v6364 = vunpack.c.l.b16 %v6299
        %v6365 = vunpack.c.h.b16 %v6299
        %v6366 = vunpack.c.l.b16 %v6300
        %v6367 = vunpack.c.h.b16 %v6300
        %v6368 = vunpack.c.l.b16 %v6301
        %v6369 = vunpack.c.h.b16 %v6301
        %v6370 = vunpack.c.l.b16 %v6302
        %v6371 = vunpack.c.h.b16 %v6302
        %v6372 = vunpack.c.l.b16 %v6303
        %v6373 = vunpack.c.h.b16 %v6303
        %v6374 = vunpack.c.l.b16 %v6304
        %v6375 = vunpack.c.h.b16 %v6304
        %v6376 = vunpack.c.l.b16 %v6305
        %v6377 = vunpack.c.h.b16 %v6305
        %v6378 = vunpack.c.l.b16 %v6306
        %v6379 = vunpack.c.h.b16 %v6306
        %v6380 = vunpack.c.l.b16 %v6307
        %v6381 = vunpack.c.h.b16 %v6307
        %v6382 = vunpack.c.l.b16 %v6308
        %v6383 = vunpack.c.h.b16 %v6308
        %v6384 = vunpack.c.l.b16 %v6309
        %v6385 = vunpack.c.h.b16 %v6309
        %v6386 = vunpack.c.l.b16 %v6310
        %v6387 = vunpack.c.h.b16 %v6310
        %v6388 = vunpack.c.l.b16 %v6311
        %v6389 = vunpack.c.h.b16 %v6311
        %v6390 = vunpack.c.l.b16 %v6312
        %v6391 = vunpack.c.h.b16 %v6312
        %v6392 = vunpack.c.l.b16 %v6313
        %v6393 = vunpack.c.h.b16 %v6313
        %v6394 = vunpack.c.l.b16 %v6314
        %v6395 = vunpack.c.h.b16 %v6314
        %v6396 = vunpack.c.l.b16 %v6315
        %v6397 = vunpack.c.h.b16 %v6315
        %v6398 = vunpack.c.l.b16 %v6316
        %v6399 = vunpack.c.h.b16 %v6316
        %v6400 = vunpack.c.l.b16 %v6317
        %v6401 = vunpack.c.h.b16 %v6317
        %v6402 = vunpack.c.l.b16 %v6318
        %v6403 = vunpack.c.h.b16 %v6318
        %v6404 = vunpack.c.l.b16 %v6319
        %v6405 = vunpack.c.h.b16 %v6319
        %v6406 = vunpack.c.l.b16 %v6320
        %v6407 = vunpack.c.h.b16 %v6320
        %v6408 = vunpack.c.l.b16 %v6321
        %v6409 = vunpack.c.h.b16 %v6321
        %v6410 = vunpack.c.l.b16 %v6322
        %v6411 = vunpack.c.h.b16 %v6322
        %v6412 = vunpack.c.l.b16 %v6323
        %v6413 = vunpack.c.h.b16 %v6323
        %v6414 = vunpack.c.l.b16 %v6324
        %v6415 = vunpack.c.h.b16 %v6324
        %v6416 = vunpack.c.l.b16 %v6325
        %v6417 = vunpack.c.h.b16 %v6325
        %v6418 = vunpack.c.l.b16 %v6326
        %v6419 = vunpack.c.h.b16 %v6326
        %v6420 = vunpack.c.l.b16 %v6327
        %v6421 = vunpack.c.h.b16 %v6327
        %v6422 = vunpack.c.l.b16 %v6328
        %v6423 = vunpack.c.h.b16 %v6328
        %v6424 = vunpack.c.l.b16 %v6329
        %v6425 = vunpack.c.h.b16 %v6329
        %v6426 = vpack.c.b16 %v6364, %v6362
        %v6427 = vpack.c.b16 %v6365, %v6363
        %v6428 = vpack.c.b16 %v6368, %v6366
        %v6429 = vpack.c.b16 %v6369, %v6367
        %v6430 = vpack.c.b16 %v6372, %v6370
        %v6431 = vpack.c.b16 %v6373, %v6371
        %v6432 = vpack.c.b16 %v6376, %v6374
        %v6433 = vpack.c.b16 %v6377, %v6375
        %v6434 = vpack.c.b16 %v6380, %v6378
        %v6435 = vpack.c.b16 %v6381, %v6379
        %v6436 = vpack.c.b16 %v6384, %v6382
        %v6437 = vpack.c.b16 %v6385, %v6383
        %v6438 = vpack.c.b16 %v6388, %v6386
        %v6439 = vpack.c.b16 %v6389, %v6387
        %v6440 = vpack.c.b16 %v6392, %v6390
        %v6441 = vpack.c.b16 %v6393, %v6391
        %v6442 = vpack.c.b16 %v6396, %v6394
        %v6443 = vpack.c.b16 %v6397, %v6395
        %v6444 = vpack.c.b16 %v6400, %v6398
        %v6445 = vpack.c.b16 %v6401, %v6399
        %v6446 = vpack.c.b16 %v6404, %v6402
        %v6447 = vpack.c.b16 %v6405, %v6403
        %v6448 = vpack.c.b16 %v6408, %v6406
        %v6449 = vpack.c.b16 %v6409, %v6407
        %v6450 = vpack.c.b16 %v6412, %v6410
        %v6451 = vpack.c.b16 %v6413, %v6411
        %v6452 = vpack.c.b16 %v6416, %v6414
        %v6453 = vpack.c.b16 %v6417, %v6415
        %v6454 = vpack.c.b16 %v6420, %v6418
        %v6455 = vpack.c.b16 %v6421, %v6419
        %v6456 = vpack.c.b16 %v6424, %v6422
        %v6457 = vpack.c.b16 %v6425, %v6423
        %6490 = vmatprep.subr.bf16.mxu0 %v6441
        %6491 = vmatpush1.bf16.msra.mxu0 %v6440
        %6492 = vmatprep.subr.bf16.mxu0 %v6439
        %6493 = vmatpush1.bf16.msra.mxu0 %v6438
        %6494 = vmatprep.subr.bf16.mxu0 %v6437
        %6495 = vmatpush1.bf16.msra.mxu0 %v6436
        %6496 = vmatprep.subr.bf16.mxu0 %v6435
        %6497 = vmatpush1.bf16.msra.mxu0 %v6434
        %6498 = vmatprep.subr.bf16.mxu0 %v6433
        %6499 = vmatpush1.bf16.msra.mxu0 %v6432
        %6500 = vmatprep.subr.bf16.mxu0 %v6431
        %6501 = vmatpush1.bf16.msra.mxu0 %v6430
        %6502 = vmatprep.subr.bf16.mxu0 %v6429
        %6503 = vmatpush1.bf16.msra.mxu0 %v6428
        %6504 = vmatprep.subr.bf16.mxu0 %v6427
        %6505 = vmatpush1.bf16.msra.mxu0 %v6426
        %6506 = vmatprep.subr.bf16.mxu0 %v6457
        %6507 = vmatpush2.bf16.msra.mxu0 %v6456
        %6508 = vmatprep.subr.bf16.mxu0 %v6455
        %6509 = vmatpush2.bf16.msra.mxu0 %v6454
        %6510 = vmatprep.subr.bf16.mxu0 %v6453
        %6511 = vmatpush2.bf16.msra.mxu0 %v6452
        %6512 = vmatprep.subr.bf16.mxu0 %v6451
        %6513 = vmatpush2.bf16.msra.mxu0 %v6450
        %6514 = vmatprep.subr.bf16.mxu0 %v6449
        %6515 = vmatpush2.bf16.msra.mxu0 %v6448
        %6516 = vmatprep.subr.bf16.mxu0 %v6447
        %6517 = vmatpush2.bf16.msra.mxu0 %v6446
        %6518 = vmatprep.subr.bf16.mxu0 %v6445
        %6519 = vmatpush2.bf16.msra.mxu0 %v6444
        %6520 = vmatprep.subr.bf16.mxu0 %v6443
        %6521 = vmatpush2.bf16.msra.mxu0 %v6442
        %6522 = vmatprep.mubr.bf16.mxu0 %v6276
        %6523 = vmatmul.mubr.bf16.gmra.mxu0 %v6275
        %v6524 = vpop.f32.mrf.mxu0
        %v6525 = vadd.f32 0.0, %v6524
        %v6526 = vpop.f32.mrf.mxu0
        %v6527 = vadd.f32 0.0, %v6526
        %v6528 = vpop.f32.mrf.mxu0
        %v6529 = vadd.f32 0.0, %v6528
        %v6530 = vpop.f32.mrf.mxu0
        %v6531 = vadd.f32 0.0, %v6530
        %6532 = vmatprep.mubr.bf16.mxu0 %v6278
        %6533 = vmatmul.mubr.bf16.gmra.mxu0 %v6277
        %v6534 = vpop.f32.mrf.mxu0
        %v6535 = vadd.f32 0.0, %v6534
        %v6536 = vpop.f32.mrf.mxu0
        %v6537 = vadd.f32 0.0, %v6536
        %v6538 = vpop.f32.mrf.mxu0
        %v6539 = vadd.f32 0.0, %v6538
        %v6540 = vpop.f32.mrf.mxu0
        %v6541 = vadd.f32 0.0, %v6540
        %6542 = vmatprep.mubr.bf16.mxu0 %v6280
        %6543 = vmatmul.mubr.bf16.gmra.mxu0 %v6279
        %v6544 = vpop.f32.mrf.mxu0
        %v6545 = vadd.f32 0.0, %v6544
        %v6546 = vpop.f32.mrf.mxu0
        %v6547 = vadd.f32 0.0, %v6546
        %v6548 = vpop.f32.mrf.mxu0
        %v6549 = vadd.f32 0.0, %v6548
        %v6550 = vpop.f32.mrf.mxu0
        %v6551 = vadd.f32 0.0, %v6550
        %6552 = vmatprep.mubr.bf16.mxu0 %v6282
        %6553 = vmatmul.mubr.bf16.gmra.mxu0 %v6281
        %v6554 = vpop.f32.mrf.mxu0
        %v6555 = vadd.f32 0.0, %v6554
        %v6556 = vpop.f32.mrf.mxu0
        %v6557 = vadd.f32 0.0, %v6556
        %v6558 = vpop.f32.mrf.mxu0
        %v6559 = vadd.f32 0.0, %v6558
        %v6560 = vpop.f32.mrf.mxu0
        %v6561 = vadd.f32 0.0, %v6560
        %6562 = vmatprep.mubr.bf16.mxu0 %v6284
        %6563 = vmatmul.mubr.bf16.gmra.mxu0 %v6283
        %v6564 = vpop.f32.mrf.mxu0
        %v6565 = vadd.f32 0.0, %v6564
        %v6566 = vpop.f32.mrf.mxu0
        %v6567 = vadd.f32 0.0, %v6566
        %v6568 = vpop.f32.mrf.mxu0
        %v6569 = vadd.f32 0.0, %v6568
        %v6570 = vpop.f32.mrf.mxu0
        %v6571 = vadd.f32 0.0, %v6570
        %6572 = vmatprep.mubr.bf16.mxu0 %v6286
        %6573 = vmatmul.mubr.bf16.gmra.mxu0 %v6285
        %v6574 = vpop.f32.mrf.mxu0
        %v6575 = vadd.f32 0.0, %v6574
        %v6576 = vpop.f32.mrf.mxu0
        %v6577 = vadd.f32 0.0, %v6576
        %v6578 = vpop.f32.mrf.mxu0
        %v6579 = vadd.f32 0.0, %v6578
        %v6580 = vpop.f32.mrf.mxu0
        %v6581 = vadd.f32 0.0, %v6580
        %6582 = vmatprep.mubr.bf16.mxu0 %v6288
        %6583 = vmatmul.mubr.bf16.gmra.mxu0 %v6287
        %v6584 = vpop.f32.mrf.mxu0
        %v6585 = vadd.f32 0.0, %v6584
        %v6586 = vpop.f32.mrf.mxu0
        %v6587 = vadd.f32 0.0, %v6586
        %v6588 = vpop.f32.mrf.mxu0
        %v6589 = vadd.f32 0.0, %v6588
        %v6590 = vpop.f32.mrf.mxu0
        %v6591 = vadd.f32 0.0, %v6590
        %6592 = vmatprep.mubr.bf16.mxu0 %v6290
        %6593 = vmatmul.mubr.bf16.gmra.mxu0 %v6289
        %v6594 = vpop.f32.mrf.mxu0
        %v6595 = vadd.f32 0.0, %v6594
        %v6596 = vpop.f32.mrf.mxu0
        %v6597 = vadd.f32 0.0, %v6596
        %v6598 = vpop.f32.mrf.mxu0
        %v6599 = vadd.f32 0.0, %v6598
        %v6600 = vpop.f32.mrf.mxu0
        %v6601 = vadd.f32 0.0, %v6600
        %6602 = vmatprep.mubr.bf16.mxu0 %v6292
        %6603 = vmatmul.mubr.bf16.gmra.mxu0 %v6291
        %v6604 = vpop.f32.mrf.mxu0
        %v6605 = vadd.f32 0.0, %v6604
        %v6606 = vpop.f32.mrf.mxu0
        %v6607 = vadd.f32 0.0, %v6606
        %v6608 = vpop.f32.mrf.mxu0
        %v6609 = vadd.f32 0.0, %v6608
        %v6610 = vpop.f32.mrf.mxu0
        %v6611 = vadd.f32 0.0, %v6610
        %6612 = vmatprep.mubr.bf16.mxu0 %v6294
        %6613 = vmatmul.mubr.bf16.gmra.mxu0 %v6293
        %v6614 = vpop.f32.mrf.mxu0
        %v6615 = vadd.f32 0.0, %v6614
        %v6616 = vpop.f32.mrf.mxu0
        %v6617 = vadd.f32 0.0, %v6616
        %v6618 = vpop.f32.mrf.mxu0
        %v6619 = vadd.f32 0.0, %v6618
        %v6620 = vpop.f32.mrf.mxu0
        %v6621 = vadd.f32 0.0, %v6620
        %6622 = vmatprep.mubr.bf16.mxu0 %v6296
        %6623 = vmatmul.mubr.bf16.gmra.mxu0 %v6295
        %v6624 = vpop.f32.mrf.mxu0
        %v6625 = vadd.f32 0.0, %v6624
        %v6626 = vpop.f32.mrf.mxu0
        %v6627 = vadd.f32 0.0, %v6626
        %v6628 = vpop.f32.mrf.mxu0
        %v6629 = vadd.f32 0.0, %v6628
        %v6630 = vpop.f32.mrf.mxu0
        %v6631 = vadd.f32 0.0, %v6630
        %6632 = vdwg.mxu0
        %v6633 = vadd.f32 %v3759, %v6525
        %v6634 = vadd.f32 %v3761, %v6527
        %v6635 = vadd.f32 %v3763, %v6529
        %v6636 = vadd.f32 %v3765, %v6531
        %v6637 = vadd.f32 %v3769, %v6535
        %v6638 = vadd.f32 %v3771, %v6537
        %v6639 = vadd.f32 %v3773, %v6539
        %v6640 = vadd.f32 %v3775, %v6541
        %v6641 = vadd.f32 %v3779, %v6545
        %v6642 = vadd.f32 %v3781, %v6547
        %v6643 = vadd.f32 %v3783, %v6549
        %v6644 = vadd.f32 %v3785, %v6551
        %v6645 = vadd.f32 %v3789, %v6555
        %v6646 = vadd.f32 %v3791, %v6557
        %v6647 = vadd.f32 %v3793, %v6559
        %v6648 = vadd.f32 %v3795, %v6561
        %v6649 = vadd.f32 %v3799, %v6565
        %v6650 = vadd.f32 %v3801, %v6567
        %v6651 = vadd.f32 %v3803, %v6569
        %v6652 = vadd.f32 %v3805, %v6571
        %v6653 = vadd.f32 %v3809, %v6575
        %v6654 = vadd.f32 %v3811, %v6577
        %v6655 = vadd.f32 %v3813, %v6579
        %v6656 = vadd.f32 %v3815, %v6581
        %v6657 = vadd.f32 %v3819, %v6585
        %v6658 = vadd.f32 %v3821, %v6587
        %v6659 = vadd.f32 %v3823, %v6589
        %v6660 = vadd.f32 %v3825, %v6591
        %v6661 = vadd.f32 %v3829, %v6595
        %v6662 = vadd.f32 %v3831, %v6597
        %v6663 = vadd.f32 %v3833, %v6599
        %v6664 = vadd.f32 %v3835, %v6601
        %v6665 = vadd.f32 %v3839, %v6605
        %v6666 = vadd.f32 %v3841, %v6607
        %v6667 = vadd.f32 %v3843, %v6609
        %v6668 = vadd.f32 %v3845, %v6611
        %v6669 = vadd.f32 %v3849, %v6615
        %v6670 = vadd.f32 %v3851, %v6617
        %v6671 = vadd.f32 %v3853, %v6619
        %v6672 = vadd.f32 %v3855, %v6621
        %v6673 = vadd.f32 %v3859, %v6625
        %v6674 = vadd.f32 %v3861, %v6627
        %v6675 = vadd.f32 %v3863, %v6629
        %v6676 = vadd.f32 %v3865, %v6631
        %v6677 = vld [vmem:[%s344] sm:$0xff]
        %v6678 = vld [vmem:[%s344 + $0x8] sm:$0xff]
        %v6679 = vld [vmem:[%s344 + $0x10] sm:$0xff]
        %v6680 = vld [vmem:[%s344 + $0x18] sm:$0xff]
        %v6681 = vld [vmem:[%s344 + $0x20] sm:$0xff]
        %v6682 = vld [vmem:[%s344 + $0x28] sm:$0xff]
        %v6683 = vld [vmem:[%s344 + $0x30] sm:$0xff]
        %v6684 = vld [vmem:[%s344 + $0x38] sm:$0xff]
        %v6685 = vld [vmem:[%s344 + $0x40] sm:$0xff]
        %v6686 = vld [vmem:[%s344 + $0x48] sm:$0xff]
        %v6687 = vld [vmem:[%s344 + $0x50] sm:$0xff]
        %v6688 = vld [vmem:[%s344 + $0x58] sm:$0xff]
        %v6689 = vld [vmem:[%s344 + $0x60] sm:$0xff]
        %v6690 = vld [vmem:[%s344 + $0x68] sm:$0xff]
        %v6691 = vld [vmem:[%s344 + $0x70] sm:$0xff]
        %v6692 = vld [vmem:[%s344 + $0x78] sm:$0xff]
        %v6693 = vld [vmem:[%s344 + $0x80] sm:$0xff]
        %v6694 = vld [vmem:[%s344 + $0x88] sm:$0xff]
        %v6695 = vld [vmem:[%s344 + $0x90] sm:$0xff]
        %v6696 = vld [vmem:[%s344 + $0x98] sm:$0xff]
        %v6697 = vld [vmem:[%s344 + $0xa0] sm:$0xff]
        %v6698 = vld [vmem:[%s344 + $0xa8] sm:$0xff]
        %v6699 = vpack.c.bf16 %v6678, %v6677
        %v6700 = vpack.c.bf16 %v6680, %v6679
        %v6701 = vpack.c.bf16 %v6682, %v6681
        %v6702 = vpack.c.bf16 %v6684, %v6683
        %v6703 = vpack.c.bf16 %v6686, %v6685
        %v6704 = vpack.c.bf16 %v6688, %v6687
        %v6705 = vpack.c.bf16 %v6690, %v6689
        %v6706 = vpack.c.bf16 %v6692, %v6691
        %v6707 = vpack.c.bf16 %v6694, %v6693
        %v6708 = vpack.c.bf16 %v6696, %v6695
        %v6709 = vpack.c.bf16 %v6698, %v6697
        %s6710 = scalar_lea.vmem %s2, 144
        %v6711 = vld [vmem:[%s6710] sm:$0xff]
        %v6712 = vld [vmem:[%s344 + $0x3] sm:$0xff]
        %v6713 = vld [vmem:[%s344 + $0xb] sm:$0xff]
        %v6714 = vld [vmem:[%s344 + $0x13] sm:$0xff]
        %v6715 = vld [vmem:[%s344 + $0x1b] sm:$0xff]
        %v6716 = vld [vmem:[%s344 + $0x23] sm:$0xff]
        %v6717 = vld [vmem:[%s344 + $0x2b] sm:$0xff]
        %v6718 = vld [vmem:[%s344 + $0x33] sm:$0xff]
        %v6719 = vld [vmem:[%s344 + $0x3b] sm:$0xff]
        %v6720 = vld [vmem:[%s344 + $0x43] sm:$0xff]
        %v6721 = vld [vmem:[%s344 + $0x4b] sm:$0xff]
        %v6722 = vld [vmem:[%s344 + $0x53] sm:$0xff]
        %v6723 = vld [vmem:[%s344 + $0x5b] sm:$0xff]
        %v6724 = vld [vmem:[%s344 + $0x63] sm:$0xff]
        %v6725 = vld [vmem:[%s344 + $0x6b] sm:$0xff]
        %v6726 = vld [vmem:[%s344 + $0x73] sm:$0xff]
        %v6727 = vld [vmem:[%s344 + $0x7b] sm:$0xff]
        %v6728 = vld [vmem:[%s344 + $0x83] sm:$0xff]
        %v6729 = vld [vmem:[%s344 + $0x8b] sm:$0xff]
        %v6730 = vld [vmem:[%s344 + $0x93] sm:$0xff]
        %v6731 = vld [vmem:[%s344 + $0x9b] sm:$0xff]
        %v6732 = vld [vmem:[%s344 + $0xa3] sm:$0xff]
        %v6733 = vld [vmem:[%s344 + $0xab] sm:$0xff]
        %v6734 = vpack.c.bf16 %v6713, %v6712
        %v6735 = vpack.c.bf16 %v6715, %v6714
        %v6736 = vpack.c.bf16 %v6717, %v6716
        %v6737 = vpack.c.bf16 %v6719, %v6718
        %v6738 = vpack.c.bf16 %v6721, %v6720
        %v6739 = vpack.c.bf16 %v6723, %v6722
        %v6740 = vpack.c.bf16 %v6725, %v6724
        %v6741 = vpack.c.bf16 %v6727, %v6726
        %v6742 = vpack.c.bf16 %v6729, %v6728
        %v6743 = vpack.c.bf16 %v6731, %v6730
        %v6744 = vpack.c.bf16 %v6733, %v6732
        %s6745 = scalar_lea.vmem %s2, 152
        %v6746 = vld [vmem:[%s6745] sm:$0xff]
        %v6748 = vunpack.c.l.b16 %v6746
        %v6749 = vunpack.c.h.b16 %v6746
        %v6750 = vpack.c.b16 %v6748, %v6748
        %v6751 = vpack.c.b16 %v6749, %v6749
        %v6753 = vsel %vm391, %v6734, 0
        %v6756 = vsel %vm391, %v6735, 0
        %v6759 = vsel %vm391, %v6736, 0
        %v6762 = vsel %vm391, %v6737, 0
        %v6765 = vsel %vm391, %v6738, 0
        %v6768 = vsel %vm391, %v6739, 0
        %v6771 = vsel %vm391, %v6740, 0
        %v6774 = vsel %vm391, %v6741, 0
        %v6777 = vsel %vm391, %v6742, 0
        %v6780 = vsel %vm391, %v6743, 0
        %v6783 = vsel %vm391, %v6744, 0
        %v6786 = vsel %vm425, %v6750, 0
        %v6789 = vsel %vm425, %v6751, 0
        %6791 = vmatprep.subr.bf16.mxu0 0
        %6792 = vmatpush1.bf16.msra.mxu0 0
        %6793 = vmatprep.subr.bf16.mxu0 0
        %6794 = vmatpush1.bf16.msra.mxu0 0
        %6795 = vmatprep.subr.bf16.mxu0 0
        %6796 = vmatpush1.bf16.msra.mxu0 0
        %6797 = vmatprep.subr.bf16.mxu0 0
        %6798 = vmatpush1.bf16.msra.mxu0 0
        %6799 = vmatprep.subr.bf16.mxu0 0
        %6800 = vmatpush1.bf16.msra.mxu0 0
        %6801 = vmatprep.subr.bf16.mxu0 0
        %6802 = vmatpush1.bf16.msra.mxu0 0
        %6803 = vmatprep.subr.bf16.mxu0 0
        %6804 = vmatpush1.bf16.msra.mxu0 0
        %6805 = vmatprep.subr.bf16.mxu0 %v6789
        %6806 = vmatpush1.bf16.msra.mxu0 %v6786
        %6807 = vmatprep.subr.bf16.mxu0 0
        %6808 = vmatpush2.bf16.msra.mxu0 0
        %6809 = vmatprep.subr.bf16.mxu0 0
        %6810 = vmatpush2.bf16.msra.mxu0 0
        %6811 = vmatprep.subr.bf16.mxu0 0
        %6812 = vmatpush2.bf16.msra.mxu0 0
        %6813 = vmatprep.subr.bf16.mxu0 0
        %6814 = vmatpush2.bf16.msra.mxu0 0
        %6815 = vmatprep.subr.bf16.mxu0 0
        %6816 = vmatpush2.bf16.msra.mxu0 0
        %6817 = vmatprep.subr.bf16.mxu0 0
        %6818 = vmatpush2.bf16.msra.mxu0 0
        %6819 = vmatprep.subr.bf16.mxu0 0
        %6820 = vmatpush2.bf16.msra.mxu0 0
        %6821 = vmatprep.subr.bf16.mxu0 0
        %6822 = vmatpush2.bf16.msra.mxu0 0
        %6823 = vmatprep.mubr.bf16.mxu0 0
        %6824 = vmatmul.mubr.bf16.gmra.mxu0 %v6753
        %v6825 = vpop.f32.mrf.mxu0
        %v6826 = vadd.f32 0.0, %v6825
        %v6827 = vpop.f32.mrf.mxu0
        %v6828 = vadd.f32 0.0, %v6827
        %v6829 = vpop.f32.mrf.mxu0
        %v6830 = vadd.f32 0.0, %v6829
        %v6831 = vpop.f32.mrf.mxu0
        %v6832 = vadd.f32 0.0, %v6831
        %6833 = vmatprep.mubr.bf16.mxu0 0
        %6834 = vmatmul.mubr.bf16.gmra.mxu0 %v6756
        %v6835 = vpop.f32.mrf.mxu0
        %v6836 = vadd.f32 0.0, %v6835
        %v6837 = vpop.f32.mrf.mxu0
        %v6838 = vadd.f32 0.0, %v6837
        %v6839 = vpop.f32.mrf.mxu0
        %v6840 = vadd.f32 0.0, %v6839
        %v6841 = vpop.f32.mrf.mxu0
        %v6842 = vadd.f32 0.0, %v6841
        %6843 = vmatprep.mubr.bf16.mxu0 0
        %6844 = vmatmul.mubr.bf16.gmra.mxu0 %v6759
        %v6845 = vpop.f32.mrf.mxu0
        %v6846 = vadd.f32 0.0, %v6845
        %v6847 = vpop.f32.mrf.mxu0
        %v6848 = vadd.f32 0.0, %v6847
        %v6849 = vpop.f32.mrf.mxu0
        %v6850 = vadd.f32 0.0, %v6849
        %v6851 = vpop.f32.mrf.mxu0
        %v6852 = vadd.f32 0.0, %v6851
        %6853 = vmatprep.mubr.bf16.mxu0 0
        %6854 = vmatmul.mubr.bf16.gmra.mxu0 %v6762
        %v6855 = vpop.f32.mrf.mxu0
        %v6856 = vadd.f32 0.0, %v6855
        %v6857 = vpop.f32.mrf.mxu0
        %v6858 = vadd.f32 0.0, %v6857
        %v6859 = vpop.f32.mrf.mxu0
        %v6860 = vadd.f32 0.0, %v6859
        %v6861 = vpop.f32.mrf.mxu0
        %v6862 = vadd.f32 0.0, %v6861
        %6863 = vmatprep.mubr.bf16.mxu0 0
        %6864 = vmatmul.mubr.bf16.gmra.mxu0 %v6765
        %v6865 = vpop.f32.mrf.mxu0
        %v6866 = vadd.f32 0.0, %v6865
        %v6867 = vpop.f32.mrf.mxu0
        %v6868 = vadd.f32 0.0, %v6867
        %v6869 = vpop.f32.mrf.mxu0
        %v6870 = vadd.f32 0.0, %v6869
        %v6871 = vpop.f32.mrf.mxu0
        %v6872 = vadd.f32 0.0, %v6871
        %6873 = vmatprep.mubr.bf16.mxu0 0
        %6874 = vmatmul.mubr.bf16.gmra.mxu0 %v6768
        %v6875 = vpop.f32.mrf.mxu0
        %v6876 = vadd.f32 0.0, %v6875
        %v6877 = vpop.f32.mrf.mxu0
        %v6878 = vadd.f32 0.0, %v6877
        %v6879 = vpop.f32.mrf.mxu0
        %v6880 = vadd.f32 0.0, %v6879
        %v6881 = vpop.f32.mrf.mxu0
        %v6882 = vadd.f32 0.0, %v6881
        %6883 = vmatprep.mubr.bf16.mxu0 0
        %6884 = vmatmul.mubr.bf16.gmra.mxu0 %v6771
        %v6885 = vpop.f32.mrf.mxu0
        %v6886 = vadd.f32 0.0, %v6885
        %v6887 = vpop.f32.mrf.mxu0
        %v6888 = vadd.f32 0.0, %v6887
        %v6889 = vpop.f32.mrf.mxu0
        %v6890 = vadd.f32 0.0, %v6889
        %v6891 = vpop.f32.mrf.mxu0
        %v6892 = vadd.f32 0.0, %v6891
        %6893 = vmatprep.mubr.bf16.mxu0 0
        %6894 = vmatmul.mubr.bf16.gmra.mxu0 %v6774
        %v6895 = vpop.f32.mrf.mxu0
        %v6896 = vadd.f32 0.0, %v6895
        %v6897 = vpop.f32.mrf.mxu0
        %v6898 = vadd.f32 0.0, %v6897
        %v6899 = vpop.f32.mrf.mxu0
        %v6900 = vadd.f32 0.0, %v6899
        %v6901 = vpop.f32.mrf.mxu0
        %v6902 = vadd.f32 0.0, %v6901
        %6903 = vmatprep.mubr.bf16.mxu0 0
        %6904 = vmatmul.mubr.bf16.gmra.mxu0 %v6777
        %v6905 = vpop.f32.mrf.mxu0
        %v6906 = vadd.f32 0.0, %v6905
        %v6907 = vpop.f32.mrf.mxu0
        %v6908 = vadd.f32 0.0, %v6907
        %v6909 = vpop.f32.mrf.mxu0
        %v6910 = vadd.f32 0.0, %v6909
        %v6911 = vpop.f32.mrf.mxu0
        %v6912 = vadd.f32 0.0, %v6911
        %6913 = vmatprep.mubr.bf16.mxu0 0
        %6914 = vmatmul.mubr.bf16.gmra.mxu0 %v6780
        %v6915 = vpop.f32.mrf.mxu0
        %v6916 = vadd.f32 0.0, %v6915
        %v6917 = vpop.f32.mrf.mxu0
        %v6918 = vadd.f32 0.0, %v6917
        %v6919 = vpop.f32.mrf.mxu0
        %v6920 = vadd.f32 0.0, %v6919
        %v6921 = vpop.f32.mrf.mxu0
        %v6922 = vadd.f32 0.0, %v6921
        %6923 = vmatprep.mubr.bf16.mxu0 0
        %6924 = vmatmul.mubr.bf16.gmra.mxu0 %v6783
        %v6925 = vpop.f32.mrf.mxu0
        %v6926 = vadd.f32 0.0, %v6925
        %v6927 = vpop.f32.mrf.mxu0
        %v6928 = vadd.f32 0.0, %v6927
        %v6929 = vpop.f32.mrf.mxu0
        %v6930 = vadd.f32 0.0, %v6929
        %v6931 = vpop.f32.mrf.mxu0
        %v6932 = vadd.f32 0.0, %v6931
        %6933 = vdwg.mxu0
        %v6935 = vunpack.c.l.b16 %v6711
        %v6936 = vunpack.c.h.b16 %v6711
        %v6937 = vpack.c.b16 %v6935, %v6935
        %v6938 = vpack.c.b16 %v6936, %v6936
        %v6940 = vsel %vm391, %v6699, 0
        %v6943 = vsel %vm391, %v6700, 0
        %v6946 = vsel %vm391, %v6701, 0
        %v6949 = vsel %vm391, %v6702, 0
        %v6952 = vsel %vm391, %v6703, 0
        %v6955 = vsel %vm391, %v6704, 0
        %v6958 = vsel %vm391, %v6705, 0
        %v6961 = vsel %vm391, %v6706, 0
        %v6964 = vsel %vm391, %v6707, 0
        %v6967 = vsel %vm391, %v6708, 0
        %v6970 = vsel %vm391, %v6709, 0
        %v6973 = vsel %vm425, %v6937, 0
        %v6976 = vsel %vm425, %v6938, 0
        %6978 = vmatprep.subr.bf16.mxu0 0
        %6979 = vmatpush1.bf16.msra.mxu0 0
        %6980 = vmatprep.subr.bf16.mxu0 0
        %6981 = vmatpush1.bf16.msra.mxu0 0
        %6982 = vmatprep.subr.bf16.mxu0 0
        %6983 = vmatpush1.bf16.msra.mxu0 0
        %6984 = vmatprep.subr.bf16.mxu0 0
        %6985 = vmatpush1.bf16.msra.mxu0 0
        %6986 = vmatprep.subr.bf16.mxu0 0
        %6987 = vmatpush1.bf16.msra.mxu0 0
        %6988 = vmatprep.subr.bf16.mxu0 0
        %6989 = vmatpush1.bf16.msra.mxu0 0
        %6990 = vmatprep.subr.bf16.mxu0 0
        %6991 = vmatpush1.bf16.msra.mxu0 0
        %6992 = vmatprep.subr.bf16.mxu0 %v6976
        %6993 = vmatpush1.bf16.msra.mxu0 %v6973
        %6994 = vmatprep.subr.bf16.mxu0 0
        %6995 = vmatpush2.bf16.msra.mxu0 0
        %6996 = vmatprep.subr.bf16.mxu0 0
        %6997 = vmatpush2.bf16.msra.mxu0 0
        %6998 = vmatprep.subr.bf16.mxu0 0
        %6999 = vmatpush2.bf16.msra.mxu0 0
        %7000 = vmatprep.subr.bf16.mxu0 0
        %7001 = vmatpush2.bf16.msra.mxu0 0
        %7002 = vmatprep.subr.bf16.mxu0 0
        %7003 = vmatpush2.bf16.msra.mxu0 0
        %7004 = vmatprep.subr.bf16.mxu0 0
        %7005 = vmatpush2.bf16.msra.mxu0 0
        %7006 = vmatprep.subr.bf16.mxu0 0
        %7007 = vmatpush2.bf16.msra.mxu0 0
        %7008 = vmatprep.subr.bf16.mxu0 0
        %7009 = vmatpush2.bf16.msra.mxu0 0
        %7010 = vmatprep.mubr.bf16.mxu0 0
        %7011 = vmatmul.mubr.bf16.gmra.mxu0 %v6940
        %v7012 = vpop.f32.mrf.mxu0
        %v7013 = vadd.f32 %v6826, %v7012
        %v7014 = vpop.f32.mrf.mxu0
        %v7015 = vadd.f32 %v6828, %v7014
        %v7016 = vpop.f32.mrf.mxu0
        %v7017 = vadd.f32 %v6830, %v7016
        %v7018 = vpop.f32.mrf.mxu0
        %v7019 = vadd.f32 %v6832, %v7018
        %7020 = vmatprep.mubr.bf16.mxu0 0
        %7021 = vmatmul.mubr.bf16.gmra.mxu0 %v6943
        %v7022 = vpop.f32.mrf.mxu0
        %v7023 = vadd.f32 %v6836, %v7022
        %v7024 = vpop.f32.mrf.mxu0
        %v7025 = vadd.f32 %v6838, %v7024
        %v7026 = vpop.f32.mrf.mxu0
        %v7027 = vadd.f32 %v6840, %v7026
        %v7028 = vpop.f32.mrf.mxu0
        %v7029 = vadd.f32 %v6842, %v7028
        %7030 = vmatprep.mubr.bf16.mxu0 0
        %7031 = vmatmul.mubr.bf16.gmra.mxu0 %v6946
        %v7032 = vpop.f32.mrf.mxu0
        %v7033 = vadd.f32 %v6846, %v7032
        %v7034 = vpop.f32.mrf.mxu0
        %v7035 = vadd.f32 %v6848, %v7034
        %v7036 = vpop.f32.mrf.mxu0
        %v7037 = vadd.f32 %v6850, %v7036
        %v7038 = vpop.f32.mrf.mxu0
        %v7039 = vadd.f32 %v6852, %v7038
        %7040 = vmatprep.mubr.bf16.mxu0 0
        %7041 = vmatmul.mubr.bf16.gmra.mxu0 %v6949
        %v7042 = vpop.f32.mrf.mxu0
        %v7043 = vadd.f32 %v6856, %v7042
        %v7044 = vpop.f32.mrf.mxu0
        %v7045 = vadd.f32 %v6858, %v7044
        %v7046 = vpop.f32.mrf.mxu0
        %v7047 = vadd.f32 %v6860, %v7046
        %v7048 = vpop.f32.mrf.mxu0
        %v7049 = vadd.f32 %v6862, %v7048
        %7050 = vmatprep.mubr.bf16.mxu0 0
        %7051 = vmatmul.mubr.bf16.gmra.mxu0 %v6952
        %v7052 = vpop.f32.mrf.mxu0
        %v7053 = vadd.f32 %v6866, %v7052
        %v7054 = vpop.f32.mrf.mxu0
        %v7055 = vadd.f32 %v6868, %v7054
        %v7056 = vpop.f32.mrf.mxu0
        %v7057 = vadd.f32 %v6870, %v7056
        %v7058 = vpop.f32.mrf.mxu0
        %v7059 = vadd.f32 %v6872, %v7058
        %7060 = vmatprep.mubr.bf16.mxu0 0
        %7061 = vmatmul.mubr.bf16.gmra.mxu0 %v6955
        %v7062 = vpop.f32.mrf.mxu0
        %v7063 = vadd.f32 %v6876, %v7062
        %v7064 = vpop.f32.mrf.mxu0
        %v7065 = vadd.f32 %v6878, %v7064
        %v7066 = vpop.f32.mrf.mxu0
        %v7067 = vadd.f32 %v6880, %v7066
        %v7068 = vpop.f32.mrf.mxu0
        %v7069 = vadd.f32 %v6882, %v7068
        %7070 = vmatprep.mubr.bf16.mxu0 0
        %7071 = vmatmul.mubr.bf16.gmra.mxu0 %v6958
        %v7072 = vpop.f32.mrf.mxu0
        %v7073 = vadd.f32 %v6886, %v7072
        %v7074 = vpop.f32.mrf.mxu0
        %v7075 = vadd.f32 %v6888, %v7074
        %v7076 = vpop.f32.mrf.mxu0
        %v7077 = vadd.f32 %v6890, %v7076
        %v7078 = vpop.f32.mrf.mxu0
        %v7079 = vadd.f32 %v6892, %v7078
        %7080 = vmatprep.mubr.bf16.mxu0 0
        %7081 = vmatmul.mubr.bf16.gmra.mxu0 %v6961
        %v7082 = vpop.f32.mrf.mxu0
        %v7083 = vadd.f32 %v6896, %v7082
        %v7084 = vpop.f32.mrf.mxu0
        %v7085 = vadd.f32 %v6898, %v7084
        %v7086 = vpop.f32.mrf.mxu0
        %v7087 = vadd.f32 %v6900, %v7086
        %v7088 = vpop.f32.mrf.mxu0
        %v7089 = vadd.f32 %v6902, %v7088
        %7090 = vmatprep.mubr.bf16.mxu0 0
        %7091 = vmatmul.mubr.bf16.gmra.mxu0 %v6964
        %v7092 = vpop.f32.mrf.mxu0
        %v7093 = vadd.f32 %v6906, %v7092
        %v7094 = vpop.f32.mrf.mxu0
        %v7095 = vadd.f32 %v6908, %v7094
        %v7096 = vpop.f32.mrf.mxu0
        %v7097 = vadd.f32 %v6910, %v7096
        %v7098 = vpop.f32.mrf.mxu0
        %v7099 = vadd.f32 %v6912, %v7098
        %7100 = vmatprep.mubr.bf16.mxu0 0
        %7101 = vmatmul.mubr.bf16.gmra.mxu0 %v6967
        %v7102 = vpop.f32.mrf.mxu0
        %v7103 = vadd.f32 %v6916, %v7102
        %v7104 = vpop.f32.mrf.mxu0
        %v7105 = vadd.f32 %v6918, %v7104
        %v7106 = vpop.f32.mrf.mxu0
        %v7107 = vadd.f32 %v6920, %v7106
        %v7108 = vpop.f32.mrf.mxu0
        %v7109 = vadd.f32 %v6922, %v7108
        %7110 = vmatprep.mubr.bf16.mxu0 0
        %7111 = vmatmul.mubr.bf16.gmra.mxu0 %v6970
        %v7112 = vpop.f32.mrf.mxu0
        %v7113 = vadd.f32 %v6926, %v7112
        %v7114 = vpop.f32.mrf.mxu0
        %v7115 = vadd.f32 %v6928, %v7114
        %v7116 = vpop.f32.mrf.mxu0
        %v7117 = vadd.f32 %v6930, %v7116
        %v7118 = vpop.f32.mrf.mxu0
        %v7119 = vadd.f32 %v6932, %v7118
        %7120 = vdwg.mxu0
        %v7121 = vld [vmem:[%s344 + $0x6] sm:$0xff]
        %v7122 = vld [vmem:[%s344 + $0xe] sm:$0xff]
        %v7123 = vld [vmem:[%s344 + $0x16] sm:$0xff]
        %v7124 = vld [vmem:[%s344 + $0x1e] sm:$0xff]
        %v7125 = vld [vmem:[%s344 + $0x26] sm:$0xff]
        %v7126 = vld [vmem:[%s344 + $0x2e] sm:$0xff]
        %v7127 = vld [vmem:[%s344 + $0x36] sm:$0xff]
        %v7128 = vld [vmem:[%s344 + $0x3e] sm:$0xff]
        %v7129 = vld [vmem:[%s344 + $0x46] sm:$0xff]
        %v7130 = vld [vmem:[%s344 + $0x4e] sm:$0xff]
        %v7131 = vld [vmem:[%s344 + $0x56] sm:$0xff]
        %v7132 = vld [vmem:[%s344 + $0x5e] sm:$0xff]
        %v7133 = vld [vmem:[%s344 + $0x66] sm:$0xff]
        %v7134 = vld [vmem:[%s344 + $0x6e] sm:$0xff]
        %v7135 = vld [vmem:[%s344 + $0x76] sm:$0xff]
        %v7136 = vld [vmem:[%s344 + $0x7e] sm:$0xff]
        %v7137 = vld [vmem:[%s344 + $0x86] sm:$0xff]
        %v7138 = vld [vmem:[%s344 + $0x8e] sm:$0xff]
        %v7139 = vld [vmem:[%s344 + $0x96] sm:$0xff]
        %v7140 = vld [vmem:[%s344 + $0x9e] sm:$0xff]
        %v7141 = vld [vmem:[%s344 + $0xa6] sm:$0xff]
        %v7142 = vld [vmem:[%s344 + $0xae] sm:$0xff]
        %v7143 = vpack.c.bf16 %v7122, %v7121
        %v7144 = vpack.c.bf16 %v7124, %v7123
        %v7145 = vpack.c.bf16 %v7126, %v7125
        %v7146 = vpack.c.bf16 %v7128, %v7127
        %v7147 = vpack.c.bf16 %v7130, %v7129
        %v7148 = vpack.c.bf16 %v7132, %v7131
        %v7149 = vpack.c.bf16 %v7134, %v7133
        %v7150 = vpack.c.bf16 %v7136, %v7135
        %v7151 = vpack.c.bf16 %v7138, %v7137
        %v7152 = vpack.c.bf16 %v7140, %v7139
        %v7153 = vpack.c.bf16 %v7142, %v7141
        %s7154 = scalar_lea.vmem %s2, 160
        %v7155 = vld [vmem:[%s7154] sm:$0xff]
        %v7157 = vunpack.c.l.b16 %v7155
        %v7158 = vunpack.c.h.b16 %v7155
        %v7159 = vpack.c.b16 %v7157, %v7157
        %v7160 = vpack.c.b16 %v7158, %v7158
        %v7162 = vsel %vm391, %v7143, 0
        %v7165 = vsel %vm391, %v7144, 0
        %v7168 = vsel %vm391, %v7145, 0
        %v7171 = vsel %vm391, %v7146, 0
        %v7174 = vsel %vm391, %v7147, 0
        %v7177 = vsel %vm391, %v7148, 0
        %v7180 = vsel %vm391, %v7149, 0
        %v7183 = vsel %vm391, %v7150, 0
        %v7186 = vsel %vm391, %v7151, 0
        %v7189 = vsel %vm391, %v7152, 0
        %v7192 = vsel %vm391, %v7153, 0
        %v7195 = vsel %vm425, %v7159, 0
        %v7198 = vsel %vm425, %v7160, 0
        %7200 = vmatprep.subr.bf16.mxu0 0
        %7201 = vmatpush1.bf16.msra.mxu0 0
        %7202 = vmatprep.subr.bf16.mxu0 0
        %7203 = vmatpush1.bf16.msra.mxu0 0
        %7204 = vmatprep.subr.bf16.mxu0 0
        %7205 = vmatpush1.bf16.msra.mxu0 0
        %7206 = vmatprep.subr.bf16.mxu0 0
        %7207 = vmatpush1.bf16.msra.mxu0 0
        %7208 = vmatprep.subr.bf16.mxu0 0
        %7209 = vmatpush1.bf16.msra.mxu0 0
        %7210 = vmatprep.subr.bf16.mxu0 0
        %7211 = vmatpush1.bf16.msra.mxu0 0
        %7212 = vmatprep.subr.bf16.mxu0 0
        %7213 = vmatpush1.bf16.msra.mxu0 0
        %7214 = vmatprep.subr.bf16.mxu0 %v7198
        %7215 = vmatpush1.bf16.msra.mxu0 %v7195
        %7216 = vmatprep.subr.bf16.mxu0 0
        %7217 = vmatpush2.bf16.msra.mxu0 0
        %7218 = vmatprep.subr.bf16.mxu0 0
        %7219 = vmatpush2.bf16.msra.mxu0 0
        %7220 = vmatprep.subr.bf16.mxu0 0
        %7221 = vmatpush2.bf16.msra.mxu0 0
        %7222 = vmatprep.subr.bf16.mxu0 0
        %7223 = vmatpush2.bf16.msra.mxu0 0
        %7224 = vmatprep.subr.bf16.mxu0 0
        %7225 = vmatpush2.bf16.msra.mxu0 0
        %7226 = vmatprep.subr.bf16.mxu0 0
        %7227 = vmatpush2.bf16.msra.mxu0 0
        %7228 = vmatprep.subr.bf16.mxu0 0
        %7229 = vmatpush2.bf16.msra.mxu0 0
        %7230 = vmatprep.subr.bf16.mxu0 0
        %7231 = vmatpush2.bf16.msra.mxu0 0
        %7232 = vmatprep.mubr.bf16.mxu0 0
        %7233 = vmatmul.mubr.bf16.gmra.mxu0 %v7162
        %v7234 = vpop.f32.mrf.mxu0
        %v7235 = vadd.f32 0.0, %v7234
        %v7236 = vpop.f32.mrf.mxu0
        %v7237 = vadd.f32 0.0, %v7236
        %v7238 = vpop.f32.mrf.mxu0
        %v7239 = vadd.f32 0.0, %v7238
        %v7240 = vpop.f32.mrf.mxu0
        %v7241 = vadd.f32 0.0, %v7240
        %7242 = vmatprep.mubr.bf16.mxu0 0
        %7243 = vmatmul.mubr.bf16.gmra.mxu0 %v7165
        %v7244 = vpop.f32.mrf.mxu0
        %v7245 = vadd.f32 0.0, %v7244
        %v7246 = vpop.f32.mrf.mxu0
        %v7247 = vadd.f32 0.0, %v7246
        %v7248 = vpop.f32.mrf.mxu0
        %v7249 = vadd.f32 0.0, %v7248
        %v7250 = vpop.f32.mrf.mxu0
        %v7251 = vadd.f32 0.0, %v7250
        %7252 = vmatprep.mubr.bf16.mxu0 0
        %7253 = vmatmul.mubr.bf16.gmra.mxu0 %v7168
        %v7254 = vpop.f32.mrf.mxu0
        %v7255 = vadd.f32 0.0, %v7254
        %v7256 = vpop.f32.mrf.mxu0
        %v7257 = vadd.f32 0.0, %v7256
        %v7258 = vpop.f32.mrf.mxu0
        %v7259 = vadd.f32 0.0, %v7258
        %v7260 = vpop.f32.mrf.mxu0
        %v7261 = vadd.f32 0.0, %v7260
        %7262 = vmatprep.mubr.bf16.mxu0 0
        %7263 = vmatmul.mubr.bf16.gmra.mxu0 %v7171
        %v7264 = vpop.f32.mrf.mxu0
        %v7265 = vadd.f32 0.0, %v7264
        %v7266 = vpop.f32.mrf.mxu0
        %v7267 = vadd.f32 0.0, %v7266
        %v7268 = vpop.f32.mrf.mxu0
        %v7269 = vadd.f32 0.0, %v7268
        %v7270 = vpop.f32.mrf.mxu0
        %v7271 = vadd.f32 0.0, %v7270
        %7272 = vmatprep.mubr.bf16.mxu0 0
        %7273 = vmatmul.mubr.bf16.gmra.mxu0 %v7174
        %v7274 = vpop.f32.mrf.mxu0
        %v7275 = vadd.f32 0.0, %v7274
        %v7276 = vpop.f32.mrf.mxu0
        %v7277 = vadd.f32 0.0, %v7276
        %v7278 = vpop.f32.mrf.mxu0
        %v7279 = vadd.f32 0.0, %v7278
        %v7280 = vpop.f32.mrf.mxu0
        %v7281 = vadd.f32 0.0, %v7280
        %7282 = vmatprep.mubr.bf16.mxu0 0
        %7283 = vmatmul.mubr.bf16.gmra.mxu0 %v7177
        %v7284 = vpop.f32.mrf.mxu0
        %v7285 = vadd.f32 0.0, %v7284
        %v7286 = vpop.f32.mrf.mxu0
        %v7287 = vadd.f32 0.0, %v7286
        %v7288 = vpop.f32.mrf.mxu0
        %v7289 = vadd.f32 0.0, %v7288
        %v7290 = vpop.f32.mrf.mxu0
        %v7291 = vadd.f32 0.0, %v7290
        %7292 = vmatprep.mubr.bf16.mxu0 0
        %7293 = vmatmul.mubr.bf16.gmra.mxu0 %v7180
        %v7294 = vpop.f32.mrf.mxu0
        %v7295 = vadd.f32 0.0, %v7294
        %v7296 = vpop.f32.mrf.mxu0
        %v7297 = vadd.f32 0.0, %v7296
        %v7298 = vpop.f32.mrf.mxu0
        %v7299 = vadd.f32 0.0, %v7298
        %v7300 = vpop.f32.mrf.mxu0
        %v7301 = vadd.f32 0.0, %v7300
        %7302 = vmatprep.mubr.bf16.mxu0 0
        %7303 = vmatmul.mubr.bf16.gmra.mxu0 %v7183
        %v7304 = vpop.f32.mrf.mxu0
        %v7305 = vadd.f32 0.0, %v7304
        %v7306 = vpop.f32.mrf.mxu0
        %v7307 = vadd.f32 0.0, %v7306
        %v7308 = vpop.f32.mrf.mxu0
        %v7309 = vadd.f32 0.0, %v7308
        %v7310 = vpop.f32.mrf.mxu0
        %v7311 = vadd.f32 0.0, %v7310
        %7312 = vmatprep.mubr.bf16.mxu0 0
        %7313 = vmatmul.mubr.bf16.gmra.mxu0 %v7186
        %v7314 = vpop.f32.mrf.mxu0
        %v7315 = vadd.f32 0.0, %v7314
        %v7316 = vpop.f32.mrf.mxu0
        %v7317 = vadd.f32 0.0, %v7316
        %v7318 = vpop.f32.mrf.mxu0
        %v7319 = vadd.f32 0.0, %v7318
        %v7320 = vpop.f32.mrf.mxu0
        %v7321 = vadd.f32 0.0, %v7320
        %7322 = vmatprep.mubr.bf16.mxu0 0
        %7323 = vmatmul.mubr.bf16.gmra.mxu0 %v7189
        %v7324 = vpop.f32.mrf.mxu0
        %v7325 = vadd.f32 0.0, %v7324
        %v7326 = vpop.f32.mrf.mxu0
        %v7327 = vadd.f32 0.0, %v7326
        %v7328 = vpop.f32.mrf.mxu0
        %v7329 = vadd.f32 0.0, %v7328
        %v7330 = vpop.f32.mrf.mxu0
        %v7331 = vadd.f32 0.0, %v7330
        %7332 = vmatprep.mubr.bf16.mxu0 0
        %7333 = vmatmul.mubr.bf16.gmra.mxu0 %v7192
        %v7334 = vpop.f32.mrf.mxu0
        %v7335 = vadd.f32 0.0, %v7334
        %v7336 = vpop.f32.mrf.mxu0
        %v7337 = vadd.f32 0.0, %v7336
        %v7338 = vpop.f32.mrf.mxu0
        %v7339 = vadd.f32 0.0, %v7338
        %v7340 = vpop.f32.mrf.mxu0
        %v7341 = vadd.f32 0.0, %v7340
        %7342 = vdwg.mxu0
        %v7343 = vadd.f32 %v7013, %v7235
        %v7344 = vadd.f32 %v7015, %v7237
        %v7345 = vadd.f32 %v7017, %v7239
        %v7346 = vadd.f32 %v7019, %v7241
        %v7347 = vadd.f32 %v7023, %v7245
        %v7348 = vadd.f32 %v7025, %v7247
        %v7349 = vadd.f32 %v7027, %v7249
        %v7350 = vadd.f32 %v7029, %v7251
        %v7351 = vadd.f32 %v7033, %v7255
        %v7352 = vadd.f32 %v7035, %v7257
        %v7353 = vadd.f32 %v7037, %v7259
        %v7354 = vadd.f32 %v7039, %v7261
        %v7355 = vadd.f32 %v7043, %v7265
        %v7356 = vadd.f32 %v7045, %v7267
        %v7357 = vadd.f32 %v7047, %v7269
        %v7358 = vadd.f32 %v7049, %v7271
        %v7359 = vadd.f32 %v7053, %v7275
        %v7360 = vadd.f32 %v7055, %v7277
        %v7361 = vadd.f32 %v7057, %v7279
        %v7362 = vadd.f32 %v7059, %v7281
        %v7363 = vadd.f32 %v7063, %v7285
        %v7364 = vadd.f32 %v7065, %v7287
        %v7365 = vadd.f32 %v7067, %v7289
        %v7366 = vadd.f32 %v7069, %v7291
        %v7367 = vadd.f32 %v7073, %v7295
        %v7368 = vadd.f32 %v7075, %v7297
        %v7369 = vadd.f32 %v7077, %v7299
        %v7370 = vadd.f32 %v7079, %v7301
        %v7371 = vadd.f32 %v7083, %v7305
        %v7372 = vadd.f32 %v7085, %v7307
        %v7373 = vadd.f32 %v7087, %v7309
        %v7374 = vadd.f32 %v7089, %v7311
        %v7375 = vadd.f32 %v7093, %v7315
        %v7376 = vadd.f32 %v7095, %v7317
        %v7377 = vadd.f32 %v7097, %v7319
        %v7378 = vadd.f32 %v7099, %v7321
        %v7379 = vadd.f32 %v7103, %v7325
        %v7380 = vadd.f32 %v7105, %v7327
        %v7381 = vadd.f32 %v7107, %v7329
        %v7382 = vadd.f32 %v7109, %v7331
        %v7383 = vadd.f32 %v7113, %v7335
        %v7384 = vadd.f32 %v7115, %v7337
        %v7385 = vadd.f32 %v7117, %v7339
        %v7386 = vadd.f32 %v7119, %v7341
        %v7387 = vld [vmem:[%s344 + $0x42] sm:$0xff]
        %v7388 = vld [vmem:[%s344 + $0x4a] sm:$0xff]
        %v7389 = vld [vmem:[%s344 + $0x52] sm:$0xff]
        %v7390 = vld [vmem:[%s344 + $0x5a] sm:$0xff]
        %v7391 = vld [vmem:[%s344 + $0x62] sm:$0xff]
        %v7392 = vld [vmem:[%s344 + $0x6a] sm:$0xff]
        %v7393 = vld [vmem:[%s344 + $0x72] sm:$0xff]
        %v7394 = vld [vmem:[%s344 + $0x7a] sm:$0xff]
        %v7395 = vld [vmem:[%s344 + $0x82] sm:$0xff]
        %v7396 = vld [vmem:[%s344 + $0x8a] sm:$0xff]
        %v7397 = vld [vmem:[%s344 + $0x92] sm:$0xff]
        %v7398 = vld [vmem:[%s344 + $0x9a] sm:$0xff]
        %v7399 = vld [vmem:[%s344 + $0xa2] sm:$0xff]
        %v7400 = vld [vmem:[%s344 + $0xaa] sm:$0xff]
        %v7401 = vld [vmem:[%s344 + $0xb2] sm:$0xff]
        %v7402 = vld [vmem:[%s344 + $0xba] sm:$0xff]
        %v7403 = vld [vmem:[%s344 + $0xc2] sm:$0xff]
        %v7404 = vld [vmem:[%s344 + $0xca] sm:$0xff]
        %v7405 = vld [vmem:[%s344 + $0xd2] sm:$0xff]
        %v7406 = vld [vmem:[%s344 + $0xda] sm:$0xff]
        %v7407 = vld [vmem:[%s344 + $0xe2] sm:$0xff]
        %v7408 = vld [vmem:[%s344 + $0xea] sm:$0xff]
        %v7409 = vpack.c.bf16 %v7388, %v7387
        %v7410 = vpack.c.bf16 %v7390, %v7389
        %v7411 = vpack.c.bf16 %v7392, %v7391
        %v7412 = vpack.c.bf16 %v7394, %v7393
        %v7413 = vpack.c.bf16 %v7396, %v7395
        %v7414 = vpack.c.bf16 %v7398, %v7397
        %v7415 = vpack.c.bf16 %v7400, %v7399
        %v7416 = vpack.c.bf16 %v7402, %v7401
        %v7417 = vpack.c.bf16 %v7404, %v7403
        %v7418 = vpack.c.bf16 %v7406, %v7405
        %v7419 = vpack.c.bf16 %v7408, %v7407
        %s7420 = scalar_lea.vmem %s2, 168
        %v7421 = vld [vmem:[%s7420] sm:$0xff]
        %v7423 = vunpack.c.l.b16 %v7421
        %v7424 = vunpack.c.h.b16 %v7421
        %v7425 = vpack.c.b16 %v7423, %v7423
        %v7426 = vpack.c.b16 %v7424, %v7424
        %v7428 = vsel %vm391, %v7409, 0
        %v7431 = vsel %vm391, %v7410, 0
        %v7434 = vsel %vm391, %v7411, 0
        %v7437 = vsel %vm391, %v7412, 0
        %v7440 = vsel %vm391, %v7413, 0
        %v7443 = vsel %vm391, %v7414, 0
        %v7446 = vsel %vm391, %v7415, 0
        %v7449 = vsel %vm391, %v7416, 0
        %v7452 = vsel %vm391, %v7417, 0
        %v7455 = vsel %vm391, %v7418, 0
        %v7458 = vsel %vm391, %v7419, 0
        %v7461 = vsel %vm425, %v7425, 0
        %v7464 = vsel %vm425, %v7426, 0
        %7466 = vmatprep.subr.bf16.mxu0 0
        %7467 = vmatpush1.bf16.msra.mxu0 0
        %7468 = vmatprep.subr.bf16.mxu0 0
        %7469 = vmatpush1.bf16.msra.mxu0 0
        %7470 = vmatprep.subr.bf16.mxu0 0
        %7471 = vmatpush1.bf16.msra.mxu0 0
        %7472 = vmatprep.subr.bf16.mxu0 0
        %7473 = vmatpush1.bf16.msra.mxu0 0
        %7474 = vmatprep.subr.bf16.mxu0 0
        %7475 = vmatpush1.bf16.msra.mxu0 0
        %7476 = vmatprep.subr.bf16.mxu0 0
        %7477 = vmatpush1.bf16.msra.mxu0 0
        %7478 = vmatprep.subr.bf16.mxu0 0
        %7479 = vmatpush1.bf16.msra.mxu0 0
        %7480 = vmatprep.subr.bf16.mxu0 %v7464
        %7481 = vmatpush1.bf16.msra.mxu0 %v7461
        %7482 = vmatprep.subr.bf16.mxu0 0
        %7483 = vmatpush2.bf16.msra.mxu0 0
        %7484 = vmatprep.subr.bf16.mxu0 0
        %7485 = vmatpush2.bf16.msra.mxu0 0
        %7486 = vmatprep.subr.bf16.mxu0 0
        %7487 = vmatpush2.bf16.msra.mxu0 0
        %7488 = vmatprep.subr.bf16.mxu0 0
        %7489 = vmatpush2.bf16.msra.mxu0 0
        %7490 = vmatprep.subr.bf16.mxu0 0
        %7491 = vmatpush2.bf16.msra.mxu0 0
        %7492 = vmatprep.subr.bf16.mxu0 0
        %7493 = vmatpush2.bf16.msra.mxu0 0
        %7494 = vmatprep.subr.bf16.mxu0 0
        %7495 = vmatpush2.bf16.msra.mxu0 0
        %7496 = vmatprep.subr.bf16.mxu0 0
        %7497 = vmatpush2.bf16.msra.mxu0 0
        %7498 = vmatprep.mubr.bf16.mxu0 0
        %7499 = vmatmul.mubr.bf16.gmra.mxu0 %v7428
        %v7500 = vpop.f32.mrf.mxu0
        %v7501 = vadd.f32 0.0, %v7500
        %v7502 = vpop.f32.mrf.mxu0
        %v7503 = vadd.f32 0.0, %v7502
        %v7504 = vpop.f32.mrf.mxu0
        %v7505 = vadd.f32 0.0, %v7504
        %v7506 = vpop.f32.mrf.mxu0
        %v7507 = vadd.f32 0.0, %v7506
        %7508 = vmatprep.mubr.bf16.mxu0 0
        %7509 = vmatmul.mubr.bf16.gmra.mxu0 %v7431
        %v7510 = vpop.f32.mrf.mxu0
        %v7511 = vadd.f32 0.0, %v7510
        %v7512 = vpop.f32.mrf.mxu0
        %v7513 = vadd.f32 0.0, %v7512
        %v7514 = vpop.f32.mrf.mxu0
        %v7515 = vadd.f32 0.0, %v7514
        %v7516 = vpop.f32.mrf.mxu0
        %v7517 = vadd.f32 0.0, %v7516
        %7518 = vmatprep.mubr.bf16.mxu0 0
        %7519 = vmatmul.mubr.bf16.gmra.mxu0 %v7434
        %v7520 = vpop.f32.mrf.mxu0
        %v7521 = vadd.f32 0.0, %v7520
        %v7522 = vpop.f32.mrf.mxu0
        %v7523 = vadd.f32 0.0, %v7522
        %v7524 = vpop.f32.mrf.mxu0
        %v7525 = vadd.f32 0.0, %v7524
        %v7526 = vpop.f32.mrf.mxu0
        %v7527 = vadd.f32 0.0, %v7526
        %7528 = vmatprep.mubr.bf16.mxu0 0
        %7529 = vmatmul.mubr.bf16.gmra.mxu0 %v7437
        %v7530 = vpop.f32.mrf.mxu0
        %v7531 = vadd.f32 0.0, %v7530
        %v7532 = vpop.f32.mrf.mxu0
        %v7533 = vadd.f32 0.0, %v7532
        %v7534 = vpop.f32.mrf.mxu0
        %v7535 = vadd.f32 0.0, %v7534
        %v7536 = vpop.f32.mrf.mxu0
        %v7537 = vadd.f32 0.0, %v7536
        %7538 = vmatprep.mubr.bf16.mxu0 0
        %7539 = vmatmul.mubr.bf16.gmra.mxu0 %v7440
        %v7540 = vpop.f32.mrf.mxu0
        %v7541 = vadd.f32 0.0, %v7540
        %v7542 = vpop.f32.mrf.mxu0
        %v7543 = vadd.f32 0.0, %v7542
        %v7544 = vpop.f32.mrf.mxu0
        %v7545 = vadd.f32 0.0, %v7544
        %v7546 = vpop.f32.mrf.mxu0
        %v7547 = vadd.f32 0.0, %v7546
        %7548 = vmatprep.mubr.bf16.mxu0 0
        %7549 = vmatmul.mubr.bf16.gmra.mxu0 %v7443
        %v7550 = vpop.f32.mrf.mxu0
        %v7551 = vadd.f32 0.0, %v7550
        %v7552 = vpop.f32.mrf.mxu0
        %v7553 = vadd.f32 0.0, %v7552
        %v7554 = vpop.f32.mrf.mxu0
        %v7555 = vadd.f32 0.0, %v7554
        %v7556 = vpop.f32.mrf.mxu0
        %v7557 = vadd.f32 0.0, %v7556
        %7558 = vmatprep.mubr.bf16.mxu0 0
        %7559 = vmatmul.mubr.bf16.gmra.mxu0 %v7446
        %v7560 = vpop.f32.mrf.mxu0
        %v7561 = vadd.f32 0.0, %v7560
        %v7562 = vpop.f32.mrf.mxu0
        %v7563 = vadd.f32 0.0, %v7562
        %v7564 = vpop.f32.mrf.mxu0
        %v7565 = vadd.f32 0.0, %v7564
        %v7566 = vpop.f32.mrf.mxu0
        %v7567 = vadd.f32 0.0, %v7566
        %7568 = vmatprep.mubr.bf16.mxu0 0
        %7569 = vmatmul.mubr.bf16.gmra.mxu0 %v7449
        %v7570 = vpop.f32.mrf.mxu0
        %v7571 = vadd.f32 0.0, %v7570
        %v7572 = vpop.f32.mrf.mxu0
        %v7573 = vadd.f32 0.0, %v7572
        %v7574 = vpop.f32.mrf.mxu0
        %v7575 = vadd.f32 0.0, %v7574
        %v7576 = vpop.f32.mrf.mxu0
        %v7577 = vadd.f32 0.0, %v7576
        %7578 = vmatprep.mubr.bf16.mxu0 0
        %7579 = vmatmul.mubr.bf16.gmra.mxu0 %v7452
        %v7580 = vpop.f32.mrf.mxu0
        %v7581 = vadd.f32 0.0, %v7580
        %v7582 = vpop.f32.mrf.mxu0
        %v7583 = vadd.f32 0.0, %v7582
        %v7584 = vpop.f32.mrf.mxu0
        %v7585 = vadd.f32 0.0, %v7584
        %v7586 = vpop.f32.mrf.mxu0
        %v7587 = vadd.f32 0.0, %v7586
        %7588 = vmatprep.mubr.bf16.mxu0 0
        %7589 = vmatmul.mubr.bf16.gmra.mxu0 %v7455
        %v7590 = vpop.f32.mrf.mxu0
        %v7591 = vadd.f32 0.0, %v7590
        %v7592 = vpop.f32.mrf.mxu0
        %v7593 = vadd.f32 0.0, %v7592
        %v7594 = vpop.f32.mrf.mxu0
        %v7595 = vadd.f32 0.0, %v7594
        %v7596 = vpop.f32.mrf.mxu0
        %v7597 = vadd.f32 0.0, %v7596
        %7598 = vmatprep.mubr.bf16.mxu0 0
        %7599 = vmatmul.mubr.bf16.gmra.mxu0 %v7458
        %v7600 = vpop.f32.mrf.mxu0
        %v7601 = vadd.f32 0.0, %v7600
        %v7602 = vpop.f32.mrf.mxu0
        %v7603 = vadd.f32 0.0, %v7602
        %v7604 = vpop.f32.mrf.mxu0
        %v7605 = vadd.f32 0.0, %v7604
        %v7606 = vpop.f32.mrf.mxu0
        %v7607 = vadd.f32 0.0, %v7606
        %7608 = vdwg.mxu0
        %v7609 = vadd.f32 %v7343, %v7501
        %v7610 = vadd.f32 %v7344, %v7503
        %v7611 = vadd.f32 %v7345, %v7505
        %v7612 = vadd.f32 %v7346, %v7507
        %v7613 = vadd.f32 %v7347, %v7511
        %v7614 = vadd.f32 %v7348, %v7513
        %v7615 = vadd.f32 %v7349, %v7515
        %v7616 = vadd.f32 %v7350, %v7517
        %v7617 = vadd.f32 %v7351, %v7521
        %v7618 = vadd.f32 %v7352, %v7523
        %v7619 = vadd.f32 %v7353, %v7525
        %v7620 = vadd.f32 %v7354, %v7527
        %v7621 = vadd.f32 %v7355, %v7531
        %v7622 = vadd.f32 %v7356, %v7533
        %v7623 = vadd.f32 %v7357, %v7535
        %v7624 = vadd.f32 %v7358, %v7537
        %v7625 = vadd.f32 %v7359, %v7541
        %v7626 = vadd.f32 %v7360, %v7543
        %v7627 = vadd.f32 %v7361, %v7545
        %v7628 = vadd.f32 %v7362, %v7547
        %v7629 = vadd.f32 %v7363, %v7551
        %v7630 = vadd.f32 %v7364, %v7553
        %v7631 = vadd.f32 %v7365, %v7555
        %v7632 = vadd.f32 %v7366, %v7557
        %v7633 = vadd.f32 %v7367, %v7561
        %v7634 = vadd.f32 %v7368, %v7563
        %v7635 = vadd.f32 %v7369, %v7565
        %v7636 = vadd.f32 %v7370, %v7567
        %v7637 = vadd.f32 %v7371, %v7571
        %v7638 = vadd.f32 %v7372, %v7573
        %v7639 = vadd.f32 %v7373, %v7575
        %v7640 = vadd.f32 %v7374, %v7577
        %v7641 = vadd.f32 %v7375, %v7581
        %v7642 = vadd.f32 %v7376, %v7583
        %v7643 = vadd.f32 %v7377, %v7585
        %v7644 = vadd.f32 %v7378, %v7587
        %v7645 = vadd.f32 %v7379, %v7591
        %v7646 = vadd.f32 %v7380, %v7593
        %v7647 = vadd.f32 %v7381, %v7595
        %v7648 = vadd.f32 %v7382, %v7597
        %v7649 = vadd.f32 %v7383, %v7601
        %v7650 = vadd.f32 %v7384, %v7603
        %v7651 = vadd.f32 %v7385, %v7605
        %v7652 = vadd.f32 %v7386, %v7607
        %s7653 = scalar_lea.vmem %s2, 176
        %v7654 = vld [vmem:[%s7653] sm:$0xff]
        %v7656 = vunpack.c.l.b16 %v7654
        %v7657 = vunpack.c.h.b16 %v7654
        %v7658 = vpack.c.b16 %v7656, %v7656
        %v7659 = vpack.c.b16 %v7657, %v7657
        %v7661 = vsel %vm425, %v7658, 0
        %v7664 = vsel %vm425, %v7659, 0
        %7666 = vmatprep.subr.bf16.mxu0 0
        %7667 = vmatpush1.bf16.msra.mxu0 0
        %7668 = vmatprep.subr.bf16.mxu0 0
        %7669 = vmatpush1.bf16.msra.mxu0 0
        %7670 = vmatprep.subr.bf16.mxu0 0
        %7671 = vmatpush1.bf16.msra.mxu0 0
        %7672 = vmatprep.subr.bf16.mxu0 0
        %7673 = vmatpush1.bf16.msra.mxu0 0
        %7674 = vmatprep.subr.bf16.mxu0 0
        %7675 = vmatpush1.bf16.msra.mxu0 0
        %7676 = vmatprep.subr.bf16.mxu0 0
        %7677 = vmatpush1.bf16.msra.mxu0 0
        %7678 = vmatprep.subr.bf16.mxu0 0
        %7679 = vmatpush1.bf16.msra.mxu0 0
        %7680 = vmatprep.subr.bf16.mxu0 %v7664
        %7681 = vmatpush1.bf16.msra.mxu0 %v7661
        %7682 = vmatprep.subr.bf16.mxu0 0
        %7683 = vmatpush2.bf16.msra.mxu0 0
        %7684 = vmatprep.subr.bf16.mxu0 0
        %7685 = vmatpush2.bf16.msra.mxu0 0
        %7686 = vmatprep.subr.bf16.mxu0 0
        %7687 = vmatpush2.bf16.msra.mxu0 0
        %7688 = vmatprep.subr.bf16.mxu0 0
        %7689 = vmatpush2.bf16.msra.mxu0 0
        %7690 = vmatprep.subr.bf16.mxu0 0
        %7691 = vmatpush2.bf16.msra.mxu0 0
        %7692 = vmatprep.subr.bf16.mxu0 0
        %7693 = vmatpush2.bf16.msra.mxu0 0
        %7694 = vmatprep.subr.bf16.mxu0 0
        %7695 = vmatpush2.bf16.msra.mxu0 0
        %7696 = vmatprep.subr.bf16.mxu0 0
        %7697 = vmatpush2.bf16.msra.mxu0 0
        %7698 = vmatprep.mubr.bf16.mxu0 0
        %7699 = vmatmul.mubr.bf16.gmra.mxu0 %v393
        %v7700 = vpop.f32.mrf.mxu0
        %v7701 = vadd.f32 0.0, %v7700
        %v7702 = vpop.f32.mrf.mxu0
        %v7703 = vadd.f32 0.0, %v7702
        %v7704 = vpop.f32.mrf.mxu0
        %v7705 = vadd.f32 0.0, %v7704
        %v7706 = vpop.f32.mrf.mxu0
        %v7707 = vadd.f32 0.0, %v7706
        %7708 = vmatprep.mubr.bf16.mxu0 0
        %7709 = vmatmul.mubr.bf16.gmra.mxu0 %v396
        %v7710 = vpop.f32.mrf.mxu0
        %v7711 = vadd.f32 0.0, %v7710
        %v7712 = vpop.f32.mrf.mxu0
        %v7713 = vadd.f32 0.0, %v7712
        %v7714 = vpop.f32.mrf.mxu0
        %v7715 = vadd.f32 0.0, %v7714
        %v7716 = vpop.f32.mrf.mxu0
        %v7717 = vadd.f32 0.0, %v7716
        %7718 = vmatprep.mubr.bf16.mxu0 0
        %7719 = vmatmul.mubr.bf16.gmra.mxu0 %v399
        %v7720 = vpop.f32.mrf.mxu0
        %v7721 = vadd.f32 0.0, %v7720
        %v7722 = vpop.f32.mrf.mxu0
        %v7723 = vadd.f32 0.0, %v7722
        %v7724 = vpop.f32.mrf.mxu0
        %v7725 = vadd.f32 0.0, %v7724
        %v7726 = vpop.f32.mrf.mxu0
        %v7727 = vadd.f32 0.0, %v7726
        %7728 = vmatprep.mubr.bf16.mxu0 0
        %7729 = vmatmul.mubr.bf16.gmra.mxu0 %v402
        %v7730 = vpop.f32.mrf.mxu0
        %v7731 = vadd.f32 0.0, %v7730
        %v7732 = vpop.f32.mrf.mxu0
        %v7733 = vadd.f32 0.0, %v7732
        %v7734 = vpop.f32.mrf.mxu0
        %v7735 = vadd.f32 0.0, %v7734
        %v7736 = vpop.f32.mrf.mxu0
        %v7737 = vadd.f32 0.0, %v7736
        %7738 = vmatprep.mubr.bf16.mxu0 0
        %7739 = vmatmul.mubr.bf16.gmra.mxu0 %v405
        %v7740 = vpop.f32.mrf.mxu0
        %v7741 = vadd.f32 0.0, %v7740
        %v7742 = vpop.f32.mrf.mxu0
        %v7743 = vadd.f32 0.0, %v7742
        %v7744 = vpop.f32.mrf.mxu0
        %v7745 = vadd.f32 0.0, %v7744
        %v7746 = vpop.f32.mrf.mxu0
        %v7747 = vadd.f32 0.0, %v7746
        %7748 = vmatprep.mubr.bf16.mxu0 0
        %7749 = vmatmul.mubr.bf16.gmra.mxu0 %v408
        %v7750 = vpop.f32.mrf.mxu0
        %v7751 = vadd.f32 0.0, %v7750
        %v7752 = vpop.f32.mrf.mxu0
        %v7753 = vadd.f32 0.0, %v7752
        %v7754 = vpop.f32.mrf.mxu0
        %v7755 = vadd.f32 0.0, %v7754
        %v7756 = vpop.f32.mrf.mxu0
        %v7757 = vadd.f32 0.0, %v7756
        %7758 = vmatprep.mubr.bf16.mxu0 0
        %7759 = vmatmul.mubr.bf16.gmra.mxu0 %v411
        %v7760 = vpop.f32.mrf.mxu0
        %v7761 = vadd.f32 0.0, %v7760
        %v7762 = vpop.f32.mrf.mxu0
        %v7763 = vadd.f32 0.0, %v7762
        %v7764 = vpop.f32.mrf.mxu0
        %v7765 = vadd.f32 0.0, %v7764
        %v7766 = vpop.f32.mrf.mxu0
        %v7767 = vadd.f32 0.0, %v7766
        %7768 = vmatprep.mubr.bf16.mxu0 0
        %7769 = vmatmul.mubr.bf16.gmra.mxu0 %v414
        %v7770 = vpop.f32.mrf.mxu0
        %v7771 = vadd.f32 0.0, %v7770
        %v7772 = vpop.f32.mrf.mxu0
        %v7773 = vadd.f32 0.0, %v7772
        %v7774 = vpop.f32.mrf.mxu0
        %v7775 = vadd.f32 0.0, %v7774
        %v7776 = vpop.f32.mrf.mxu0
        %v7777 = vadd.f32 0.0, %v7776
        %7778 = vmatprep.mubr.bf16.mxu0 0
        %7779 = vmatmul.mubr.bf16.gmra.mxu0 %v417
        %v7780 = vpop.f32.mrf.mxu0
        %v7781 = vadd.f32 0.0, %v7780
        %v7782 = vpop.f32.mrf.mxu0
        %v7783 = vadd.f32 0.0, %v7782
        %v7784 = vpop.f32.mrf.mxu0
        %v7785 = vadd.f32 0.0, %v7784
        %v7786 = vpop.f32.mrf.mxu0
        %v7787 = vadd.f32 0.0, %v7786
        %7788 = vmatprep.mubr.bf16.mxu0 0
        %7789 = vmatmul.mubr.bf16.gmra.mxu0 %v420
        %v7790 = vpop.f32.mrf.mxu0
        %v7791 = vadd.f32 0.0, %v7790
        %v7792 = vpop.f32.mrf.mxu0
        %v7793 = vadd.f32 0.0, %v7792
        %v7794 = vpop.f32.mrf.mxu0
        %v7795 = vadd.f32 0.0, %v7794
        %v7796 = vpop.f32.mrf.mxu0
        %v7797 = vadd.f32 0.0, %v7796
        %7798 = vmatprep.mubr.bf16.mxu0 0
        %7799 = vmatmul.mubr.bf16.gmra.mxu0 %v423
        %v7800 = vpop.f32.mrf.mxu0
        %v7801 = vadd.f32 0.0, %v7800
        %v7802 = vpop.f32.mrf.mxu0
        %v7803 = vadd.f32 0.0, %v7802
        %v7804 = vpop.f32.mrf.mxu0
        %v7805 = vadd.f32 0.0, %v7804
        %v7806 = vpop.f32.mrf.mxu0
        %v7807 = vadd.f32 0.0, %v7806
        %7808 = vdwg.mxu0
        %v7809 = vadd.f32 %v7609, %v7701
        %v7810 = vadd.f32 %v7610, %v7703
        %v7811 = vadd.f32 %v7611, %v7705
        %v7812 = vadd.f32 %v7612, %v7707
        %v7813 = vadd.f32 %v7613, %v7711
        %v7814 = vadd.f32 %v7614, %v7713
        %v7815 = vadd.f32 %v7615, %v7715
        %v7816 = vadd.f32 %v7616, %v7717
        %v7817 = vadd.f32 %v7617, %v7721
        %v7818 = vadd.f32 %v7618, %v7723
        %v7819 = vadd.f32 %v7619, %v7725
        %v7820 = vadd.f32 %v7620, %v7727
        %v7821 = vadd.f32 %v7621, %v7731
        %v7822 = vadd.f32 %v7622, %v7733
        %v7823 = vadd.f32 %v7623, %v7735
        %v7824 = vadd.f32 %v7624, %v7737
        %v7825 = vadd.f32 %v7625, %v7741
        %v7826 = vadd.f32 %v7626, %v7743
        %v7827 = vadd.f32 %v7627, %v7745
        %v7828 = vadd.f32 %v7628, %v7747
        %v7829 = vadd.f32 %v7629, %v7751
        %v7830 = vadd.f32 %v7630, %v7753
        %v7831 = vadd.f32 %v7631, %v7755
        %v7832 = vadd.f32 %v7632, %v7757
        %v7833 = vadd.f32 %v7633, %v7761
        %v7834 = vadd.f32 %v7634, %v7763
        %v7835 = vadd.f32 %v7635, %v7765
        %v7836 = vadd.f32 %v7636, %v7767
        %v7837 = vadd.f32 %v7637, %v7771
        %v7838 = vadd.f32 %v7638, %v7773
        %v7839 = vadd.f32 %v7639, %v7775
        %v7840 = vadd.f32 %v7640, %v7777
        %v7841 = vadd.f32 %v7641, %v7781
        %v7842 = vadd.f32 %v7642, %v7783
        %v7843 = vadd.f32 %v7643, %v7785
        %v7844 = vadd.f32 %v7644, %v7787
        %v7845 = vadd.f32 %v7645, %v7791
        %v7846 = vadd.f32 %v7646, %v7793
        %v7847 = vadd.f32 %v7647, %v7795
        %v7848 = vadd.f32 %v7648, %v7797
        %v7849 = vadd.f32 %v7649, %v7801
        %v7850 = vadd.f32 %v7650, %v7803
        %v7851 = vadd.f32 %v7651, %v7805
        %v7852 = vadd.f32 %v7652, %v7807
        %v7853 = vld [vmem:[%s344 + $0x48] sm:$0xff]
        %v7854 = vld [vmem:[%s344 + $0x50] sm:$0xff]
        %v7855 = vld [vmem:[%s344 + $0x58] sm:$0xff]
        %v7856 = vld [vmem:[%s344 + $0x60] sm:$0xff]
        %v7857 = vld [vmem:[%s344 + $0x68] sm:$0xff]
        %v7858 = vld [vmem:[%s344 + $0x70] sm:$0xff]
        %v7859 = vld [vmem:[%s344 + $0x78] sm:$0xff]
        %v7860 = vld [vmem:[%s344 + $0x80] sm:$0xff]
        %v7861 = vld [vmem:[%s344 + $0x88] sm:$0xff]
        %v7862 = vld [vmem:[%s344 + $0x90] sm:$0xff]
        %v7863 = vld [vmem:[%s344 + $0x98] sm:$0xff]
        %v7864 = vld [vmem:[%s344 + $0xa0] sm:$0xff]
        %v7865 = vld [vmem:[%s344 + $0xa8] sm:$0xff]
        %v7866 = vld [vmem:[%s344 + $0xb0] sm:$0xff]
        %v7867 = vld [vmem:[%s344 + $0xb8] sm:$0xff]
        %v7868 = vld [vmem:[%s344 + $0xc0] sm:$0xff]
        %v7869 = vld [vmem:[%s344 + $0xc8] sm:$0xff]
        %v7870 = vld [vmem:[%s344 + $0xd0] sm:$0xff]
        %v7871 = vld [vmem:[%s344 + $0xd8] sm:$0xff]
        %v7872 = vld [vmem:[%s344 + $0xe0] sm:$0xff]
        %v7873 = vld [vmem:[%s344 + $0xe8] sm:$0xff]
        %v7874 = vld [vmem:[%s344 + $0xf0] sm:$0xff]
        %v7875 = vpack.c.bf16 %v7854, %v7853
        %v7876 = vpack.c.bf16 %v7856, %v7855
        %v7877 = vpack.c.bf16 %v7858, %v7857
        %v7878 = vpack.c.bf16 %v7860, %v7859
        %v7879 = vpack.c.bf16 %v7862, %v7861
        %v7880 = vpack.c.bf16 %v7864, %v7863
        %v7881 = vpack.c.bf16 %v7866, %v7865
        %v7882 = vpack.c.bf16 %v7868, %v7867
        %v7883 = vpack.c.bf16 %v7870, %v7869
        %v7884 = vpack.c.bf16 %v7872, %v7871
        %v7885 = vpack.c.bf16 %v7874, %v7873
        %s7886 = scalar_lea.vmem %s2, 184
        %v7887 = vld [vmem:[%s7886] sm:$0xff]
        %v7889 = vunpack.c.l.b16 %v7887
        %v7890 = vunpack.c.h.b16 %v7887
        %v7891 = vpack.c.b16 %v7889, %v7889
        %v7892 = vpack.c.b16 %v7890, %v7890
        %v7894 = vsel %vm391, %v7875, 0
        %v7897 = vsel %vm391, %v7876, 0
        %v7900 = vsel %vm391, %v7877, 0
        %v7903 = vsel %vm391, %v7878, 0
        %v7906 = vsel %vm391, %v7879, 0
        %v7909 = vsel %vm391, %v7880, 0
        %v7912 = vsel %vm391, %v7881, 0
        %v7915 = vsel %vm391, %v7882, 0
        %v7918 = vsel %vm391, %v7883, 0
        %v7921 = vsel %vm391, %v7884, 0
        %v7924 = vsel %vm391, %v7885, 0
        %v7927 = vsel %vm425, %v7891, 0
        %v7930 = vsel %vm425, %v7892, 0
        %7932 = vmatprep.subr.bf16.mxu0 0
        %7933 = vmatpush1.bf16.msra.mxu0 0
        %7934 = vmatprep.subr.bf16.mxu0 0
        %7935 = vmatpush1.bf16.msra.mxu0 0
        %7936 = vmatprep.subr.bf16.mxu0 0
        %7937 = vmatpush1.bf16.msra.mxu0 0
        %7938 = vmatprep.subr.bf16.mxu0 0
        %7939 = vmatpush1.bf16.msra.mxu0 0
        %7940 = vmatprep.subr.bf16.mxu0 0
        %7941 = vmatpush1.bf16.msra.mxu0 0
        %7942 = vmatprep.subr.bf16.mxu0 0
        %7943 = vmatpush1.bf16.msra.mxu0 0
        %7944 = vmatprep.subr.bf16.mxu0 0
        %7945 = vmatpush1.bf16.msra.mxu0 0
        %7946 = vmatprep.subr.bf16.mxu0 %v7930
        %7947 = vmatpush1.bf16.msra.mxu0 %v7927
        %7948 = vmatprep.subr.bf16.mxu0 0
        %7949 = vmatpush2.bf16.msra.mxu0 0
        %7950 = vmatprep.subr.bf16.mxu0 0
        %7951 = vmatpush2.bf16.msra.mxu0 0
        %7952 = vmatprep.subr.bf16.mxu0 0
        %7953 = vmatpush2.bf16.msra.mxu0 0
        %7954 = vmatprep.subr.bf16.mxu0 0
        %7955 = vmatpush2.bf16.msra.mxu0 0
        %7956 = vmatprep.subr.bf16.mxu0 0
        %7957 = vmatpush2.bf16.msra.mxu0 0
        %7958 = vmatprep.subr.bf16.mxu0 0
        %7959 = vmatpush2.bf16.msra.mxu0 0
        %7960 = vmatprep.subr.bf16.mxu0 0
        %7961 = vmatpush2.bf16.msra.mxu0 0
        %7962 = vmatprep.subr.bf16.mxu0 0
        %7963 = vmatpush2.bf16.msra.mxu0 0
        %7964 = vmatprep.mubr.bf16.mxu0 0
        %7965 = vmatmul.mubr.bf16.gmra.mxu0 %v7894
        %v7966 = vpop.f32.mrf.mxu0
        %v7967 = vadd.f32 0.0, %v7966
        %v7968 = vpop.f32.mrf.mxu0
        %v7969 = vadd.f32 0.0, %v7968
        %v7970 = vpop.f32.mrf.mxu0
        %v7971 = vadd.f32 0.0, %v7970
        %v7972 = vpop.f32.mrf.mxu0
        %v7973 = vadd.f32 0.0, %v7972
        %7974 = vmatprep.mubr.bf16.mxu0 0
        %7975 = vmatmul.mubr.bf16.gmra.mxu0 %v7897
        %v7976 = vpop.f32.mrf.mxu0
        %v7977 = vadd.f32 0.0, %v7976
        %v7978 = vpop.f32.mrf.mxu0
        %v7979 = vadd.f32 0.0, %v7978
        %v7980 = vpop.f32.mrf.mxu0
        %v7981 = vadd.f32 0.0, %v7980
        %v7982 = vpop.f32.mrf.mxu0
        %v7983 = vadd.f32 0.0, %v7982
        %7984 = vmatprep.mubr.bf16.mxu0 0
        %7985 = vmatmul.mubr.bf16.gmra.mxu0 %v7900
        %v7986 = vpop.f32.mrf.mxu0
        %v7987 = vadd.f32 0.0, %v7986
        %v7988 = vpop.f32.mrf.mxu0
        %v7989 = vadd.f32 0.0, %v7988
        %v7990 = vpop.f32.mrf.mxu0
        %v7991 = vadd.f32 0.0, %v7990
        %v7992 = vpop.f32.mrf.mxu0
        %v7993 = vadd.f32 0.0, %v7992
        %7994 = vmatprep.mubr.bf16.mxu0 0
        %7995 = vmatmul.mubr.bf16.gmra.mxu0 %v7903
        %v7996 = vpop.f32.mrf.mxu0
        %v7997 = vadd.f32 0.0, %v7996
        %v7998 = vpop.f32.mrf.mxu0
        %v7999 = vadd.f32 0.0, %v7998
        %v8000 = vpop.f32.mrf.mxu0
        %v8001 = vadd.f32 0.0, %v8000
        %v8002 = vpop.f32.mrf.mxu0
        %v8003 = vadd.f32 0.0, %v8002
        %8004 = vmatprep.mubr.bf16.mxu0 0
        %8005 = vmatmul.mubr.bf16.gmra.mxu0 %v7906
        %v8006 = vpop.f32.mrf.mxu0
        %v8007 = vadd.f32 0.0, %v8006
        %v8008 = vpop.f32.mrf.mxu0
        %v8009 = vadd.f32 0.0, %v8008
        %v8010 = vpop.f32.mrf.mxu0
        %v8011 = vadd.f32 0.0, %v8010
        %v8012 = vpop.f32.mrf.mxu0
        %v8013 = vadd.f32 0.0, %v8012
        %8014 = vmatprep.mubr.bf16.mxu0 0
        %8015 = vmatmul.mubr.bf16.gmra.mxu0 %v7909
        %v8016 = vpop.f32.mrf.mxu0
        %v8017 = vadd.f32 0.0, %v8016
        %v8018 = vpop.f32.mrf.mxu0
        %v8019 = vadd.f32 0.0, %v8018
        %v8020 = vpop.f32.mrf.mxu0
        %v8021 = vadd.f32 0.0, %v8020
        %v8022 = vpop.f32.mrf.mxu0
        %v8023 = vadd.f32 0.0, %v8022
        %8024 = vmatprep.mubr.bf16.mxu0 0
        %8025 = vmatmul.mubr.bf16.gmra.mxu0 %v7912
        %v8026 = vpop.f32.mrf.mxu0
        %v8027 = vadd.f32 0.0, %v8026
        %v8028 = vpop.f32.mrf.mxu0
        %v8029 = vadd.f32 0.0, %v8028
        %v8030 = vpop.f32.mrf.mxu0
        %v8031 = vadd.f32 0.0, %v8030
        %v8032 = vpop.f32.mrf.mxu0
        %v8033 = vadd.f32 0.0, %v8032
        %8034 = vmatprep.mubr.bf16.mxu0 0
        %8035 = vmatmul.mubr.bf16.gmra.mxu0 %v7915
        %v8036 = vpop.f32.mrf.mxu0
        %v8037 = vadd.f32 0.0, %v8036
        %v8038 = vpop.f32.mrf.mxu0
        %v8039 = vadd.f32 0.0, %v8038
        %v8040 = vpop.f32.mrf.mxu0
        %v8041 = vadd.f32 0.0, %v8040
        %v8042 = vpop.f32.mrf.mxu0
        %v8043 = vadd.f32 0.0, %v8042
        %8044 = vmatprep.mubr.bf16.mxu0 0
        %8045 = vmatmul.mubr.bf16.gmra.mxu0 %v7918
        %v8046 = vpop.f32.mrf.mxu0
        %v8047 = vadd.f32 0.0, %v8046
        %v8048 = vpop.f32.mrf.mxu0
        %v8049 = vadd.f32 0.0, %v8048
        %v8050 = vpop.f32.mrf.mxu0
        %v8051 = vadd.f32 0.0, %v8050
        %v8052 = vpop.f32.mrf.mxu0
        %v8053 = vadd.f32 0.0, %v8052
        %8054 = vmatprep.mubr.bf16.mxu0 0
        %8055 = vmatmul.mubr.bf16.gmra.mxu0 %v7921
        %v8056 = vpop.f32.mrf.mxu0
        %v8057 = vadd.f32 0.0, %v8056
        %v8058 = vpop.f32.mrf.mxu0
        %v8059 = vadd.f32 0.0, %v8058
        %v8060 = vpop.f32.mrf.mxu0
        %v8061 = vadd.f32 0.0, %v8060
        %v8062 = vpop.f32.mrf.mxu0
        %v8063 = vadd.f32 0.0, %v8062
        %8064 = vmatprep.mubr.bf16.mxu0 0
        %8065 = vmatmul.mubr.bf16.gmra.mxu0 %v7924
        %v8066 = vpop.f32.mrf.mxu0
        %v8067 = vadd.f32 0.0, %v8066
        %v8068 = vpop.f32.mrf.mxu0
        %v8069 = vadd.f32 0.0, %v8068
        %v8070 = vpop.f32.mrf.mxu0
        %v8071 = vadd.f32 0.0, %v8070
        %v8072 = vpop.f32.mrf.mxu0
        %v8073 = vadd.f32 0.0, %v8072
        %8074 = vdwg.mxu0
        %v8075 = vadd.f32 %v7809, %v7967
        %v8076 = vadd.f32 %v7810, %v7969
        %v8077 = vadd.f32 %v7811, %v7971
        %v8078 = vadd.f32 %v7812, %v7973
        %v8079 = vadd.f32 %v7813, %v7977
        %v8080 = vadd.f32 %v7814, %v7979
        %v8081 = vadd.f32 %v7815, %v7981
        %v8082 = vadd.f32 %v7816, %v7983
        %v8083 = vadd.f32 %v7817, %v7987
        %v8084 = vadd.f32 %v7818, %v7989
        %v8085 = vadd.f32 %v7819, %v7991
        %v8086 = vadd.f32 %v7820, %v7993
        %v8087 = vadd.f32 %v7821, %v7997
        %v8088 = vadd.f32 %v7822, %v7999
        %v8089 = vadd.f32 %v7823, %v8001
        %v8090 = vadd.f32 %v7824, %v8003
        %v8091 = vadd.f32 %v7825, %v8007
        %v8092 = vadd.f32 %v7826, %v8009
        %v8093 = vadd.f32 %v7827, %v8011
        %v8094 = vadd.f32 %v7828, %v8013
        %v8095 = vadd.f32 %v7829, %v8017
        %v8096 = vadd.f32 %v7830, %v8019
        %v8097 = vadd.f32 %v7831, %v8021
        %v8098 = vadd.f32 %v7832, %v8023
        %v8099 = vadd.f32 %v7833, %v8027
        %v8100 = vadd.f32 %v7834, %v8029
        %v8101 = vadd.f32 %v7835, %v8031
        %v8102 = vadd.f32 %v7836, %v8033
        %v8103 = vadd.f32 %v7837, %v8037
        %v8104 = vadd.f32 %v7838, %v8039
        %v8105 = vadd.f32 %v7839, %v8041
        %v8106 = vadd.f32 %v7840, %v8043
        %v8107 = vadd.f32 %v7841, %v8047
        %v8108 = vadd.f32 %v7842, %v8049
        %v8109 = vadd.f32 %v7843, %v8051
        %v8110 = vadd.f32 %v7844, %v8053
        %v8111 = vadd.f32 %v7845, %v8057
        %v8112 = vadd.f32 %v7846, %v8059
        %v8113 = vadd.f32 %v7847, %v8061
        %v8114 = vadd.f32 %v7848, %v8063
        %v8115 = vadd.f32 %v7849, %v8067
        %v8116 = vadd.f32 %v7850, %v8069
        %v8117 = vadd.f32 %v7851, %v8071
        %v8118 = vadd.f32 %v7852, %v8073
        %v8119 = vld [vmem:[%s344 + $0x84] sm:$0xff]
        %v8120 = vld [vmem:[%s344 + $0x8c] sm:$0xff]
        %v8121 = vld [vmem:[%s344 + $0x94] sm:$0xff]
        %v8122 = vld [vmem:[%s344 + $0x9c] sm:$0xff]
        %v8123 = vld [vmem:[%s344 + $0xa4] sm:$0xff]
        %v8124 = vld [vmem:[%s344 + $0xac] sm:$0xff]
        %v8125 = vld [vmem:[%s344 + $0xb4] sm:$0xff]
        %v8126 = vld [vmem:[%s344 + $0xbc] sm:$0xff]
        %v8127 = vld [vmem:[%s344 + $0xc4] sm:$0xff]
        %v8128 = vld [vmem:[%s344 + $0xcc] sm:$0xff]
        %v8129 = vld [vmem:[%s344 + $0xd4] sm:$0xff]
        %v8130 = vld [vmem:[%s344 + $0xdc] sm:$0xff]
        %v8131 = vld [vmem:[%s344 + $0xe4] sm:$0xff]
        %v8132 = vld [vmem:[%s344 + $0xec] sm:$0xff]
        %v8133 = vld [vmem:[%s344 + $0xf4] sm:$0xff]
        %v8134 = vld [vmem:[%s344 + $0xfc] sm:$0xff]
        %v8135 = vld [vmem:[%s344 + $0x104] sm:$0xff]
        %v8136 = vld [vmem:[%s344 + $0x10c] sm:$0xff]
        %v8137 = vld [vmem:[%s344 + $0x114] sm:$0xff]
        %v8138 = vld [vmem:[%s344 + $0x11c] sm:$0xff]
        %v8139 = vld [vmem:[%s344 + $0x124] sm:$0xff]
        %v8140 = vld [vmem:[%s344 + $0x12c] sm:$0xff]
        %v8141 = vpack.c.bf16 %v8120, %v8119
        %v8142 = vpack.c.bf16 %v8122, %v8121
        %v8143 = vpack.c.bf16 %v8124, %v8123
        %v8144 = vpack.c.bf16 %v8126, %v8125
        %v8145 = vpack.c.bf16 %v8128, %v8127
        %v8146 = vpack.c.bf16 %v8130, %v8129
        %v8147 = vpack.c.bf16 %v8132, %v8131
        %v8148 = vpack.c.bf16 %v8134, %v8133
        %v8149 = vpack.c.bf16 %v8136, %v8135
        %v8150 = vpack.c.bf16 %v8138, %v8137
        %v8151 = vpack.c.bf16 %v8140, %v8139
        %s8152 = scalar_lea.vmem %s2, 192
        %v8153 = vld [vmem:[%s8152] sm:$0xff]
        %v8155 = vunpack.c.l.b16 %v8153
        %v8156 = vunpack.c.h.b16 %v8153
        %v8157 = vpack.c.b16 %v8155, %v8155
        %v8158 = vpack.c.b16 %v8156, %v8156
        %v8160 = vsel %vm391, %v8141, 0
        %v8163 = vsel %vm391, %v8142, 0
        %v8166 = vsel %vm391, %v8143, 0
        %v8169 = vsel %vm391, %v8144, 0
        %v8172 = vsel %vm391, %v8145, 0
        %v8175 = vsel %vm391, %v8146, 0
        %v8178 = vsel %vm391, %v8147, 0
        %v8181 = vsel %vm391, %v8148, 0
        %v8184 = vsel %vm391, %v8149, 0
        %v8187 = vsel %vm391, %v8150, 0
        %v8190 = vsel %vm391, %v8151, 0
        %v8193 = vsel %vm425, %v8157, 0
        %v8196 = vsel %vm425, %v8158, 0
        %8198 = vmatprep.subr.bf16.mxu0 0
        %8199 = vmatpush1.bf16.msra.mxu0 0
        %8200 = vmatprep.subr.bf16.mxu0 0
        %8201 = vmatpush1.bf16.msra.mxu0 0
        %8202 = vmatprep.subr.bf16.mxu0 0
        %8203 = vmatpush1.bf16.msra.mxu0 0
        %8204 = vmatprep.subr.bf16.mxu0 0
        %8205 = vmatpush1.bf16.msra.mxu0 0
        %8206 = vmatprep.subr.bf16.mxu0 0
        %8207 = vmatpush1.bf16.msra.mxu0 0
        %8208 = vmatprep.subr.bf16.mxu0 0
        %8209 = vmatpush1.bf16.msra.mxu0 0
        %8210 = vmatprep.subr.bf16.mxu0 0
        %8211 = vmatpush1.bf16.msra.mxu0 0
        %8212 = vmatprep.subr.bf16.mxu0 %v8196
        %8213 = vmatpush1.bf16.msra.mxu0 %v8193
        %8214 = vmatprep.subr.bf16.mxu0 0
        %8215 = vmatpush2.bf16.msra.mxu0 0
        %8216 = vmatprep.subr.bf16.mxu0 0
        %8217 = vmatpush2.bf16.msra.mxu0 0
        %8218 = vmatprep.subr.bf16.mxu0 0
        %8219 = vmatpush2.bf16.msra.mxu0 0
        %8220 = vmatprep.subr.bf16.mxu0 0
        %8221 = vmatpush2.bf16.msra.mxu0 0
        %8222 = vmatprep.subr.bf16.mxu0 0
        %8223 = vmatpush2.bf16.msra.mxu0 0
        %8224 = vmatprep.subr.bf16.mxu0 0
        %8225 = vmatpush2.bf16.msra.mxu0 0
        %8226 = vmatprep.subr.bf16.mxu0 0
        %8227 = vmatpush2.bf16.msra.mxu0 0
        %8228 = vmatprep.subr.bf16.mxu0 0
        %8229 = vmatpush2.bf16.msra.mxu0 0
        %8230 = vmatprep.mubr.bf16.mxu0 0
        %8231 = vmatmul.mubr.bf16.gmra.mxu0 %v8160
        %v8232 = vpop.f32.mrf.mxu0
        %v8233 = vadd.f32 0.0, %v8232
        %v8234 = vpop.f32.mrf.mxu0
        %v8235 = vadd.f32 0.0, %v8234
        %v8236 = vpop.f32.mrf.mxu0
        %v8237 = vadd.f32 0.0, %v8236
        %v8238 = vpop.f32.mrf.mxu0
        %v8239 = vadd.f32 0.0, %v8238
        %8240 = vmatprep.mubr.bf16.mxu0 0
        %8241 = vmatmul.mubr.bf16.gmra.mxu0 %v8163
        %v8242 = vpop.f32.mrf.mxu0
        %v8243 = vadd.f32 0.0, %v8242
        %v8244 = vpop.f32.mrf.mxu0
        %v8245 = vadd.f32 0.0, %v8244
        %v8246 = vpop.f32.mrf.mxu0
        %v8247 = vadd.f32 0.0, %v8246
        %v8248 = vpop.f32.mrf.mxu0
        %v8249 = vadd.f32 0.0, %v8248
        %8250 = vmatprep.mubr.bf16.mxu0 0
        %8251 = vmatmul.mubr.bf16.gmra.mxu0 %v8166
        %v8252 = vpop.f32.mrf.mxu0
        %v8253 = vadd.f32 0.0, %v8252
        %v8254 = vpop.f32.mrf.mxu0
        %v8255 = vadd.f32 0.0, %v8254
        %v8256 = vpop.f32.mrf.mxu0
        %v8257 = vadd.f32 0.0, %v8256
        %v8258 = vpop.f32.mrf.mxu0
        %v8259 = vadd.f32 0.0, %v8258
        %8260 = vmatprep.mubr.bf16.mxu0 0
        %8261 = vmatmul.mubr.bf16.gmra.mxu0 %v8169
        %v8262 = vpop.f32.mrf.mxu0
        %v8263 = vadd.f32 0.0, %v8262
        %v8264 = vpop.f32.mrf.mxu0
        %v8265 = vadd.f32 0.0, %v8264
        %v8266 = vpop.f32.mrf.mxu0
        %v8267 = vadd.f32 0.0, %v8266
        %v8268 = vpop.f32.mrf.mxu0
        %v8269 = vadd.f32 0.0, %v8268
        %8270 = vmatprep.mubr.bf16.mxu0 0
        %8271 = vmatmul.mubr.bf16.gmra.mxu0 %v8172
        %v8272 = vpop.f32.mrf.mxu0
        %v8273 = vadd.f32 0.0, %v8272
        %v8274 = vpop.f32.mrf.mxu0
        %v8275 = vadd.f32 0.0, %v8274
        %v8276 = vpop.f32.mrf.mxu0
        %v8277 = vadd.f32 0.0, %v8276
        %v8278 = vpop.f32.mrf.mxu0
        %v8279 = vadd.f32 0.0, %v8278
        %8280 = vmatprep.mubr.bf16.mxu0 0
        %8281 = vmatmul.mubr.bf16.gmra.mxu0 %v8175
        %v8282 = vpop.f32.mrf.mxu0
        %v8283 = vadd.f32 0.0, %v8282
        %v8284 = vpop.f32.mrf.mxu0
        %v8285 = vadd.f32 0.0, %v8284
        %v8286 = vpop.f32.mrf.mxu0
        %v8287 = vadd.f32 0.0, %v8286
        %v8288 = vpop.f32.mrf.mxu0
        %v8289 = vadd.f32 0.0, %v8288
        %8290 = vmatprep.mubr.bf16.mxu0 0
        %8291 = vmatmul.mubr.bf16.gmra.mxu0 %v8178
        %v8292 = vpop.f32.mrf.mxu0
        %v8293 = vadd.f32 0.0, %v8292
        %v8294 = vpop.f32.mrf.mxu0
        %v8295 = vadd.f32 0.0, %v8294
        %v8296 = vpop.f32.mrf.mxu0
        %v8297 = vadd.f32 0.0, %v8296
        %v8298 = vpop.f32.mrf.mxu0
        %v8299 = vadd.f32 0.0, %v8298
        %8300 = vmatprep.mubr.bf16.mxu0 0
        %8301 = vmatmul.mubr.bf16.gmra.mxu0 %v8181
        %v8302 = vpop.f32.mrf.mxu0
        %v8303 = vadd.f32 0.0, %v8302
        %v8304 = vpop.f32.mrf.mxu0
        %v8305 = vadd.f32 0.0, %v8304
        %v8306 = vpop.f32.mrf.mxu0
        %v8307 = vadd.f32 0.0, %v8306
        %v8308 = vpop.f32.mrf.mxu0
        %v8309 = vadd.f32 0.0, %v8308
        %8310 = vmatprep.mubr.bf16.mxu0 0
        %8311 = vmatmul.mubr.bf16.gmra.mxu0 %v8184
        %v8312 = vpop.f32.mrf.mxu0
        %v8313 = vadd.f32 0.0, %v8312
        %v8314 = vpop.f32.mrf.mxu0
        %v8315 = vadd.f32 0.0, %v8314
        %v8316 = vpop.f32.mrf.mxu0
        %v8317 = vadd.f32 0.0, %v8316
        %v8318 = vpop.f32.mrf.mxu0
        %v8319 = vadd.f32 0.0, %v8318
        %8320 = vmatprep.mubr.bf16.mxu0 0
        %8321 = vmatmul.mubr.bf16.gmra.mxu0 %v8187
        %v8322 = vpop.f32.mrf.mxu0
        %v8323 = vadd.f32 0.0, %v8322
        %v8324 = vpop.f32.mrf.mxu0
        %v8325 = vadd.f32 0.0, %v8324
        %v8326 = vpop.f32.mrf.mxu0
        %v8327 = vadd.f32 0.0, %v8326
        %v8328 = vpop.f32.mrf.mxu0
        %v8329 = vadd.f32 0.0, %v8328
        %8330 = vmatprep.mubr.bf16.mxu0 0
        %8331 = vmatmul.mubr.bf16.gmra.mxu0 %v8190
        %v8332 = vpop.f32.mrf.mxu0
        %v8333 = vadd.f32 0.0, %v8332
        %v8334 = vpop.f32.mrf.mxu0
        %v8335 = vadd.f32 0.0, %v8334
        %v8336 = vpop.f32.mrf.mxu0
        %v8337 = vadd.f32 0.0, %v8336
        %v8338 = vpop.f32.mrf.mxu0
        %v8339 = vadd.f32 0.0, %v8338
        %8340 = vdwg.mxu0
        %v8341 = vadd.f32 %v8075, %v8233
        %v8342 = vadd.f32 %v8076, %v8235
        %v8343 = vadd.f32 %v8077, %v8237
        %v8344 = vadd.f32 %v8078, %v8239
        %v8345 = vadd.f32 %v8079, %v8243
        %v8346 = vadd.f32 %v8080, %v8245
        %v8347 = vadd.f32 %v8081, %v8247
        %v8348 = vadd.f32 %v8082, %v8249
        %v8349 = vadd.f32 %v8083, %v8253
        %v8350 = vadd.f32 %v8084, %v8255
        %v8351 = vadd.f32 %v8085, %v8257
        %v8352 = vadd.f32 %v8086, %v8259
        %v8353 = vadd.f32 %v8087, %v8263
        %v8354 = vadd.f32 %v8088, %v8265
        %v8355 = vadd.f32 %v8089, %v8267
        %v8356 = vadd.f32 %v8090, %v8269
        %v8357 = vadd.f32 %v8091, %v8273
        %v8358 = vadd.f32 %v8092, %v8275
        %v8359 = vadd.f32 %v8093, %v8277
        %v8360 = vadd.f32 %v8094, %v8279
        %v8361 = vadd.f32 %v8095, %v8283
        %v8362 = vadd.f32 %v8096, %v8285
        %v8363 = vadd.f32 %v8097, %v8287
        %v8364 = vadd.f32 %v8098, %v8289
        %v8365 = vadd.f32 %v8099, %v8293
        %v8366 = vadd.f32 %v8100, %v8295
        %v8367 = vadd.f32 %v8101, %v8297
        %v8368 = vadd.f32 %v8102, %v8299
        %v8369 = vadd.f32 %v8103, %v8303
        %v8370 = vadd.f32 %v8104, %v8305
        %v8371 = vadd.f32 %v8105, %v8307
        %v8372 = vadd.f32 %v8106, %v8309
        %v8373 = vadd.f32 %v8107, %v8313
        %v8374 = vadd.f32 %v8108, %v8315
        %v8375 = vadd.f32 %v8109, %v8317
        %v8376 = vadd.f32 %v8110, %v8319
        %v8377 = vadd.f32 %v8111, %v8323
        %v8378 = vadd.f32 %v8112, %v8325
        %v8379 = vadd.f32 %v8113, %v8327
        %v8380 = vadd.f32 %v8114, %v8329
        %v8381 = vadd.f32 %v8115, %v8333
        %v8382 = vadd.f32 %v8116, %v8335
        %v8383 = vadd.f32 %v8117, %v8337
        %v8384 = vadd.f32 %v8118, %v8339
        %v8385 = vld [vmem:[%s344 + $0x87] sm:$0xff]
        %v8386 = vld [vmem:[%s344 + $0x8f] sm:$0xff]
        %v8387 = vld [vmem:[%s344 + $0x97] sm:$0xff]
        %v8388 = vld [vmem:[%s344 + $0x9f] sm:$0xff]
        %v8389 = vld [vmem:[%s344 + $0xa7] sm:$0xff]
        %v8390 = vld [vmem:[%s344 + $0xaf] sm:$0xff]
        %v8391 = vld [vmem:[%s344 + $0xb7] sm:$0xff]
        %v8392 = vld [vmem:[%s344 + $0xbf] sm:$0xff]
        %v8393 = vld [vmem:[%s344 + $0xc7] sm:$0xff]
        %v8394 = vld [vmem:[%s344 + $0xcf] sm:$0xff]
        %v8395 = vld [vmem:[%s344 + $0xd7] sm:$0xff]
        %v8396 = vld [vmem:[%s344 + $0xdf] sm:$0xff]
        %v8397 = vld [vmem:[%s344 + $0xe7] sm:$0xff]
        %v8398 = vld [vmem:[%s344 + $0xef] sm:$0xff]
        %v8399 = vld [vmem:[%s344 + $0xf7] sm:$0xff]
        %v8400 = vld [vmem:[%s344 + $0xff] sm:$0xff]
        %v8401 = vld [vmem:[%s344 + $0x107] sm:$0xff]
        %v8402 = vld [vmem:[%s344 + $0x10f] sm:$0xff]
        %v8403 = vld [vmem:[%s344 + $0x117] sm:$0xff]
        %v8404 = vld [vmem:[%s344 + $0x11f] sm:$0xff]
        %v8405 = vld [vmem:[%s344 + $0x127] sm:$0xff]
        %v8406 = vld [vmem:[%s344 + $0x12f] sm:$0xff]
        %v8407 = vpack.c.bf16 %v8386, %v8385
        %v8408 = vpack.c.bf16 %v8388, %v8387
        %v8409 = vpack.c.bf16 %v8390, %v8389
        %v8410 = vpack.c.bf16 %v8392, %v8391
        %v8411 = vpack.c.bf16 %v8394, %v8393
        %v8412 = vpack.c.bf16 %v8396, %v8395
        %v8413 = vpack.c.bf16 %v8398, %v8397
        %v8414 = vpack.c.bf16 %v8400, %v8399
        %v8415 = vpack.c.bf16 %v8402, %v8401
        %v8416 = vpack.c.bf16 %v8404, %v8403
        %v8417 = vpack.c.bf16 %v8406, %v8405
        %s8418 = scalar_lea.vmem %s2, 200
        %v8419 = vld [vmem:[%s8418] sm:$0xff]
        %v8421 = vunpack.c.l.b16 %v8419
        %v8422 = vunpack.c.h.b16 %v8419
        %v8423 = vpack.c.b16 %v8421, %v8421
        %v8424 = vpack.c.b16 %v8422, %v8422
        %v8426 = vsel %vm391, %v8407, 0
        %v8429 = vsel %vm391, %v8408, 0
        %v8432 = vsel %vm391, %v8409, 0
        %v8435 = vsel %vm391, %v8410, 0
        %v8438 = vsel %vm391, %v8411, 0
        %v8441 = vsel %vm391, %v8412, 0
        %v8444 = vsel %vm391, %v8413, 0
        %v8447 = vsel %vm391, %v8414, 0
        %v8450 = vsel %vm391, %v8415, 0
        %v8453 = vsel %vm391, %v8416, 0
        %v8456 = vsel %vm391, %v8417, 0
        %v8459 = vsel %vm425, %v8423, 0
        %v8462 = vsel %vm425, %v8424, 0
        %8464 = vmatprep.subr.bf16.mxu0 0
        %8465 = vmatpush1.bf16.msra.mxu0 0
        %8466 = vmatprep.subr.bf16.mxu0 0
        %8467 = vmatpush1.bf16.msra.mxu0 0
        %8468 = vmatprep.subr.bf16.mxu0 0
        %8469 = vmatpush1.bf16.msra.mxu0 0
        %8470 = vmatprep.subr.bf16.mxu0 0
        %8471 = vmatpush1.bf16.msra.mxu0 0
        %8472 = vmatprep.subr.bf16.mxu0 0
        %8473 = vmatpush1.bf16.msra.mxu0 0
        %8474 = vmatprep.subr.bf16.mxu0 0
        %8475 = vmatpush1.bf16.msra.mxu0 0
        %8476 = vmatprep.subr.bf16.mxu0 0
        %8477 = vmatpush1.bf16.msra.mxu0 0
        %8478 = vmatprep.subr.bf16.mxu0 %v8462
        %8479 = vmatpush1.bf16.msra.mxu0 %v8459
        %8480 = vmatprep.subr.bf16.mxu0 0
        %8481 = vmatpush2.bf16.msra.mxu0 0
        %8482 = vmatprep.subr.bf16.mxu0 0
        %8483 = vmatpush2.bf16.msra.mxu0 0
        %8484 = vmatprep.subr.bf16.mxu0 0
        %8485 = vmatpush2.bf16.msra.mxu0 0
        %8486 = vmatprep.subr.bf16.mxu0 0
        %8487 = vmatpush2.bf16.msra.mxu0 0
        %8488 = vmatprep.subr.bf16.mxu0 0
        %8489 = vmatpush2.bf16.msra.mxu0 0
        %8490 = vmatprep.subr.bf16.mxu0 0
        %8491 = vmatpush2.bf16.msra.mxu0 0
        %8492 = vmatprep.subr.bf16.mxu0 0
        %8493 = vmatpush2.bf16.msra.mxu0 0
        %8494 = vmatprep.subr.bf16.mxu0 0
        %8495 = vmatpush2.bf16.msra.mxu0 0
        %8496 = vmatprep.mubr.bf16.mxu0 0
        %8497 = vmatmul.mubr.bf16.gmra.mxu0 %v8426
        %v8498 = vpop.f32.mrf.mxu0
        %v8499 = vadd.f32 0.0, %v8498
        %v8500 = vpop.f32.mrf.mxu0
        %v8501 = vadd.f32 0.0, %v8500
        %v8502 = vpop.f32.mrf.mxu0
        %v8503 = vadd.f32 0.0, %v8502
        %v8504 = vpop.f32.mrf.mxu0
        %v8505 = vadd.f32 0.0, %v8504
        %8506 = vmatprep.mubr.bf16.mxu0 0
        %8507 = vmatmul.mubr.bf16.gmra.mxu0 %v8429
        %v8508 = vpop.f32.mrf.mxu0
        %v8509 = vadd.f32 0.0, %v8508
        %v8510 = vpop.f32.mrf.mxu0
        %v8511 = vadd.f32 0.0, %v8510
        %v8512 = vpop.f32.mrf.mxu0
        %v8513 = vadd.f32 0.0, %v8512
        %v8514 = vpop.f32.mrf.mxu0
        %v8515 = vadd.f32 0.0, %v8514
        %8516 = vmatprep.mubr.bf16.mxu0 0
        %8517 = vmatmul.mubr.bf16.gmra.mxu0 %v8432
        %v8518 = vpop.f32.mrf.mxu0
        %v8519 = vadd.f32 0.0, %v8518
        %v8520 = vpop.f32.mrf.mxu0
        %v8521 = vadd.f32 0.0, %v8520
        %v8522 = vpop.f32.mrf.mxu0
        %v8523 = vadd.f32 0.0, %v8522
        %v8524 = vpop.f32.mrf.mxu0
        %v8525 = vadd.f32 0.0, %v8524
        %8526 = vmatprep.mubr.bf16.mxu0 0
        %8527 = vmatmul.mubr.bf16.gmra.mxu0 %v8435
        %v8528 = vpop.f32.mrf.mxu0
        %v8529 = vadd.f32 0.0, %v8528
        %v8530 = vpop.f32.mrf.mxu0
        %v8531 = vadd.f32 0.0, %v8530
        %v8532 = vpop.f32.mrf.mxu0
        %v8533 = vadd.f32 0.0, %v8532
        %v8534 = vpop.f32.mrf.mxu0
        %v8535 = vadd.f32 0.0, %v8534
        %8536 = vmatprep.mubr.bf16.mxu0 0
        %8537 = vmatmul.mubr.bf16.gmra.mxu0 %v8438
        %v8538 = vpop.f32.mrf.mxu0
        %v8539 = vadd.f32 0.0, %v8538
        %v8540 = vpop.f32.mrf.mxu0
        %v8541 = vadd.f32 0.0, %v8540
        %v8542 = vpop.f32.mrf.mxu0
        %v8543 = vadd.f32 0.0, %v8542
        %v8544 = vpop.f32.mrf.mxu0
        %v8545 = vadd.f32 0.0, %v8544
        %8546 = vmatprep.mubr.bf16.mxu0 0
        %8547 = vmatmul.mubr.bf16.gmra.mxu0 %v8441
        %v8548 = vpop.f32.mrf.mxu0
        %v8549 = vadd.f32 0.0, %v8548
        %v8550 = vpop.f32.mrf.mxu0
        %v8551 = vadd.f32 0.0, %v8550
        %v8552 = vpop.f32.mrf.mxu0
        %v8553 = vadd.f32 0.0, %v8552
        %v8554 = vpop.f32.mrf.mxu0
        %v8555 = vadd.f32 0.0, %v8554
        %8556 = vmatprep.mubr.bf16.mxu0 0
        %8557 = vmatmul.mubr.bf16.gmra.mxu0 %v8444
        %v8558 = vpop.f32.mrf.mxu0
        %v8559 = vadd.f32 0.0, %v8558
        %v8560 = vpop.f32.mrf.mxu0
        %v8561 = vadd.f32 0.0, %v8560
        %v8562 = vpop.f32.mrf.mxu0
        %v8563 = vadd.f32 0.0, %v8562
        %v8564 = vpop.f32.mrf.mxu0
        %v8565 = vadd.f32 0.0, %v8564
        %8566 = vmatprep.mubr.bf16.mxu0 0
        %8567 = vmatmul.mubr.bf16.gmra.mxu0 %v8447
        %v8568 = vpop.f32.mrf.mxu0
        %v8569 = vadd.f32 0.0, %v8568
        %v8570 = vpop.f32.mrf.mxu0
        %v8571 = vadd.f32 0.0, %v8570
        %v8572 = vpop.f32.mrf.mxu0
        %v8573 = vadd.f32 0.0, %v8572
        %v8574 = vpop.f32.mrf.mxu0
        %v8575 = vadd.f32 0.0, %v8574
        %8576 = vmatprep.mubr.bf16.mxu0 0
        %8577 = vmatmul.mubr.bf16.gmra.mxu0 %v8450
        %v8578 = vpop.f32.mrf.mxu0
        %v8579 = vadd.f32 0.0, %v8578
        %v8580 = vpop.f32.mrf.mxu0
        %v8581 = vadd.f32 0.0, %v8580
        %v8582 = vpop.f32.mrf.mxu0
        %v8583 = vadd.f32 0.0, %v8582
        %v8584 = vpop.f32.mrf.mxu0
        %v8585 = vadd.f32 0.0, %v8584
        %8586 = vmatprep.mubr.bf16.mxu0 0
        %8587 = vmatmul.mubr.bf16.gmra.mxu0 %v8453
        %v8588 = vpop.f32.mrf.mxu0
        %v8589 = vadd.f32 0.0, %v8588
        %v8590 = vpop.f32.mrf.mxu0
        %v8591 = vadd.f32 0.0, %v8590
        %v8592 = vpop.f32.mrf.mxu0
        %v8593 = vadd.f32 0.0, %v8592
        %v8594 = vpop.f32.mrf.mxu0
        %v8595 = vadd.f32 0.0, %v8594
        %8596 = vmatprep.mubr.bf16.mxu0 0
        %8597 = vmatmul.mubr.bf16.gmra.mxu0 %v8456
        %v8598 = vpop.f32.mrf.mxu0
        %v8599 = vadd.f32 0.0, %v8598
        %v8600 = vpop.f32.mrf.mxu0
        %v8601 = vadd.f32 0.0, %v8600
        %v8602 = vpop.f32.mrf.mxu0
        %v8603 = vadd.f32 0.0, %v8602
        %v8604 = vpop.f32.mrf.mxu0
        %v8605 = vadd.f32 0.0, %v8604
        %8606 = vdwg.mxu0
        %v8607 = vadd.f32 %v8341, %v8499
        %v8608 = vadd.f32 %v8342, %v8501
        %v8609 = vadd.f32 %v8343, %v8503
        %v8610 = vadd.f32 %v8344, %v8505
        %v8611 = vadd.f32 %v8345, %v8509
        %v8612 = vadd.f32 %v8346, %v8511
        %v8613 = vadd.f32 %v8347, %v8513
        %v8614 = vadd.f32 %v8348, %v8515
        %v8615 = vadd.f32 %v8349, %v8519
        %v8616 = vadd.f32 %v8350, %v8521
        %v8617 = vadd.f32 %v8351, %v8523
        %v8618 = vadd.f32 %v8352, %v8525
        %v8619 = vadd.f32 %v8353, %v8529
        %v8620 = vadd.f32 %v8354, %v8531
        %v8621 = vadd.f32 %v8355, %v8533
        %v8622 = vadd.f32 %v8356, %v8535
        %v8623 = vadd.f32 %v8357, %v8539
        %v8624 = vadd.f32 %v8358, %v8541
        %v8625 = vadd.f32 %v8359, %v8543
        %v8626 = vadd.f32 %v8360, %v8545
        %v8627 = vadd.f32 %v8361, %v8549
        %v8628 = vadd.f32 %v8362, %v8551
        %v8629 = vadd.f32 %v8363, %v8553
        %v8630 = vadd.f32 %v8364, %v8555
        %v8631 = vadd.f32 %v8365, %v8559
        %v8632 = vadd.f32 %v8366, %v8561
        %v8633 = vadd.f32 %v8367, %v8563
        %v8634 = vadd.f32 %v8368, %v8565
        %v8635 = vadd.f32 %v8369, %v8569
        %v8636 = vadd.f32 %v8370, %v8571
        %v8637 = vadd.f32 %v8371, %v8573
        %v8638 = vadd.f32 %v8372, %v8575
        %v8639 = vadd.f32 %v8373, %v8579
        %v8640 = vadd.f32 %v8374, %v8581
        %v8641 = vadd.f32 %v8375, %v8583
        %v8642 = vadd.f32 %v8376, %v8585
        %v8643 = vadd.f32 %v8377, %v8589
        %v8644 = vadd.f32 %v8378, %v8591
        %v8645 = vadd.f32 %v8379, %v8593
        %v8646 = vadd.f32 %v8380, %v8595
        %v8647 = vadd.f32 %v8381, %v8599
        %v8648 = vadd.f32 %v8382, %v8601
        %v8649 = vadd.f32 %v8383, %v8603
        %v8650 = vadd.f32 %v8384, %v8605
        %v8651 = vld [vmem:[%s344 + $0x8a] sm:$0xff]
        %v8652 = vld [vmem:[%s344 + $0x92] sm:$0xff]
        %v8653 = vld [vmem:[%s344 + $0x9a] sm:$0xff]
        %v8654 = vld [vmem:[%s344 + $0xa2] sm:$0xff]
        %v8655 = vld [vmem:[%s344 + $0xaa] sm:$0xff]
        %v8656 = vld [vmem:[%s344 + $0xb2] sm:$0xff]
        %v8657 = vld [vmem:[%s344 + $0xba] sm:$0xff]
        %v8658 = vld [vmem:[%s344 + $0xc2] sm:$0xff]
        %v8659 = vld [vmem:[%s344 + $0xca] sm:$0xff]
        %v8660 = vld [vmem:[%s344 + $0xd2] sm:$0xff]
        %v8661 = vld [vmem:[%s344 + $0xda] sm:$0xff]
        %v8662 = vld [vmem:[%s344 + $0xe2] sm:$0xff]
        %v8663 = vld [vmem:[%s344 + $0xea] sm:$0xff]
        %v8664 = vld [vmem:[%s344 + $0xf2] sm:$0xff]
        %v8665 = vld [vmem:[%s344 + $0xfa] sm:$0xff]
        %v8666 = vld [vmem:[%s344 + $0x102] sm:$0xff]
        %v8667 = vld [vmem:[%s344 + $0x10a] sm:$0xff]
        %v8668 = vld [vmem:[%s344 + $0x112] sm:$0xff]
        %v8669 = vld [vmem:[%s344 + $0x11a] sm:$0xff]
        %v8670 = vld [vmem:[%s344 + $0x122] sm:$0xff]
        %v8671 = vld [vmem:[%s344 + $0x12a] sm:$0xff]
        %v8672 = vld [vmem:[%s344 + $0x132] sm:$0xff]
        %v8673 = vpack.c.bf16 %v8652, %v8651
        %v8674 = vpack.c.bf16 %v8654, %v8653
        %v8675 = vpack.c.bf16 %v8656, %v8655
        %v8676 = vpack.c.bf16 %v8658, %v8657
        %v8677 = vpack.c.bf16 %v8660, %v8659
        %v8678 = vpack.c.bf16 %v8662, %v8661
        %v8679 = vpack.c.bf16 %v8664, %v8663
        %v8680 = vpack.c.bf16 %v8666, %v8665
        %v8681 = vpack.c.bf16 %v8668, %v8667
        %v8682 = vpack.c.bf16 %v8670, %v8669
        %v8683 = vpack.c.bf16 %v8672, %v8671
        %s8684 = scalar_lea.vmem %s2, 208
        %v8685 = vld [vmem:[%s8684] sm:$0xff]
        %v8687 = vunpack.c.l.b16 %v8685
        %v8688 = vunpack.c.h.b16 %v8685
        %v8689 = vpack.c.b16 %v8687, %v8687
        %v8690 = vpack.c.b16 %v8688, %v8688
        %v8692 = vsel %vm391, %v8673, 0
        %v8695 = vsel %vm391, %v8674, 0
        %v8698 = vsel %vm391, %v8675, 0
        %v8701 = vsel %vm391, %v8676, 0
        %v8704 = vsel %vm391, %v8677, 0
        %v8707 = vsel %vm391, %v8678, 0
        %v8710 = vsel %vm391, %v8679, 0
        %v8713 = vsel %vm391, %v8680, 0
        %v8716 = vsel %vm391, %v8681, 0
        %v8719 = vsel %vm391, %v8682, 0
        %v8722 = vsel %vm391, %v8683, 0
        %v8725 = vsel %vm425, %v8689, 0
        %v8728 = vsel %vm425, %v8690, 0
        %8730 = vmatprep.subr.bf16.mxu0 0
        %8731 = vmatpush1.bf16.msra.mxu0 0
        %8732 = vmatprep.subr.bf16.mxu0 0
        %8733 = vmatpush1.bf16.msra.mxu0 0
        %8734 = vmatprep.subr.bf16.mxu0 0
        %8735 = vmatpush1.bf16.msra.mxu0 0
        %8736 = vmatprep.subr.bf16.mxu0 0
        %8737 = vmatpush1.bf16.msra.mxu0 0
        %8738 = vmatprep.subr.bf16.mxu0 0
        %8739 = vmatpush1.bf16.msra.mxu0 0
        %8740 = vmatprep.subr.bf16.mxu0 0
        %8741 = vmatpush1.bf16.msra.mxu0 0
        %8742 = vmatprep.subr.bf16.mxu0 0
        %8743 = vmatpush1.bf16.msra.mxu0 0
        %8744 = vmatprep.subr.bf16.mxu0 %v8728
        %8745 = vmatpush1.bf16.msra.mxu0 %v8725
        %8746 = vmatprep.subr.bf16.mxu0 0
        %8747 = vmatpush2.bf16.msra.mxu0 0
        %8748 = vmatprep.subr.bf16.mxu0 0
        %8749 = vmatpush2.bf16.msra.mxu0 0
        %8750 = vmatprep.subr.bf16.mxu0 0
        %8751 = vmatpush2.bf16.msra.mxu0 0
        %8752 = vmatprep.subr.bf16.mxu0 0
        %8753 = vmatpush2.bf16.msra.mxu0 0
        %8754 = vmatprep.subr.bf16.mxu0 0
        %8755 = vmatpush2.bf16.msra.mxu0 0
        %8756 = vmatprep.subr.bf16.mxu0 0
        %8757 = vmatpush2.bf16.msra.mxu0 0
        %8758 = vmatprep.subr.bf16.mxu0 0
        %8759 = vmatpush2.bf16.msra.mxu0 0
        %8760 = vmatprep.subr.bf16.mxu0 0
        %8761 = vmatpush2.bf16.msra.mxu0 0
        %8762 = vmatprep.mubr.bf16.mxu0 0
        %8763 = vmatmul.mubr.bf16.gmra.mxu0 %v8692
        %v8764 = vpop.f32.mrf.mxu0
        %v8765 = vadd.f32 0.0, %v8764
        %v8766 = vpop.f32.mrf.mxu0
        %v8767 = vadd.f32 0.0, %v8766
        %v8768 = vpop.f32.mrf.mxu0
        %v8769 = vadd.f32 0.0, %v8768
        %v8770 = vpop.f32.mrf.mxu0
        %v8771 = vadd.f32 0.0, %v8770
        %8772 = vmatprep.mubr.bf16.mxu0 0
        %8773 = vmatmul.mubr.bf16.gmra.mxu0 %v8695
        %v8774 = vpop.f32.mrf.mxu0
        %v8775 = vadd.f32 0.0, %v8774
        %v8776 = vpop.f32.mrf.mxu0
        %v8777 = vadd.f32 0.0, %v8776
        %v8778 = vpop.f32.mrf.mxu0
        %v8779 = vadd.f32 0.0, %v8778
        %v8780 = vpop.f32.mrf.mxu0
        %v8781 = vadd.f32 0.0, %v8780
        %8782 = vmatprep.mubr.bf16.mxu0 0
        %8783 = vmatmul.mubr.bf16.gmra.mxu0 %v8698
        %v8784 = vpop.f32.mrf.mxu0
        %v8785 = vadd.f32 0.0, %v8784
        %v8786 = vpop.f32.mrf.mxu0
        %v8787 = vadd.f32 0.0, %v8786
        %v8788 = vpop.f32.mrf.mxu0
        %v8789 = vadd.f32 0.0, %v8788
        %v8790 = vpop.f32.mrf.mxu0
        %v8791 = vadd.f32 0.0, %v8790
        %8792 = vmatprep.mubr.bf16.mxu0 0
        %8793 = vmatmul.mubr.bf16.gmra.mxu0 %v8701
        %v8794 = vpop.f32.mrf.mxu0
        %v8795 = vadd.f32 0.0, %v8794
        %v8796 = vpop.f32.mrf.mxu0
        %v8797 = vadd.f32 0.0, %v8796
        %v8798 = vpop.f32.mrf.mxu0
        %v8799 = vadd.f32 0.0, %v8798
        %v8800 = vpop.f32.mrf.mxu0
        %v8801 = vadd.f32 0.0, %v8800
        %8802 = vmatprep.mubr.bf16.mxu0 0
        %8803 = vmatmul.mubr.bf16.gmra.mxu0 %v8704
        %v8804 = vpop.f32.mrf.mxu0
        %v8805 = vadd.f32 0.0, %v8804
        %v8806 = vpop.f32.mrf.mxu0
        %v8807 = vadd.f32 0.0, %v8806
        %v8808 = vpop.f32.mrf.mxu0
        %v8809 = vadd.f32 0.0, %v8808
        %v8810 = vpop.f32.mrf.mxu0
        %v8811 = vadd.f32 0.0, %v8810
        %8812 = vmatprep.mubr.bf16.mxu0 0
        %8813 = vmatmul.mubr.bf16.gmra.mxu0 %v8707
        %v8814 = vpop.f32.mrf.mxu0
        %v8815 = vadd.f32 0.0, %v8814
        %v8816 = vpop.f32.mrf.mxu0
        %v8817 = vadd.f32 0.0, %v8816
        %v8818 = vpop.f32.mrf.mxu0
        %v8819 = vadd.f32 0.0, %v8818
        %v8820 = vpop.f32.mrf.mxu0
        %v8821 = vadd.f32 0.0, %v8820
        %8822 = vmatprep.mubr.bf16.mxu0 0
        %8823 = vmatmul.mubr.bf16.gmra.mxu0 %v8710
        %v8824 = vpop.f32.mrf.mxu0
        %v8825 = vadd.f32 0.0, %v8824
        %v8826 = vpop.f32.mrf.mxu0
        %v8827 = vadd.f32 0.0, %v8826
        %v8828 = vpop.f32.mrf.mxu0
        %v8829 = vadd.f32 0.0, %v8828
        %v8830 = vpop.f32.mrf.mxu0
        %v8831 = vadd.f32 0.0, %v8830
        %8832 = vmatprep.mubr.bf16.mxu0 0
        %8833 = vmatmul.mubr.bf16.gmra.mxu0 %v8713
        %v8834 = vpop.f32.mrf.mxu0
        %v8835 = vadd.f32 0.0, %v8834
        %v8836 = vpop.f32.mrf.mxu0
        %v8837 = vadd.f32 0.0, %v8836
        %v8838 = vpop.f32.mrf.mxu0
        %v8839 = vadd.f32 0.0, %v8838
        %v8840 = vpop.f32.mrf.mxu0
        %v8841 = vadd.f32 0.0, %v8840
        %8842 = vmatprep.mubr.bf16.mxu0 0
        %8843 = vmatmul.mubr.bf16.gmra.mxu0 %v8716
        %v8844 = vpop.f32.mrf.mxu0
        %v8845 = vadd.f32 0.0, %v8844
        %v8846 = vpop.f32.mrf.mxu0
        %v8847 = vadd.f32 0.0, %v8846
        %v8848 = vpop.f32.mrf.mxu0
        %v8849 = vadd.f32 0.0, %v8848
        %v8850 = vpop.f32.mrf.mxu0
        %v8851 = vadd.f32 0.0, %v8850
        %8852 = vmatprep.mubr.bf16.mxu0 0
        %8853 = vmatmul.mubr.bf16.gmra.mxu0 %v8719
        %v8854 = vpop.f32.mrf.mxu0
        %v8855 = vadd.f32 0.0, %v8854
        %v8856 = vpop.f32.mrf.mxu0
        %v8857 = vadd.f32 0.0, %v8856
        %v8858 = vpop.f32.mrf.mxu0
        %v8859 = vadd.f32 0.0, %v8858
        %v8860 = vpop.f32.mrf.mxu0
        %v8861 = vadd.f32 0.0, %v8860
        %8862 = vmatprep.mubr.bf16.mxu0 0
        %8863 = vmatmul.mubr.bf16.gmra.mxu0 %v8722
        %v8864 = vpop.f32.mrf.mxu0
        %v8865 = vadd.f32 0.0, %v8864
        %v8866 = vpop.f32.mrf.mxu0
        %v8867 = vadd.f32 0.0, %v8866
        %v8868 = vpop.f32.mrf.mxu0
        %v8869 = vadd.f32 0.0, %v8868
        %v8870 = vpop.f32.mrf.mxu0
        %v8871 = vadd.f32 0.0, %v8870
        %8872 = vdwg.mxu0
        %v8873 = vadd.f32 %v8607, %v8765
        %v8874 = vadd.f32 %v8608, %v8767
        %v8875 = vadd.f32 %v8609, %v8769
        %v8876 = vadd.f32 %v8610, %v8771
        %v8877 = vadd.f32 %v8611, %v8775
        %v8878 = vadd.f32 %v8612, %v8777
        %v8879 = vadd.f32 %v8613, %v8779
        %v8880 = vadd.f32 %v8614, %v8781
        %v8881 = vadd.f32 %v8615, %v8785
        %v8882 = vadd.f32 %v8616, %v8787
        %v8883 = vadd.f32 %v8617, %v8789
        %v8884 = vadd.f32 %v8618, %v8791
        %v8885 = vadd.f32 %v8619, %v8795
        %v8886 = vadd.f32 %v8620, %v8797
        %v8887 = vadd.f32 %v8621, %v8799
        %v8888 = vadd.f32 %v8622, %v8801
        %v8889 = vadd.f32 %v8623, %v8805
        %v8890 = vadd.f32 %v8624, %v8807
        %v8891 = vadd.f32 %v8625, %v8809
        %v8892 = vadd.f32 %v8626, %v8811
        %v8893 = vadd.f32 %v8627, %v8815
        %v8894 = vadd.f32 %v8628, %v8817
        %v8895 = vadd.f32 %v8629, %v8819
        %v8896 = vadd.f32 %v8630, %v8821
        %v8897 = vadd.f32 %v8631, %v8825
        %v8898 = vadd.f32 %v8632, %v8827
        %v8899 = vadd.f32 %v8633, %v8829
        %v8900 = vadd.f32 %v8634, %v8831
        %v8901 = vadd.f32 %v8635, %v8835
        %v8902 = vadd.f32 %v8636, %v8837
        %v8903 = vadd.f32 %v8637, %v8839
        %v8904 = vadd.f32 %v8638, %v8841
        %v8905 = vadd.f32 %v8639, %v8845
        %v8906 = vadd.f32 %v8640, %v8847
        %v8907 = vadd.f32 %v8641, %v8849
        %v8908 = vadd.f32 %v8642, %v8851
        %v8909 = vadd.f32 %v8643, %v8855
        %v8910 = vadd.f32 %v8644, %v8857
        %v8911 = vadd.f32 %v8645, %v8859
        %v8912 = vadd.f32 %v8646, %v8861
        %v8913 = vadd.f32 %v8647, %v8865
        %v8914 = vadd.f32 %v8648, %v8867
        %v8915 = vadd.f32 %v8649, %v8869
        %v8916 = vadd.f32 %v8650, %v8871
        %v8917 = vlaneseq
        %v8918 = vshrl.u32 %v8917, 7
        %v8919 = vsub.s32 3, %v8918
        %v8920 = vrot.slane %v350, %v8919
        %v8921 = vlaneseq
        %v8922 = vshrl.u32 %v8921, 7
        %v8923 = vsub.s32 7, %v8922
        %v8924 = vrot.slane %v350, %v8923
        %v8927 = vlaneseq
        %v8928 = vshrl.u32 %v8927, 7
        %v8929 = vsub.s32 3, %v8928
        %v8930 = vrot.slane %v8920, %v8929
        %v8931 = vlaneseq
        %v8932 = vshrl.u32 %v8931, 7
        %v8933 = vsub.s32 3, %v8932
        %v8934 = vrot.slane %v8924, %v8933
        %v8935 = vmul.f32 %v8873, %v8930
        %v8936 = vmul.f32 %v8874, %v8934
        %v8937 = vmul.f32 %v8875, %v8930
        %v8938 = vmul.f32 %v8876, %v8934
        %v8939 = vmul.f32 %v8877, %v8930
        %v8940 = vmul.f32 %v8878, %v8934
        %v8941 = vmul.f32 %v8879, %v8930
        %v8942 = vmul.f32 %v8880, %v8934
        %v8943 = vmul.f32 %v8881, %v8930
        %v8944 = vmul.f32 %v8882, %v8934
        %v8945 = vmul.f32 %v8883, %v8930
        %v8946 = vmul.f32 %v8884, %v8934
        %v8947 = vmul.f32 %v8885, %v8930
        %v8948 = vmul.f32 %v8886, %v8934
        %v8949 = vmul.f32 %v8887, %v8930
        %v8950 = vmul.f32 %v8888, %v8934
        %v8951 = vmul.f32 %v8889, %v8930
        %v8952 = vmul.f32 %v8890, %v8934
        %v8953 = vmul.f32 %v8891, %v8930
        %v8954 = vmul.f32 %v8892, %v8934
        %v8955 = vmul.f32 %v8893, %v8930
        %v8956 = vmul.f32 %v8894, %v8934
        %v8957 = vmul.f32 %v8895, %v8930
        %v8958 = vmul.f32 %v8896, %v8934
        %v8959 = vmul.f32 %v8897, %v8930
        %v8960 = vmul.f32 %v8898, %v8934
        %v8961 = vmul.f32 %v8899, %v8930
        %v8962 = vmul.f32 %v8900, %v8934
        %v8963 = vmul.f32 %v8901, %v8930
        %v8964 = vmul.f32 %v8902, %v8934
        %v8965 = vmul.f32 %v8903, %v8930
        %v8966 = vmul.f32 %v8904, %v8934
        %v8967 = vmul.f32 %v8905, %v8930
        %v8968 = vmul.f32 %v8906, %v8934
        %v8969 = vmul.f32 %v8907, %v8930
        %v8970 = vmul.f32 %v8908, %v8934
        %v8971 = vmul.f32 %v8909, %v8930
        %v8972 = vmul.f32 %v8910, %v8934
        %v8973 = vmul.f32 %v8911, %v8930
        %v8974 = vmul.f32 %v8912, %v8934
        %v8975 = vmul.f32 %v8913, %v8930
        %v8976 = vmul.f32 %v8914, %v8934
        %v8977 = vmul.f32 %v8915, %v8930
        %v8978 = vmul.f32 %v8916, %v8934
        %v8979 = vlaneseq
        %v8980 = vshrl.u32 %v8979, 7
        %v8981 = vsub.s32 3, %v8980
        %v8982 = vrot.slane %v351, %v8981
        %v8983 = vlaneseq
        %v8984 = vshrl.u32 %v8983, 7
        %v8985 = vsub.s32 7, %v8984
        %v8986 = vrot.slane %v351, %v8985
        %v8989 = vlaneseq
        %v8990 = vshrl.u32 %v8989, 7
        %v8991 = vsub.s32 3, %v8990
        %v8992 = vrot.slane %v8982, %v8991
        %v8993 = vlaneseq
        %v8994 = vshrl.u32 %v8993, 7
        %v8995 = vsub.s32 3, %v8994
        %v8996 = vrot.slane %v8986, %v8995
        %v8997 = vadd.f32 %v8935, %v8992
        %v8998 = vadd.f32 %v8936, %v8996
        %v8999 = vadd.f32 %v8937, %v8992
        %v9000 = vadd.f32 %v8938, %v8996
        %v9001 = vadd.f32 %v8939, %v8992
        %v9002 = vadd.f32 %v8940, %v8996
        %v9003 = vadd.f32 %v8941, %v8992
        %v9004 = vadd.f32 %v8942, %v8996
        %v9005 = vadd.f32 %v8943, %v8992
        %v9006 = vadd.f32 %v8944, %v8996
        %v9007 = vadd.f32 %v8945, %v8992
        %v9008 = vadd.f32 %v8946, %v8996
        %v9009 = vadd.f32 %v8947, %v8992
        %v9010 = vadd.f32 %v8948, %v8996
        %v9011 = vadd.f32 %v8949, %v8992
        %v9012 = vadd.f32 %v8950, %v8996
        %v9013 = vadd.f32 %v8951, %v8992
        %v9014 = vadd.f32 %v8952, %v8996
        %v9015 = vadd.f32 %v8953, %v8992
        %v9016 = vadd.f32 %v8954, %v8996
        %v9017 = vadd.f32 %v8955, %v8992
        %v9018 = vadd.f32 %v8956, %v8996
        %v9019 = vadd.f32 %v8957, %v8992
        %v9020 = vadd.f32 %v8958, %v8996
        %v9021 = vadd.f32 %v8959, %v8992
        %v9022 = vadd.f32 %v8960, %v8996
        %v9023 = vadd.f32 %v8961, %v8992
        %v9024 = vadd.f32 %v8962, %v8996
        %v9025 = vadd.f32 %v8963, %v8992
        %v9026 = vadd.f32 %v8964, %v8996
        %v9027 = vadd.f32 %v8965, %v8992
        %v9028 = vadd.f32 %v8966, %v8996
        %v9029 = vadd.f32 %v8967, %v8992
        %v9030 = vadd.f32 %v8968, %v8996
        %v9031 = vadd.f32 %v8969, %v8992
        %v9032 = vadd.f32 %v8970, %v8996
        %v9033 = vadd.f32 %v8971, %v8992
        %v9034 = vadd.f32 %v8972, %v8996
        %v9035 = vadd.f32 %v8973, %v8992
        %v9036 = vadd.f32 %v8974, %v8996
        %v9037 = vadd.f32 %v8975, %v8992
        %v9038 = vadd.f32 %v8976, %v8996
        %v9039 = vadd.f32 %v8977, %v8992
        %v9040 = vadd.f32 %v8978, %v8996
        %v9041 = vmax.f32 %v8997, 0.0
        %v9042 = vmax.f32 %v8998, 0.0
        %v9043 = vmax.f32 %v8999, 0.0
        %v9044 = vmax.f32 %v9000, 0.0
        %v9045 = vmax.f32 %v9001, 0.0
        %v9046 = vmax.f32 %v9002, 0.0
        %v9047 = vmax.f32 %v9003, 0.0
        %v9048 = vmax.f32 %v9004, 0.0
        %v9049 = vmax.f32 %v9005, 0.0
        %v9050 = vmax.f32 %v9006, 0.0
        %v9051 = vmax.f32 %v9007, 0.0
        %v9052 = vmax.f32 %v9008, 0.0
        %v9053 = vmax.f32 %v9009, 0.0
        %v9054 = vmax.f32 %v9010, 0.0
        %v9055 = vmax.f32 %v9011, 0.0
        %v9056 = vmax.f32 %v9012, 0.0
        %v9057 = vmax.f32 %v9013, 0.0
        %v9058 = vmax.f32 %v9014, 0.0
        %v9059 = vmax.f32 %v9015, 0.0
        %v9060 = vmax.f32 %v9016, 0.0
        %v9061 = vmax.f32 %v9017, 0.0
        %v9062 = vmax.f32 %v9018, 0.0
        %v9063 = vmax.f32 %v9019, 0.0
        %v9064 = vmax.f32 %v9020, 0.0
        %v9065 = vmax.f32 %v9021, 0.0
        %v9066 = vmax.f32 %v9022, 0.0
        %v9067 = vmax.f32 %v9023, 0.0
        %v9068 = vmax.f32 %v9024, 0.0
        %v9069 = vmax.f32 %v9025, 0.0
        %v9070 = vmax.f32 %v9026, 0.0
        %v9071 = vmax.f32 %v9027, 0.0
        %v9072 = vmax.f32 %v9028, 0.0
        %v9073 = vmax.f32 %v9029, 0.0
        %v9074 = vmax.f32 %v9030, 0.0
        %v9075 = vmax.f32 %v9031, 0.0
        %v9076 = vmax.f32 %v9032, 0.0
        %v9077 = vmax.f32 %v9033, 0.0
        %v9078 = vmax.f32 %v9034, 0.0
        %v9079 = vmax.f32 %v9035, 0.0
        %v9080 = vmax.f32 %v9036, 0.0
        %v9081 = vmax.f32 %v9037, 0.0
        %v9082 = vmax.f32 %v9038, 0.0
        %v9083 = vmax.f32 %v9039, 0.0
        %v9084 = vmax.f32 %v9040, 0.0
        %v9085 = vpack.c.bf16 %v9043, %v9041
        %v9086 = vpack.c.bf16 %v9044, %v9042
        %v9087 = vpack.c.bf16 %v9047, %v9045
        %v9088 = vpack.c.bf16 %v9048, %v9046
        %v9089 = vpack.c.bf16 %v9051, %v9049
        %v9090 = vpack.c.bf16 %v9052, %v9050
        %v9091 = vpack.c.bf16 %v9055, %v9053
        %v9092 = vpack.c.bf16 %v9056, %v9054
        %v9093 = vpack.c.bf16 %v9059, %v9057
        %v9094 = vpack.c.bf16 %v9060, %v9058
        %v9095 = vpack.c.bf16 %v9063, %v9061
        %v9096 = vpack.c.bf16 %v9064, %v9062
        %v9097 = vpack.c.bf16 %v9067, %v9065
        %v9098 = vpack.c.bf16 %v9068, %v9066
        %v9099 = vpack.c.bf16 %v9071, %v9069
        %v9100 = vpack.c.bf16 %v9072, %v9070
        %v9101 = vpack.c.bf16 %v9075, %v9073
        %v9102 = vpack.c.bf16 %v9076, %v9074
        %v9103 = vpack.c.bf16 %v9079, %v9077
        %v9104 = vpack.c.bf16 %v9080, %v9078
        %v9105 = vpack.c.bf16 %v9083, %v9081
        %v9106 = vpack.c.bf16 %v9084, %v9082
        %s9107 = scalar_lea.vmem %s3, 768
        %v9108 = vld [vmem:[%s9107] sm:$0xff]
        %v9109 = vld [vmem:[%s9107 + $0x8] sm:$0xff]
        %v9110 = vld [vmem:[%s9107 + $0x10] sm:$0xff]
        %v9111 = vld [vmem:[%s9107 + $0x18] sm:$0xff]
        %v9112 = vld [vmem:[%s9107 + $0x20] sm:$0xff]
        %v9113 = vld [vmem:[%s9107 + $0x28] sm:$0xff]
        %v9114 = vld [vmem:[%s9107 + $0x30] sm:$0xff]
        %v9115 = vld [vmem:[%s9107 + $0x38] sm:$0xff]
        %v9116 = vld [vmem:[%s9107 + $0x40] sm:$0xff]
        %v9117 = vld [vmem:[%s9107 + $0x48] sm:$0xff]
        %v9118 = vld [vmem:[%s9107 + $0x50] sm:$0xff]
        %v9119 = vld [vmem:[%s9107 + $0x58] sm:$0xff]
        %v9120 = vld [vmem:[%s9107 + $0x60] sm:$0xff]
        %v9121 = vld [vmem:[%s9107 + $0x68] sm:$0xff]
        %v9122 = vld [vmem:[%s9107 + $0x70] sm:$0xff]
        %v9123 = vld [vmem:[%s9107 + $0x78] sm:$0xff]
        %v9124 = vld [vmem:[%s9107 + $0x80] sm:$0xff]
        %v9125 = vld [vmem:[%s9107 + $0x88] sm:$0xff]
        %v9126 = vld [vmem:[%s9107 + $0x90] sm:$0xff]
        %v9127 = vld [vmem:[%s9107 + $0x98] sm:$0xff]
        %v9128 = vld [vmem:[%s9107 + $0xa0] sm:$0xff]
        %v9129 = vld [vmem:[%s9107 + $0xa8] sm:$0xff]
        %v9130 = vld [vmem:[%s9107 + $0xb0] sm:$0xff]
        %v9131 = vld [vmem:[%s9107 + $0xb8] sm:$0xff]
        %v9132 = vld [vmem:[%s9107 + $0xc0] sm:$0xff]
        %v9133 = vld [vmem:[%s9107 + $0xc8] sm:$0xff]
        %v9134 = vld [vmem:[%s9107 + $0xd0] sm:$0xff]
        %v9135 = vld [vmem:[%s9107 + $0xd8] sm:$0xff]
        %v9136 = vld [vmem:[%s9107 + $0xe0] sm:$0xff]
        %v9137 = vld [vmem:[%s9107 + $0xe8] sm:$0xff]
        %v9138 = vld [vmem:[%s9107 + $0xf0] sm:$0xff]
        %v9139 = vld [vmem:[%s9107 + $0xf8] sm:$0xff]
        %v9172 = vunpack.c.l.b16 %v9108
        %v9173 = vunpack.c.h.b16 %v9108
        %v9174 = vunpack.c.l.b16 %v9109
        %v9175 = vunpack.c.h.b16 %v9109
        %v9176 = vunpack.c.l.b16 %v9110
        %v9177 = vunpack.c.h.b16 %v9110
        %v9178 = vunpack.c.l.b16 %v9111
        %v9179 = vunpack.c.h.b16 %v9111
        %v9180 = vunpack.c.l.b16 %v9112
        %v9181 = vunpack.c.h.b16 %v9112
        %v9182 = vunpack.c.l.b16 %v9113
        %v9183 = vunpack.c.h.b16 %v9113
        %v9184 = vunpack.c.l.b16 %v9114
        %v9185 = vunpack.c.h.b16 %v9114
        %v9186 = vunpack.c.l.b16 %v9115
        %v9187 = vunpack.c.h.b16 %v9115
        %v9188 = vunpack.c.l.b16 %v9116
        %v9189 = vunpack.c.h.b16 %v9116
        %v9190 = vunpack.c.l.b16 %v9117
        %v9191 = vunpack.c.h.b16 %v9117
        %v9192 = vunpack.c.l.b16 %v9118
        %v9193 = vunpack.c.h.b16 %v9118
        %v9194 = vunpack.c.l.b16 %v9119
        %v9195 = vunpack.c.h.b16 %v9119
        %v9196 = vunpack.c.l.b16 %v9120
        %v9197 = vunpack.c.h.b16 %v9120
        %v9198 = vunpack.c.l.b16 %v9121
        %v9199 = vunpack.c.h.b16 %v9121
        %v9200 = vunpack.c.l.b16 %v9122
        %v9201 = vunpack.c.h.b16 %v9122
        %v9202 = vunpack.c.l.b16 %v9123
        %v9203 = vunpack.c.h.b16 %v9123
        %v9204 = vunpack.c.l.b16 %v9124
        %v9205 = vunpack.c.h.b16 %v9124
        %v9206 = vunpack.c.l.b16 %v9125
        %v9207 = vunpack.c.h.b16 %v9125
        %v9208 = vunpack.c.l.b16 %v9126
        %v9209 = vunpack.c.h.b16 %v9126
        %v9210 = vunpack.c.l.b16 %v9127
        %v9211 = vunpack.c.h.b16 %v9127
        %v9212 = vunpack.c.l.b16 %v9128
        %v9213 = vunpack.c.h.b16 %v9128
        %v9214 = vunpack.c.l.b16 %v9129
        %v9215 = vunpack.c.h.b16 %v9129
        %v9216 = vunpack.c.l.b16 %v9130
        %v9217 = vunpack.c.h.b16 %v9130
        %v9218 = vunpack.c.l.b16 %v9131
        %v9219 = vunpack.c.h.b16 %v9131
        %v9220 = vunpack.c.l.b16 %v9132
        %v9221 = vunpack.c.h.b16 %v9132
        %v9222 = vunpack.c.l.b16 %v9133
        %v9223 = vunpack.c.h.b16 %v9133
        %v9224 = vunpack.c.l.b16 %v9134
        %v9225 = vunpack.c.h.b16 %v9134
        %v9226 = vunpack.c.l.b16 %v9135
        %v9227 = vunpack.c.h.b16 %v9135
        %v9228 = vunpack.c.l.b16 %v9136
        %v9229 = vunpack.c.h.b16 %v9136
        %v9230 = vunpack.c.l.b16 %v9137
        %v9231 = vunpack.c.h.b16 %v9137
        %v9232 = vunpack.c.l.b16 %v9138
        %v9233 = vunpack.c.h.b16 %v9138
        %v9234 = vunpack.c.l.b16 %v9139
        %v9235 = vunpack.c.h.b16 %v9139
        %v9236 = vpack.c.b16 %v9174, %v9172
        %v9237 = vpack.c.b16 %v9175, %v9173
        %v9238 = vpack.c.b16 %v9178, %v9176
        %v9239 = vpack.c.b16 %v9179, %v9177
        %v9240 = vpack.c.b16 %v9182, %v9180
        %v9241 = vpack.c.b16 %v9183, %v9181
        %v9242 = vpack.c.b16 %v9186, %v9184
        %v9243 = vpack.c.b16 %v9187, %v9185
        %v9244 = vpack.c.b16 %v9190, %v9188
        %v9245 = vpack.c.b16 %v9191, %v9189
        %v9246 = vpack.c.b16 %v9194, %v9192
        %v9247 = vpack.c.b16 %v9195, %v9193
        %v9248 = vpack.c.b16 %v9198, %v9196
        %v9249 = vpack.c.b16 %v9199, %v9197
        %v9250 = vpack.c.b16 %v9202, %v9200
        %v9251 = vpack.c.b16 %v9203, %v9201
        %v9252 = vpack.c.b16 %v9206, %v9204
        %v9253 = vpack.c.b16 %v9207, %v9205
        %v9254 = vpack.c.b16 %v9210, %v9208
        %v9255 = vpack.c.b16 %v9211, %v9209
        %v9256 = vpack.c.b16 %v9214, %v9212
        %v9257 = vpack.c.b16 %v9215, %v9213
        %v9258 = vpack.c.b16 %v9218, %v9216
        %v9259 = vpack.c.b16 %v9219, %v9217
        %v9260 = vpack.c.b16 %v9222, %v9220
        %v9261 = vpack.c.b16 %v9223, %v9221
        %v9262 = vpack.c.b16 %v9226, %v9224
        %v9263 = vpack.c.b16 %v9227, %v9225
        %v9264 = vpack.c.b16 %v9230, %v9228
        %v9265 = vpack.c.b16 %v9231, %v9229
        %v9266 = vpack.c.b16 %v9234, %v9232
        %v9267 = vpack.c.b16 %v9235, %v9233
        %9300 = vmatprep.subr.bf16.mxu0 %v9251
        %9301 = vmatpush1.bf16.msra.mxu0 %v9250
        %9302 = vmatprep.subr.bf16.mxu0 %v9249
        %9303 = vmatpush1.bf16.msra.mxu0 %v9248
        %9304 = vmatprep.subr.bf16.mxu0 %v9247
        %9305 = vmatpush1.bf16.msra.mxu0 %v9246
        %9306 = vmatprep.subr.bf16.mxu0 %v9245
        %9307 = vmatpush1.bf16.msra.mxu0 %v9244
        %9308 = vmatprep.subr.bf16.mxu0 %v9243
        %9309 = vmatpush1.bf16.msra.mxu0 %v9242
        %9310 = vmatprep.subr.bf16.mxu0 %v9241
        %9311 = vmatpush1.bf16.msra.mxu0 %v9240
        %9312 = vmatprep.subr.bf16.mxu0 %v9239
        %9313 = vmatpush1.bf16.msra.mxu0 %v9238
        %9314 = vmatprep.subr.bf16.mxu0 %v9237
        %9315 = vmatpush1.bf16.msra.mxu0 %v9236
        %9316 = vmatprep.subr.bf16.mxu0 %v9267
        %9317 = vmatpush2.bf16.msra.mxu0 %v9266
        %9318 = vmatprep.subr.bf16.mxu0 %v9265
        %9319 = vmatpush2.bf16.msra.mxu0 %v9264
        %9320 = vmatprep.subr.bf16.mxu0 %v9263
        %9321 = vmatpush2.bf16.msra.mxu0 %v9262
        %9322 = vmatprep.subr.bf16.mxu0 %v9261
        %9323 = vmatpush2.bf16.msra.mxu0 %v9260
        %9324 = vmatprep.subr.bf16.mxu0 %v9259
        %9325 = vmatpush2.bf16.msra.mxu0 %v9258
        %9326 = vmatprep.subr.bf16.mxu0 %v9257
        %9327 = vmatpush2.bf16.msra.mxu0 %v9256
        %9328 = vmatprep.subr.bf16.mxu0 %v9255
        %9329 = vmatpush2.bf16.msra.mxu0 %v9254
        %9330 = vmatprep.subr.bf16.mxu0 %v9253
        %9331 = vmatpush2.bf16.msra.mxu0 %v9252
        %9332 = vmatprep.mubr.bf16.mxu0 %v9086
        %9333 = vmatmul.mubr.bf16.gmra.mxu0 %v9085
        %v9334 = vpop.f32.mrf.mxu0
        %v9335 = vadd.f32 0.0, %v9334
        %v9336 = vpop.f32.mrf.mxu0
        %v9337 = vadd.f32 0.0, %v9336
        %v9338 = vpop.f32.mrf.mxu0
        %v9339 = vadd.f32 0.0, %v9338
        %v9340 = vpop.f32.mrf.mxu0
        %v9341 = vadd.f32 0.0, %v9340
        %9342 = vmatprep.mubr.bf16.mxu0 %v9088
        %9343 = vmatmul.mubr.bf16.gmra.mxu0 %v9087
        %v9344 = vpop.f32.mrf.mxu0
        %v9345 = vadd.f32 0.0, %v9344
        %v9346 = vpop.f32.mrf.mxu0
        %v9347 = vadd.f32 0.0, %v9346
        %v9348 = vpop.f32.mrf.mxu0
        %v9349 = vadd.f32 0.0, %v9348
        %v9350 = vpop.f32.mrf.mxu0
        %v9351 = vadd.f32 0.0, %v9350
        %9352 = vmatprep.mubr.bf16.mxu0 %v9090
        %9353 = vmatmul.mubr.bf16.gmra.mxu0 %v9089
        %v9354 = vpop.f32.mrf.mxu0
        %v9355 = vadd.f32 0.0, %v9354
        %v9356 = vpop.f32.mrf.mxu0
        %v9357 = vadd.f32 0.0, %v9356
        %v9358 = vpop.f32.mrf.mxu0
        %v9359 = vadd.f32 0.0, %v9358
        %v9360 = vpop.f32.mrf.mxu0
        %v9361 = vadd.f32 0.0, %v9360
        %9362 = vmatprep.mubr.bf16.mxu0 %v9092
        %9363 = vmatmul.mubr.bf16.gmra.mxu0 %v9091
        %v9364 = vpop.f32.mrf.mxu0
        %v9365 = vadd.f32 0.0, %v9364
        %v9366 = vpop.f32.mrf.mxu0
        %v9367 = vadd.f32 0.0, %v9366
        %v9368 = vpop.f32.mrf.mxu0
        %v9369 = vadd.f32 0.0, %v9368
        %v9370 = vpop.f32.mrf.mxu0
        %v9371 = vadd.f32 0.0, %v9370
        %9372 = vmatprep.mubr.bf16.mxu0 %v9094
        %9373 = vmatmul.mubr.bf16.gmra.mxu0 %v9093
        %v9374 = vpop.f32.mrf.mxu0
        %v9375 = vadd.f32 0.0, %v9374
        %v9376 = vpop.f32.mrf.mxu0
        %v9377 = vadd.f32 0.0, %v9376
        %v9378 = vpop.f32.mrf.mxu0
        %v9379 = vadd.f32 0.0, %v9378
        %v9380 = vpop.f32.mrf.mxu0
        %v9381 = vadd.f32 0.0, %v9380
        %9382 = vmatprep.mubr.bf16.mxu0 %v9096
        %9383 = vmatmul.mubr.bf16.gmra.mxu0 %v9095
        %v9384 = vpop.f32.mrf.mxu0
        %v9385 = vadd.f32 0.0, %v9384
        %v9386 = vpop.f32.mrf.mxu0
        %v9387 = vadd.f32 0.0, %v9386
        %v9388 = vpop.f32.mrf.mxu0
        %v9389 = vadd.f32 0.0, %v9388
        %v9390 = vpop.f32.mrf.mxu0
        %v9391 = vadd.f32 0.0, %v9390
        %9392 = vmatprep.mubr.bf16.mxu0 %v9098
        %9393 = vmatmul.mubr.bf16.gmra.mxu0 %v9097
        %v9394 = vpop.f32.mrf.mxu0
        %v9395 = vadd.f32 0.0, %v9394
        %v9396 = vpop.f32.mrf.mxu0
        %v9397 = vadd.f32 0.0, %v9396
        %v9398 = vpop.f32.mrf.mxu0
        %v9399 = vadd.f32 0.0, %v9398
        %v9400 = vpop.f32.mrf.mxu0
        %v9401 = vadd.f32 0.0, %v9400
        %9402 = vmatprep.mubr.bf16.mxu0 %v9100
        %9403 = vmatmul.mubr.bf16.gmra.mxu0 %v9099
        %v9404 = vpop.f32.mrf.mxu0
        %v9405 = vadd.f32 0.0, %v9404
        %v9406 = vpop.f32.mrf.mxu0
        %v9407 = vadd.f32 0.0, %v9406
        %v9408 = vpop.f32.mrf.mxu0
        %v9409 = vadd.f32 0.0, %v9408
        %v9410 = vpop.f32.mrf.mxu0
        %v9411 = vadd.f32 0.0, %v9410
        %9412 = vmatprep.mubr.bf16.mxu0 %v9102
        %9413 = vmatmul.mubr.bf16.gmra.mxu0 %v9101
        %v9414 = vpop.f32.mrf.mxu0
        %v9415 = vadd.f32 0.0, %v9414
        %v9416 = vpop.f32.mrf.mxu0
        %v9417 = vadd.f32 0.0, %v9416
        %v9418 = vpop.f32.mrf.mxu0
        %v9419 = vadd.f32 0.0, %v9418
        %v9420 = vpop.f32.mrf.mxu0
        %v9421 = vadd.f32 0.0, %v9420
        %9422 = vmatprep.mubr.bf16.mxu0 %v9104
        %9423 = vmatmul.mubr.bf16.gmra.mxu0 %v9103
        %v9424 = vpop.f32.mrf.mxu0
        %v9425 = vadd.f32 0.0, %v9424
        %v9426 = vpop.f32.mrf.mxu0
        %v9427 = vadd.f32 0.0, %v9426
        %v9428 = vpop.f32.mrf.mxu0
        %v9429 = vadd.f32 0.0, %v9428
        %v9430 = vpop.f32.mrf.mxu0
        %v9431 = vadd.f32 0.0, %v9430
        %9432 = vmatprep.mubr.bf16.mxu0 %v9106
        %9433 = vmatmul.mubr.bf16.gmra.mxu0 %v9105
        %v9434 = vpop.f32.mrf.mxu0
        %v9435 = vadd.f32 0.0, %v9434
        %v9436 = vpop.f32.mrf.mxu0
        %v9437 = vadd.f32 0.0, %v9436
        %v9438 = vpop.f32.mrf.mxu0
        %v9439 = vadd.f32 0.0, %v9438
        %v9440 = vpop.f32.mrf.mxu0
        %v9441 = vadd.f32 0.0, %v9440
        %9442 = vdwg.mxu0
        %v9443 = vadd.f32 %v6633, %v9335
        %v9444 = vadd.f32 %v6634, %v9337
        %v9445 = vadd.f32 %v6635, %v9339
        %v9446 = vadd.f32 %v6636, %v9341
        %v9447 = vadd.f32 %v6637, %v9345
        %v9448 = vadd.f32 %v6638, %v9347
        %v9449 = vadd.f32 %v6639, %v9349
        %v9450 = vadd.f32 %v6640, %v9351
        %v9451 = vadd.f32 %v6641, %v9355
        %v9452 = vadd.f32 %v6642, %v9357
        %v9453 = vadd.f32 %v6643, %v9359
        %v9454 = vadd.f32 %v6644, %v9361
        %v9455 = vadd.f32 %v6645, %v9365
        %v9456 = vadd.f32 %v6646, %v9367
        %v9457 = vadd.f32 %v6647, %v9369
        %v9458 = vadd.f32 %v6648, %v9371
        %v9459 = vadd.f32 %v6649, %v9375
        %v9460 = vadd.f32 %v6650, %v9377
        %v9461 = vadd.f32 %v6651, %v9379
        %v9462 = vadd.f32 %v6652, %v9381
        %v9463 = vadd.f32 %v6653, %v9385
        %v9464 = vadd.f32 %v6654, %v9387
        %v9465 = vadd.f32 %v6655, %v9389
        %v9466 = vadd.f32 %v6656, %v9391
        %v9467 = vadd.f32 %v6657, %v9395
        %v9468 = vadd.f32 %v6658, %v9397
        %v9469 = vadd.f32 %v6659, %v9399
        %v9470 = vadd.f32 %v6660, %v9401
        %v9471 = vadd.f32 %v6661, %v9405
        %v9472 = vadd.f32 %v6662, %v9407
        %v9473 = vadd.f32 %v6663, %v9409
        %v9474 = vadd.f32 %v6664, %v9411
        %v9475 = vadd.f32 %v6665, %v9415
        %v9476 = vadd.f32 %v6666, %v9417
        %v9477 = vadd.f32 %v6667, %v9419
        %v9478 = vadd.f32 %v6668, %v9421
        %v9479 = vadd.f32 %v6669, %v9425
        %v9480 = vadd.f32 %v6670, %v9427
        %v9481 = vadd.f32 %v6671, %v9429
        %v9482 = vadd.f32 %v6672, %v9431
        %v9483 = vadd.f32 %v6673, %v9435
        %v9484 = vadd.f32 %v6674, %v9437
        %v9485 = vadd.f32 %v6675, %v9439
        %v9486 = vadd.f32 %v6676, %v9441
        %v9487 = vld [vmem:[%s6] sm:$0x3]
        %v9489 = vlaneseq
        %v9490 = vshrl.u32 %v9489, 7
        %v9491 = vsub.s32 0, %v9490
        %v9492 = vrot.slane %v9487, %v9491
        %v9493 = vlaneseq
        %v9494 = vshrl.u32 %v9493, 7
        %v9495 = vsub.s32 1, %v9494
        %v9496 = vrot.slane %v9487, %v9495
        %v9499 = vmul.f32 %v9443, %v9492
        %v9500 = vmul.f32 %v9444, %v9496
        %v9501 = vmul.f32 %v9445, %v9492
        %v9502 = vmul.f32 %v9446, %v9496
        %v9503 = vmul.f32 %v9447, %v9492
        %v9504 = vmul.f32 %v9448, %v9496
        %v9505 = vmul.f32 %v9449, %v9492
        %v9506 = vmul.f32 %v9450, %v9496
        %v9507 = vmul.f32 %v9451, %v9492
        %v9508 = vmul.f32 %v9452, %v9496
        %v9509 = vmul.f32 %v9453, %v9492
        %v9510 = vmul.f32 %v9454, %v9496
        %v9511 = vmul.f32 %v9455, %v9492
        %v9512 = vmul.f32 %v9456, %v9496
        %v9513 = vmul.f32 %v9457, %v9492
        %v9514 = vmul.f32 %v9458, %v9496
        %v9515 = vmul.f32 %v9459, %v9492
        %v9516 = vmul.f32 %v9460, %v9496
        %v9517 = vmul.f32 %v9461, %v9492
        %v9518 = vmul.f32 %v9462, %v9496
        %v9519 = vmul.f32 %v9463, %v9492
        %v9520 = vmul.f32 %v9464, %v9496
        %v9521 = vmul.f32 %v9465, %v9492
        %v9522 = vmul.f32 %v9466, %v9496
        %v9523 = vmul.f32 %v9467, %v9492
        %v9524 = vmul.f32 %v9468, %v9496
        %v9525 = vmul.f32 %v9469, %v9492
        %v9526 = vmul.f32 %v9470, %v9496
        %v9527 = vmul.f32 %v9471, %v9492
        %v9528 = vmul.f32 %v9472, %v9496
        %v9529 = vmul.f32 %v9473, %v9492
        %v9530 = vmul.f32 %v9474, %v9496
        %v9531 = vmul.f32 %v9475, %v9492
        %v9532 = vmul.f32 %v9476, %v9496
        %v9533 = vmul.f32 %v9477, %v9492
        %v9534 = vmul.f32 %v9478, %v9496
        %v9535 = vmul.f32 %v9479, %v9492
        %v9536 = vmul.f32 %v9480, %v9496
        %v9537 = vmul.f32 %v9481, %v9492
        %v9538 = vmul.f32 %v9482, %v9496
        %v9539 = vmul.f32 %v9483, %v9492
        %v9540 = vmul.f32 %v9484, %v9496
        %v9541 = vmul.f32 %v9485, %v9492
        %v9542 = vmul.f32 %v9486, %v9496
        %v9543 = vld [vmem:[%s348] sm:$0x3]
        %v9545 = vlaneseq
        %v9546 = vshrl.u32 %v9545, 7
        %v9547 = vsub.s32 0, %v9546
        %v9548 = vrot.slane %v9543, %v9547
        %v9549 = vlaneseq
        %v9550 = vshrl.u32 %v9549, 7
        %v9551 = vsub.s32 1, %v9550
        %v9552 = vrot.slane %v9543, %v9551
        %v9555 = vadd.f32 %v9499, %v9548
        %v9556 = vadd.f32 %v9500, %v9552
        %v9557 = vadd.f32 %v9501, %v9548
        %v9558 = vadd.f32 %v9502, %v9552
        %v9559 = vadd.f32 %v9503, %v9548
        %v9560 = vadd.f32 %v9504, %v9552
        %v9561 = vadd.f32 %v9505, %v9548
        %v9562 = vadd.f32 %v9506, %v9552
        %v9563 = vadd.f32 %v9507, %v9548
        %v9564 = vadd.f32 %v9508, %v9552
        %v9565 = vadd.f32 %v9509, %v9548
        %v9566 = vadd.f32 %v9510, %v9552
        %v9567 = vadd.f32 %v9511, %v9548
        %v9568 = vadd.f32 %v9512, %v9552
        %v9569 = vadd.f32 %v9513, %v9548
        %v9570 = vadd.f32 %v9514, %v9552
        %v9571 = vadd.f32 %v9515, %v9548
        %v9572 = vadd.f32 %v9516, %v9552
        %v9573 = vadd.f32 %v9517, %v9548
        %v9574 = vadd.f32 %v9518, %v9552
        %v9575 = vadd.f32 %v9519, %v9548
        %v9576 = vadd.f32 %v9520, %v9552
        %v9577 = vadd.f32 %v9521, %v9548
        %v9578 = vadd.f32 %v9522, %v9552
        %v9579 = vadd.f32 %v9523, %v9548
        %v9580 = vadd.f32 %v9524, %v9552
        %v9581 = vadd.f32 %v9525, %v9548
        %v9582 = vadd.f32 %v9526, %v9552
        %v9583 = vadd.f32 %v9527, %v9548
        %v9584 = vadd.f32 %v9528, %v9552
        %v9585 = vadd.f32 %v9529, %v9548
        %v9586 = vadd.f32 %v9530, %v9552
        %v9587 = vadd.f32 %v9531, %v9548
        %v9588 = vadd.f32 %v9532, %v9552
        %v9589 = vadd.f32 %v9533, %v9548
        %v9590 = vadd.f32 %v9534, %v9552
        %v9591 = vadd.f32 %v9535, %v9548
        %v9592 = vadd.f32 %v9536, %v9552
        %v9593 = vadd.f32 %v9537, %v9548
        %v9594 = vadd.f32 %v9538, %v9552
        %v9595 = vadd.f32 %v9539, %v9548
        %v9596 = vadd.f32 %v9540, %v9552
        %v9597 = vadd.f32 %v9541, %v9548
        %v9598 = vadd.f32 %v9542, %v9552
        %v9599 = vmax.f32 %v9555, 0.0
        %v9600 = vmax.f32 %v9556, 0.0
        %v9601 = vmax.f32 %v9557, 0.0
        %v9602 = vmax.f32 %v9558, 0.0
        %v9603 = vmax.f32 %v9559, 0.0
        %v9604 = vmax.f32 %v9560, 0.0
        %v9605 = vmax.f32 %v9561, 0.0
        %v9606 = vmax.f32 %v9562, 0.0
        %v9607 = vmax.f32 %v9563, 0.0
        %v9608 = vmax.f32 %v9564, 0.0
        %v9609 = vmax.f32 %v9565, 0.0
        %v9610 = vmax.f32 %v9566, 0.0
        %v9611 = vmax.f32 %v9567, 0.0
        %v9612 = vmax.f32 %v9568, 0.0
        %v9613 = vmax.f32 %v9569, 0.0
        %v9614 = vmax.f32 %v9570, 0.0
        %v9615 = vmax.f32 %v9571, 0.0
        %v9616 = vmax.f32 %v9572, 0.0
        %v9617 = vmax.f32 %v9573, 0.0
        %v9618 = vmax.f32 %v9574, 0.0
        %v9619 = vmax.f32 %v9575, 0.0
        %v9620 = vmax.f32 %v9576, 0.0
        %v9621 = vmax.f32 %v9577, 0.0
        %v9622 = vmax.f32 %v9578, 0.0
        %v9623 = vmax.f32 %v9579, 0.0
        %v9624 = vmax.f32 %v9580, 0.0
        %v9625 = vmax.f32 %v9581, 0.0
        %v9626 = vmax.f32 %v9582, 0.0
        %v9627 = vmax.f32 %v9583, 0.0
        %v9628 = vmax.f32 %v9584, 0.0
        %v9629 = vmax.f32 %v9585, 0.0
        %v9630 = vmax.f32 %v9586, 0.0
        %v9631 = vmax.f32 %v9587, 0.0
        %v9632 = vmax.f32 %v9588, 0.0
        %v9633 = vmax.f32 %v9589, 0.0
        %v9634 = vmax.f32 %v9590, 0.0
        %v9635 = vmax.f32 %v9591, 0.0
        %v9636 = vmax.f32 %v9592, 0.0
        %v9637 = vmax.f32 %v9593, 0.0
        %v9638 = vmax.f32 %v9594, 0.0
        %v9639 = vmax.f32 %v9595, 0.0
        %v9640 = vmax.f32 %v9596, 0.0
        %v9641 = vmax.f32 %v9597, 0.0
        %v9642 = vmax.f32 %v9598, 0.0
        %9643 = vst [vmem:[%s335] sm:$0xff] %v9599
        %9644 = vst [vmem:[%s335 + $0x8] sm:$0xff] %v9600
        %9645 = vst [vmem:[%s335 + $0x10] sm:$0xff] %v9601
        %9646 = vst [vmem:[%s335 + $0x18] sm:$0xff] %v9602
        %9647 = vst [vmem:[%s335 + $0x20] sm:$0xff] %v9603
        %9648 = vst [vmem:[%s335 + $0x28] sm:$0xff] %v9604
        %9649 = vst [vmem:[%s335 + $0x30] sm:$0xff] %v9605
        %9650 = vst [vmem:[%s335 + $0x38] sm:$0xff] %v9606
        %9651 = vst [vmem:[%s335 + $0x40] sm:$0xff] %v9607
        %9652 = vst [vmem:[%s335 + $0x48] sm:$0xff] %v9608
        %9653 = vst [vmem:[%s335 + $0x50] sm:$0xff] %v9609
        %9654 = vst [vmem:[%s335 + $0x58] sm:$0xff] %v9610
        %9655 = vst [vmem:[%s335 + $0x60] sm:$0xff] %v9611
        %9656 = vst [vmem:[%s335 + $0x68] sm:$0xff] %v9612
        %9657 = vst [vmem:[%s335 + $0x70] sm:$0xff] %v9613
        %9658 = vst [vmem:[%s335 + $0x78] sm:$0xff] %v9614
        %9659 = vst [vmem:[%s335 + $0x80] sm:$0xff] %v9615
        %9660 = vst [vmem:[%s335 + $0x88] sm:$0xff] %v9616
        %9661 = vst [vmem:[%s335 + $0x90] sm:$0xff] %v9617
        %9662 = vst [vmem:[%s335 + $0x98] sm:$0xff] %v9618
        %9663 = vst [vmem:[%s335 + $0xa0] sm:$0xff] %v9619
        %9664 = vst [vmem:[%s335 + $0xa8] sm:$0xff] %v9620
        %9665 = vst [vmem:[%s335 + $0xb0] sm:$0xff] %v9621
        %9666 = vst [vmem:[%s335 + $0xb8] sm:$0xff] %v9622
        %9667 = vst [vmem:[%s335 + $0xc0] sm:$0xff] %v9623
        %9668 = vst [vmem:[%s335 + $0xc8] sm:$0xff] %v9624
        %9669 = vst [vmem:[%s335 + $0xd0] sm:$0xff] %v9625
        %9670 = vst [vmem:[%s335 + $0xd8] sm:$0xff] %v9626
        %9671 = vst [vmem:[%s335 + $0xe0] sm:$0xff] %v9627
        %9672 = vst [vmem:[%s335 + $0xe8] sm:$0xff] %v9628
        %9673 = vst [vmem:[%s335 + $0xf0] sm:$0xff] %v9629
        %9674 = vst [vmem:[%s335 + $0xf8] sm:$0xff] %v9630
        %9675 = vst [vmem:[%s335 + $0x100] sm:$0xff] %v9631
        %9676 = vst [vmem:[%s335 + $0x108] sm:$0xff] %v9632
        %9677 = vst [vmem:[%s335 + $0x110] sm:$0xff] %v9633
        %9678 = vst [vmem:[%s335 + $0x118] sm:$0xff] %v9634
        %9679 = vst [vmem:[%s335 + $0x120] sm:$0xff] %v9635
        %9680 = vst [vmem:[%s335 + $0x128] sm:$0xff] %v9636
        %9681 = vst [vmem:[%s335 + $0x130] sm:$0xff] %v9637
        %9682 = vst [vmem:[%s335 + $0x138] sm:$0xff] %v9638
        %9683 = vst [vmem:[%s335 + $0x140] sm:$0xff] %v9639
        %9684 = vst [vmem:[%s335 + $0x148] sm:$0xff] %v9640
        %9685 = vst [vmem:[%s335 + $0x150] sm:$0xff] %v9641
        %9686 = vst [vmem:[%s335 + $0x158] sm:$0xff] %v9642
        %s9687 = sand.u32 %s224, 1
        %s9688 = scalar_lea.sflag [#allocation3], %s9687
        %s9689 = sand.u32 %s224, 1
        %s9690 = smul.addr %s9689, 352
        %s9691 = scalar_lea.vmem [#allocation2], %s9690
        // Predicated region
        $region53: #{tpu_custom_call.1} parent=51 // pred_check
          %p9692 = pneg %p234
        $region54: #{tpu_custom_call.1} parent=51 // pred_check_branch
          %9694 = sbr.rel (%p9692) target = $region56
        $region55: #{tpu_custom_call.1} parent=51 // pred_region
          %s9696 = ssub.s32 5632, 5632
          %9697 = vsyncadd %s9688, %s9696
          %s9698 = smul.addr %s27, 44
          %s9699 = smul.addr %s26, 88
          %s9700 = sadd.s32 %s9698, %s9699
          %s9701 = smul.addr %s9700, 128
          %s9702 = scalar_lea.hbm %s8, %s9701
          %s9703 = sshll.u32 %s9691, 4
          %s9704 = int_to_ptr.vmem [resolvable:$true] %s9703
          %9709 = dma.vmem_to_hbm [thread:$0]  %s9704, 5632, %s9702, %s9688, 256, 256, 16
        $region56: #{tpu_custom_call.1} parent=51 // pred_fallthru
          _
      $region52: #{tpu_custom_call.1} parent=5 // pred_fallthru
        _
      %p9710 = scmp.le.s32.totalorder 2, %s17
      // Predicated region
      $region57: #{tpu_custom_call.1} parent=5 // pred_check
        %p9711 = pneg %p9710
      $region58: #{tpu_custom_call.1} parent=5 // pred_check_branch
        %9713 = sbr.rel (%p9711) target = $region60
      $region59: #{tpu_custom_call.1} parent=5 // pred_region
        %s9714 = ssub.s32 %s17, 2
        // Predicated region
        $region61: #{tpu_custom_call.1} parent=59 // pred_check
          %p9715 = pneg %p240
        $region62: #{tpu_custom_call.1} parent=59 // pred_check_branch
          %9717 = sbr.rel (%p9715) target = $region64
        $region63: #{tpu_custom_call.1} parent=59 // pred_region
          %s9718 = sand.u32 %s225, 1
          %s9719 = scalar_lea.sflag [#allocation3], %s9718
          %s9720 = sand.u32 %s225, 1
          %s9721 = smul.addr %s9720, 352
          %s9722 = scalar_lea.vmem [#allocation2], %s9721
          %9723 = dma.done %s9719, 5632
        $region64: #{tpu_custom_call.1} parent=59 // pred_fallthru
          _
      $region60: #{tpu_custom_call.1} parent=5 // pred_fallthru
        _
    $region6: #{tpu_custom_call.1} parent=1 // loop_footer
      %s21 = sadd.s32 1, %s17
    $region7: #{tpu_custom_call.1} parent=1 // loop_footer_branch
      %16 = sbr.rel target = $region3
    $region8: #{tpu_custom_call.1} parent=1 // loop_exit
      _
    %9724 = vsyncpa [#allocation3], 1
    %s9725 = scalar_lea.sflag [#allocation3], 1
    %9726 = vsyncpa %s9725, 1

</llo_original>
